<compile_context>
chip_gen: v7x
topology: tpu7x:2x2x1
jax: 0.10.0
libtpu: 0.0.40
codegen_flags: <defaults>
</compile_context>

<pallas_src>
import functools

import jax
import jax.numpy as jnp
import numpy as np
from jax import lax
from jax.experimental import pallas as pl
from jax.experimental.pallas import tpu as pltpu


# ----------------------------- in-kernel helpers -----------------------------

def _reflect_pad_hw(x, pad):
    """PyTorch-style reflection padding of the last two axes of a (C, H, W) value."""
    if pad == 0:
        return x
    _, h, w = x.shape
    # rows: pad, pad-1, ..., 1  /  h-2, h-3, ..., h-1-pad
    top = [x[:, pad - j:pad - j + 1, :] for j in range(pad)]
    bot = [x[:, h - 2 - j:h - 1 - j, :] for j in range(pad)]
    x = jnp.concatenate(top + [x] + bot, axis=1)
    left = [x[:, :, pad - j:pad - j + 1] for j in range(pad)]
    right = [x[:, :, w - 2 - j:w - 1 - j] for j in range(pad)]
    return jnp.concatenate(left + [x] + right, axis=2)


def _im2col_cmajor(xp, k, stride, h_out, w_out):
    """(C, Hp, Wp) -> (k*k*C, h_out*w_out); rows are (tap, channel), lanes are pixels."""
    taps = []
    for kh in range(k):
        for kw in range(k):
            if stride == 1:
                taps.append(xp[:, kh:kh + h_out, kw:kw + w_out])
            else:
                taps.append(xp[:, kh:kh + stride * (h_out - 1) + 1:stride,
                               kw:kw + stride * (w_out - 1) + 1:stride])
    p3 = jnp.concatenate(taps, axis=0)                      # (k*k*C, Ho, Wo)
    # Flatten spatial into the lane dim via static lane-axis concatenation
    # (avoids a lane-dim-changing reshape).
    rows = [p3[:, i, :] for i in range(h_out)]              # each (k*k*C, Wo)
    return jnp.concatenate(rows, axis=1)                    # (k*k*C, Ho*Wo)


def _unflatten_hw(a, h, w):
    """(C, h*w) -> (C, h, w) via static lane slices (avoids a lane-dim reshape)."""
    rows = [a[:, i * w:(i + 1) * w][:, None, :] for i in range(h)]
    return jnp.concatenate(rows, axis=1)                    # (C, h, w)


# --------------------------------- kernel ------------------------------------

def _conv_block_kernel(x_ref, w1_ref, b1_ref, w2_ref, b2_ref, o_ref, *,
                       k, stride, pad, h1, w1o, h2, w2o):
    x = x_ref[0].astype(jnp.float32)                        # (Cin, H, W)

    # ---- ConvLayer 1: reflect-pad conv + ReLU (intermediate stays on-chip) ----
    p1 = _im2col_cmajor(_reflect_pad_hw(x, pad), k, stride, h1, w1o)
    a1 = jnp.dot(w1_ref[...], p1, preferred_element_type=jnp.float32)
    a1 = jnp.maximum(a1 + b1_ref[...], 0.0)                 # (16, h1*w1o)

    # ---- ConvLayer 2: reflect-pad conv + ReLU ----
    mid = _unflatten_hw(a1, h1, w1o)                        # (16, h1, w1o)
    p2 = _im2col_cmajor(_reflect_pad_hw(mid, pad), k, stride, h2, w2o)
    a2 = jnp.dot(w2_ref[...], p2, preferred_element_type=jnp.float32)
    a2 = jnp.maximum(a2 + b2_ref[...], 0.0)                 # (Cout, h2*w2o)

    o_ref[0] = a2.astype(o_ref.dtype)                       # lane-dense store


# -------------------------------- wrapper -------------------------------------

def conv_block_forward(x_nchw, params, *, stride):
    """ConvBlock.forward: two fused ConvLayers (reflect-pad conv + ReLU each)."""
    w1, b1, w2, b2 = params
    n, cin, h, w = x_nchw.shape
    c_mid, cin_w, k, _ = w1.shape
    assert cin == cin_w
    cout = w2.shape[0]
    pad = k // 2

    h1 = (h + 2 * pad - k) // stride + 1
    w1o = (w + 2 * pad - k) // stride + 1
    h2 = (h1 + 2 * pad - k) // stride + 1
    w2o = (w1o + 2 * pad - k) // stride + 1

    # Weights in matmul form: row order (kh, kw, cin) matches _im2col_cmajor.
    w1_mat = jnp.transpose(w1, (0, 2, 3, 1)).reshape(c_mid, k * k * cin)
    w2_mat = jnp.transpose(w2, (0, 2, 3, 1)).reshape(cout, k * k * c_mid)
    b1c = b1.reshape(c_mid, 1)
    b2c = b2.reshape(cout, 1)

    kernel = functools.partial(_conv_block_kernel, k=k, stride=stride, pad=pad,
                               h1=h1, w1o=w1o, h2=h2, w2o=w2o)

    flops = 2 * n * (h1 * w1o * k * k * cin * c_mid + h2 * w2o * k * k * c_mid * cout)
    bytes_accessed = 4 * (n * cin * h * w + n * cout * h2 * w2o
                          + c_mid * k * k * cin + cout * k * k * c_mid + c_mid + cout)

    out_flat = pl.pallas_call(
        kernel,
        out_shape=jax.ShapeDtypeStruct((n, cout, h2 * w2o), x_nchw.dtype),
        grid_spec=pltpu.PrefetchScalarGridSpec(
            num_scalar_prefetch=0,
            grid=(n,),
            in_specs=[
                pl.BlockSpec((1, cin, h, w), lambda i: (i, 0, 0, 0)),
                pl.BlockSpec((c_mid, k * k * cin), lambda i: (0, 0)),
                pl.BlockSpec((c_mid, 1), lambda i: (0, 0)),
                pl.BlockSpec((cout, k * k * c_mid), lambda i: (0, 0)),
                pl.BlockSpec((cout, 1), lambda i: (0, 0)),
            ],
            out_specs=pl.BlockSpec((1, cout, h2 * w2o), lambda i: (i, 0, 0)),
        ),
        compiler_params=pltpu.CompilerParams(dimension_semantics=("parallel",)),
        cost_estimate=pl.CostEstimate(flops=flops, transcendentals=0,
                                      bytes_accessed=bytes_accessed),
    )(x_nchw, w1_mat, b1c, w2_mat, b2c)

    # Pure reshape (no transpose): kernel output is already (N, Cout, Ho*Wo) NCHW.
    return out_flat.reshape(n, cout, h2, w2o)


# ------------------------- reference & test utilities -------------------------

def _conv_block_ref(x, params, *, stride):
    """Independent pure-JAX reference (jnp.pad reflect + lax.conv, NCHW)."""
    w1, b1, w2, b2 = params

    def layer(x, w, b):
        pad = w.shape[2] // 2
        xp = jnp.pad(x, ((0, 0), (0, 0), (pad, pad), (pad, pad)), mode="reflect")
        y = lax.conv_general_dilated(
            xp, w, window_strides=(stride, stride), padding="VALID",
            dimension_numbers=("NCHW", "OIHW", "NCHW"),
            precision=lax.Precision.HIGHEST)
        return jnp.maximum(y + b[None, :, None, None], 0.0)

    return layer(layer(x, w1, b1), w2, b2)


def _make_params(key, in_channels, out_channels, kernel_size):
    """Deterministic synthetic Conv2d params (PyTorch OIHW layout)."""
    out_channels_def = 16
    k1, k2, k3, k4 = jax.random.split(key, 4)
    fan1 = in_channels * kernel_size * kernel_size
    fan2 = out_channels_def * kernel_size * kernel_size
    w1 = jax.random.uniform(k1, (out_channels_def, in_channels, kernel_size, kernel_size),
                            jnp.float32, -1.0, 1.0) / np.sqrt(fan1)
    b1 = jax.random.uniform(k2, (out_channels_def,), jnp.float32, -1.0, 1.0) / np.sqrt(fan1)
    w2 = jax.random.uniform(k3, (out_channels, out_channels_def, kernel_size, kernel_size),
                            jnp.float32, -1.0, 1.0) / np.sqrt(fan2)
    b2 = jax.random.uniform(k4, (out_channels,), jnp.float32, -1.0, 1.0) / np.sqrt(fan2)
    return w1, b1, w2, b2


if __name__ == "__main__":
    key = jax.random.PRNGKey(0)
    kx, kp = jax.random.split(key)

    # Small shapes consistent with the module: N=2, Cin=4, 16x16 spatial,
    # ConvBlock(in=4, out=8, kernel_size=3, stride=1).
    N, Cin, H, W = 2, 4, 16, 16
    Cout, K, S = 8, 3, 1

    x = jax.random.normal(kx, (N, Cin, H, W), jnp.float32)
    params = _make_params(kp, Cin, Cout, K)

    out = jax.block_until_ready(conv_block_forward(x, params, stride=S))

    ref = _conv_block_ref(x, params, stride=S)
    np.testing.assert_allclose(np.asarray(out), np.asarray(ref), rtol=1e-5, atol=1e-5)
    assert out.shape == (N, Cout, H, W)

    print("KERNEL_OK")
</pallas_src>

<mosaic_0001>
module attributes {stable_mosaic.version = 11 : i64} {
  func.func @_conv_block_kernel(%arg0: i32, %arg1: memref<1x4x16x16xf32, #tpu.memory_space<vmem>>, %arg2: memref<16x36xf32, #tpu.memory_space<vmem>>, %arg3: memref<16x1xf32, #tpu.memory_space<vmem>>, %arg4: memref<8x144xf32, #tpu.memory_space<vmem>>, %arg5: memref<8x1xf32, #tpu.memory_space<vmem>>, %arg6: memref<1x8x256xf32, #tpu.memory_space<vmem>>) attributes {dimension_semantics = [#tpu.dimension_semantics<parallel>], iteration_bounds = array<i64: 2>, scalar_prefetch = 0 : i64, scratch_operands = 0 : i64, tpu.core_type = #tpu.core_type<tc>, window_params = [{transform_indices = @transform_0, window_bounds = array<i64: 1, 4, 16, 16>}, {pipeline_mode = #tpu.pipeline_mode<synchronous>, transform_indices = @transform_1, window_bounds = array<i64: 16, 36>}, {pipeline_mode = #tpu.pipeline_mode<synchronous>, transform_indices = @transform_2, window_bounds = array<i64: 16, 1>}, {pipeline_mode = #tpu.pipeline_mode<synchronous>, transform_indices = @transform_3, window_bounds = array<i64: 8, 144>}, {pipeline_mode = #tpu.pipeline_mode<synchronous>, transform_indices = @transform_4, window_bounds = array<i64: 8, 1>}, {transform_indices = @transform_5, window_bounds = array<i64: 1, 8, 256>}]} {
    %c0 = arith.constant 0 : index
    %c0_0 = arith.constant 0 : index
    %c0_1 = arith.constant 0 : index
    %c0_2 = arith.constant 0 : index
    %0 = vector.load %arg1[%c0, %c0_0, %c0_1, %c0_2] : memref<1x4x16x16xf32, #tpu.memory_space<vmem>>, vector<1x4x16x16xf32>
    %1 = vector.shape_cast %0 : vector<1x4x16x16xf32> to vector<4x16x16xf32>
    %2 = vector.extract_strided_slice %1 {offsets = [0, 1, 0], sizes = [4, 1, 16], strides = [1, 1, 1]} : vector<4x16x16xf32> to vector<4x1x16xf32>
    %3 = vector.extract_strided_slice %1 {offsets = [0, 14, 0], sizes = [4, 1, 16], strides = [1, 1, 1]} : vector<4x16x16xf32> to vector<4x1x16xf32>
    %4 = tpu.concatenate %2, %1, %3 in 1 : vector<4x1x16xf32>, vector<4x16x16xf32>, vector<4x1x16xf32> -> vector<4x18x16xf32>
    %5 = vector.extract_strided_slice %4 {offsets = [0, 0, 1], sizes = [4, 18, 1], strides = [1, 1, 1]} : vector<4x18x16xf32> to vector<4x18x1xf32>
    %6 = vector.extract_strided_slice %4 {offsets = [0, 0, 14], sizes = [4, 18, 1], strides = [1, 1, 1]} : vector<4x18x16xf32> to vector<4x18x1xf32>
    %7 = tpu.concatenate %5, %4, %6 in 2 : vector<4x18x1xf32>, vector<4x18x16xf32>, vector<4x18x1xf32> -> vector<4x18x18xf32>
    %8 = vector.extract_strided_slice %7 {offsets = [0, 0, 0], sizes = [4, 16, 16], strides = [1, 1, 1]} : vector<4x18x18xf32> to vector<4x16x16xf32>
    %9 = vector.extract_strided_slice %7 {offsets = [0, 0, 1], sizes = [4, 16, 16], strides = [1, 1, 1]} : vector<4x18x18xf32> to vector<4x16x16xf32>
    %10 = vector.extract_strided_slice %7 {offsets = [0, 0, 2], sizes = [4, 16, 16], strides = [1, 1, 1]} : vector<4x18x18xf32> to vector<4x16x16xf32>
    %11 = vector.extract_strided_slice %7 {offsets = [0, 1, 0], sizes = [4, 16, 16], strides = [1, 1, 1]} : vector<4x18x18xf32> to vector<4x16x16xf32>
    %12 = vector.extract_strided_slice %7 {offsets = [0, 1, 1], sizes = [4, 16, 16], strides = [1, 1, 1]} : vector<4x18x18xf32> to vector<4x16x16xf32>
    %13 = vector.extract_strided_slice %7 {offsets = [0, 1, 2], sizes = [4, 16, 16], strides = [1, 1, 1]} : vector<4x18x18xf32> to vector<4x16x16xf32>
    %14 = vector.extract_strided_slice %7 {offsets = [0, 2, 0], sizes = [4, 16, 16], strides = [1, 1, 1]} : vector<4x18x18xf32> to vector<4x16x16xf32>
    %15 = vector.extract_strided_slice %7 {offsets = [0, 2, 1], sizes = [4, 16, 16], strides = [1, 1, 1]} : vector<4x18x18xf32> to vector<4x16x16xf32>
    %16 = vector.extract_strided_slice %7 {offsets = [0, 2, 2], sizes = [4, 16, 16], strides = [1, 1, 1]} : vector<4x18x18xf32> to vector<4x16x16xf32>
    %17 = tpu.concatenate %8, %9, %10, %11, %12, %13, %14, %15, %16 in 0 : vector<4x16x16xf32>, vector<4x16x16xf32>, vector<4x16x16xf32>, vector<4x16x16xf32>, vector<4x16x16xf32>, vector<4x16x16xf32>, vector<4x16x16xf32>, vector<4x16x16xf32>, vector<4x16x16xf32> -> vector<36x16x16xf32>
    %18 = vector.extract_strided_slice %17 {offsets = [0, 0, 0], sizes = [36, 1, 16], strides = [1, 1, 1]} : vector<36x16x16xf32> to vector<36x1x16xf32>
    %19 = vector.shape_cast %18 : vector<36x1x16xf32> to vector<36x16xf32>
    %20 = vector.extract_strided_slice %17 {offsets = [0, 1, 0], sizes = [36, 1, 16], strides = [1, 1, 1]} : vector<36x16x16xf32> to vector<36x1x16xf32>
    %21 = vector.shape_cast %20 : vector<36x1x16xf32> to vector<36x16xf32>
    %22 = vector.extract_strided_slice %17 {offsets = [0, 2, 0], sizes = [36, 1, 16], strides = [1, 1, 1]} : vector<36x16x16xf32> to vector<36x1x16xf32>
    %23 = vector.shape_cast %22 : vector<36x1x16xf32> to vector<36x16xf32>
    %24 = vector.extract_strided_slice %17 {offsets = [0, 3, 0], sizes = [36, 1, 16], strides = [1, 1, 1]} : vector<36x16x16xf32> to vector<36x1x16xf32>
    %25 = vector.shape_cast %24 : vector<36x1x16xf32> to vector<36x16xf32>
    %26 = vector.extract_strided_slice %17 {offsets = [0, 4, 0], sizes = [36, 1, 16], strides = [1, 1, 1]} : vector<36x16x16xf32> to vector<36x1x16xf32>
    %27 = vector.shape_cast %26 : vector<36x1x16xf32> to vector<36x16xf32>
    %28 = vector.extract_strided_slice %17 {offsets = [0, 5, 0], sizes = [36, 1, 16], strides = [1, 1, 1]} : vector<36x16x16xf32> to vector<36x1x16xf32>
    %29 = vector.shape_cast %28 : vector<36x1x16xf32> to vector<36x16xf32>
    %30 = vector.extract_strided_slice %17 {offsets = [0, 6, 0], sizes = [36, 1, 16], strides = [1, 1, 1]} : vector<36x16x16xf32> to vector<36x1x16xf32>
    %31 = vector.shape_cast %30 : vector<36x1x16xf32> to vector<36x16xf32>
    %32 = vector.extract_strided_slice %17 {offsets = [0, 7, 0], sizes = [36, 1, 16], strides = [1, 1, 1]} : vector<36x16x16xf32> to vector<36x1x16xf32>
    %33 = vector.shape_cast %32 : vector<36x1x16xf32> to vector<36x16xf32>
    %34 = vector.extract_strided_slice %17 {offsets = [0, 8, 0], sizes = [36, 1, 16], strides = [1, 1, 1]} : vector<36x16x16xf32> to vector<36x1x16xf32>
    %35 = vector.shape_cast %34 : vector<36x1x16xf32> to vector<36x16xf32>
    %36 = vector.extract_strided_slice %17 {offsets = [0, 9, 0], sizes = [36, 1, 16], strides = [1, 1, 1]} : vector<36x16x16xf32> to vector<36x1x16xf32>
    %37 = vector.shape_cast %36 : vector<36x1x16xf32> to vector<36x16xf32>
    %38 = vector.extract_strided_slice %17 {offsets = [0, 10, 0], sizes = [36, 1, 16], strides = [1, 1, 1]} : vector<36x16x16xf32> to vector<36x1x16xf32>
    %39 = vector.shape_cast %38 : vector<36x1x16xf32> to vector<36x16xf32>
    %40 = vector.extract_strided_slice %17 {offsets = [0, 11, 0], sizes = [36, 1, 16], strides = [1, 1, 1]} : vector<36x16x16xf32> to vector<36x1x16xf32>
    %41 = vector.shape_cast %40 : vector<36x1x16xf32> to vector<36x16xf32>
    %42 = vector.extract_strided_slice %17 {offsets = [0, 12, 0], sizes = [36, 1, 16], strides = [1, 1, 1]} : vector<36x16x16xf32> to vector<36x1x16xf32>
    %43 = vector.shape_cast %42 : vector<36x1x16xf32> to vector<36x16xf32>
    %44 = vector.extract_strided_slice %17 {offsets = [0, 13, 0], sizes = [36, 1, 16], strides = [1, 1, 1]} : vector<36x16x16xf32> to vector<36x1x16xf32>
    %45 = vector.shape_cast %44 : vector<36x1x16xf32> to vector<36x16xf32>
    %46 = vector.extract_strided_slice %17 {offsets = [0, 14, 0], sizes = [36, 1, 16], strides = [1, 1, 1]} : vector<36x16x16xf32> to vector<36x1x16xf32>
    %47 = vector.shape_cast %46 : vector<36x1x16xf32> to vector<36x16xf32>
    %48 = vector.extract_strided_slice %17 {offsets = [0, 15, 0], sizes = [36, 1, 16], strides = [1, 1, 1]} : vector<36x16x16xf32> to vector<36x1x16xf32>
    %49 = vector.shape_cast %48 : vector<36x1x16xf32> to vector<36x16xf32>
    %50 = tpu.concatenate %19, %21, %23, %25, %27, %29, %31, %33, %35, %37, %39, %41, %43, %45, %47, %49 in 1 : vector<36x16xf32>, vector<36x16xf32>, vector<36x16xf32>, vector<36x16xf32>, vector<36x16xf32>, vector<36x16xf32>, vector<36x16xf32>, vector<36x16xf32>, vector<36x16xf32>, vector<36x16xf32>, vector<36x16xf32>, vector<36x16xf32>, vector<36x16xf32>, vector<36x16xf32>, vector<36x16xf32>, vector<36x16xf32> -> vector<36x256xf32>
    %c0_3 = arith.constant 0 : index
    %c0_4 = arith.constant 0 : index
    %51 = vector.load %arg2[%c0_3, %c0_4] : memref<16x36xf32, #tpu.memory_space<vmem>>, vector<16x36xf32>
    %cst = arith.constant dense<0.000000e+00> : vector<16x256xf32>
    %52 = tpu.matmul %51, %50, %cst {dimension_numbers = #tpu.dot_dimension_numbers<[1], [0], [0], [1], [0, 0, 1, 1], [], []>} : vector<16x36xf32>, vector<36x256xf32>, vector<16x256xf32> -> vector<16x256xf32>
    %c0_5 = arith.constant 0 : index
    %c0_6 = arith.constant 0 : index
    %53 = vector.load %arg3[%c0_5, %c0_6] : memref<16x1xf32, #tpu.memory_space<vmem>>, vector<16x1xf32>
    %54 = vector.broadcast %53 : vector<16x1xf32> to vector<16x256xf32>
    %55 = arith.addf %52, %54 : vector<16x256xf32>
    %cst_7 = arith.constant 0.000000e+00 : f32
    %56 = vector.broadcast %cst_7 : f32 to vector<16x256xf32>
    %57 = arith.maximumf %55, %56 : vector<16x256xf32>
    %58 = vector.extract_strided_slice %57 {offsets = [0, 0], sizes = [16, 16], strides = [1, 1]} : vector<16x256xf32> to vector<16x16xf32>
    %59 = vector.shape_cast %58 : vector<16x16xf32> to vector<16x1x16xf32>
    %60 = vector.extract_strided_slice %57 {offsets = [0, 16], sizes = [16, 16], strides = [1, 1]} : vector<16x256xf32> to vector<16x16xf32>
    %61 = vector.shape_cast %60 : vector<16x16xf32> to vector<16x1x16xf32>
    %62 = vector.extract_strided_slice %57 {offsets = [0, 32], sizes = [16, 16], strides = [1, 1]} : vector<16x256xf32> to vector<16x16xf32>
    %63 = vector.shape_cast %62 : vector<16x16xf32> to vector<16x1x16xf32>
    %64 = vector.extract_strided_slice %57 {offsets = [0, 48], sizes = [16, 16], strides = [1, 1]} : vector<16x256xf32> to vector<16x16xf32>
    %65 = vector.shape_cast %64 : vector<16x16xf32> to vector<16x1x16xf32>
    %66 = vector.extract_strided_slice %57 {offsets = [0, 64], sizes = [16, 16], strides = [1, 1]} : vector<16x256xf32> to vector<16x16xf32>
    %67 = vector.shape_cast %66 : vector<16x16xf32> to vector<16x1x16xf32>
    %68 = vector.extract_strided_slice %57 {offsets = [0, 80], sizes = [16, 16], strides = [1, 1]} : vector<16x256xf32> to vector<16x16xf32>
    %69 = vector.shape_cast %68 : vector<16x16xf32> to vector<16x1x16xf32>
    %70 = vector.extract_strided_slice %57 {offsets = [0, 96], sizes = [16, 16], strides = [1, 1]} : vector<16x256xf32> to vector<16x16xf32>
    %71 = vector.shape_cast %70 : vector<16x16xf32> to vector<16x1x16xf32>
    %72 = vector.extract_strided_slice %57 {offsets = [0, 112], sizes = [16, 16], strides = [1, 1]} : vector<16x256xf32> to vector<16x16xf32>
    %73 = vector.shape_cast %72 : vector<16x16xf32> to vector<16x1x16xf32>
    %74 = vector.extract_strided_slice %57 {offsets = [0, 128], sizes = [16, 16], strides = [1, 1]} : vector<16x256xf32> to vector<16x16xf32>
    %75 = vector.shape_cast %74 : vector<16x16xf32> to vector<16x1x16xf32>
    %76 = vector.extract_strided_slice %57 {offsets = [0, 144], sizes = [16, 16], strides = [1, 1]} : vector<16x256xf32> to vector<16x16xf32>
    %77 = vector.shape_cast %76 : vector<16x16xf32> to vector<16x1x16xf32>
    %78 = vector.extract_strided_slice %57 {offsets = [0, 160], sizes = [16, 16], strides = [1, 1]} : vector<16x256xf32> to vector<16x16xf32>
    %79 = vector.shape_cast %78 : vector<16x16xf32> to vector<16x1x16xf32>
    %80 = vector.extract_strided_slice %57 {offsets = [0, 176], sizes = [16, 16], strides = [1, 1]} : vector<16x256xf32> to vector<16x16xf32>
    %81 = vector.shape_cast %80 : vector<16x16xf32> to vector<16x1x16xf32>
    %82 = vector.extract_strided_slice %57 {offsets = [0, 192], sizes = [16, 16], strides = [1, 1]} : vector<16x256xf32> to vector<16x16xf32>
    %83 = vector.shape_cast %82 : vector<16x16xf32> to vector<16x1x16xf32>
    %84 = vector.extract_strided_slice %57 {offsets = [0, 208], sizes = [16, 16], strides = [1, 1]} : vector<16x256xf32> to vector<16x16xf32>
    %85 = vector.shape_cast %84 : vector<16x16xf32> to vector<16x1x16xf32>
    %86 = vector.extract_strided_slice %57 {offsets = [0, 224], sizes = [16, 16], strides = [1, 1]} : vector<16x256xf32> to vector<16x16xf32>
    %87 = vector.shape_cast %86 : vector<16x16xf32> to vector<16x1x16xf32>
    %88 = vector.extract_strided_slice %57 {offsets = [0, 240], sizes = [16, 16], strides = [1, 1]} : vector<16x256xf32> to vector<16x16xf32>
    %89 = vector.shape_cast %88 : vector<16x16xf32> to vector<16x1x16xf32>
    %90 = tpu.concatenate %59, %61, %63, %65, %67, %69, %71, %73, %75, %77, %79, %81, %83, %85, %87, %89 in 1 : vector<16x1x16xf32>, vector<16x1x16xf32>, vector<16x1x16xf32>, vector<16x1x16xf32>, vector<16x1x16xf32>, vector<16x1x16xf32>, vector<16x1x16xf32>, vector<16x1x16xf32>, vector<16x1x16xf32>, vector<16x1x16xf32>, vector<16x1x16xf32>, vector<16x1x16xf32>, vector<16x1x16xf32>, vector<16x1x16xf32>, vector<16x1x16xf32>, vector<16x1x16xf32> -> vector<16x16x16xf32>
    %91 = vector.extract_strided_slice %90 {offsets = [0, 1, 0], sizes = [16, 1, 16], strides = [1, 1, 1]} : vector<16x16x16xf32> to vector<16x1x16xf32>
    %92 = vector.extract_strided_slice %90 {offsets = [0, 14, 0], sizes = [16, 1, 16], strides = [1, 1, 1]} : vector<16x16x16xf32> to vector<16x1x16xf32>
    %93 = tpu.concatenate %91, %90, %92 in 1 : vector<16x1x16xf32>, vector<16x16x16xf32>, vector<16x1x16xf32> -> vector<16x18x16xf32>
    %94 = vector.extract_strided_slice %93 {offsets = [0, 0, 1], sizes = [16, 18, 1], strides = [1, 1, 1]} : vector<16x18x16xf32> to vector<16x18x1xf32>
    %95 = vector.extract_strided_slice %93 {offsets = [0, 0, 14], sizes = [16, 18, 1], strides = [1, 1, 1]} : vector<16x18x16xf32> to vector<16x18x1xf32>
    %96 = tpu.concatenate %94, %93, %95 in 2 : vector<16x18x1xf32>, vector<16x18x16xf32>, vector<16x18x1xf32> -> vector<16x18x18xf32>
    %97 = vector.extract_strided_slice %96 {offsets = [0, 0, 0], sizes = [16, 16, 16], strides = [1, 1, 1]} : vector<16x18x18xf32> to vector<16x16x16xf32>
    %98 = vector.extract_strided_slice %96 {offsets = [0, 0, 1], sizes = [16, 16, 16], strides = [1, 1, 1]} : vector<16x18x18xf32> to vector<16x16x16xf32>
    %99 = vector.extract_strided_slice %96 {offsets = [0, 0, 2], sizes = [16, 16, 16], strides = [1, 1, 1]} : vector<16x18x18xf32> to vector<16x16x16xf32>
    %100 = vector.extract_strided_slice %96 {offsets = [0, 1, 0], sizes = [16, 16, 16], strides = [1, 1, 1]} : vector<16x18x18xf32> to vector<16x16x16xf32>
    %101 = vector.extract_strided_slice %96 {offsets = [0, 1, 1], sizes = [16, 16, 16], strides = [1, 1, 1]} : vector<16x18x18xf32> to vector<16x16x16xf32>
    %102 = vector.extract_strided_slice %96 {offsets = [0, 1, 2], sizes = [16, 16, 16], strides = [1, 1, 1]} : vector<16x18x18xf32> to vector<16x16x16xf32>
    %103 = vector.extract_strided_slice %96 {offsets = [0, 2, 0], sizes = [16, 16, 16], strides = [1, 1, 1]} : vector<16x18x18xf32> to vector<16x16x16xf32>
    %104 = vector.extract_strided_slice %96 {offsets = [0, 2, 1], sizes = [16, 16, 16], strides = [1, 1, 1]} : vector<16x18x18xf32> to vector<16x16x16xf32>
    %105 = vector.extract_strided_slice %96 {offsets = [0, 2, 2], sizes = [16, 16, 16], strides = [1, 1, 1]} : vector<16x18x18xf32> to vector<16x16x16xf32>
    %106 = tpu.concatenate %97, %98, %99, %100, %101, %102, %103, %104, %105 in 0 : vector<16x16x16xf32>, vector<16x16x16xf32>, vector<16x16x16xf32>, vector<16x16x16xf32>, vector<16x16x16xf32>, vector<16x16x16xf32>, vector<16x16x16xf32>, vector<16x16x16xf32>, vector<16x16x16xf32> -> vector<144x16x16xf32>
    %107 = vector.extract_strided_slice %106 {offsets = [0, 0, 0], sizes = [144, 1, 16], strides = [1, 1, 1]} : vector<144x16x16xf32> to vector<144x1x16xf32>
    %108 = vector.shape_cast %107 : vector<144x1x16xf32> to vector<144x16xf32>
    %109 = vector.extract_strided_slice %106 {offsets = [0, 1, 0], sizes = [144, 1, 16], strides = [1, 1, 1]} : vector<144x16x16xf32> to vector<144x1x16xf32>
    %110 = vector.shape_cast %109 : vector<144x1x16xf32> to vector<144x16xf32>
    %111 = vector.extract_strided_slice %106 {offsets = [0, 2, 0], sizes = [144, 1, 16], strides = [1, 1, 1]} : vector<144x16x16xf32> to vector<144x1x16xf32>
    %112 = vector.shape_cast %111 : vector<144x1x16xf32> to vector<144x16xf32>
    %113 = vector.extract_strided_slice %106 {offsets = [0, 3, 0], sizes = [144, 1, 16], strides = [1, 1, 1]} : vector<144x16x16xf32> to vector<144x1x16xf32>
    %114 = vector.shape_cast %113 : vector<144x1x16xf32> to vector<144x16xf32>
    %115 = vector.extract_strided_slice %106 {offsets = [0, 4, 0], sizes = [144, 1, 16], strides = [1, 1, 1]} : vector<144x16x16xf32> to vector<144x1x16xf32>
    %116 = vector.shape_cast %115 : vector<144x1x16xf32> to vector<144x16xf32>
    %117 = vector.extract_strided_slice %106 {offsets = [0, 5, 0], sizes = [144, 1, 16], strides = [1, 1, 1]} : vector<144x16x16xf32> to vector<144x1x16xf32>
    %118 = vector.shape_cast %117 : vector<144x1x16xf32> to vector<144x16xf32>
    %119 = vector.extract_strided_slice %106 {offsets = [0, 6, 0], sizes = [144, 1, 16], strides = [1, 1, 1]} : vector<144x16x16xf32> to vector<144x1x16xf32>
    %120 = vector.shape_cast %119 : vector<144x1x16xf32> to vector<144x16xf32>
    %121 = vector.extract_strided_slice %106 {offsets = [0, 7, 0], sizes = [144, 1, 16], strides = [1, 1, 1]} : vector<144x16x16xf32> to vector<144x1x16xf32>
    %122 = vector.shape_cast %121 : vector<144x1x16xf32> to vector<144x16xf32>
    %123 = vector.extract_strided_slice %106 {offsets = [0, 8, 0], sizes = [144, 1, 16], strides = [1, 1, 1]} : vector<144x16x16xf32> to vector<144x1x16xf32>
    %124 = vector.shape_cast %123 : vector<144x1x16xf32> to vector<144x16xf32>
    %125 = vector.extract_strided_slice %106 {offsets = [0, 9, 0], sizes = [144, 1, 16], strides = [1, 1, 1]} : vector<144x16x16xf32> to vector<144x1x16xf32>
    %126 = vector.shape_cast %125 : vector<144x1x16xf32> to vector<144x16xf32>
    %127 = vector.extract_strided_slice %106 {offsets = [0, 10, 0], sizes = [144, 1, 16], strides = [1, 1, 1]} : vector<144x16x16xf32> to vector<144x1x16xf32>
    %128 = vector.shape_cast %127 : vector<144x1x16xf32> to vector<144x16xf32>
    %129 = vector.extract_strided_slice %106 {offsets = [0, 11, 0], sizes = [144, 1, 16], strides = [1, 1, 1]} : vector<144x16x16xf32> to vector<144x1x16xf32>
    %130 = vector.shape_cast %129 : vector<144x1x16xf32> to vector<144x16xf32>
    %131 = vector.extract_strided_slice %106 {offsets = [0, 12, 0], sizes = [144, 1, 16], strides = [1, 1, 1]} : vector<144x16x16xf32> to vector<144x1x16xf32>
    %132 = vector.shape_cast %131 : vector<144x1x16xf32> to vector<144x16xf32>
    %133 = vector.extract_strided_slice %106 {offsets = [0, 13, 0], sizes = [144, 1, 16], strides = [1, 1, 1]} : vector<144x16x16xf32> to vector<144x1x16xf32>
    %134 = vector.shape_cast %133 : vector<144x1x16xf32> to vector<144x16xf32>
    %135 = vector.extract_strided_slice %106 {offsets = [0, 14, 0], sizes = [144, 1, 16], strides = [1, 1, 1]} : vector<144x16x16xf32> to vector<144x1x16xf32>
    %136 = vector.shape_cast %135 : vector<144x1x16xf32> to vector<144x16xf32>
    %137 = vector.extract_strided_slice %106 {offsets = [0, 15, 0], sizes = [144, 1, 16], strides = [1, 1, 1]} : vector<144x16x16xf32> to vector<144x1x16xf32>
    %138 = vector.shape_cast %137 : vector<144x1x16xf32> to vector<144x16xf32>
    %139 = tpu.concatenate %108, %110, %112, %114, %116, %118, %120, %122, %124, %126, %128, %130, %132, %134, %136, %138 in 1 : vector<144x16xf32>, vector<144x16xf32>, vector<144x16xf32>, vector<144x16xf32>, vector<144x16xf32>, vector<144x16xf32>, vector<144x16xf32>, vector<144x16xf32>, vector<144x16xf32>, vector<144x16xf32>, vector<144x16xf32>, vector<144x16xf32>, vector<144x16xf32>, vector<144x16xf32>, vector<144x16xf32>, vector<144x16xf32> -> vector<144x256xf32>
    %c0_8 = arith.constant 0 : index
    %c0_9 = arith.constant 0 : index
    %140 = vector.load %arg4[%c0_8, %c0_9] : memref<8x144xf32, #tpu.memory_space<vmem>>, vector<8x144xf32>
    %cst_10 = arith.constant dense<0.000000e+00> : vector<8x256xf32>
    %141 = tpu.matmul %140, %139, %cst_10 {dimension_numbers = #tpu.dot_dimension_numbers<[1], [0], [0], [1], [0, 0, 1, 1], [], []>} : vector<8x144xf32>, vector<144x256xf32>, vector<8x256xf32> -> vector<8x256xf32>
    %c0_11 = arith.constant 0 : index
    %c0_12 = arith.constant 0 : index
    %142 = vector.load %arg5[%c0_11, %c0_12] : memref<8x1xf32, #tpu.memory_space<vmem>>, vector<8x1xf32>
    %143 = vector.broadcast %142 : vector<8x1xf32> to vector<8x256xf32>
    %144 = arith.addf %141, %143 : vector<8x256xf32>
    %cst_13 = arith.constant 0.000000e+00 : f32
    %145 = vector.broadcast %cst_13 : f32 to vector<8x256xf32>
    %146 = arith.maximumf %144, %145 : vector<8x256xf32>
    %c0_14 = arith.constant 0 : index
    %c0_15 = arith.constant 0 : index
    %c0_16 = arith.constant 0 : index
    %147 = vector.load %arg6[%c0_14, %c0_15, %c0_16] : memref<1x8x256xf32, #tpu.memory_space<vmem>>, vector<1x8x256xf32>
    %148 = vector.shape_cast %147 : vector<1x8x256xf32> to vector<8x256xf32>
    %149 = vector.shape_cast %146 : vector<8x256xf32> to vector<1x8x256xf32>
    tpu.vector_store %arg6[%c0_14, %c0_15, %c0_16], %149 {strides = array<i32>} : memref<1x8x256xf32, #tpu.memory_space<vmem>>, vector<1x8x256xf32>,
    return
  }
  func.func @transform_0(%arg0: i32) -> (i32, i32, i32, i32) {
    %c0_i32 = arith.constant 0 : i32
    %c0_i32_0 = arith.constant 0 : i32
    %c0_i32_1 = arith.constant 0 : i32
    %c0_i32_2 = arith.constant 0 : i32
    return %arg0, %c0_i32, %c0_i32_0, %c0_i32_1 : i32, i32, i32, i32
  }
  func.func @transform_1(%arg0: i32) -> (i32, i32) {
    %c0_i32 = arith.constant 0 : i32
    %c0_i32_0 = arith.constant 0 : i32
    %c0_i32_1 = arith.constant 0 : i32
    return %c0_i32, %c0_i32_0 : i32, i32
  }
  func.func @transform_2(%arg0: i32) -> (i32, i32) {
    %c0_i32 = arith.constant 0 : i32
    %c0_i32_0 = arith.constant 0 : i32
    %c0_i32_1 = arith.constant 0 : i32
    return %c0_i32, %c0_i32_0 : i32, i32
  }
  func.func @transform_3(%arg0: i32) -> (i32, i32) {
    %c0_i32 = arith.constant 0 : i32
    %c0_i32_0 = arith.constant 0 : i32
    %c0_i32_1 = arith.constant 0 : i32
    return %c0_i32, %c0_i32_0 : i32, i32
  }
  func.func @transform_4(%arg0: i32) -> (i32, i32) {
    %c0_i32 = arith.constant 0 : i32
    %c0_i32_0 = arith.constant 0 : i32
    %c0_i32_1 = arith.constant 0 : i32
    return %c0_i32, %c0_i32_0 : i32, i32
  }
  func.func @transform_5(%arg0: i32) -> (i32, i32, i32) {
    %c0_i32 = arith.constant 0 : i32
    %c0_i32_0 = arith.constant 0 : i32
    %c0_i32_1 = arith.constant 0 : i32
    return %arg0, %c0_i32, %c0_i32_0 : i32, i32, i32
  }
}

</mosaic_0001>

<llo_original>
// kernel: tpu_custom_call.1
$region0: #{tpu_custom_call.1}
  #allocation0 [shape = 'u32[]', space=smem, size = 0x4, offset = 0x4, fixed_abs, tag = 'smem constant byte address 0x4 - core index']
  #allocation1 [shape = 'u32[144,128]{1,0:T(1,128)}', space=vmem, size = 0x12000, scoped, tag = 'internal scratch']
  %s0 = inlined_call_operand.hbm [shape: f32[2,4,16,16], index: 0, kind: input, shape index: {}]
  %s1 = inlined_call_operand.vmem [shape: f32[16,36], index: 1, kind: input, shape index: {}]
  %s2 = inlined_call_operand.vmem [shape: f32[16,1], index: 2, kind: input, shape index: {}]
  %s3 = inlined_call_operand.vmem [shape: f32[8,144], index: 3, kind: input, shape index: {}]
  %s4 = inlined_call_operand.vmem [shape: f32[8,1], index: 4, kind: input, shape index: {}]
  %s5 = inlined_call_operand.hbm [shape: f32[2,8,256], index: 5, kind: output, shape index: {}]
  %s6 = sld [smem:[#allocation0]]
  $region57: #{tpu_custom_call.1} parent=0
    _
  %s8 = ssub.s32 1, %s6
  %s9 = scalar_select 0, %s8, %s6
  $region1: #{tpu_custom_call.1} parent=0
    #allocation2 [shape = 'u8[65536]{0}', space=vmem, size = 0x10000, scoped, tag = 'input window, operand 0']
    #allocation3 [shape = 's32[2]{0}', space=sflag, size = 0x8, scoped, tag = 'scoped memory for tpu_custom_call.1']
    #allocation4 [shape = 's32[2]{0}', space=sflag, size = 0x8, scoped, tag = 'scoped memory for tpu_custom_call.1']
    #allocation5 [shape = 'u8[16384]{0}', space=vmem, size = 0x4000, scoped, tag = 'output window, operand 0']
    %10 = vsyncpa [#allocation3], 0
    %s11 = scalar_lea.sflag [#allocation3], 1
    %12 = vsyncpa %s11, 0
    %13 = vsyncpa [#allocation4], 0
    %s14 = scalar_lea.sflag [#allocation4], 1
    %15 = vsyncpa %s14, 0
    loop: start=0, step=1, limit=4
    $region2: #{tpu_custom_call.1} parent=1 // loop_pre_header
      _
    $region3: #{tpu_custom_call.1} parent=1 // loop_header
      %s17 = sphi 0, %s21
      %p18 = scmp.ge.s32.totalorder %s17, 4
      %s27 = sphi 0, %s29
      %s30 = sphi 0, %s27
      %s31 = sphi 0, %s30
      %s47 = sphi 0, %s31
      %s51 = sphi 0, %s51
      %s53 = sphi 0, %s51
      %s54 = sphi 0, %s53
      %s68 = sphi 0, %s54
      %s72 = sphi 0, %s72
      %s74 = sphi 0, %s72
      %s75 = sphi 0, %s74
      %s89 = sphi 0, %s75
      %s93 = sphi 0, %s93
      %s95 = sphi 0, %s93
      %s96 = sphi 0, %s95
      %s110 = sphi 0, %s96
      %s114 = sphi 0, %s114
      %s116 = sphi 0, %s114
      %s117 = sphi 0, %s116
      %s131 = sphi 0, %s117
      %s137 = sphi 0, %s139
      %s140 = sphi 0, %s137
      %s141 = sphi 0, %s140
      %s157 = sphi 0, %s141
    $region4: #{tpu_custom_call.1} parent=1 // loop_header_branch
      %20 = sbr.rel (%p18) target = $region8
    $region5: #{tpu_custom_call.1} parent=1 // loop_body
      %s22 = ssub.s32 %s17, 1
      %s23 = ssub.s32 %s17, 2
      %s24 = sadd.s32 %s17, 1
      %s25 = ssub.s32 %s17, %s24
      %p26 = scmp.eq.s32.totalorder %s25, 0
      %s28 = sadd.s32 %s27, 1
      %s29 = scalar_select %p26, %s27, %s28
      %p32 = pneg %p26
      %p33 = scmp.eq.s32.totalorder %s17, 1
      %p34 = por %p32, %p33
      %p35 = scmp.ne.s32.totalorder %s27, %s30
      %p36 = scmp.eq.s32.totalorder %s17, 0
      %p37 = por %p35, %p36
      %p38 = scmp.ne.s32.totalorder %s27, %s30
      %p39 = scmp.eq.s32.totalorder %s22, 1
      %p40 = por %p38, %p39
      %p41 = scmp.ne.s32.totalorder %s30, %s31
      %p42 = scmp.eq.s32.totalorder %s22, 0
      %p43 = por %p41, %p42
      %p44 = scmp.ne.s32.totalorder %s30, %s31
      %p45 = scmp.eq.s32.totalorder %s23, 1
      %p46 = por %p44, %p45
      %p48 = scmp.ne.s32.totalorder %s31, %s47
      %p49 = scmp.eq.s32.totalorder %s23, 0
      %p50 = por %p48, %p49
      %s52 = sadd.s32 %s51, 1
      %p55 = scmp.eq.s32.totalorder %s17, 1
      %p56 = scmp.ne.s32.totalorder %s51, %s53
      %p57 = scmp.eq.s32.totalorder %s17, 0
      %p58 = por %p56, %p57
      %p59 = scmp.ne.s32.totalorder %s51, %s53
      %p60 = scmp.eq.s32.totalorder %s22, 1
      %p61 = por %p59, %p60
      %p62 = scmp.ne.s32.totalorder %s53, %s54
      %p63 = scmp.eq.s32.totalorder %s22, 0
      %p64 = por %p62, %p63
      %p65 = scmp.ne.s32.totalorder %s53, %s54
      %p66 = scmp.eq.s32.totalorder %s23, 1
      %p67 = por %p65, %p66
      %p69 = scmp.ne.s32.totalorder %s54, %s68
      %p70 = scmp.eq.s32.totalorder %s23, 0
      %p71 = por %p69, %p70
      %s73 = sadd.s32 %s72, 1
      %p76 = scmp.eq.s32.totalorder %s17, 1
      %p77 = scmp.ne.s32.totalorder %s72, %s74
      %p78 = scmp.eq.s32.totalorder %s17, 0
      %p79 = por %p77, %p78
      %p80 = scmp.ne.s32.totalorder %s72, %s74
      %p81 = scmp.eq.s32.totalorder %s22, 1
      %p82 = por %p80, %p81
      %p83 = scmp.ne.s32.totalorder %s74, %s75
      %p84 = scmp.eq.s32.totalorder %s22, 0
      %p85 = por %p83, %p84
      %p86 = scmp.ne.s32.totalorder %s74, %s75
      %p87 = scmp.eq.s32.totalorder %s23, 1
      %p88 = por %p86, %p87
      %p90 = scmp.ne.s32.totalorder %s75, %s89
      %p91 = scmp.eq.s32.totalorder %s23, 0
      %p92 = por %p90, %p91
      %s94 = sadd.s32 %s93, 1
      %p97 = scmp.eq.s32.totalorder %s17, 1
      %p98 = scmp.ne.s32.totalorder %s93, %s95
      %p99 = scmp.eq.s32.totalorder %s17, 0
      %p100 = por %p98, %p99
      %p101 = scmp.ne.s32.totalorder %s93, %s95
      %p102 = scmp.eq.s32.totalorder %s22, 1
      %p103 = por %p101, %p102
      %p104 = scmp.ne.s32.totalorder %s95, %s96
      %p105 = scmp.eq.s32.totalorder %s22, 0
      %p106 = por %p104, %p105
      %p107 = scmp.ne.s32.totalorder %s95, %s96
      %p108 = scmp.eq.s32.totalorder %s23, 1
      %p109 = por %p107, %p108
      %p111 = scmp.ne.s32.totalorder %s96, %s110
      %p112 = scmp.eq.s32.totalorder %s23, 0
      %p113 = por %p111, %p112
      %s115 = sadd.s32 %s114, 1
      %p118 = scmp.eq.s32.totalorder %s17, 1
      %p119 = scmp.ne.s32.totalorder %s114, %s116
      %p120 = scmp.eq.s32.totalorder %s17, 0
      %p121 = por %p119, %p120
      %p122 = scmp.ne.s32.totalorder %s114, %s116
      %p123 = scmp.eq.s32.totalorder %s22, 1
      %p124 = por %p122, %p123
      %p125 = scmp.ne.s32.totalorder %s116, %s117
      %p126 = scmp.eq.s32.totalorder %s22, 0
      %p127 = por %p125, %p126
      %p128 = scmp.ne.s32.totalorder %s116, %s117
      %p129 = scmp.eq.s32.totalorder %s23, 1
      %p130 = por %p128, %p129
      %p132 = scmp.ne.s32.totalorder %s117, %s131
      %p133 = scmp.eq.s32.totalorder %s23, 0
      %p134 = por %p132, %p133
      %s135 = ssub.s32 %s17, %s24
      %p136 = scmp.eq.s32.totalorder %s135, 0
      %s138 = sadd.s32 %s137, 1
      %s139 = scalar_select %p136, %s137, %s138
      %p142 = pneg %p136
      %p143 = scmp.eq.s32.totalorder %s17, 1
      %p144 = por %p142, %p143
      %p145 = scmp.ne.s32.totalorder %s137, %s140
      %p146 = scmp.eq.s32.totalorder %s17, 0
      %p147 = por %p145, %p146
      %p148 = scmp.ne.s32.totalorder %s137, %s140
      %p149 = scmp.eq.s32.totalorder %s22, 1
      %p150 = por %p148, %p149
      %p151 = scmp.ne.s32.totalorder %s140, %s141
      %p152 = scmp.eq.s32.totalorder %s22, 0
      %p153 = por %p151, %p152
      %p154 = scmp.ne.s32.totalorder %s140, %s141
      %p155 = scmp.eq.s32.totalorder %s23, 1
      %p156 = por %p154, %p155
      %p158 = scmp.ne.s32.totalorder %s141, %s157
      %p159 = scmp.eq.s32.totalorder %s23, 0
      %p160 = por %p158, %p159
      %p161 = scmp.le.s32.totalorder 1, %s17
      %p162 = scmp.lt.s32.totalorder %s17, 3
      %p163 = pnand %p161, %p162
      %p164 = pneg %p163
      // Predicated region
      $region9: #{tpu_custom_call.1} parent=5 // pred_check
        _
      $region10: #{tpu_custom_call.1} parent=5 // pred_check_branch
        %166 = sbr.rel (%p163) target = $region12
      $region11: #{tpu_custom_call.1} parent=5 // pred_region
        %s167 = ssub.s32 %s17, 1
        // Predicated region
        $region13: #{tpu_custom_call.1} parent=11 // pred_check
          %p168 = pneg %p64
        $region14: #{tpu_custom_call.1} parent=11 // pred_check_branch
          %170 = sbr.rel (%p168) target = $region16
        $region15: #{tpu_custom_call.1} parent=11 // pred_region
          _
        $region16: #{tpu_custom_call.1} parent=11 // pred_fallthru
          _
        // Predicated region
        $region17: #{tpu_custom_call.1} parent=11 // pred_check
          %p171 = pneg %p85
        $region18: #{tpu_custom_call.1} parent=11 // pred_check_branch
          %173 = sbr.rel (%p171) target = $region20
        $region19: #{tpu_custom_call.1} parent=11 // pred_region
          _
        $region20: #{tpu_custom_call.1} parent=11 // pred_fallthru
          _
        // Predicated region
        $region21: #{tpu_custom_call.1} parent=11 // pred_check
          %p174 = pneg %p106
        $region22: #{tpu_custom_call.1} parent=11 // pred_check_branch
          %176 = sbr.rel (%p174) target = $region24
        $region23: #{tpu_custom_call.1} parent=11 // pred_region
          _
        $region24: #{tpu_custom_call.1} parent=11 // pred_fallthru
          _
        // Predicated region
        $region25: #{tpu_custom_call.1} parent=11 // pred_check
          %p177 = pneg %p127
        $region26: #{tpu_custom_call.1} parent=11 // pred_check_branch
          %179 = sbr.rel (%p177) target = $region28
        $region27: #{tpu_custom_call.1} parent=11 // pred_region
          _
        $region28: #{tpu_custom_call.1} parent=11 // pred_fallthru
          _
      $region12: #{tpu_custom_call.1} parent=5 // pred_fallthru
        _
      %p180 = scmp.lt.s32.totalorder %s17, 2
      // Predicated region
      $region29: #{tpu_custom_call.1} parent=5 // pred_check
        %p181 = pneg %p180
      $region30: #{tpu_custom_call.1} parent=5 // pred_check_branch
        %183 = sbr.rel (%p181) target = $region32
      $region31: #{tpu_custom_call.1} parent=5 // pred_region
        // Predicated region
        $region33: #{tpu_custom_call.1} parent=31 // pred_check
          %p184 = pneg %p37
        $region34: #{tpu_custom_call.1} parent=31 // pred_check_branch
          %186 = sbr.rel (%p184) target = $region36
        $region35: #{tpu_custom_call.1} parent=31 // pred_region
          %s187 = sand.u32 %s27, 1
          %s188 = scalar_lea.sflag [#allocation3], %s187
          %s189 = sand.u32 %s27, 1
          %s190 = smul.addr %s189, 64
          %s191 = scalar_lea.vmem [#allocation2], %s190
          %s193 = ssub.s32 1024, 1024
          %194 = vsyncadd %s188, %s193
          %s195 = smul.addr %s17, 8
          %s196 = smul.addr %s195, 128
          %s197 = scalar_lea.hbm %s0, %s196
          %s198 = sshll.u32 %s191, 4
          %s199 = int_to_ptr.vmem [resolvable:$true] %s198
          %204 = dma.hbm_to_vmem [thread:$0]  %s197, 1024, %s199, %s188, 128, 128, 8
        $region36: #{tpu_custom_call.1} parent=31 // pred_fallthru
          _
      $region32: #{tpu_custom_call.1} parent=5 // pred_fallthru
        _
      %p205 = scmp.le.s32.totalorder 1, %s17
      %p206 = scmp.lt.s32.totalorder %s17, 3
      %p207 = pnand %p205, %p206
      %p208 = pneg %p207
      // Predicated region
      $region37: #{tpu_custom_call.1} parent=5 // pred_check
        _
      $region38: #{tpu_custom_call.1} parent=5 // pred_check_branch
        %210 = sbr.rel (%p207) target = $region40
      $region39: #{tpu_custom_call.1} parent=5 // pred_region
        %s211 = ssub.s32 %s17, 1
        %s212 = sand.u32 %s30, 1
        %s213 = scalar_lea.sflag [#allocation3], %s212
        %s214 = sand.u32 %s30, 1
        %s215 = smul.addr %s214, 64
        %s216 = scalar_lea.vmem [#allocation2], %s215
        // Predicated region
        $region41: #{tpu_custom_call.1} parent=39 // pred_check
          %p217 = pneg %p43
        $region42: #{tpu_custom_call.1} parent=39 // pred_check_branch
          %219 = sbr.rel (%p217) target = $region44
        $region43: #{tpu_custom_call.1} parent=39 // pred_region
          %220 = dma.done %s213, 1024
        $region44: #{tpu_custom_call.1} parent=39 // pred_fallthru
          _
        %s221 = sand.u32 %s30, 1
        %s222 = scalar_lea.sflag [#allocation3], %s221
        %s223 = sand.u32 %s30, 1
        %s224 = smul.addr %s223, 64
        %s225 = scalar_lea.vmem [#allocation2], %s224
        %p226 = pneg %p43
        %p227 = pneg %p40
        %p228 = pneg %p64
        %p229 = pneg %p61
        %p230 = pneg %p85
        %p231 = pneg %p82
        %p232 = pneg %p106
        %p233 = pneg %p103
        %p234 = pneg %p127
        %p235 = pneg %p124
        %p236 = pneg %p153
        %p237 = pneg %p150
        %s238 = sand.u32 %s140, 1
        %s239 = scalar_lea.sflag [#allocation4], %s238
        %s240 = sand.u32 %s140, 1
        %s241 = smul.addr %s240, 16
        %s242 = scalar_lea.vmem [#allocation5], %s241
        %v243 = vld [vmem:[%s216] sm:$0xff]
        %v244 = vld [vmem:[%s216 + $0x8] sm:$0xff]
        %v245 = vld [vmem:[%s216 + $0x10] sm:$0xff]
        %v246 = vld [vmem:[%s216 + $0x18] sm:$0xff]
        %v247 = vld [vmem:[%s216 + $0x20] sm:$0xff]
        %v248 = vld [vmem:[%s216 + $0x28] sm:$0xff]
        %v249 = vld [vmem:[%s216 + $0x30] sm:$0xff]
        %v250 = vld [vmem:[%s216 + $0x38] sm:$0xff]
        %v255 = vrot.slane %v243, 1
        %v256 = vrot.slane %v245, 1
        %v257 = vrot.slane %v247, 1
        %v258 = vrot.slane %v249, 1
        %vm267 = vcmask 1040384
        %v268 = vrot.slane %v243, 7
        %v269 = vrot.slane %v244, 7
        %v270 = vsel %vm267, %v268, %v269
        %v271 = vrot.slane %v245, 7
        %v272 = vrot.slane %v246, 7
        %v273 = vsel %vm267, %v271, %v272
        %v274 = vrot.slane %v247, 7
        %v275 = vrot.slane %v248, 7
        %v276 = vsel %vm267, %v274, %v275
        %v277 = vrot.slane %v249, 7
        %v278 = vrot.slane %v250, 7
        %v279 = vsel %vm267, %v277, %v278
        %v288 = vrot.slane %v244, 5
        %v289 = vrot.slane %v246, 5
        %v290 = vrot.slane %v248, 5
        %v291 = vrot.slane %v250, 5
        %v296 = vsel %vm267, %v255, %v268
        %v297 = vsel %vm267, %v256, %v271
        %v298 = vsel %vm267, %v257, %v274
        %v299 = vsel %vm267, %v258, %v277
        %v300 = vsel %vm267, %v269, %v288
        %v301 = vsel %vm267, %v272, %v289
        %v302 = vsel %vm267, %v275, %v290
        %v303 = vsel %vm267, %v278, %v291
        %312 = vrot.lane.b32.xlu0 %v296, 127
        %v313 = vpop.permute.xlu0 %312
        %314 = vrot.lane.b32.xlu0 %v270, 127
        %v315 = vpop.permute.xlu0 %314
        %316 = vrot.lane.b32.xlu0 %v300, 127
        %v317 = vpop.permute.xlu0 %316
        %318 = vrot.lane.b32.xlu0 %v297, 127
        %v319 = vpop.permute.xlu0 %318
        %320 = vrot.lane.b32.xlu0 %v273, 127
        %v321 = vpop.permute.xlu0 %320
        %322 = vrot.lane.b32.xlu0 %v301, 127
        %v323 = vpop.permute.xlu0 %322
        %324 = vrot.lane.b32.xlu0 %v298, 127
        %v325 = vpop.permute.xlu0 %324
        %326 = vrot.lane.b32.xlu0 %v276, 127
        %v327 = vpop.permute.xlu0 %326
        %328 = vrot.lane.b32.xlu0 %v302, 127
        %v329 = vpop.permute.xlu0 %328
        %330 = vrot.lane.b32.xlu0 %v299, 127
        %v331 = vpop.permute.xlu0 %330
        %332 = vrot.lane.b32.xlu0 %v279, 127
        %v333 = vpop.permute.xlu0 %332
        %334 = vrot.lane.b32.xlu0 %v303, 127
        %v335 = vpop.permute.xlu0 %334
        %348 = vrot.lane.b32.xlu0 %v296, 1
        %v349 = vpop.permute.xlu0 %348
        %350 = vrot.lane.b32.xlu0 %v270, 1
        %v351 = vpop.permute.xlu0 %350
        %352 = vrot.lane.b32.xlu0 %v300, 1
        %v353 = vpop.permute.xlu0 %352
        %354 = vrot.lane.b32.xlu0 %v297, 1
        %v355 = vpop.permute.xlu0 %354
        %356 = vrot.lane.b32.xlu0 %v273, 1
        %v357 = vpop.permute.xlu0 %356
        %358 = vrot.lane.b32.xlu0 %v301, 1
        %v359 = vpop.permute.xlu0 %358
        %360 = vrot.lane.b32.xlu0 %v298, 1
        %v361 = vpop.permute.xlu0 %360
        %362 = vrot.lane.b32.xlu0 %v276, 1
        %v363 = vpop.permute.xlu0 %362
        %364 = vrot.lane.b32.xlu0 %v302, 1
        %v365 = vpop.permute.xlu0 %364
        %366 = vrot.lane.b32.xlu0 %v299, 1
        %v367 = vpop.permute.xlu0 %366
        %368 = vrot.lane.b32.xlu0 %v279, 1
        %v369 = vpop.permute.xlu0 %368
        %370 = vrot.lane.b32.xlu0 %v303, 1
        %v371 = vpop.permute.xlu0 %370
        %384 = vrot.lane.b32.xlu0 %v296, 3
        %v385 = vpop.permute.xlu0 %384
        %386 = vrot.lane.b32.xlu0 %v270, 3
        %v387 = vpop.permute.xlu0 %386
        %388 = vrot.lane.b32.xlu0 %v300, 3
        %v389 = vpop.permute.xlu0 %388
        %390 = vrot.lane.b32.xlu0 %v297, 3
        %v391 = vpop.permute.xlu0 %390
        %392 = vrot.lane.b32.xlu0 %v273, 3
        %v393 = vpop.permute.xlu0 %392
        %394 = vrot.lane.b32.xlu0 %v301, 3
        %v395 = vpop.permute.xlu0 %394
        %396 = vrot.lane.b32.xlu0 %v298, 3
        %v397 = vpop.permute.xlu0 %396
        %398 = vrot.lane.b32.xlu0 %v276, 3
        %v399 = vpop.permute.xlu0 %398
        %400 = vrot.lane.b32.xlu0 %v302, 3
        %v401 = vpop.permute.xlu0 %400
        %402 = vrot.lane.b32.xlu0 %v299, 3
        %v403 = vpop.permute.xlu0 %402
        %404 = vrot.lane.b32.xlu0 %v279, 3
        %v405 = vpop.permute.xlu0 %404
        %406 = vrot.lane.b32.xlu0 %v303, 3
        %v407 = vpop.permute.xlu0 %406
        %vm420 = vcmask 7168
        %v421 = vsel %vm420, %v313, %v349
        %v422 = vsel %vm420, %v315, %v351
        %v423 = vsel %vm420, %v317, %v353
        %v424 = vsel %vm420, %v319, %v355
        %v425 = vsel %vm420, %v321, %v357
        %v426 = vsel %vm420, %v323, %v359
        %v427 = vsel %vm420, %v325, %v361
        %v428 = vsel %vm420, %v327, %v363
        %v429 = vsel %vm420, %v329, %v365
        %v430 = vsel %vm420, %v331, %v367
        %v431 = vsel %vm420, %v333, %v369
        %v432 = vsel %vm420, %v335, %v371
        %vm433 = vcmask 138240
        %v434 = vsel %vm433, %v421, %v385
        %v435 = vsel %vm433, %v422, %v387
        %v436 = vsel %vm433, %v423, %v389
        %v437 = vsel %vm433, %v424, %v391
        %v438 = vsel %vm433, %v425, %v393
        %v439 = vsel %vm433, %v426, %v395
        %v440 = vsel %vm433, %v427, %v397
        %v441 = vsel %vm433, %v428, %v399
        %v442 = vsel %vm433, %v429, %v401
        %v443 = vsel %vm433, %v430, %v403
        %v444 = vsel %vm433, %v431, %v405
        %v445 = vsel %vm433, %v432, %v407
        %454 = vrot.lane.b32.xlu0 %v434, 127
        %v455 = vpop.permute.xlu0 %454
        %456 = vrot.lane.b32.xlu0 %v435, 127
        %v457 = vpop.permute.xlu0 %456
        %458 = vrot.lane.b32.xlu0 %v437, 127
        %v459 = vpop.permute.xlu0 %458
        %460 = vrot.lane.b32.xlu0 %v438, 127
        %v461 = vpop.permute.xlu0 %460
        %462 = vrot.lane.b32.xlu0 %v440, 127
        %v463 = vpop.permute.xlu0 %462
        %464 = vrot.lane.b32.xlu0 %v441, 127
        %v465 = vpop.permute.xlu0 %464
        %466 = vrot.lane.b32.xlu0 %v443, 127
        %v467 = vpop.permute.xlu0 %466
        %468 = vrot.lane.b32.xlu0 %v444, 127
        %v469 = vpop.permute.xlu0 %468
        %470 = vrot.lane.b32.xlu0 %v434, 126
        %v471 = vpop.permute.xlu0 %470
        %472 = vrot.lane.b32.xlu0 %v435, 126
        %v473 = vpop.permute.xlu0 %472
        %474 = vrot.lane.b32.xlu0 %v437, 126
        %v475 = vpop.permute.xlu0 %474
        %476 = vrot.lane.b32.xlu0 %v438, 126
        %v477 = vpop.permute.xlu0 %476
        %478 = vrot.lane.b32.xlu0 %v440, 126
        %v479 = vpop.permute.xlu0 %478
        %480 = vrot.lane.b32.xlu0 %v441, 126
        %v481 = vpop.permute.xlu0 %480
        %482 = vrot.lane.b32.xlu0 %v443, 126
        %v483 = vpop.permute.xlu0 %482
        %484 = vrot.lane.b32.xlu0 %v444, 126
        %v485 = vpop.permute.xlu0 %484
        %vm490 = vcmask 1046528
        %v491 = vrot.slane %v434, 1
        %v492 = vrot.slane %v435, 1
        %v493 = vsel %vm490, %v491, %v492
        %v494 = vrot.slane %v436, 1
        %v495 = vsel %vm490, %v492, %v494
        %v496 = vrot.slane %v437, 1
        %v497 = vrot.slane %v438, 1
        %v498 = vsel %vm490, %v496, %v497
        %v499 = vrot.slane %v439, 1
        %v500 = vsel %vm490, %v497, %v499
        %v501 = vrot.slane %v440, 1
        %v502 = vrot.slane %v441, 1
        %v503 = vsel %vm490, %v501, %v502
        %v504 = vrot.slane %v442, 1
        %v505 = vsel %vm490, %v502, %v504
        %v506 = vrot.slane %v443, 1
        %v507 = vrot.slane %v444, 1
        %v508 = vsel %vm490, %v506, %v507
        %v509 = vrot.slane %v445, 1
        %v510 = vsel %vm490, %v507, %v509
        %511 = vrot.lane.b32.xlu0 %v493, 127
        %v512 = vpop.permute.xlu0 %511
        %513 = vrot.lane.b32.xlu0 %v495, 127
        %v514 = vpop.permute.xlu0 %513
        %515 = vrot.lane.b32.xlu0 %v498, 127
        %v516 = vpop.permute.xlu0 %515
        %517 = vrot.lane.b32.xlu0 %v500, 127
        %v518 = vpop.permute.xlu0 %517
        %519 = vrot.lane.b32.xlu0 %v503, 127
        %v520 = vpop.permute.xlu0 %519
        %521 = vrot.lane.b32.xlu0 %v505, 127
        %v522 = vpop.permute.xlu0 %521
        %523 = vrot.lane.b32.xlu0 %v508, 127
        %v524 = vpop.permute.xlu0 %523
        %525 = vrot.lane.b32.xlu0 %v510, 127
        %v526 = vpop.permute.xlu0 %525
        %527 = vrot.lane.b32.xlu0 %v493, 126
        %v528 = vpop.permute.xlu0 %527
        %529 = vrot.lane.b32.xlu0 %v495, 126
        %v530 = vpop.permute.xlu0 %529
        %531 = vrot.lane.b32.xlu0 %v498, 126
        %v532 = vpop.permute.xlu0 %531
        %533 = vrot.lane.b32.xlu0 %v500, 126
        %v534 = vpop.permute.xlu0 %533
        %535 = vrot.lane.b32.xlu0 %v503, 126
        %v536 = vpop.permute.xlu0 %535
        %537 = vrot.lane.b32.xlu0 %v505, 126
        %v538 = vpop.permute.xlu0 %537
        %539 = vrot.lane.b32.xlu0 %v508, 126
        %v540 = vpop.permute.xlu0 %539
        %541 = vrot.lane.b32.xlu0 %v510, 126
        %v542 = vpop.permute.xlu0 %541
        %vm543 = vcmask 1045504
        %v544 = vrot.slane %v434, 2
        %v545 = vrot.slane %v435, 2
        %v546 = vsel %vm543, %v544, %v545
        %v547 = vrot.slane %v436, 2
        %v548 = vsel %vm543, %v545, %v547
        %v549 = vrot.slane %v437, 2
        %v550 = vrot.slane %v438, 2
        %v551 = vsel %vm543, %v549, %v550
        %v552 = vrot.slane %v439, 2
        %v553 = vsel %vm543, %v550, %v552
        %v554 = vrot.slane %v440, 2
        %v555 = vrot.slane %v441, 2
        %v556 = vsel %vm543, %v554, %v555
        %v557 = vrot.slane %v442, 2
        %v558 = vsel %vm543, %v555, %v557
        %v559 = vrot.slane %v443, 2
        %v560 = vrot.slane %v444, 2
        %v561 = vsel %vm543, %v559, %v560
        %v562 = vrot.slane %v445, 2
        %v563 = vsel %vm543, %v560, %v562
        %564 = vrot.lane.b32.xlu0 %v546, 127
        %v565 = vpop.permute.xlu0 %564
        %566 = vrot.lane.b32.xlu0 %v548, 127
        %v567 = vpop.permute.xlu0 %566
        %568 = vrot.lane.b32.xlu0 %v551, 127
        %v569 = vpop.permute.xlu0 %568
        %570 = vrot.lane.b32.xlu0 %v553, 127
        %v571 = vpop.permute.xlu0 %570
        %572 = vrot.lane.b32.xlu0 %v556, 127
        %v573 = vpop.permute.xlu0 %572
        %574 = vrot.lane.b32.xlu0 %v558, 127
        %v575 = vpop.permute.xlu0 %574
        %576 = vrot.lane.b32.xlu0 %v561, 127
        %v577 = vpop.permute.xlu0 %576
        %578 = vrot.lane.b32.xlu0 %v563, 127
        %v579 = vpop.permute.xlu0 %578
        %580 = vrot.lane.b32.xlu0 %v546, 126
        %v581 = vpop.permute.xlu0 %580
        %582 = vrot.lane.b32.xlu0 %v548, 126
        %v583 = vpop.permute.xlu0 %582
        %584 = vrot.lane.b32.xlu0 %v551, 126
        %v585 = vpop.permute.xlu0 %584
        %586 = vrot.lane.b32.xlu0 %v553, 126
        %v587 = vpop.permute.xlu0 %586
        %588 = vrot.lane.b32.xlu0 %v556, 126
        %v589 = vpop.permute.xlu0 %588
        %590 = vrot.lane.b32.xlu0 %v558, 126
        %v591 = vpop.permute.xlu0 %590
        %592 = vrot.lane.b32.xlu0 %v561, 126
        %v593 = vpop.permute.xlu0 %592
        %594 = vrot.lane.b32.xlu0 %v563, 126
        %v595 = vpop.permute.xlu0 %594
        %v596 = vrot.slane %v437, 7
        %vm597 = vcmask 1041409
        %v598 = vsel %vm597, %v596, %v434
        %v599 = vrot.slane %v440, 6
        %vm600 = vcmask 1042434
        %v601 = vsel %vm600, %v599, %v598
        %v602 = vrot.slane %v443, 5
        %vm603 = vcmask 1043459
        %v604 = vsel %vm603, %v602, %v601
        %v605 = vrot.slane %v455, 4
        %vm606 = vcmask 1044484
        %v607 = vsel %vm606, %v605, %v604
        %v608 = vrot.slane %v459, 3
        %vm609 = vcmask 1045509
        %v610 = vsel %vm609, %v608, %v607
        %v611 = vrot.slane %v463, 2
        %vm612 = vcmask 1046534
        %v613 = vsel %vm612, %v611, %v610
        %v614 = vrot.slane %v467, 1
        %vm615 = vcmask 1047559
        %v616 = vsel %vm615, %v614, %v613
        %v617 = vrot.slane %v475, 7
        %v618 = vsel %vm597, %v617, %v471
        %v619 = vrot.slane %v479, 6
        %v620 = vsel %vm600, %v619, %v618
        %v621 = vrot.slane %v483, 5
        %v622 = vsel %vm603, %v621, %v620
        %v623 = vrot.slane %v493, 4
        %v624 = vsel %vm606, %v623, %v622
        %v625 = vrot.slane %v498, 3
        %v626 = vsel %vm609, %v625, %v624
        %v627 = vrot.slane %v503, 2
        %v628 = vsel %vm612, %v627, %v626
        %v629 = vrot.slane %v508, 1
        %v630 = vsel %vm615, %v629, %v628
        %v631 = vrot.slane %v516, 7
        %v632 = vsel %vm597, %v631, %v512
        %v633 = vrot.slane %v520, 6
        %v634 = vsel %vm600, %v633, %v632
        %v635 = vrot.slane %v524, 5
        %v636 = vsel %vm603, %v635, %v634
        %v637 = vrot.slane %v528, 4
        %v638 = vsel %vm606, %v637, %v636
        %v639 = vrot.slane %v532, 3
        %v640 = vsel %vm609, %v639, %v638
        %v641 = vrot.slane %v536, 2
        %v642 = vsel %vm612, %v641, %v640
        %v643 = vrot.slane %v540, 1
        %v644 = vsel %vm615, %v643, %v642
        %v645 = vrot.slane %v551, 7
        %v646 = vsel %vm597, %v645, %v546
        %v647 = vrot.slane %v556, 6
        %v648 = vsel %vm600, %v647, %v646
        %v649 = vrot.slane %v561, 5
        %v650 = vsel %vm603, %v649, %v648
        %v651 = vrot.slane %v565, 4
        %v652 = vsel %vm606, %v651, %v650
        %v653 = vrot.slane %v569, 3
        %v654 = vsel %vm609, %v653, %v652
        %v655 = vrot.slane %v573, 2
        %v656 = vsel %vm612, %v655, %v654
        %v657 = vrot.slane %v577, 1
        %v658 = vsel %vm615, %v657, %v656
        %v659 = vrot.slane %v585, 7
        %v660 = vsel %vm597, %v659, %v581
        %v661 = vrot.slane %v589, 6
        %v662 = vsel %vm600, %v661, %v660
        %v663 = vrot.slane %v593, 5
        %v664 = vsel %vm603, %v663, %v662
        %v670 = vsel %vm597, %v437, %v491
        %v671 = vrot.slane %v440, 7
        %v672 = vsel %vm600, %v671, %v670
        %v673 = vrot.slane %v443, 6
        %v674 = vsel %vm603, %v673, %v672
        %v675 = vrot.slane %v455, 5
        %v676 = vsel %vm606, %v675, %v674
        %v677 = vrot.slane %v459, 4
        %v678 = vsel %vm609, %v677, %v676
        %v679 = vrot.slane %v463, 3
        %v680 = vsel %vm612, %v679, %v678
        %v681 = vrot.slane %v467, 2
        %v682 = vsel %vm615, %v681, %v680
        %v683 = vrot.slane %v471, 1
        %v684 = vsel %vm597, %v475, %v683
        %v685 = vrot.slane %v479, 7
        %v686 = vsel %vm600, %v685, %v684
        %v687 = vrot.slane %v483, 6
        %v688 = vsel %vm603, %v687, %v686
        %v689 = vrot.slane %v493, 5
        %v690 = vsel %vm606, %v689, %v688
        %v691 = vrot.slane %v498, 4
        %v692 = vsel %vm609, %v691, %v690
        %v693 = vrot.slane %v503, 3
        %v694 = vsel %vm612, %v693, %v692
        %v695 = vrot.slane %v508, 2
        %v696 = vsel %vm615, %v695, %v694
        %v697 = vrot.slane %v512, 1
        %v698 = vsel %vm597, %v516, %v697
        %v699 = vrot.slane %v520, 7
        %v700 = vsel %vm600, %v699, %v698
        %v701 = vrot.slane %v524, 6
        %v702 = vsel %vm603, %v701, %v700
        %v703 = vrot.slane %v528, 5
        %v704 = vsel %vm606, %v703, %v702
        %v705 = vrot.slane %v532, 4
        %v706 = vsel %vm609, %v705, %v704
        %v707 = vrot.slane %v536, 3
        %v708 = vsel %vm612, %v707, %v706
        %v709 = vrot.slane %v540, 2
        %v710 = vsel %vm615, %v709, %v708
        %v711 = vrot.slane %v546, 1
        %v712 = vsel %vm597, %v551, %v711
        %v713 = vrot.slane %v556, 7
        %v714 = vsel %vm600, %v713, %v712
        %v715 = vrot.slane %v561, 6
        %v716 = vsel %vm603, %v715, %v714
        %v717 = vrot.slane %v565, 5
        %v718 = vsel %vm606, %v717, %v716
        %v719 = vrot.slane %v569, 4
        %v720 = vsel %vm609, %v719, %v718
        %v721 = vrot.slane %v573, 3
        %v722 = vsel %vm612, %v721, %v720
        %v723 = vrot.slane %v577, 2
        %v724 = vsel %vm615, %v723, %v722
        %v725 = vrot.slane %v581, 1
        %v726 = vsel %vm597, %v585, %v725
        %v727 = vrot.slane %v589, 7
        %v728 = vsel %vm600, %v727, %v726
        %v729 = vrot.slane %v593, 6
        %v730 = vsel %vm603, %v729, %v728
        %731 = vrot.lane.b32.xlu0 %v682, 16
        %v732 = vpop.permute.xlu0 %731
        %733 = vrot.lane.b32.xlu0 %v696, 16
        %v734 = vpop.permute.xlu0 %733
        %735 = vrot.lane.b32.xlu0 %v710, 16
        %v736 = vpop.permute.xlu0 %735
        %737 = vrot.lane.b32.xlu0 %v724, 16
        %v738 = vpop.permute.xlu0 %737
        %739 = vrot.lane.b32.xlu0 %v730, 16
        %v740 = vpop.permute.xlu0 %739
        %v746 = vsel %vm597, %v496, %v544
        %v747 = vsel %vm600, %v440, %v746
        %v748 = vrot.slane %v443, 7
        %v749 = vsel %vm603, %v748, %v747
        %v750 = vrot.slane %v455, 6
        %v751 = vsel %vm606, %v750, %v749
        %v752 = vrot.slane %v459, 5
        %v753 = vsel %vm609, %v752, %v751
        %v754 = vrot.slane %v463, 4
        %v755 = vsel %vm612, %v754, %v753
        %v756 = vrot.slane %v467, 3
        %v757 = vsel %vm615, %v756, %v755
        %v758 = vrot.slane %v471, 2
        %v759 = vrot.slane %v475, 1
        %v760 = vsel %vm597, %v759, %v758
        %v761 = vsel %vm600, %v479, %v760
        %v762 = vrot.slane %v483, 7
        %v763 = vsel %vm603, %v762, %v761
        %v764 = vrot.slane %v493, 6
        %v765 = vsel %vm606, %v764, %v763
        %v766 = vrot.slane %v498, 5
        %v767 = vsel %vm609, %v766, %v765
        %v768 = vrot.slane %v503, 4
        %v769 = vsel %vm612, %v768, %v767
        %v770 = vrot.slane %v508, 3
        %v771 = vsel %vm615, %v770, %v769
        %v772 = vrot.slane %v512, 2
        %v773 = vrot.slane %v516, 1
        %v774 = vsel %vm597, %v773, %v772
        %v775 = vsel %vm600, %v520, %v774
        %v776 = vrot.slane %v524, 7
        %v777 = vsel %vm603, %v776, %v775
        %v778 = vrot.slane %v528, 6
        %v779 = vsel %vm606, %v778, %v777
        %v780 = vrot.slane %v532, 5
        %v781 = vsel %vm609, %v780, %v779
        %v782 = vrot.slane %v536, 4
        %v783 = vsel %vm612, %v782, %v781
        %v784 = vrot.slane %v540, 3
        %v785 = vsel %vm615, %v784, %v783
        %v786 = vrot.slane %v546, 2
        %v787 = vrot.slane %v551, 1
        %v788 = vsel %vm597, %v787, %v786
        %v789 = vsel %vm600, %v556, %v788
        %v790 = vrot.slane %v561, 7
        %v791 = vsel %vm603, %v790, %v789
        %v792 = vrot.slane %v565, 6
        %v793 = vsel %vm606, %v792, %v791
        %v794 = vrot.slane %v569, 5
        %v795 = vsel %vm609, %v794, %v793
        %v796 = vrot.slane %v573, 4
        %v797 = vsel %vm612, %v796, %v795
        %v798 = vrot.slane %v577, 3
        %v799 = vsel %vm615, %v798, %v797
        %v800 = vrot.slane %v581, 2
        %v801 = vrot.slane %v585, 1
        %v802 = vsel %vm597, %v801, %v800
        %v803 = vsel %vm600, %v589, %v802
        %v804 = vrot.slane %v593, 7
        %v805 = vsel %vm603, %v804, %v803
        %806 = vrot.lane.b32.xlu0 %v757, 32
        %v807 = vpop.permute.xlu0 %806
        %808 = vrot.lane.b32.xlu0 %v771, 32
        %v809 = vpop.permute.xlu0 %808
        %810 = vrot.lane.b32.xlu0 %v785, 32
        %v811 = vpop.permute.xlu0 %810
        %812 = vrot.lane.b32.xlu0 %v799, 32
        %v813 = vpop.permute.xlu0 %812
        %814 = vrot.lane.b32.xlu0 %v805, 32
        %v815 = vpop.permute.xlu0 %814
        %v821 = vrot.slane %v434, 3
        %v822 = vsel %vm597, %v549, %v821
        %v823 = vsel %vm600, %v501, %v822
        %v824 = vsel %vm603, %v443, %v823
        %v825 = vrot.slane %v455, 7
        %v826 = vsel %vm606, %v825, %v824
        %v827 = vrot.slane %v459, 6
        %v828 = vsel %vm609, %v827, %v826
        %v829 = vrot.slane %v463, 5
        %v830 = vsel %vm612, %v829, %v828
        %v831 = vrot.slane %v467, 4
        %v832 = vsel %vm615, %v831, %v830
        %v833 = vrot.slane %v471, 3
        %v834 = vrot.slane %v475, 2
        %v835 = vsel %vm597, %v834, %v833
        %v836 = vrot.slane %v479, 1
        %v837 = vsel %vm600, %v836, %v835
        %v838 = vsel %vm603, %v483, %v837
        %v839 = vrot.slane %v493, 7
        %v840 = vsel %vm606, %v839, %v838
        %v841 = vrot.slane %v498, 6
        %v842 = vsel %vm609, %v841, %v840
        %v843 = vrot.slane %v503, 5
        %v844 = vsel %vm612, %v843, %v842
        %v845 = vrot.slane %v508, 4
        %v846 = vsel %vm615, %v845, %v844
        %v847 = vrot.slane %v512, 3
        %v848 = vrot.slane %v516, 2
        %v849 = vsel %vm597, %v848, %v847
        %v850 = vrot.slane %v520, 1
        %v851 = vsel %vm600, %v850, %v849
        %v852 = vsel %vm603, %v524, %v851
        %v853 = vrot.slane %v528, 7
        %v854 = vsel %vm606, %v853, %v852
        %v855 = vrot.slane %v532, 6
        %v856 = vsel %vm609, %v855, %v854
        %v857 = vrot.slane %v536, 5
        %v858 = vsel %vm612, %v857, %v856
        %v859 = vrot.slane %v540, 4
        %v860 = vsel %vm615, %v859, %v858
        %v861 = vrot.slane %v546, 3
        %v862 = vrot.slane %v551, 2
        %v863 = vsel %vm597, %v862, %v861
        %v864 = vrot.slane %v556, 1
        %v865 = vsel %vm600, %v864, %v863
        %v866 = vsel %vm603, %v561, %v865
        %v867 = vrot.slane %v565, 7
        %v868 = vsel %vm606, %v867, %v866
        %v869 = vrot.slane %v569, 6
        %v870 = vsel %vm609, %v869, %v868
        %v871 = vrot.slane %v573, 5
        %v872 = vsel %vm612, %v871, %v870
        %v873 = vrot.slane %v577, 4
        %v874 = vsel %vm615, %v873, %v872
        %v875 = vrot.slane %v581, 3
        %v876 = vrot.slane %v585, 2
        %v877 = vsel %vm597, %v876, %v875
        %v878 = vrot.slane %v589, 1
        %v879 = vsel %vm600, %v878, %v877
        %v880 = vsel %vm603, %v593, %v879
        %881 = vrot.lane.b32.xlu0 %v832, 48
        %v882 = vpop.permute.xlu0 %881
        %883 = vrot.lane.b32.xlu0 %v846, 48
        %v884 = vpop.permute.xlu0 %883
        %885 = vrot.lane.b32.xlu0 %v860, 48
        %v886 = vpop.permute.xlu0 %885
        %887 = vrot.lane.b32.xlu0 %v874, 48
        %v888 = vpop.permute.xlu0 %887
        %889 = vrot.lane.b32.xlu0 %v880, 48
        %v890 = vpop.permute.xlu0 %889
        %v896 = vrot.slane %v434, 4
        %v897 = vrot.slane %v437, 3
        %v898 = vsel %vm597, %v897, %v896
        %v899 = vsel %vm600, %v554, %v898
        %v900 = vsel %vm603, %v506, %v899
        %v901 = vsel %vm606, %v455, %v900
        %v902 = vrot.slane %v459, 7
        %v903 = vsel %vm609, %v902, %v901
        %v904 = vrot.slane %v463, 6
        %v905 = vsel %vm612, %v904, %v903
        %v906 = vrot.slane %v467, 5
        %v907 = vsel %vm615, %v906, %v905
        %v908 = vrot.slane %v471, 4
        %v909 = vrot.slane %v475, 3
        %v910 = vsel %vm597, %v909, %v908
        %v911 = vrot.slane %v479, 2
        %v912 = vsel %vm600, %v911, %v910
        %v913 = vrot.slane %v483, 1
        %v914 = vsel %vm603, %v913, %v912
        %v915 = vsel %vm606, %v493, %v914
        %v916 = vrot.slane %v498, 7
        %v917 = vsel %vm609, %v916, %v915
        %v918 = vrot.slane %v503, 6
        %v919 = vsel %vm612, %v918, %v917
        %v920 = vrot.slane %v508, 5
        %v921 = vsel %vm615, %v920, %v919
        %v922 = vrot.slane %v512, 4
        %v923 = vrot.slane %v516, 3
        %v924 = vsel %vm597, %v923, %v922
        %v925 = vrot.slane %v520, 2
        %v926 = vsel %vm600, %v925, %v924
        %v927 = vrot.slane %v524, 1
        %v928 = vsel %vm603, %v927, %v926
        %v929 = vsel %vm606, %v528, %v928
        %v930 = vrot.slane %v532, 7
        %v931 = vsel %vm609, %v930, %v929
        %v932 = vrot.slane %v536, 6
        %v933 = vsel %vm612, %v932, %v931
        %v934 = vrot.slane %v540, 5
        %v935 = vsel %vm615, %v934, %v933
        %v936 = vrot.slane %v546, 4
        %v937 = vrot.slane %v551, 3
        %v938 = vsel %vm597, %v937, %v936
        %v939 = vrot.slane %v556, 2
        %v940 = vsel %vm600, %v939, %v938
        %v941 = vrot.slane %v561, 1
        %v942 = vsel %vm603, %v941, %v940
        %v943 = vsel %vm606, %v565, %v942
        %v944 = vrot.slane %v569, 7
        %v945 = vsel %vm609, %v944, %v943
        %v946 = vrot.slane %v573, 6
        %v947 = vsel %vm612, %v946, %v945
        %v948 = vrot.slane %v577, 5
        %v949 = vsel %vm615, %v948, %v947
        %v950 = vrot.slane %v581, 4
        %v951 = vrot.slane %v585, 3
        %v952 = vsel %vm597, %v951, %v950
        %v953 = vrot.slane %v589, 2
        %v954 = vsel %vm600, %v953, %v952
        %v955 = vrot.slane %v593, 1
        %v956 = vsel %vm603, %v955, %v954
        %957 = vrot.lane.b32.xlu0 %v907, 64
        %v958 = vpop.permute.xlu0 %957
        %959 = vrot.lane.b32.xlu0 %v921, 64
        %v960 = vpop.permute.xlu0 %959
        %961 = vrot.lane.b32.xlu0 %v935, 64
        %v962 = vpop.permute.xlu0 %961
        %963 = vrot.lane.b32.xlu0 %v949, 64
        %v964 = vpop.permute.xlu0 %963
        %965 = vrot.lane.b32.xlu0 %v956, 64
        %v966 = vpop.permute.xlu0 %965
        %v972 = vrot.slane %v434, 5
        %v973 = vrot.slane %v437, 4
        %v974 = vsel %vm597, %v973, %v972
        %v975 = vrot.slane %v440, 3
        %v976 = vsel %vm600, %v975, %v974
        %v977 = vsel %vm603, %v559, %v976
        %v978 = vrot.slane %v455, 1
        %v979 = vsel %vm606, %v978, %v977
        %v980 = vsel %vm609, %v459, %v979
        %v981 = vrot.slane %v463, 7
        %v982 = vsel %vm612, %v981, %v980
        %v983 = vrot.slane %v467, 6
        %v984 = vsel %vm615, %v983, %v982
        %v985 = vrot.slane %v471, 5
        %v986 = vrot.slane %v475, 4
        %v987 = vsel %vm597, %v986, %v985
        %v988 = vrot.slane %v479, 3
        %v989 = vsel %vm600, %v988, %v987
        %v990 = vrot.slane %v483, 2
        %v991 = vsel %vm603, %v990, %v989
        %v992 = vrot.slane %v493, 1
        %v993 = vsel %vm606, %v992, %v991
        %v994 = vsel %vm609, %v498, %v993
        %v995 = vrot.slane %v503, 7
        %v996 = vsel %vm612, %v995, %v994
        %v997 = vrot.slane %v508, 6
        %v998 = vsel %vm615, %v997, %v996
        %v999 = vrot.slane %v512, 5
        %v1000 = vrot.slane %v516, 4
        %v1001 = vsel %vm597, %v1000, %v999
        %v1002 = vrot.slane %v520, 3
        %v1003 = vsel %vm600, %v1002, %v1001
        %v1004 = vrot.slane %v524, 2
        %v1005 = vsel %vm603, %v1004, %v1003
        %v1006 = vrot.slane %v528, 1
        %v1007 = vsel %vm606, %v1006, %v1005
        %v1008 = vsel %vm609, %v532, %v1007
        %v1009 = vrot.slane %v536, 7
        %v1010 = vsel %vm612, %v1009, %v1008
        %v1011 = vrot.slane %v540, 6
        %v1012 = vsel %vm615, %v1011, %v1010
        %v1013 = vrot.slane %v546, 5
        %v1014 = vrot.slane %v551, 4
        %v1015 = vsel %vm597, %v1014, %v1013
        %v1016 = vrot.slane %v556, 3
        %v1017 = vsel %vm600, %v1016, %v1015
        %v1018 = vrot.slane %v561, 2
        %v1019 = vsel %vm603, %v1018, %v1017
        %v1020 = vrot.slane %v565, 1
        %v1021 = vsel %vm606, %v1020, %v1019
        %v1022 = vsel %vm609, %v569, %v1021
        %v1023 = vrot.slane %v573, 7
        %v1024 = vsel %vm612, %v1023, %v1022
        %v1025 = vrot.slane %v577, 6
        %v1026 = vsel %vm615, %v1025, %v1024
        %v1027 = vrot.slane %v581, 5
        %v1028 = vrot.slane %v585, 4
        %v1029 = vsel %vm597, %v1028, %v1027
        %v1030 = vrot.slane %v589, 3
        %v1031 = vsel %vm600, %v1030, %v1029
        %v1032 = vrot.slane %v593, 2
        %v1033 = vsel %vm603, %v1032, %v1031
        %1034 = vrot.lane.b32.xlu0 %v984, 80
        %v1035 = vpop.permute.xlu0 %1034
        %1036 = vrot.lane.b32.xlu0 %v998, 80
        %v1037 = vpop.permute.xlu0 %1036
        %1038 = vrot.lane.b32.xlu0 %v1012, 80
        %v1039 = vpop.permute.xlu0 %1038
        %1040 = vrot.lane.b32.xlu0 %v1026, 80
        %v1041 = vpop.permute.xlu0 %1040
        %1042 = vrot.lane.b32.xlu0 %v1033, 80
        %v1043 = vpop.permute.xlu0 %1042
        %v1049 = vrot.slane %v434, 6
        %v1050 = vrot.slane %v437, 5
        %v1051 = vsel %vm597, %v1050, %v1049
        %v1052 = vrot.slane %v440, 4
        %v1053 = vsel %vm600, %v1052, %v1051
        %v1054 = vrot.slane %v443, 3
        %v1055 = vsel %vm603, %v1054, %v1053
        %v1056 = vrot.slane %v455, 2
        %v1057 = vsel %vm606, %v1056, %v1055
        %v1058 = vrot.slane %v459, 1
        %v1059 = vsel %vm609, %v1058, %v1057
        %v1060 = vsel %vm612, %v463, %v1059
        %v1061 = vrot.slane %v467, 7
        %v1062 = vsel %vm615, %v1061, %v1060
        %v1063 = vrot.slane %v471, 6
        %v1064 = vrot.slane %v475, 5
        %v1065 = vsel %vm597, %v1064, %v1063
        %v1066 = vrot.slane %v479, 4
        %v1067 = vsel %vm600, %v1066, %v1065
        %v1068 = vrot.slane %v483, 3
        %v1069 = vsel %vm603, %v1068, %v1067
        %v1070 = vrot.slane %v493, 2
        %v1071 = vsel %vm606, %v1070, %v1069
        %v1072 = vrot.slane %v498, 1
        %v1073 = vsel %vm609, %v1072, %v1071
        %v1074 = vsel %vm612, %v503, %v1073
        %v1075 = vrot.slane %v508, 7
        %v1076 = vsel %vm615, %v1075, %v1074
        %v1077 = vrot.slane %v512, 6
        %v1078 = vrot.slane %v516, 5
        %v1079 = vsel %vm597, %v1078, %v1077
        %v1080 = vrot.slane %v520, 4
        %v1081 = vsel %vm600, %v1080, %v1079
        %v1082 = vrot.slane %v524, 3
        %v1083 = vsel %vm603, %v1082, %v1081
        %v1084 = vrot.slane %v528, 2
        %v1085 = vsel %vm606, %v1084, %v1083
        %v1086 = vrot.slane %v532, 1
        %v1087 = vsel %vm609, %v1086, %v1085
        %v1088 = vsel %vm612, %v536, %v1087
        %v1089 = vrot.slane %v540, 7
        %v1090 = vsel %vm615, %v1089, %v1088
        %v1091 = vrot.slane %v546, 6
        %v1092 = vrot.slane %v551, 5
        %v1093 = vsel %vm597, %v1092, %v1091
        %v1094 = vrot.slane %v556, 4
        %v1095 = vsel %vm600, %v1094, %v1093
        %v1096 = vrot.slane %v561, 3
        %v1097 = vsel %vm603, %v1096, %v1095
        %v1098 = vrot.slane %v565, 2
        %v1099 = vsel %vm606, %v1098, %v1097
        %v1100 = vrot.slane %v569, 1
        %v1101 = vsel %vm609, %v1100, %v1099
        %v1102 = vsel %vm612, %v573, %v1101
        %v1103 = vrot.slane %v577, 7
        %v1104 = vsel %vm615, %v1103, %v1102
        %v1105 = vrot.slane %v581, 6
        %v1106 = vrot.slane %v585, 5
        %v1107 = vsel %vm597, %v1106, %v1105
        %v1108 = vrot.slane %v589, 4
        %v1109 = vsel %vm600, %v1108, %v1107
        %v1110 = vrot.slane %v593, 3
        %v1111 = vsel %vm603, %v1110, %v1109
        %1112 = vrot.lane.b32.xlu0 %v1062, 96
        %v1113 = vpop.permute.xlu0 %1112
        %1114 = vrot.lane.b32.xlu0 %v1076, 96
        %v1115 = vpop.permute.xlu0 %1114
        %1116 = vrot.lane.b32.xlu0 %v1090, 96
        %v1117 = vpop.permute.xlu0 %1116
        %1118 = vrot.lane.b32.xlu0 %v1104, 96
        %v1119 = vpop.permute.xlu0 %1118
        %1120 = vrot.lane.b32.xlu0 %v1111, 96
        %v1121 = vpop.permute.xlu0 %1120
        %v1127 = vrot.slane %v434, 7
        %v1128 = vrot.slane %v437, 6
        %v1129 = vsel %vm597, %v1128, %v1127
        %v1130 = vrot.slane %v440, 5
        %v1131 = vsel %vm600, %v1130, %v1129
        %v1132 = vrot.slane %v443, 4
        %v1133 = vsel %vm603, %v1132, %v1131
        %v1134 = vrot.slane %v455, 3
        %v1135 = vsel %vm606, %v1134, %v1133
        %v1136 = vrot.slane %v459, 2
        %v1137 = vsel %vm609, %v1136, %v1135
        %v1138 = vrot.slane %v463, 1
        %v1139 = vsel %vm612, %v1138, %v1137
        %v1140 = vsel %vm615, %v467, %v1139
        %v1141 = vrot.slane %v471, 7
        %v1142 = vrot.slane %v475, 6
        %v1143 = vsel %vm597, %v1142, %v1141
        %v1144 = vrot.slane %v479, 5
        %v1145 = vsel %vm600, %v1144, %v1143
        %v1146 = vrot.slane %v483, 4
        %v1147 = vsel %vm603, %v1146, %v1145
        %v1148 = vrot.slane %v493, 3
        %v1149 = vsel %vm606, %v1148, %v1147
        %v1150 = vrot.slane %v498, 2
        %v1151 = vsel %vm609, %v1150, %v1149
        %v1152 = vrot.slane %v503, 1
        %v1153 = vsel %vm612, %v1152, %v1151
        %v1154 = vsel %vm615, %v508, %v1153
        %v1155 = vrot.slane %v512, 7
        %v1156 = vrot.slane %v516, 6
        %v1157 = vsel %vm597, %v1156, %v1155
        %v1158 = vrot.slane %v520, 5
        %v1159 = vsel %vm600, %v1158, %v1157
        %v1160 = vrot.slane %v524, 4
        %v1161 = vsel %vm603, %v1160, %v1159
        %v1162 = vrot.slane %v528, 3
        %v1163 = vsel %vm606, %v1162, %v1161
        %v1164 = vrot.slane %v532, 2
        %v1165 = vsel %vm609, %v1164, %v1163
        %v1166 = vrot.slane %v536, 1
        %v1167 = vsel %vm612, %v1166, %v1165
        %v1168 = vsel %vm615, %v540, %v1167
        %v1169 = vrot.slane %v546, 7
        %v1170 = vrot.slane %v551, 6
        %v1171 = vsel %vm597, %v1170, %v1169
        %v1172 = vrot.slane %v556, 5
        %v1173 = vsel %vm600, %v1172, %v1171
        %v1174 = vrot.slane %v561, 4
        %v1175 = vsel %vm603, %v1174, %v1173
        %v1176 = vrot.slane %v565, 3
        %v1177 = vsel %vm606, %v1176, %v1175
        %v1178 = vrot.slane %v569, 2
        %v1179 = vsel %vm609, %v1178, %v1177
        %v1180 = vrot.slane %v573, 1
        %v1181 = vsel %vm612, %v1180, %v1179
        %v1182 = vsel %vm615, %v577, %v1181
        %v1183 = vrot.slane %v581, 7
        %v1184 = vrot.slane %v585, 6
        %v1185 = vsel %vm597, %v1184, %v1183
        %v1186 = vrot.slane %v589, 5
        %v1187 = vsel %vm600, %v1186, %v1185
        %v1188 = vrot.slane %v593, 4
        %v1189 = vsel %vm603, %v1188, %v1187
        %1190 = vrot.lane.b32.xlu0 %v1140, 112
        %v1191 = vpop.permute.xlu0 %1190
        %1192 = vrot.lane.b32.xlu0 %v1154, 112
        %v1193 = vpop.permute.xlu0 %1192
        %1194 = vrot.lane.b32.xlu0 %v1168, 112
        %v1195 = vpop.permute.xlu0 %1194
        %1196 = vrot.lane.b32.xlu0 %v1182, 112
        %v1197 = vpop.permute.xlu0 %1196
        %1198 = vrot.lane.b32.xlu0 %v1189, 112
        %v1199 = vpop.permute.xlu0 %1198
        %v1205 = vrot.slane %v438, 7
        %v1206 = vsel %vm597, %v1205, %v435
        %v1207 = vrot.slane %v441, 6
        %v1208 = vsel %vm600, %v1207, %v1206
        %v1209 = vrot.slane %v444, 5
        %v1210 = vsel %vm603, %v1209, %v1208
        %v1211 = vrot.slane %v457, 4
        %v1212 = vsel %vm606, %v1211, %v1210
        %v1213 = vrot.slane %v461, 3
        %v1214 = vsel %vm609, %v1213, %v1212
        %v1215 = vrot.slane %v465, 2
        %v1216 = vsel %vm612, %v1215, %v1214
        %v1217 = vrot.slane %v469, 1
        %v1218 = vsel %vm615, %v1217, %v1216
        %v1219 = vrot.slane %v477, 7
        %v1220 = vsel %vm597, %v1219, %v473
        %v1221 = vrot.slane %v481, 6
        %v1222 = vsel %vm600, %v1221, %v1220
        %v1223 = vrot.slane %v485, 5
        %v1224 = vsel %vm603, %v1223, %v1222
        %v1225 = vrot.slane %v495, 4
        %v1226 = vsel %vm606, %v1225, %v1224
        %v1227 = vrot.slane %v500, 3
        %v1228 = vsel %vm609, %v1227, %v1226
        %v1229 = vrot.slane %v505, 2
        %v1230 = vsel %vm612, %v1229, %v1228
        %v1231 = vrot.slane %v510, 1
        %v1232 = vsel %vm615, %v1231, %v1230
        %v1233 = vrot.slane %v518, 7
        %v1234 = vsel %vm597, %v1233, %v514
        %v1235 = vrot.slane %v522, 6
        %v1236 = vsel %vm600, %v1235, %v1234
        %v1237 = vrot.slane %v526, 5
        %v1238 = vsel %vm603, %v1237, %v1236
        %v1239 = vrot.slane %v530, 4
        %v1240 = vsel %vm606, %v1239, %v1238
        %v1241 = vrot.slane %v534, 3
        %v1242 = vsel %vm609, %v1241, %v1240
        %v1243 = vrot.slane %v538, 2
        %v1244 = vsel %vm612, %v1243, %v1242
        %v1245 = vrot.slane %v542, 1
        %v1246 = vsel %vm615, %v1245, %v1244
        %v1247 = vrot.slane %v553, 7
        %v1248 = vsel %vm597, %v1247, %v548
        %v1249 = vrot.slane %v558, 6
        %v1250 = vsel %vm600, %v1249, %v1248
        %v1251 = vrot.slane %v563, 5
        %v1252 = vsel %vm603, %v1251, %v1250
        %v1253 = vrot.slane %v567, 4
        %v1254 = vsel %vm606, %v1253, %v1252
        %v1255 = vrot.slane %v571, 3
        %v1256 = vsel %vm609, %v1255, %v1254
        %v1257 = vrot.slane %v575, 2
        %v1258 = vsel %vm612, %v1257, %v1256
        %v1259 = vrot.slane %v579, 1
        %v1260 = vsel %vm615, %v1259, %v1258
        %v1261 = vrot.slane %v587, 7
        %v1262 = vsel %vm597, %v1261, %v583
        %v1263 = vrot.slane %v591, 6
        %v1264 = vsel %vm600, %v1263, %v1262
        %v1265 = vrot.slane %v595, 5
        %v1266 = vsel %vm603, %v1265, %v1264
        %v1272 = vsel %vm597, %v438, %v492
        %v1273 = vrot.slane %v441, 7
        %v1274 = vsel %vm600, %v1273, %v1272
        %v1275 = vrot.slane %v444, 6
        %v1276 = vsel %vm603, %v1275, %v1274
        %v1277 = vrot.slane %v457, 5
        %v1278 = vsel %vm606, %v1277, %v1276
        %v1279 = vrot.slane %v461, 4
        %v1280 = vsel %vm609, %v1279, %v1278
        %v1281 = vrot.slane %v465, 3
        %v1282 = vsel %vm612, %v1281, %v1280
        %v1283 = vrot.slane %v469, 2
        %v1284 = vsel %vm615, %v1283, %v1282
        %v1285 = vrot.slane %v473, 1
        %v1286 = vsel %vm597, %v477, %v1285
        %v1287 = vrot.slane %v481, 7
        %v1288 = vsel %vm600, %v1287, %v1286
        %v1289 = vrot.slane %v485, 6
        %v1290 = vsel %vm603, %v1289, %v1288
        %v1291 = vrot.slane %v495, 5
        %v1292 = vsel %vm606, %v1291, %v1290
        %v1293 = vrot.slane %v500, 4
        %v1294 = vsel %vm609, %v1293, %v1292
        %v1295 = vrot.slane %v505, 3
        %v1296 = vsel %vm612, %v1295, %v1294
        %v1297 = vrot.slane %v510, 2
        %v1298 = vsel %vm615, %v1297, %v1296
        %v1299 = vrot.slane %v514, 1
        %v1300 = vsel %vm597, %v518, %v1299
        %v1301 = vrot.slane %v522, 7
        %v1302 = vsel %vm600, %v1301, %v1300
        %v1303 = vrot.slane %v526, 6
        %v1304 = vsel %vm603, %v1303, %v1302
        %v1305 = vrot.slane %v530, 5
        %v1306 = vsel %vm606, %v1305, %v1304
        %v1307 = vrot.slane %v534, 4
        %v1308 = vsel %vm609, %v1307, %v1306
        %v1309 = vrot.slane %v538, 3
        %v1310 = vsel %vm612, %v1309, %v1308
        %v1311 = vrot.slane %v542, 2
        %v1312 = vsel %vm615, %v1311, %v1310
        %v1313 = vrot.slane %v548, 1
        %v1314 = vsel %vm597, %v553, %v1313
        %v1315 = vrot.slane %v558, 7
        %v1316 = vsel %vm600, %v1315, %v1314
        %v1317 = vrot.slane %v563, 6
        %v1318 = vsel %vm603, %v1317, %v1316
        %v1319 = vrot.slane %v567, 5
        %v1320 = vsel %vm606, %v1319, %v1318
        %v1321 = vrot.slane %v571, 4
        %v1322 = vsel %vm609, %v1321, %v1320
        %v1323 = vrot.slane %v575, 3
        %v1324 = vsel %vm612, %v1323, %v1322
        %v1325 = vrot.slane %v579, 2
        %v1326 = vsel %vm615, %v1325, %v1324
        %v1327 = vrot.slane %v583, 1
        %v1328 = vsel %vm597, %v587, %v1327
        %v1329 = vrot.slane %v591, 7
        %v1330 = vsel %vm600, %v1329, %v1328
        %v1331 = vrot.slane %v595, 6
        %v1332 = vsel %vm603, %v1331, %v1330
        %1333 = vrot.lane.b32.xlu0 %v1284, 16
        %v1334 = vpop.permute.xlu0 %1333
        %1335 = vrot.lane.b32.xlu0 %v1298, 16
        %v1336 = vpop.permute.xlu0 %1335
        %1337 = vrot.lane.b32.xlu0 %v1312, 16
        %v1338 = vpop.permute.xlu0 %1337
        %1339 = vrot.lane.b32.xlu0 %v1326, 16
        %v1340 = vpop.permute.xlu0 %1339
        %1341 = vrot.lane.b32.xlu0 %v1332, 16
        %v1342 = vpop.permute.xlu0 %1341
        %v1348 = vsel %vm597, %v497, %v545
        %v1349 = vsel %vm600, %v441, %v1348
        %v1350 = vrot.slane %v444, 7
        %v1351 = vsel %vm603, %v1350, %v1349
        %v1352 = vrot.slane %v457, 6
        %v1353 = vsel %vm606, %v1352, %v1351
        %v1354 = vrot.slane %v461, 5
        %v1355 = vsel %vm609, %v1354, %v1353
        %v1356 = vrot.slane %v465, 4
        %v1357 = vsel %vm612, %v1356, %v1355
        %v1358 = vrot.slane %v469, 3
        %v1359 = vsel %vm615, %v1358, %v1357
        %v1360 = vrot.slane %v473, 2
        %v1361 = vrot.slane %v477, 1
        %v1362 = vsel %vm597, %v1361, %v1360
        %v1363 = vsel %vm600, %v481, %v1362
        %v1364 = vrot.slane %v485, 7
        %v1365 = vsel %vm603, %v1364, %v1363
        %v1366 = vrot.slane %v495, 6
        %v1367 = vsel %vm606, %v1366, %v1365
        %v1368 = vrot.slane %v500, 5
        %v1369 = vsel %vm609, %v1368, %v1367
        %v1370 = vrot.slane %v505, 4
        %v1371 = vsel %vm612, %v1370, %v1369
        %v1372 = vrot.slane %v510, 3
        %v1373 = vsel %vm615, %v1372, %v1371
        %v1374 = vrot.slane %v514, 2
        %v1375 = vrot.slane %v518, 1
        %v1376 = vsel %vm597, %v1375, %v1374
        %v1377 = vsel %vm600, %v522, %v1376
        %v1378 = vrot.slane %v526, 7
        %v1379 = vsel %vm603, %v1378, %v1377
        %v1380 = vrot.slane %v530, 6
        %v1381 = vsel %vm606, %v1380, %v1379
        %v1382 = vrot.slane %v534, 5
        %v1383 = vsel %vm609, %v1382, %v1381
        %v1384 = vrot.slane %v538, 4
        %v1385 = vsel %vm612, %v1384, %v1383
        %v1386 = vrot.slane %v542, 3
        %v1387 = vsel %vm615, %v1386, %v1385
        %v1388 = vrot.slane %v548, 2
        %v1389 = vrot.slane %v553, 1
        %v1390 = vsel %vm597, %v1389, %v1388
        %v1391 = vsel %vm600, %v558, %v1390
        %v1392 = vrot.slane %v563, 7
        %v1393 = vsel %vm603, %v1392, %v1391
        %v1394 = vrot.slane %v567, 6
        %v1395 = vsel %vm606, %v1394, %v1393
        %v1396 = vrot.slane %v571, 5
        %v1397 = vsel %vm609, %v1396, %v1395
        %v1398 = vrot.slane %v575, 4
        %v1399 = vsel %vm612, %v1398, %v1397
        %v1400 = vrot.slane %v579, 3
        %v1401 = vsel %vm615, %v1400, %v1399
        %v1402 = vrot.slane %v583, 2
        %v1403 = vrot.slane %v587, 1
        %v1404 = vsel %vm597, %v1403, %v1402
        %v1405 = vsel %vm600, %v591, %v1404
        %v1406 = vrot.slane %v595, 7
        %v1407 = vsel %vm603, %v1406, %v1405
        %1408 = vrot.lane.b32.xlu0 %v1359, 32
        %v1409 = vpop.permute.xlu0 %1408
        %1410 = vrot.lane.b32.xlu0 %v1373, 32
        %v1411 = vpop.permute.xlu0 %1410
        %1412 = vrot.lane.b32.xlu0 %v1387, 32
        %v1413 = vpop.permute.xlu0 %1412
        %1414 = vrot.lane.b32.xlu0 %v1401, 32
        %v1415 = vpop.permute.xlu0 %1414
        %1416 = vrot.lane.b32.xlu0 %v1407, 32
        %v1417 = vpop.permute.xlu0 %1416
        %v1423 = vrot.slane %v435, 3
        %v1424 = vsel %vm597, %v550, %v1423
        %v1425 = vsel %vm600, %v502, %v1424
        %v1426 = vsel %vm603, %v444, %v1425
        %v1427 = vrot.slane %v457, 7
        %v1428 = vsel %vm606, %v1427, %v1426
        %v1429 = vrot.slane %v461, 6
        %v1430 = vsel %vm609, %v1429, %v1428
        %v1431 = vrot.slane %v465, 5
        %v1432 = vsel %vm612, %v1431, %v1430
        %v1433 = vrot.slane %v469, 4
        %v1434 = vsel %vm615, %v1433, %v1432
        %v1435 = vrot.slane %v473, 3
        %v1436 = vrot.slane %v477, 2
        %v1437 = vsel %vm597, %v1436, %v1435
        %v1438 = vrot.slane %v481, 1
        %v1439 = vsel %vm600, %v1438, %v1437
        %v1440 = vsel %vm603, %v485, %v1439
        %v1441 = vrot.slane %v495, 7
        %v1442 = vsel %vm606, %v1441, %v1440
        %v1443 = vrot.slane %v500, 6
        %v1444 = vsel %vm609, %v1443, %v1442
        %v1445 = vrot.slane %v505, 5
        %v1446 = vsel %vm612, %v1445, %v1444
        %v1447 = vrot.slane %v510, 4
        %v1448 = vsel %vm615, %v1447, %v1446
        %v1449 = vrot.slane %v514, 3
        %v1450 = vrot.slane %v518, 2
        %v1451 = vsel %vm597, %v1450, %v1449
        %v1452 = vrot.slane %v522, 1
        %v1453 = vsel %vm600, %v1452, %v1451
        %v1454 = vsel %vm603, %v526, %v1453
        %v1455 = vrot.slane %v530, 7
        %v1456 = vsel %vm606, %v1455, %v1454
        %v1457 = vrot.slane %v534, 6
        %v1458 = vsel %vm609, %v1457, %v1456
        %v1459 = vrot.slane %v538, 5
        %v1460 = vsel %vm612, %v1459, %v1458
        %v1461 = vrot.slane %v542, 4
        %v1462 = vsel %vm615, %v1461, %v1460
        %v1463 = vrot.slane %v548, 3
        %v1464 = vrot.slane %v553, 2
        %v1465 = vsel %vm597, %v1464, %v1463
        %v1466 = vrot.slane %v558, 1
        %v1467 = vsel %vm600, %v1466, %v1465
        %v1468 = vsel %vm603, %v563, %v1467
        %v1469 = vrot.slane %v567, 7
        %v1470 = vsel %vm606, %v1469, %v1468
        %v1471 = vrot.slane %v571, 6
        %v1472 = vsel %vm609, %v1471, %v1470
        %v1473 = vrot.slane %v575, 5
        %v1474 = vsel %vm612, %v1473, %v1472
        %v1475 = vrot.slane %v579, 4
        %v1476 = vsel %vm615, %v1475, %v1474
        %v1477 = vrot.slane %v583, 3
        %v1478 = vrot.slane %v587, 2
        %v1479 = vsel %vm597, %v1478, %v1477
        %v1480 = vrot.slane %v591, 1
        %v1481 = vsel %vm600, %v1480, %v1479
        %v1482 = vsel %vm603, %v595, %v1481
        %1483 = vrot.lane.b32.xlu0 %v1434, 48
        %v1484 = vpop.permute.xlu0 %1483
        %1485 = vrot.lane.b32.xlu0 %v1448, 48
        %v1486 = vpop.permute.xlu0 %1485
        %1487 = vrot.lane.b32.xlu0 %v1462, 48
        %v1488 = vpop.permute.xlu0 %1487
        %1489 = vrot.lane.b32.xlu0 %v1476, 48
        %v1490 = vpop.permute.xlu0 %1489
        %1491 = vrot.lane.b32.xlu0 %v1482, 48
        %v1492 = vpop.permute.xlu0 %1491
        %v1498 = vrot.slane %v435, 4
        %v1499 = vrot.slane %v438, 3
        %v1500 = vsel %vm597, %v1499, %v1498
        %v1501 = vsel %vm600, %v555, %v1500
        %v1502 = vsel %vm603, %v507, %v1501
        %v1503 = vsel %vm606, %v457, %v1502
        %v1504 = vrot.slane %v461, 7
        %v1505 = vsel %vm609, %v1504, %v1503
        %v1506 = vrot.slane %v465, 6
        %v1507 = vsel %vm612, %v1506, %v1505
        %v1508 = vrot.slane %v469, 5
        %v1509 = vsel %vm615, %v1508, %v1507
        %v1510 = vrot.slane %v473, 4
        %v1511 = vrot.slane %v477, 3
        %v1512 = vsel %vm597, %v1511, %v1510
        %v1513 = vrot.slane %v481, 2
        %v1514 = vsel %vm600, %v1513, %v1512
        %v1515 = vrot.slane %v485, 1
        %v1516 = vsel %vm603, %v1515, %v1514
        %v1517 = vsel %vm606, %v495, %v1516
        %v1518 = vrot.slane %v500, 7
        %v1519 = vsel %vm609, %v1518, %v1517
        %v1520 = vrot.slane %v505, 6
        %v1521 = vsel %vm612, %v1520, %v1519
        %v1522 = vrot.slane %v510, 5
        %v1523 = vsel %vm615, %v1522, %v1521
        %v1524 = vrot.slane %v514, 4
        %v1525 = vrot.slane %v518, 3
        %v1526 = vsel %vm597, %v1525, %v1524
        %v1527 = vrot.slane %v522, 2
        %v1528 = vsel %vm600, %v1527, %v1526
        %v1529 = vrot.slane %v526, 1
        %v1530 = vsel %vm603, %v1529, %v1528
        %v1531 = vsel %vm606, %v530, %v1530
        %v1532 = vrot.slane %v534, 7
        %v1533 = vsel %vm609, %v1532, %v1531
        %v1534 = vrot.slane %v538, 6
        %v1535 = vsel %vm612, %v1534, %v1533
        %v1536 = vrot.slane %v542, 5
        %v1537 = vsel %vm615, %v1536, %v1535
        %v1538 = vrot.slane %v548, 4
        %v1539 = vrot.slane %v553, 3
        %v1540 = vsel %vm597, %v1539, %v1538
        %v1541 = vrot.slane %v558, 2
        %v1542 = vsel %vm600, %v1541, %v1540
        %v1543 = vrot.slane %v563, 1
        %v1544 = vsel %vm603, %v1543, %v1542
        %v1545 = vsel %vm606, %v567, %v1544
        %v1546 = vrot.slane %v571, 7
        %v1547 = vsel %vm609, %v1546, %v1545
        %v1548 = vrot.slane %v575, 6
        %v1549 = vsel %vm612, %v1548, %v1547
        %v1550 = vrot.slane %v579, 5
        %v1551 = vsel %vm615, %v1550, %v1549
        %v1552 = vrot.slane %v583, 4
        %v1553 = vrot.slane %v587, 3
        %v1554 = vsel %vm597, %v1553, %v1552
        %v1555 = vrot.slane %v591, 2
        %v1556 = vsel %vm600, %v1555, %v1554
        %v1557 = vrot.slane %v595, 1
        %v1558 = vsel %vm603, %v1557, %v1556
        %1559 = vrot.lane.b32.xlu0 %v1509, 64
        %v1560 = vpop.permute.xlu0 %1559
        %1561 = vrot.lane.b32.xlu0 %v1523, 64
        %v1562 = vpop.permute.xlu0 %1561
        %1563 = vrot.lane.b32.xlu0 %v1537, 64
        %v1564 = vpop.permute.xlu0 %1563
        %1565 = vrot.lane.b32.xlu0 %v1551, 64
        %v1566 = vpop.permute.xlu0 %1565
        %1567 = vrot.lane.b32.xlu0 %v1558, 64
        %v1568 = vpop.permute.xlu0 %1567
        %v1574 = vrot.slane %v435, 5
        %v1575 = vrot.slane %v438, 4
        %v1576 = vsel %vm597, %v1575, %v1574
        %v1577 = vrot.slane %v441, 3
        %v1578 = vsel %vm600, %v1577, %v1576
        %v1579 = vsel %vm603, %v560, %v1578
        %v1580 = vrot.slane %v457, 1
        %v1581 = vsel %vm606, %v1580, %v1579
        %v1582 = vsel %vm609, %v461, %v1581
        %v1583 = vrot.slane %v465, 7
        %v1584 = vsel %vm612, %v1583, %v1582
        %v1585 = vrot.slane %v469, 6
        %v1586 = vsel %vm615, %v1585, %v1584
        %v1587 = vrot.slane %v473, 5
        %v1588 = vrot.slane %v477, 4
        %v1589 = vsel %vm597, %v1588, %v1587
        %v1590 = vrot.slane %v481, 3
        %v1591 = vsel %vm600, %v1590, %v1589
        %v1592 = vrot.slane %v485, 2
        %v1593 = vsel %vm603, %v1592, %v1591
        %v1594 = vrot.slane %v495, 1
        %v1595 = vsel %vm606, %v1594, %v1593
        %v1596 = vsel %vm609, %v500, %v1595
        %v1597 = vrot.slane %v505, 7
        %v1598 = vsel %vm612, %v1597, %v1596
        %v1599 = vrot.slane %v510, 6
        %v1600 = vsel %vm615, %v1599, %v1598
        %v1601 = vrot.slane %v514, 5
        %v1602 = vrot.slane %v518, 4
        %v1603 = vsel %vm597, %v1602, %v1601
        %v1604 = vrot.slane %v522, 3
        %v1605 = vsel %vm600, %v1604, %v1603
        %v1606 = vrot.slane %v526, 2
        %v1607 = vsel %vm603, %v1606, %v1605
        %v1608 = vrot.slane %v530, 1
        %v1609 = vsel %vm606, %v1608, %v1607
        %v1610 = vsel %vm609, %v534, %v1609
        %v1611 = vrot.slane %v538, 7
        %v1612 = vsel %vm612, %v1611, %v1610
        %v1613 = vrot.slane %v542, 6
        %v1614 = vsel %vm615, %v1613, %v1612
        %v1615 = vrot.slane %v548, 5
        %v1616 = vrot.slane %v553, 4
        %v1617 = vsel %vm597, %v1616, %v1615
        %v1618 = vrot.slane %v558, 3
        %v1619 = vsel %vm600, %v1618, %v1617
        %v1620 = vrot.slane %v563, 2
        %v1621 = vsel %vm603, %v1620, %v1619
        %v1622 = vrot.slane %v567, 1
        %v1623 = vsel %vm606, %v1622, %v1621
        %v1624 = vsel %vm609, %v571, %v1623
        %v1625 = vrot.slane %v575, 7
        %v1626 = vsel %vm612, %v1625, %v1624
        %v1627 = vrot.slane %v579, 6
        %v1628 = vsel %vm615, %v1627, %v1626
        %v1629 = vrot.slane %v583, 5
        %v1630 = vrot.slane %v587, 4
        %v1631 = vsel %vm597, %v1630, %v1629
        %v1632 = vrot.slane %v591, 3
        %v1633 = vsel %vm600, %v1632, %v1631
        %v1634 = vrot.slane %v595, 2
        %v1635 = vsel %vm603, %v1634, %v1633
        %1636 = vrot.lane.b32.xlu0 %v1586, 80
        %v1637 = vpop.permute.xlu0 %1636
        %1638 = vrot.lane.b32.xlu0 %v1600, 80
        %v1639 = vpop.permute.xlu0 %1638
        %1640 = vrot.lane.b32.xlu0 %v1614, 80
        %v1641 = vpop.permute.xlu0 %1640
        %1642 = vrot.lane.b32.xlu0 %v1628, 80
        %v1643 = vpop.permute.xlu0 %1642
        %1644 = vrot.lane.b32.xlu0 %v1635, 80
        %v1645 = vpop.permute.xlu0 %1644
        %v1651 = vrot.slane %v435, 6
        %v1652 = vrot.slane %v438, 5
        %v1653 = vsel %vm597, %v1652, %v1651
        %v1654 = vrot.slane %v441, 4
        %v1655 = vsel %vm600, %v1654, %v1653
        %v1656 = vrot.slane %v444, 3
        %v1657 = vsel %vm603, %v1656, %v1655
        %v1658 = vrot.slane %v457, 2
        %v1659 = vsel %vm606, %v1658, %v1657
        %v1660 = vrot.slane %v461, 1
        %v1661 = vsel %vm609, %v1660, %v1659
        %v1662 = vsel %vm612, %v465, %v1661
        %v1663 = vrot.slane %v469, 7
        %v1664 = vsel %vm615, %v1663, %v1662
        %v1665 = vrot.slane %v473, 6
        %v1666 = vrot.slane %v477, 5
        %v1667 = vsel %vm597, %v1666, %v1665
        %v1668 = vrot.slane %v481, 4
        %v1669 = vsel %vm600, %v1668, %v1667
        %v1670 = vrot.slane %v485, 3
        %v1671 = vsel %vm603, %v1670, %v1669
        %v1672 = vrot.slane %v495, 2
        %v1673 = vsel %vm606, %v1672, %v1671
        %v1674 = vrot.slane %v500, 1
        %v1675 = vsel %vm609, %v1674, %v1673
        %v1676 = vsel %vm612, %v505, %v1675
        %v1677 = vrot.slane %v510, 7
        %v1678 = vsel %vm615, %v1677, %v1676
        %v1679 = vrot.slane %v514, 6
        %v1680 = vrot.slane %v518, 5
        %v1681 = vsel %vm597, %v1680, %v1679
        %v1682 = vrot.slane %v522, 4
        %v1683 = vsel %vm600, %v1682, %v1681
        %v1684 = vrot.slane %v526, 3
        %v1685 = vsel %vm603, %v1684, %v1683
        %v1686 = vrot.slane %v530, 2
        %v1687 = vsel %vm606, %v1686, %v1685
        %v1688 = vrot.slane %v534, 1
        %v1689 = vsel %vm609, %v1688, %v1687
        %v1690 = vsel %vm612, %v538, %v1689
        %v1691 = vrot.slane %v542, 7
        %v1692 = vsel %vm615, %v1691, %v1690
        %v1693 = vrot.slane %v548, 6
        %v1694 = vrot.slane %v553, 5
        %v1695 = vsel %vm597, %v1694, %v1693
        %v1696 = vrot.slane %v558, 4
        %v1697 = vsel %vm600, %v1696, %v1695
        %v1698 = vrot.slane %v563, 3
        %v1699 = vsel %vm603, %v1698, %v1697
        %v1700 = vrot.slane %v567, 2
        %v1701 = vsel %vm606, %v1700, %v1699
        %v1702 = vrot.slane %v571, 1
        %v1703 = vsel %vm609, %v1702, %v1701
        %v1704 = vsel %vm612, %v575, %v1703
        %v1705 = vrot.slane %v579, 7
        %v1706 = vsel %vm615, %v1705, %v1704
        %v1707 = vrot.slane %v583, 6
        %v1708 = vrot.slane %v587, 5
        %v1709 = vsel %vm597, %v1708, %v1707
        %v1710 = vrot.slane %v591, 4
        %v1711 = vsel %vm600, %v1710, %v1709
        %v1712 = vrot.slane %v595, 3
        %v1713 = vsel %vm603, %v1712, %v1711
        %1714 = vrot.lane.b32.xlu0 %v1664, 96
        %v1715 = vpop.permute.xlu0 %1714
        %1716 = vrot.lane.b32.xlu0 %v1678, 96
        %v1717 = vpop.permute.xlu0 %1716
        %1718 = vrot.lane.b32.xlu0 %v1692, 96
        %v1719 = vpop.permute.xlu0 %1718
        %1720 = vrot.lane.b32.xlu0 %v1706, 96
        %v1721 = vpop.permute.xlu0 %1720
        %1722 = vrot.lane.b32.xlu0 %v1713, 96
        %v1723 = vpop.permute.xlu0 %1722
        %v1729 = vrot.slane %v435, 7
        %v1730 = vrot.slane %v438, 6
        %v1731 = vsel %vm597, %v1730, %v1729
        %v1732 = vrot.slane %v441, 5
        %v1733 = vsel %vm600, %v1732, %v1731
        %v1734 = vrot.slane %v444, 4
        %v1735 = vsel %vm603, %v1734, %v1733
        %v1736 = vrot.slane %v457, 3
        %v1737 = vsel %vm606, %v1736, %v1735
        %v1738 = vrot.slane %v461, 2
        %v1739 = vsel %vm609, %v1738, %v1737
        %v1740 = vrot.slane %v465, 1
        %v1741 = vsel %vm612, %v1740, %v1739
        %v1742 = vsel %vm615, %v469, %v1741
        %v1743 = vrot.slane %v473, 7
        %v1744 = vrot.slane %v477, 6
        %v1745 = vsel %vm597, %v1744, %v1743
        %v1746 = vrot.slane %v481, 5
        %v1747 = vsel %vm600, %v1746, %v1745
        %v1748 = vrot.slane %v485, 4
        %v1749 = vsel %vm603, %v1748, %v1747
        %v1750 = vrot.slane %v495, 3
        %v1751 = vsel %vm606, %v1750, %v1749
        %v1752 = vrot.slane %v500, 2
        %v1753 = vsel %vm609, %v1752, %v1751
        %v1754 = vrot.slane %v505, 1
        %v1755 = vsel %vm612, %v1754, %v1753
        %v1756 = vsel %vm615, %v510, %v1755
        %v1757 = vrot.slane %v514, 7
        %v1758 = vrot.slane %v518, 6
        %v1759 = vsel %vm597, %v1758, %v1757
        %v1760 = vrot.slane %v522, 5
        %v1761 = vsel %vm600, %v1760, %v1759
        %v1762 = vrot.slane %v526, 4
        %v1763 = vsel %vm603, %v1762, %v1761
        %v1764 = vrot.slane %v530, 3
        %v1765 = vsel %vm606, %v1764, %v1763
        %v1766 = vrot.slane %v534, 2
        %v1767 = vsel %vm609, %v1766, %v1765
        %v1768 = vrot.slane %v538, 1
        %v1769 = vsel %vm612, %v1768, %v1767
        %v1770 = vsel %vm615, %v542, %v1769
        %v1771 = vrot.slane %v548, 7
        %v1772 = vrot.slane %v553, 6
        %v1773 = vsel %vm597, %v1772, %v1771
        %v1774 = vrot.slane %v558, 5
        %v1775 = vsel %vm600, %v1774, %v1773
        %v1776 = vrot.slane %v563, 4
        %v1777 = vsel %vm603, %v1776, %v1775
        %v1778 = vrot.slane %v567, 3
        %v1779 = vsel %vm606, %v1778, %v1777
        %v1780 = vrot.slane %v571, 2
        %v1781 = vsel %vm609, %v1780, %v1779
        %v1782 = vrot.slane %v575, 1
        %v1783 = vsel %vm612, %v1782, %v1781
        %v1784 = vsel %vm615, %v579, %v1783
        %v1785 = vrot.slane %v583, 7
        %v1786 = vrot.slane %v587, 6
        %v1787 = vsel %vm597, %v1786, %v1785
        %v1788 = vrot.slane %v591, 5
        %v1789 = vsel %vm600, %v1788, %v1787
        %v1790 = vrot.slane %v595, 4
        %v1791 = vsel %vm603, %v1790, %v1789
        %1792 = vrot.lane.b32.xlu0 %v1742, 112
        %v1793 = vpop.permute.xlu0 %1792
        %1794 = vrot.lane.b32.xlu0 %v1756, 112
        %v1795 = vpop.permute.xlu0 %1794
        %1796 = vrot.lane.b32.xlu0 %v1770, 112
        %v1797 = vpop.permute.xlu0 %1796
        %1798 = vrot.lane.b32.xlu0 %v1784, 112
        %v1799 = vpop.permute.xlu0 %1798
        %1800 = vrot.lane.b32.xlu0 %v1791, 112
        %v1801 = vpop.permute.xlu0 %1800
        %vm1807 = vcmask 130048
        %v1808 = vsel %vm1807, %v616, %v732
        %v1809 = vsel %vm1807, %v630, %v734
        %v1810 = vsel %vm1807, %v644, %v736
        %v1811 = vsel %vm1807, %v658, %v738
        %v1812 = vsel %vm1807, %v664, %v740
        %vm1813 = vcmask 261120
        %v1814 = vsel %vm1813, %v1808, %v807
        %v1815 = vsel %vm1813, %v1809, %v809
        %v1816 = vsel %vm1813, %v1810, %v811
        %v1817 = vsel %vm1813, %v1811, %v813
        %v1818 = vsel %vm1813, %v1812, %v815
        %vm1819 = vcmask 392192
        %v1820 = vsel %vm1819, %v1814, %v882
        %v1821 = vsel %vm1819, %v1815, %v884
        %v1822 = vsel %vm1819, %v1816, %v886
        %v1823 = vsel %vm1819, %v1817, %v888
        %v1824 = vsel %vm1819, %v1818, %v890
        %vm1825 = vcmask 523264
        %v1826 = vsel %vm1825, %v1820, %v958
        %v1827 = vsel %vm1825, %v1821, %v960
        %v1828 = vsel %vm1825, %v1822, %v962
        %v1829 = vsel %vm1825, %v1823, %v964
        %v1830 = vsel %vm1825, %v1824, %v966
        %vm1831 = vcmask 654336
        %v1832 = vsel %vm1831, %v1826, %v1035
        %v1833 = vsel %vm1831, %v1827, %v1037
        %v1834 = vsel %vm1831, %v1828, %v1039
        %v1835 = vsel %vm1831, %v1829, %v1041
        %v1836 = vsel %vm1831, %v1830, %v1043
        %vm1837 = vcmask 785408
        %v1838 = vsel %vm1837, %v1832, %v1113
        %v1839 = vsel %vm1837, %v1833, %v1115
        %v1840 = vsel %vm1837, %v1834, %v1117
        %v1841 = vsel %vm1837, %v1835, %v1119
        %v1842 = vsel %vm1837, %v1836, %v1121
        %vm1843 = vcmask 916480
        %v1844 = vsel %vm1843, %v1838, %v1191
        %v1845 = vsel %vm1843, %v1839, %v1193
        %v1846 = vsel %vm1843, %v1840, %v1195
        %v1847 = vsel %vm1843, %v1841, %v1197
        %v1848 = vsel %vm1843, %v1842, %v1199
        %v1849 = vsel %vm1807, %v1218, %v1334
        %v1850 = vsel %vm1807, %v1232, %v1336
        %v1851 = vsel %vm1807, %v1246, %v1338
        %v1852 = vsel %vm1807, %v1260, %v1340
        %v1853 = vsel %vm1807, %v1266, %v1342
        %v1854 = vsel %vm1813, %v1849, %v1409
        %v1855 = vsel %vm1813, %v1850, %v1411
        %v1856 = vsel %vm1813, %v1851, %v1413
        %v1857 = vsel %vm1813, %v1852, %v1415
        %v1858 = vsel %vm1813, %v1853, %v1417
        %v1859 = vsel %vm1819, %v1854, %v1484
        %v1860 = vsel %vm1819, %v1855, %v1486
        %v1861 = vsel %vm1819, %v1856, %v1488
        %v1862 = vsel %vm1819, %v1857, %v1490
        %v1863 = vsel %vm1819, %v1858, %v1492
        %v1864 = vsel %vm1825, %v1859, %v1560
        %v1865 = vsel %vm1825, %v1860, %v1562
        %v1866 = vsel %vm1825, %v1861, %v1564
        %v1867 = vsel %vm1825, %v1862, %v1566
        %v1868 = vsel %vm1825, %v1863, %v1568
        %v1869 = vsel %vm1831, %v1864, %v1637
        %v1870 = vsel %vm1831, %v1865, %v1639
        %v1871 = vsel %vm1831, %v1866, %v1641
        %v1872 = vsel %vm1831, %v1867, %v1643
        %v1873 = vsel %vm1831, %v1868, %v1645
        %v1874 = vsel %vm1837, %v1869, %v1715
        %v1875 = vsel %vm1837, %v1870, %v1717
        %v1876 = vsel %vm1837, %v1871, %v1719
        %v1877 = vsel %vm1837, %v1872, %v1721
        %v1878 = vsel %vm1837, %v1873, %v1723
        %v1879 = vsel %vm1843, %v1874, %v1793
        %v1880 = vsel %vm1843, %v1875, %v1795
        %v1881 = vsel %vm1843, %v1876, %v1797
        %v1882 = vsel %vm1843, %v1877, %v1799
        %v1883 = vsel %vm1843, %v1878, %v1801
        %v1884 = vld [vmem:[%s1] sm:$0xff]
        %v1885 = vld [vmem:[%s1 + $0x8] sm:$0xff]
        %v1886 = vld [vmem:[%s2] sm:$0xff]
        %v1887 = vld [vmem:[%s2 + $0x8] sm:$0xff]
        %1889 = vset.pattern.permute.xlu0 0
        %1890 = vperm.xlu0 %1889, %v1886
        %v1891 = vpop.permute.xlu0 %1890
        %1894 = vset.pattern.permute.xlu0 0
        %1895 = vperm.xlu0 %1894, %v1887
        %v1896 = vpop.permute.xlu0 %1895
        %vm1898 = vcmask 293888
        %v1900 = vsel %vm1898, %v1884, 0
        %v1903 = vsel %vm1898, %v1885, 0
        %vm1905 = vcmask 1043456
        %v1907 = vsel %vm1905, %v1848, 0
        %v1910 = vsel %vm1905, %v1883, 0
        %1912 = vmatprep.subr.mxu0 %v1879
        %1913 = vmatpush1.msra.mxu0 %v1844
        %1914 = vmatprep.subr.mxu0 %v1880
        %1915 = vmatpush1.msra.mxu0 %v1845
        %1916 = vmatprep.subr.mxu0 %v1881
        %1917 = vmatpush1.msra.mxu0 %v1846
        %1918 = vmatprep.subr.mxu0 %v1882
        %1919 = vmatpush1.msra.mxu0 %v1847
        %1920 = vmatprep.subr.mxu0 %v1910
        %1921 = vmatpush1.msra.mxu0 %v1907
        %1922 = vmatprep.subr.mxu0 0.0
        %1923 = vmatpush1.msra.mxu0 0.0
        %1924 = vmatprep.subr.mxu0 0.0
        %1925 = vmatpush1.msra.mxu0 0.0
        %1926 = vmatprep.subr.mxu0 0.0
        %1927 = vmatpush1.msra.mxu0 0.0
        %1928 = vmatprep.subr.mxu0 0.0
        %1929 = vmatpush1.msra.mxu0 0.0
        %1930 = vmatprep.subr.mxu0 0.0
        %1931 = vmatpush1.msra.mxu0 0.0
        %1932 = vmatprep.subr.mxu0 0.0
        %1933 = vmatpush1.msra.mxu0 0.0
        %1934 = vmatprep.subr.mxu0 0.0
        %1935 = vmatpush1.msra.mxu0 0.0
        %1936 = vmatprep.subr.mxu0 0.0
        %1937 = vmatpush1.msra.mxu0 0.0
        %1938 = vmatprep.subr.mxu0 0.0
        %1939 = vmatpush1.msra.mxu0 0.0
        %1940 = vmatprep.subr.mxu0 0.0
        %1941 = vmatpush1.msra.mxu0 0.0
        %1942 = vmatprep.subr.mxu0 0.0
        %1943 = vmatpush1.msra.mxu0 0.0
        %1944 = vmatprep.subr.mxu0 0.0
        %1945 = vmatpush1.msra.mxu0 0.0
        %1946 = vmatprep.subr.mxu0 0.0
        %1947 = vmatpush1.msra.mxu0 0.0
        %1948 = vmatprep.subr.mxu0 0.0
        %1949 = vmatpush1.msra.mxu0 0.0
        %1950 = vmatprep.subr.mxu0 0.0
        %1951 = vmatpush1.msra.mxu0 0.0
        %1952 = vmatprep.subr.mxu0 0.0
        %1953 = vmatpush1.msra.mxu0 0.0
        %1954 = vmatprep.subr.mxu0 0.0
        %1955 = vmatpush1.msra.mxu0 0.0
        %1956 = vmatprep.subr.mxu0 0.0
        %1957 = vmatpush1.msra.mxu0 0.0
        %1958 = vmatprep.subr.mxu0 0.0
        %1959 = vmatpush1.msra.mxu0 0.0
        %1960 = vmatprep.subr.mxu0 0.0
        %1961 = vmatpush1.msra.mxu0 0.0
        %1962 = vmatprep.subr.mxu0 0.0
        %1963 = vmatpush1.msra.mxu0 0.0
        %1964 = vmatprep.subr.mxu0 0.0
        %1965 = vmatpush1.msra.mxu0 0.0
        %1966 = vmatprep.subr.mxu0 0.0
        %1967 = vmatpush1.msra.mxu0 0.0
        %1968 = vmatprep.subr.mxu0 0.0
        %1969 = vmatpush1.msra.mxu0 0.0
        %1970 = vmatprep.subr.mxu0 0.0
        %1971 = vmatpush1.msra.mxu0 0.0
        %1972 = vmatprep.subr.mxu0 0.0
        %1973 = vmatpush1.msra.mxu0 0.0
        %1974 = vmatprep.subr.mxu0 0.0
        %1975 = vmatpush1.msra.mxu0 0.0
        %1976 = vmatprep.mubr.f32.mxu0 0.0
        %1977 = vmatmul.mubr.f32.gmra.mrb[0].mxu0 %v1900
        %v1978 = vpop.f32.mrb[0].mxu0
        %v1979 = vadd.f32 %v1891, %v1978
        %v1980 = vpop.f32.mrb[0].mxu0
        %v1981 = vadd.f32 %v1891, %v1980
        %1982 = vmatprep.mubr.f32.mxu0 0.0
        %1983 = vmatmul.mubr.f32.gmra.mrb[0].mxu0 %v1903
        %v1984 = vpop.f32.mrb[0].mxu0
        %v1985 = vadd.f32 %v1896, %v1984
        %v1986 = vpop.f32.mrb[0].mxu0
        %v1987 = vadd.f32 %v1896, %v1986
        %1988 = vdwg.mxu0
        %v1989 = vmax.f32 %v1979, 0.0
        %v1990 = vmax.f32 %v1981, 0.0
        %v1991 = vmax.f32 %v1985, 0.0
        %v1992 = vmax.f32 %v1987, 0.0
        %v1995 = vcombine.high %v1989, %v1989
        %v1997 = vunpack.c.l.s4 1966171168
        %v1998 = vunpack.c.0.s8 %v1997
        %v1999 = vlaneseq
        %v2000 = vshrl.u32 %v1999, 7
        %v2001 = vsub.s32 %v1998, %v2000
        %v2002 = vrot.slane %v1989, %v2001
        %v2004 = vunpack.c.l.s4 1966171168
        %v2005 = vunpack.c.0.s8 %v2004
        %v2006 = vlaneseq
        %v2007 = vshrl.u32 %v2006, 7
        %v2008 = vsub.s32 %v2005, %v2007
        %v2009 = vrot.slane %v1995, %v2008
        %v2010 = vcombine.high %v2002, %v2002
        %v2011 = vcombine.high %v2009, %v2009
        %v2013 = vunpack.c.l.s4 1966171168
        %v2014 = vunpack.c.0.s8 %v2013
        %v2015 = vlaneseq
        %v2016 = vshrl.u32 %v2015, 7
        %v2017 = vsub.s32 %v2014, %v2016
        %v2018 = vrot.slane %v2002, %v2017
        %v2020 = vunpack.c.l.s4 1966171168
        %v2021 = vunpack.c.0.s8 %v2020
        %v2022 = vlaneseq
        %v2023 = vshrl.u32 %v2022, 7
        %v2024 = vsub.s32 %v2021, %v2023
        %v2025 = vrot.slane %v2009, %v2024
        %v2027 = vunpack.c.l.s4 1966171168
        %v2028 = vunpack.c.0.s8 %v2027
        %v2029 = vlaneseq
        %v2030 = vshrl.u32 %v2029, 7
        %v2031 = vsub.s32 %v2028, %v2030
        %v2032 = vrot.slane %v2010, %v2031
        %v2034 = vunpack.c.l.s4 1966171168
        %v2035 = vunpack.c.0.s8 %v2034
        %v2036 = vlaneseq
        %v2037 = vshrl.u32 %v2036, 7
        %v2038 = vsub.s32 %v2035, %v2037
        %v2039 = vrot.slane %v2011, %v2038
        %v2040 = vcombine.high %v2018, %v2018
        %v2041 = vcombine.high %v2025, %v2025
        %v2042 = vcombine.high %v2032, %v2032
        %v2043 = vcombine.high %v2039, %v2039
        %v2044 = vcombine.high %v1991, %v1991
        %v2046 = vunpack.c.l.s4 1966171168
        %v2047 = vunpack.c.0.s8 %v2046
        %v2048 = vlaneseq
        %v2049 = vshrl.u32 %v2048, 7
        %v2050 = vsub.s32 %v2047, %v2049
        %v2051 = vrot.slane %v1991, %v2050
        %v2053 = vunpack.c.l.s4 1966171168
        %v2054 = vunpack.c.0.s8 %v2053
        %v2055 = vlaneseq
        %v2056 = vshrl.u32 %v2055, 7
        %v2057 = vsub.s32 %v2054, %v2056
        %v2058 = vrot.slane %v2044, %v2057
        %v2059 = vcombine.high %v2051, %v2051
        %v2060 = vcombine.high %v2058, %v2058
        %v2062 = vunpack.c.l.s4 1966171168
        %v2063 = vunpack.c.0.s8 %v2062
        %v2064 = vlaneseq
        %v2065 = vshrl.u32 %v2064, 7
        %v2066 = vsub.s32 %v2063, %v2065
        %v2067 = vrot.slane %v2051, %v2066
        %v2069 = vunpack.c.l.s4 1966171168
        %v2070 = vunpack.c.0.s8 %v2069
        %v2071 = vlaneseq
        %v2072 = vshrl.u32 %v2071, 7
        %v2073 = vsub.s32 %v2070, %v2072
        %v2074 = vrot.slane %v2058, %v2073
        %v2076 = vunpack.c.l.s4 1966171168
        %v2077 = vunpack.c.0.s8 %v2076
        %v2078 = vlaneseq
        %v2079 = vshrl.u32 %v2078, 7
        %v2080 = vsub.s32 %v2077, %v2079
        %v2081 = vrot.slane %v2059, %v2080
        %v2083 = vunpack.c.l.s4 1966171168
        %v2084 = vunpack.c.0.s8 %v2083
        %v2085 = vlaneseq
        %v2086 = vshrl.u32 %v2085, 7
        %v2087 = vsub.s32 %v2084, %v2086
        %v2088 = vrot.slane %v2060, %v2087
        %v2089 = vcombine.high %v2067, %v2067
        %v2090 = vcombine.high %v2074, %v2074
        %v2091 = vcombine.high %v2081, %v2081
        %v2092 = vcombine.high %v2088, %v2088
        %v2111 = vcombine.high %v1990, %v1990
        %v2113 = vunpack.c.l.s4 1966171168
        %v2114 = vunpack.c.0.s8 %v2113
        %v2115 = vlaneseq
        %v2116 = vshrl.u32 %v2115, 7
        %v2117 = vsub.s32 %v2114, %v2116
        %v2118 = vrot.slane %v1990, %v2117
        %v2120 = vunpack.c.l.s4 1966171168
        %v2121 = vunpack.c.0.s8 %v2120
        %v2122 = vlaneseq
        %v2123 = vshrl.u32 %v2122, 7
        %v2124 = vsub.s32 %v2121, %v2123
        %v2125 = vrot.slane %v2111, %v2124
        %v2126 = vcombine.high %v2118, %v2118
        %v2127 = vcombine.high %v2125, %v2125
        %v2129 = vunpack.c.l.s4 1966171168
        %v2130 = vunpack.c.0.s8 %v2129
        %v2131 = vlaneseq
        %v2132 = vshrl.u32 %v2131, 7
        %v2133 = vsub.s32 %v2130, %v2132
        %v2134 = vrot.slane %v2118, %v2133
        %v2136 = vunpack.c.l.s4 1966171168
        %v2137 = vunpack.c.0.s8 %v2136
        %v2138 = vlaneseq
        %v2139 = vshrl.u32 %v2138, 7
        %v2140 = vsub.s32 %v2137, %v2139
        %v2141 = vrot.slane %v2125, %v2140
        %v2143 = vunpack.c.l.s4 1966171168
        %v2144 = vunpack.c.0.s8 %v2143
        %v2145 = vlaneseq
        %v2146 = vshrl.u32 %v2145, 7
        %v2147 = vsub.s32 %v2144, %v2146
        %v2148 = vrot.slane %v2126, %v2147
        %v2150 = vunpack.c.l.s4 1966171168
        %v2151 = vunpack.c.0.s8 %v2150
        %v2152 = vlaneseq
        %v2153 = vshrl.u32 %v2152, 7
        %v2154 = vsub.s32 %v2151, %v2153
        %v2155 = vrot.slane %v2127, %v2154
        %v2156 = vcombine.high %v2134, %v2134
        %v2157 = vcombine.high %v2141, %v2141
        %v2158 = vcombine.high %v2148, %v2148
        %v2159 = vcombine.high %v2155, %v2155
        %v2160 = vcombine.high %v1992, %v1992
        %v2162 = vunpack.c.l.s4 1966171168
        %v2163 = vunpack.c.0.s8 %v2162
        %v2164 = vlaneseq
        %v2165 = vshrl.u32 %v2164, 7
        %v2166 = vsub.s32 %v2163, %v2165
        %v2167 = vrot.slane %v1992, %v2166
        %v2169 = vunpack.c.l.s4 1966171168
        %v2170 = vunpack.c.0.s8 %v2169
        %v2171 = vlaneseq
        %v2172 = vshrl.u32 %v2171, 7
        %v2173 = vsub.s32 %v2170, %v2172
        %v2174 = vrot.slane %v2160, %v2173
        %v2175 = vcombine.high %v2167, %v2167
        %v2176 = vcombine.high %v2174, %v2174
        %v2178 = vunpack.c.l.s4 1966171168
        %v2179 = vunpack.c.0.s8 %v2178
        %v2180 = vlaneseq
        %v2181 = vshrl.u32 %v2180, 7
        %v2182 = vsub.s32 %v2179, %v2181
        %v2183 = vrot.slane %v2167, %v2182
        %v2185 = vunpack.c.l.s4 1966171168
        %v2186 = vunpack.c.0.s8 %v2185
        %v2187 = vlaneseq
        %v2188 = vshrl.u32 %v2187, 7
        %v2189 = vsub.s32 %v2186, %v2188
        %v2190 = vrot.slane %v2174, %v2189
        %v2192 = vunpack.c.l.s4 1966171168
        %v2193 = vunpack.c.0.s8 %v2192
        %v2194 = vlaneseq
        %v2195 = vshrl.u32 %v2194, 7
        %v2196 = vsub.s32 %v2193, %v2195
        %v2197 = vrot.slane %v2175, %v2196
        %v2199 = vunpack.c.l.s4 1966171168
        %v2200 = vunpack.c.0.s8 %v2199
        %v2201 = vlaneseq
        %v2202 = vshrl.u32 %v2201, 7
        %v2203 = vsub.s32 %v2200, %v2202
        %v2204 = vrot.slane %v2176, %v2203
        %v2205 = vcombine.high %v2183, %v2183
        %v2206 = vcombine.high %v2190, %v2190
        %v2207 = vcombine.high %v2197, %v2197
        %v2208 = vcombine.high %v2204, %v2204
        %v2225 = vlaneseq
        %v2226 = vshrl.u32 %v2225, 7
        %v2227 = vsub.s32 0, %v2226
        %v2228 = vrot.slane %v2018, %v2227
        %v2229 = vlaneseq
        %v2230 = vshrl.u32 %v2229, 7
        %v2231 = vsub.s32 0, %v2230
        %v2232 = vrot.slane %v2032, %v2231
        %v2233 = vlaneseq
        %v2234 = vshrl.u32 %v2233, 7
        %v2235 = vsub.s32 0, %v2234
        %v2236 = vrot.slane %v2040, %v2235
        %v2237 = vlaneseq
        %v2238 = vshrl.u32 %v2237, 7
        %v2239 = vsub.s32 0, %v2238
        %v2240 = vrot.slane %v2042, %v2239
        %v2241 = vlaneseq
        %v2242 = vshrl.u32 %v2241, 7
        %v2243 = vsub.s32 0, %v2242
        %v2244 = vrot.slane %v2025, %v2243
        %v2245 = vlaneseq
        %v2246 = vshrl.u32 %v2245, 7
        %v2247 = vsub.s32 0, %v2246
        %v2248 = vrot.slane %v2039, %v2247
        %v2249 = vlaneseq
        %v2250 = vshrl.u32 %v2249, 7
        %v2251 = vsub.s32 0, %v2250
        %v2252 = vrot.slane %v2041, %v2251
        %v2253 = vlaneseq
        %v2254 = vshrl.u32 %v2253, 7
        %v2255 = vsub.s32 0, %v2254
        %v2256 = vrot.slane %v2043, %v2255
        %v2257 = vlaneseq
        %v2258 = vshrl.u32 %v2257, 7
        %v2259 = vsub.s32 0, %v2258
        %v2260 = vrot.slane %v2067, %v2259
        %v2261 = vlaneseq
        %v2262 = vshrl.u32 %v2261, 7
        %v2263 = vsub.s32 0, %v2262
        %v2264 = vrot.slane %v2081, %v2263
        %v2265 = vlaneseq
        %v2266 = vshrl.u32 %v2265, 7
        %v2267 = vsub.s32 0, %v2266
        %v2268 = vrot.slane %v2089, %v2267
        %v2269 = vlaneseq
        %v2270 = vshrl.u32 %v2269, 7
        %v2271 = vsub.s32 0, %v2270
        %v2272 = vrot.slane %v2091, %v2271
        %v2273 = vlaneseq
        %v2274 = vshrl.u32 %v2273, 7
        %v2275 = vsub.s32 0, %v2274
        %v2276 = vrot.slane %v2074, %v2275
        %v2277 = vlaneseq
        %v2278 = vshrl.u32 %v2277, 7
        %v2279 = vsub.s32 0, %v2278
        %v2280 = vrot.slane %v2088, %v2279
        %v2281 = vlaneseq
        %v2282 = vshrl.u32 %v2281, 7
        %v2283 = vsub.s32 0, %v2282
        %v2284 = vrot.slane %v2090, %v2283
        %v2285 = vlaneseq
        %v2286 = vshrl.u32 %v2285, 7
        %v2287 = vsub.s32 0, %v2286
        %v2288 = vrot.slane %v2092, %v2287
        %2289 = vrot.lane.b32.xlu0 %v2228, 112
        %v2290 = vpop.permute.xlu0 %2289
        %2291 = vrot.lane.b32.xlu0 %v2232, 112
        %v2292 = vpop.permute.xlu0 %2291
        %2293 = vrot.lane.b32.xlu0 %v2236, 112
        %v2294 = vpop.permute.xlu0 %2293
        %2295 = vrot.lane.b32.xlu0 %v2240, 112
        %v2296 = vpop.permute.xlu0 %2295
        %2297 = vrot.lane.b32.xlu0 %v2244, 112
        %v2298 = vpop.permute.xlu0 %2297
        %2299 = vrot.lane.b32.xlu0 %v2248, 112
        %v2300 = vpop.permute.xlu0 %2299
        %2301 = vrot.lane.b32.xlu0 %v2252, 112
        %v2302 = vpop.permute.xlu0 %2301
        %2303 = vrot.lane.b32.xlu0 %v2256, 112
        %v2304 = vpop.permute.xlu0 %2303
        %2305 = vrot.lane.b32.xlu0 %v2260, 112
        %v2306 = vpop.permute.xlu0 %2305
        %2307 = vrot.lane.b32.xlu0 %v2264, 112
        %v2308 = vpop.permute.xlu0 %2307
        %2309 = vrot.lane.b32.xlu0 %v2268, 112
        %v2310 = vpop.permute.xlu0 %2309
        %2311 = vrot.lane.b32.xlu0 %v2272, 112
        %v2312 = vpop.permute.xlu0 %2311
        %2313 = vrot.lane.b32.xlu0 %v2276, 112
        %v2314 = vpop.permute.xlu0 %2313
        %2315 = vrot.lane.b32.xlu0 %v2280, 112
        %v2316 = vpop.permute.xlu0 %2315
        %2317 = vrot.lane.b32.xlu0 %v2284, 112
        %v2318 = vpop.permute.xlu0 %2317
        %2319 = vrot.lane.b32.xlu0 %v2288, 112
        %v2320 = vpop.permute.xlu0 %2319
        %2337 = vrot.lane.b32.xlu0 %v2228, 96
        %v2338 = vpop.permute.xlu0 %2337
        %2339 = vrot.lane.b32.xlu0 %v2232, 96
        %v2340 = vpop.permute.xlu0 %2339
        %2341 = vrot.lane.b32.xlu0 %v2236, 96
        %v2342 = vpop.permute.xlu0 %2341
        %2343 = vrot.lane.b32.xlu0 %v2240, 96
        %v2344 = vpop.permute.xlu0 %2343
        %2345 = vrot.lane.b32.xlu0 %v2244, 96
        %v2346 = vpop.permute.xlu0 %2345
        %2347 = vrot.lane.b32.xlu0 %v2248, 96
        %v2348 = vpop.permute.xlu0 %2347
        %2349 = vrot.lane.b32.xlu0 %v2252, 96
        %v2350 = vpop.permute.xlu0 %2349
        %2351 = vrot.lane.b32.xlu0 %v2256, 96
        %v2352 = vpop.permute.xlu0 %2351
        %2353 = vrot.lane.b32.xlu0 %v2260, 96
        %v2354 = vpop.permute.xlu0 %2353
        %2355 = vrot.lane.b32.xlu0 %v2264, 96
        %v2356 = vpop.permute.xlu0 %2355
        %2357 = vrot.lane.b32.xlu0 %v2268, 96
        %v2358 = vpop.permute.xlu0 %2357
        %2359 = vrot.lane.b32.xlu0 %v2272, 96
        %v2360 = vpop.permute.xlu0 %2359
        %2361 = vrot.lane.b32.xlu0 %v2276, 96
        %v2362 = vpop.permute.xlu0 %2361
        %2363 = vrot.lane.b32.xlu0 %v2280, 96
        %v2364 = vpop.permute.xlu0 %2363
        %2365 = vrot.lane.b32.xlu0 %v2284, 96
        %v2366 = vpop.permute.xlu0 %2365
        %2367 = vrot.lane.b32.xlu0 %v2288, 96
        %v2368 = vpop.permute.xlu0 %2367
        %2385 = vrot.lane.b32.xlu0 %v2228, 80
        %v2386 = vpop.permute.xlu0 %2385
        %2387 = vrot.lane.b32.xlu0 %v2232, 80
        %v2388 = vpop.permute.xlu0 %2387
        %2389 = vrot.lane.b32.xlu0 %v2236, 80
        %v2390 = vpop.permute.xlu0 %2389
        %2391 = vrot.lane.b32.xlu0 %v2240, 80
        %v2392 = vpop.permute.xlu0 %2391
        %2393 = vrot.lane.b32.xlu0 %v2244, 80
        %v2394 = vpop.permute.xlu0 %2393
        %2395 = vrot.lane.b32.xlu0 %v2248, 80
        %v2396 = vpop.permute.xlu0 %2395
        %2397 = vrot.lane.b32.xlu0 %v2252, 80
        %v2398 = vpop.permute.xlu0 %2397
        %2399 = vrot.lane.b32.xlu0 %v2256, 80
        %v2400 = vpop.permute.xlu0 %2399
        %2401 = vrot.lane.b32.xlu0 %v2260, 80
        %v2402 = vpop.permute.xlu0 %2401
        %2403 = vrot.lane.b32.xlu0 %v2264, 80
        %v2404 = vpop.permute.xlu0 %2403
        %2405 = vrot.lane.b32.xlu0 %v2268, 80
        %v2406 = vpop.permute.xlu0 %2405
        %2407 = vrot.lane.b32.xlu0 %v2272, 80
        %v2408 = vpop.permute.xlu0 %2407
        %2409 = vrot.lane.b32.xlu0 %v2276, 80
        %v2410 = vpop.permute.xlu0 %2409
        %2411 = vrot.lane.b32.xlu0 %v2280, 80
        %v2412 = vpop.permute.xlu0 %2411
        %2413 = vrot.lane.b32.xlu0 %v2284, 80
        %v2414 = vpop.permute.xlu0 %2413
        %2415 = vrot.lane.b32.xlu0 %v2288, 80
        %v2416 = vpop.permute.xlu0 %2415
        %2433 = vrot.lane.b32.xlu0 %v2228, 64
        %v2434 = vpop.permute.xlu0 %2433
        %2435 = vrot.lane.b32.xlu0 %v2232, 64
        %v2436 = vpop.permute.xlu0 %2435
        %2437 = vrot.lane.b32.xlu0 %v2236, 64
        %v2438 = vpop.permute.xlu0 %2437
        %2439 = vrot.lane.b32.xlu0 %v2240, 64
        %v2440 = vpop.permute.xlu0 %2439
        %2441 = vrot.lane.b32.xlu0 %v2244, 64
        %v2442 = vpop.permute.xlu0 %2441
        %2443 = vrot.lane.b32.xlu0 %v2248, 64
        %v2444 = vpop.permute.xlu0 %2443
        %2445 = vrot.lane.b32.xlu0 %v2252, 64
        %v2446 = vpop.permute.xlu0 %2445
        %2447 = vrot.lane.b32.xlu0 %v2256, 64
        %v2448 = vpop.permute.xlu0 %2447
        %2449 = vrot.lane.b32.xlu0 %v2260, 64
        %v2450 = vpop.permute.xlu0 %2449
        %2451 = vrot.lane.b32.xlu0 %v2264, 64
        %v2452 = vpop.permute.xlu0 %2451
        %2453 = vrot.lane.b32.xlu0 %v2268, 64
        %v2454 = vpop.permute.xlu0 %2453
        %2455 = vrot.lane.b32.xlu0 %v2272, 64
        %v2456 = vpop.permute.xlu0 %2455
        %2457 = vrot.lane.b32.xlu0 %v2276, 64
        %v2458 = vpop.permute.xlu0 %2457
        %2459 = vrot.lane.b32.xlu0 %v2280, 64
        %v2460 = vpop.permute.xlu0 %2459
        %2461 = vrot.lane.b32.xlu0 %v2284, 64
        %v2462 = vpop.permute.xlu0 %2461
        %2463 = vrot.lane.b32.xlu0 %v2288, 64
        %v2464 = vpop.permute.xlu0 %2463
        %2481 = vrot.lane.b32.xlu0 %v2228, 48
        %v2482 = vpop.permute.xlu0 %2481
        %2483 = vrot.lane.b32.xlu0 %v2232, 48
        %v2484 = vpop.permute.xlu0 %2483
        %2485 = vrot.lane.b32.xlu0 %v2236, 48
        %v2486 = vpop.permute.xlu0 %2485
        %2487 = vrot.lane.b32.xlu0 %v2240, 48
        %v2488 = vpop.permute.xlu0 %2487
        %2489 = vrot.lane.b32.xlu0 %v2244, 48
        %v2490 = vpop.permute.xlu0 %2489
        %2491 = vrot.lane.b32.xlu0 %v2248, 48
        %v2492 = vpop.permute.xlu0 %2491
        %2493 = vrot.lane.b32.xlu0 %v2252, 48
        %v2494 = vpop.permute.xlu0 %2493
        %2495 = vrot.lane.b32.xlu0 %v2256, 48
        %v2496 = vpop.permute.xlu0 %2495
        %2497 = vrot.lane.b32.xlu0 %v2260, 48
        %v2498 = vpop.permute.xlu0 %2497
        %2499 = vrot.lane.b32.xlu0 %v2264, 48
        %v2500 = vpop.permute.xlu0 %2499
        %2501 = vrot.lane.b32.xlu0 %v2268, 48
        %v2502 = vpop.permute.xlu0 %2501
        %2503 = vrot.lane.b32.xlu0 %v2272, 48
        %v2504 = vpop.permute.xlu0 %2503
        %2505 = vrot.lane.b32.xlu0 %v2276, 48
        %v2506 = vpop.permute.xlu0 %2505
        %2507 = vrot.lane.b32.xlu0 %v2280, 48
        %v2508 = vpop.permute.xlu0 %2507
        %2509 = vrot.lane.b32.xlu0 %v2284, 48
        %v2510 = vpop.permute.xlu0 %2509
        %2511 = vrot.lane.b32.xlu0 %v2288, 48
        %v2512 = vpop.permute.xlu0 %2511
        %2529 = vrot.lane.b32.xlu0 %v2228, 32
        %v2530 = vpop.permute.xlu0 %2529
        %2531 = vrot.lane.b32.xlu0 %v2232, 32
        %v2532 = vpop.permute.xlu0 %2531
        %2533 = vrot.lane.b32.xlu0 %v2236, 32
        %v2534 = vpop.permute.xlu0 %2533
        %2535 = vrot.lane.b32.xlu0 %v2240, 32
        %v2536 = vpop.permute.xlu0 %2535
        %2537 = vrot.lane.b32.xlu0 %v2244, 32
        %v2538 = vpop.permute.xlu0 %2537
        %2539 = vrot.lane.b32.xlu0 %v2248, 32
        %v2540 = vpop.permute.xlu0 %2539
        %2541 = vrot.lane.b32.xlu0 %v2252, 32
        %v2542 = vpop.permute.xlu0 %2541
        %2543 = vrot.lane.b32.xlu0 %v2256, 32
        %v2544 = vpop.permute.xlu0 %2543
        %2545 = vrot.lane.b32.xlu0 %v2260, 32
        %v2546 = vpop.permute.xlu0 %2545
        %2547 = vrot.lane.b32.xlu0 %v2264, 32
        %v2548 = vpop.permute.xlu0 %2547
        %2549 = vrot.lane.b32.xlu0 %v2268, 32
        %v2550 = vpop.permute.xlu0 %2549
        %2551 = vrot.lane.b32.xlu0 %v2272, 32
        %v2552 = vpop.permute.xlu0 %2551
        %2553 = vrot.lane.b32.xlu0 %v2276, 32
        %v2554 = vpop.permute.xlu0 %2553
        %2555 = vrot.lane.b32.xlu0 %v2280, 32
        %v2556 = vpop.permute.xlu0 %2555
        %2557 = vrot.lane.b32.xlu0 %v2284, 32
        %v2558 = vpop.permute.xlu0 %2557
        %2559 = vrot.lane.b32.xlu0 %v2288, 32
        %v2560 = vpop.permute.xlu0 %2559
        %2577 = vrot.lane.b32.xlu0 %v2228, 16
        %v2578 = vpop.permute.xlu0 %2577
        %2579 = vrot.lane.b32.xlu0 %v2232, 16
        %v2580 = vpop.permute.xlu0 %2579
        %2581 = vrot.lane.b32.xlu0 %v2236, 16
        %v2582 = vpop.permute.xlu0 %2581
        %2583 = vrot.lane.b32.xlu0 %v2240, 16
        %v2584 = vpop.permute.xlu0 %2583
        %2585 = vrot.lane.b32.xlu0 %v2244, 16
        %v2586 = vpop.permute.xlu0 %2585
        %2587 = vrot.lane.b32.xlu0 %v2248, 16
        %v2588 = vpop.permute.xlu0 %2587
        %2589 = vrot.lane.b32.xlu0 %v2252, 16
        %v2590 = vpop.permute.xlu0 %2589
        %2591 = vrot.lane.b32.xlu0 %v2256, 16
        %v2592 = vpop.permute.xlu0 %2591
        %2593 = vrot.lane.b32.xlu0 %v2260, 16
        %v2594 = vpop.permute.xlu0 %2593
        %2595 = vrot.lane.b32.xlu0 %v2264, 16
        %v2596 = vpop.permute.xlu0 %2595
        %2597 = vrot.lane.b32.xlu0 %v2268, 16
        %v2598 = vpop.permute.xlu0 %2597
        %2599 = vrot.lane.b32.xlu0 %v2272, 16
        %v2600 = vpop.permute.xlu0 %2599
        %2601 = vrot.lane.b32.xlu0 %v2276, 16
        %v2602 = vpop.permute.xlu0 %2601
        %2603 = vrot.lane.b32.xlu0 %v2280, 16
        %v2604 = vpop.permute.xlu0 %2603
        %2605 = vrot.lane.b32.xlu0 %v2284, 16
        %v2606 = vpop.permute.xlu0 %2605
        %2607 = vrot.lane.b32.xlu0 %v2288, 16
        %v2608 = vpop.permute.xlu0 %2607
        %v2625 = vlaneseq
        %v2626 = vshrl.u32 %v2625, 7
        %v2627 = vsub.s32 0, %v2626
        %v2628 = vrot.slane %v2134, %v2627
        %v2629 = vlaneseq
        %v2630 = vshrl.u32 %v2629, 7
        %v2631 = vsub.s32 0, %v2630
        %v2632 = vrot.slane %v2148, %v2631
        %v2633 = vlaneseq
        %v2634 = vshrl.u32 %v2633, 7
        %v2635 = vsub.s32 0, %v2634
        %v2636 = vrot.slane %v2156, %v2635
        %v2637 = vlaneseq
        %v2638 = vshrl.u32 %v2637, 7
        %v2639 = vsub.s32 0, %v2638
        %v2640 = vrot.slane %v2158, %v2639
        %v2641 = vlaneseq
        %v2642 = vshrl.u32 %v2641, 7
        %v2643 = vsub.s32 0, %v2642
        %v2644 = vrot.slane %v2141, %v2643
        %v2645 = vlaneseq
        %v2646 = vshrl.u32 %v2645, 7
        %v2647 = vsub.s32 0, %v2646
        %v2648 = vrot.slane %v2155, %v2647
        %v2649 = vlaneseq
        %v2650 = vshrl.u32 %v2649, 7
        %v2651 = vsub.s32 0, %v2650
        %v2652 = vrot.slane %v2157, %v2651
        %v2653 = vlaneseq
        %v2654 = vshrl.u32 %v2653, 7
        %v2655 = vsub.s32 0, %v2654
        %v2656 = vrot.slane %v2159, %v2655
        %v2657 = vlaneseq
        %v2658 = vshrl.u32 %v2657, 7
        %v2659 = vsub.s32 0, %v2658
        %v2660 = vrot.slane %v2183, %v2659
        %v2661 = vlaneseq
        %v2662 = vshrl.u32 %v2661, 7
        %v2663 = vsub.s32 0, %v2662
        %v2664 = vrot.slane %v2197, %v2663
        %v2665 = vlaneseq
        %v2666 = vshrl.u32 %v2665, 7
        %v2667 = vsub.s32 0, %v2666
        %v2668 = vrot.slane %v2205, %v2667
        %v2669 = vlaneseq
        %v2670 = vshrl.u32 %v2669, 7
        %v2671 = vsub.s32 0, %v2670
        %v2672 = vrot.slane %v2207, %v2671
        %v2673 = vlaneseq
        %v2674 = vshrl.u32 %v2673, 7
        %v2675 = vsub.s32 0, %v2674
        %v2676 = vrot.slane %v2190, %v2675
        %v2677 = vlaneseq
        %v2678 = vshrl.u32 %v2677, 7
        %v2679 = vsub.s32 0, %v2678
        %v2680 = vrot.slane %v2204, %v2679
        %v2681 = vlaneseq
        %v2682 = vshrl.u32 %v2681, 7
        %v2683 = vsub.s32 0, %v2682
        %v2684 = vrot.slane %v2206, %v2683
        %v2685 = vlaneseq
        %v2686 = vshrl.u32 %v2685, 7
        %v2687 = vsub.s32 0, %v2686
        %v2688 = vrot.slane %v2208, %v2687
        %2689 = vrot.lane.b32.xlu0 %v2628, 112
        %v2690 = vpop.permute.xlu0 %2689
        %2691 = vrot.lane.b32.xlu0 %v2632, 112
        %v2692 = vpop.permute.xlu0 %2691
        %2693 = vrot.lane.b32.xlu0 %v2636, 112
        %v2694 = vpop.permute.xlu0 %2693
        %2695 = vrot.lane.b32.xlu0 %v2640, 112
        %v2696 = vpop.permute.xlu0 %2695
        %2697 = vrot.lane.b32.xlu0 %v2644, 112
        %v2698 = vpop.permute.xlu0 %2697
        %2699 = vrot.lane.b32.xlu0 %v2648, 112
        %v2700 = vpop.permute.xlu0 %2699
        %2701 = vrot.lane.b32.xlu0 %v2652, 112
        %v2702 = vpop.permute.xlu0 %2701
        %2703 = vrot.lane.b32.xlu0 %v2656, 112
        %v2704 = vpop.permute.xlu0 %2703
        %2705 = vrot.lane.b32.xlu0 %v2660, 112
        %v2706 = vpop.permute.xlu0 %2705
        %2707 = vrot.lane.b32.xlu0 %v2664, 112
        %v2708 = vpop.permute.xlu0 %2707
        %2709 = vrot.lane.b32.xlu0 %v2668, 112
        %v2710 = vpop.permute.xlu0 %2709
        %2711 = vrot.lane.b32.xlu0 %v2672, 112
        %v2712 = vpop.permute.xlu0 %2711
        %2713 = vrot.lane.b32.xlu0 %v2676, 112
        %v2714 = vpop.permute.xlu0 %2713
        %2715 = vrot.lane.b32.xlu0 %v2680, 112
        %v2716 = vpop.permute.xlu0 %2715
        %2717 = vrot.lane.b32.xlu0 %v2684, 112
        %v2718 = vpop.permute.xlu0 %2717
        %2719 = vrot.lane.b32.xlu0 %v2688, 112
        %v2720 = vpop.permute.xlu0 %2719
        %2737 = vrot.lane.b32.xlu0 %v2628, 96
        %v2738 = vpop.permute.xlu0 %2737
        %2739 = vrot.lane.b32.xlu0 %v2632, 96
        %v2740 = vpop.permute.xlu0 %2739
        %2741 = vrot.lane.b32.xlu0 %v2636, 96
        %v2742 = vpop.permute.xlu0 %2741
        %2743 = vrot.lane.b32.xlu0 %v2640, 96
        %v2744 = vpop.permute.xlu0 %2743
        %2745 = vrot.lane.b32.xlu0 %v2644, 96
        %v2746 = vpop.permute.xlu0 %2745
        %2747 = vrot.lane.b32.xlu0 %v2648, 96
        %v2748 = vpop.permute.xlu0 %2747
        %2749 = vrot.lane.b32.xlu0 %v2652, 96
        %v2750 = vpop.permute.xlu0 %2749
        %2751 = vrot.lane.b32.xlu0 %v2656, 96
        %v2752 = vpop.permute.xlu0 %2751
        %2753 = vrot.lane.b32.xlu0 %v2660, 96
        %v2754 = vpop.permute.xlu0 %2753
        %2755 = vrot.lane.b32.xlu0 %v2664, 96
        %v2756 = vpop.permute.xlu0 %2755
        %2757 = vrot.lane.b32.xlu0 %v2668, 96
        %v2758 = vpop.permute.xlu0 %2757
        %2759 = vrot.lane.b32.xlu0 %v2672, 96
        %v2760 = vpop.permute.xlu0 %2759
        %2761 = vrot.lane.b32.xlu0 %v2676, 96
        %v2762 = vpop.permute.xlu0 %2761
        %2763 = vrot.lane.b32.xlu0 %v2680, 96
        %v2764 = vpop.permute.xlu0 %2763
        %2765 = vrot.lane.b32.xlu0 %v2684, 96
        %v2766 = vpop.permute.xlu0 %2765
        %2767 = vrot.lane.b32.xlu0 %v2688, 96
        %v2768 = vpop.permute.xlu0 %2767
        %2785 = vrot.lane.b32.xlu0 %v2628, 80
        %v2786 = vpop.permute.xlu0 %2785
        %2787 = vrot.lane.b32.xlu0 %v2632, 80
        %v2788 = vpop.permute.xlu0 %2787
        %2789 = vrot.lane.b32.xlu0 %v2636, 80
        %v2790 = vpop.permute.xlu0 %2789
        %2791 = vrot.lane.b32.xlu0 %v2640, 80
        %v2792 = vpop.permute.xlu0 %2791
        %2793 = vrot.lane.b32.xlu0 %v2644, 80
        %v2794 = vpop.permute.xlu0 %2793
        %2795 = vrot.lane.b32.xlu0 %v2648, 80
        %v2796 = vpop.permute.xlu0 %2795
        %2797 = vrot.lane.b32.xlu0 %v2652, 80
        %v2798 = vpop.permute.xlu0 %2797
        %2799 = vrot.lane.b32.xlu0 %v2656, 80
        %v2800 = vpop.permute.xlu0 %2799
        %2801 = vrot.lane.b32.xlu0 %v2660, 80
        %v2802 = vpop.permute.xlu0 %2801
        %2803 = vrot.lane.b32.xlu0 %v2664, 80
        %v2804 = vpop.permute.xlu0 %2803
        %2805 = vrot.lane.b32.xlu0 %v2668, 80
        %v2806 = vpop.permute.xlu0 %2805
        %2807 = vrot.lane.b32.xlu0 %v2672, 80
        %v2808 = vpop.permute.xlu0 %2807
        %2809 = vrot.lane.b32.xlu0 %v2676, 80
        %v2810 = vpop.permute.xlu0 %2809
        %2811 = vrot.lane.b32.xlu0 %v2680, 80
        %v2812 = vpop.permute.xlu0 %2811
        %2813 = vrot.lane.b32.xlu0 %v2684, 80
        %v2814 = vpop.permute.xlu0 %2813
        %2815 = vrot.lane.b32.xlu0 %v2688, 80
        %v2816 = vpop.permute.xlu0 %2815
        %2833 = vrot.lane.b32.xlu0 %v2628, 64
        %v2834 = vpop.permute.xlu0 %2833
        %2835 = vrot.lane.b32.xlu0 %v2632, 64
        %v2836 = vpop.permute.xlu0 %2835
        %2837 = vrot.lane.b32.xlu0 %v2636, 64
        %v2838 = vpop.permute.xlu0 %2837
        %2839 = vrot.lane.b32.xlu0 %v2640, 64
        %v2840 = vpop.permute.xlu0 %2839
        %2841 = vrot.lane.b32.xlu0 %v2644, 64
        %v2842 = vpop.permute.xlu0 %2841
        %2843 = vrot.lane.b32.xlu0 %v2648, 64
        %v2844 = vpop.permute.xlu0 %2843
        %2845 = vrot.lane.b32.xlu0 %v2652, 64
        %v2846 = vpop.permute.xlu0 %2845
        %2847 = vrot.lane.b32.xlu0 %v2656, 64
        %v2848 = vpop.permute.xlu0 %2847
        %2849 = vrot.lane.b32.xlu0 %v2660, 64
        %v2850 = vpop.permute.xlu0 %2849
        %2851 = vrot.lane.b32.xlu0 %v2664, 64
        %v2852 = vpop.permute.xlu0 %2851
        %2853 = vrot.lane.b32.xlu0 %v2668, 64
        %v2854 = vpop.permute.xlu0 %2853
        %2855 = vrot.lane.b32.xlu0 %v2672, 64
        %v2856 = vpop.permute.xlu0 %2855
        %2857 = vrot.lane.b32.xlu0 %v2676, 64
        %v2858 = vpop.permute.xlu0 %2857
        %2859 = vrot.lane.b32.xlu0 %v2680, 64
        %v2860 = vpop.permute.xlu0 %2859
        %2861 = vrot.lane.b32.xlu0 %v2684, 64
        %v2862 = vpop.permute.xlu0 %2861
        %2863 = vrot.lane.b32.xlu0 %v2688, 64
        %v2864 = vpop.permute.xlu0 %2863
        %2881 = vrot.lane.b32.xlu0 %v2628, 48
        %v2882 = vpop.permute.xlu0 %2881
        %2883 = vrot.lane.b32.xlu0 %v2632, 48
        %v2884 = vpop.permute.xlu0 %2883
        %2885 = vrot.lane.b32.xlu0 %v2636, 48
        %v2886 = vpop.permute.xlu0 %2885
        %2887 = vrot.lane.b32.xlu0 %v2640, 48
        %v2888 = vpop.permute.xlu0 %2887
        %2889 = vrot.lane.b32.xlu0 %v2644, 48
        %v2890 = vpop.permute.xlu0 %2889
        %2891 = vrot.lane.b32.xlu0 %v2648, 48
        %v2892 = vpop.permute.xlu0 %2891
        %2893 = vrot.lane.b32.xlu0 %v2652, 48
        %v2894 = vpop.permute.xlu0 %2893
        %2895 = vrot.lane.b32.xlu0 %v2656, 48
        %v2896 = vpop.permute.xlu0 %2895
        %2897 = vrot.lane.b32.xlu0 %v2660, 48
        %v2898 = vpop.permute.xlu0 %2897
        %2899 = vrot.lane.b32.xlu0 %v2664, 48
        %v2900 = vpop.permute.xlu0 %2899
        %2901 = vrot.lane.b32.xlu0 %v2668, 48
        %v2902 = vpop.permute.xlu0 %2901
        %2903 = vrot.lane.b32.xlu0 %v2672, 48
        %v2904 = vpop.permute.xlu0 %2903
        %2905 = vrot.lane.b32.xlu0 %v2676, 48
        %v2906 = vpop.permute.xlu0 %2905
        %2907 = vrot.lane.b32.xlu0 %v2680, 48
        %v2908 = vpop.permute.xlu0 %2907
        %2909 = vrot.lane.b32.xlu0 %v2684, 48
        %v2910 = vpop.permute.xlu0 %2909
        %2911 = vrot.lane.b32.xlu0 %v2688, 48
        %v2912 = vpop.permute.xlu0 %2911
        %2929 = vrot.lane.b32.xlu0 %v2628, 32
        %v2930 = vpop.permute.xlu0 %2929
        %2931 = vrot.lane.b32.xlu0 %v2632, 32
        %v2932 = vpop.permute.xlu0 %2931
        %2933 = vrot.lane.b32.xlu0 %v2636, 32
        %v2934 = vpop.permute.xlu0 %2933
        %2935 = vrot.lane.b32.xlu0 %v2640, 32
        %v2936 = vpop.permute.xlu0 %2935
        %2937 = vrot.lane.b32.xlu0 %v2644, 32
        %v2938 = vpop.permute.xlu0 %2937
        %2939 = vrot.lane.b32.xlu0 %v2648, 32
        %v2940 = vpop.permute.xlu0 %2939
        %2941 = vrot.lane.b32.xlu0 %v2652, 32
        %v2942 = vpop.permute.xlu0 %2941
        %2943 = vrot.lane.b32.xlu0 %v2656, 32
        %v2944 = vpop.permute.xlu0 %2943
        %2945 = vrot.lane.b32.xlu0 %v2660, 32
        %v2946 = vpop.permute.xlu0 %2945
        %2947 = vrot.lane.b32.xlu0 %v2664, 32
        %v2948 = vpop.permute.xlu0 %2947
        %2949 = vrot.lane.b32.xlu0 %v2668, 32
        %v2950 = vpop.permute.xlu0 %2949
        %2951 = vrot.lane.b32.xlu0 %v2672, 32
        %v2952 = vpop.permute.xlu0 %2951
        %2953 = vrot.lane.b32.xlu0 %v2676, 32
        %v2954 = vpop.permute.xlu0 %2953
        %2955 = vrot.lane.b32.xlu0 %v2680, 32
        %v2956 = vpop.permute.xlu0 %2955
        %2957 = vrot.lane.b32.xlu0 %v2684, 32
        %v2958 = vpop.permute.xlu0 %2957
        %2959 = vrot.lane.b32.xlu0 %v2688, 32
        %v2960 = vpop.permute.xlu0 %2959
        %2977 = vrot.lane.b32.xlu0 %v2628, 16
        %v2978 = vpop.permute.xlu0 %2977
        %2979 = vrot.lane.b32.xlu0 %v2632, 16
        %v2980 = vpop.permute.xlu0 %2979
        %2981 = vrot.lane.b32.xlu0 %v2636, 16
        %v2982 = vpop.permute.xlu0 %2981
        %2983 = vrot.lane.b32.xlu0 %v2640, 16
        %v2984 = vpop.permute.xlu0 %2983
        %2985 = vrot.lane.b32.xlu0 %v2644, 16
        %v2986 = vpop.permute.xlu0 %2985
        %2987 = vrot.lane.b32.xlu0 %v2648, 16
        %v2988 = vpop.permute.xlu0 %2987
        %2989 = vrot.lane.b32.xlu0 %v2652, 16
        %v2990 = vpop.permute.xlu0 %2989
        %2991 = vrot.lane.b32.xlu0 %v2656, 16
        %v2992 = vpop.permute.xlu0 %2991
        %2993 = vrot.lane.b32.xlu0 %v2660, 16
        %v2994 = vpop.permute.xlu0 %2993
        %2995 = vrot.lane.b32.xlu0 %v2664, 16
        %v2996 = vpop.permute.xlu0 %2995
        %2997 = vrot.lane.b32.xlu0 %v2668, 16
        %v2998 = vpop.permute.xlu0 %2997
        %2999 = vrot.lane.b32.xlu0 %v2672, 16
        %v3000 = vpop.permute.xlu0 %2999
        %3001 = vrot.lane.b32.xlu0 %v2676, 16
        %v3002 = vpop.permute.xlu0 %3001
        %3003 = vrot.lane.b32.xlu0 %v2680, 16
        %v3004 = vpop.permute.xlu0 %3003
        %3005 = vrot.lane.b32.xlu0 %v2684, 16
        %v3006 = vpop.permute.xlu0 %3005
        %3007 = vrot.lane.b32.xlu0 %v2688, 16
        %v3008 = vpop.permute.xlu0 %3007
        %v3025 = vsel %vm267, %v2018, %v2290
        %v3026 = vsel %vm267, %v2032, %v2292
        %v3027 = vsel %vm267, %v2040, %v2294
        %v3028 = vsel %vm267, %v2042, %v2296
        %v3029 = vsel %vm267, %v2025, %v2298
        %v3030 = vsel %vm267, %v2039, %v2300
        %v3031 = vsel %vm267, %v2041, %v2302
        %v3032 = vsel %vm267, %v2043, %v2304
        %v3033 = vsel %vm267, %v2067, %v2306
        %v3034 = vsel %vm267, %v2081, %v2308
        %v3035 = vsel %vm267, %v2089, %v2310
        %v3036 = vsel %vm267, %v2091, %v2312
        %v3037 = vsel %vm267, %v2074, %v2314
        %v3038 = vsel %vm267, %v2088, %v2316
        %v3039 = vsel %vm267, %v2090, %v2318
        %v3040 = vsel %vm267, %v2092, %v2320
        %vm3041 = vcmask 1041408
        %v3042 = vsel %vm3041, %v3025, %v2338
        %v3043 = vsel %vm3041, %v3026, %v2340
        %v3044 = vsel %vm3041, %v3027, %v2342
        %v3045 = vsel %vm3041, %v3028, %v2344
        %v3046 = vsel %vm3041, %v3029, %v2346
        %v3047 = vsel %vm3041, %v3030, %v2348
        %v3048 = vsel %vm3041, %v3031, %v2350
        %v3049 = vsel %vm3041, %v3032, %v2352
        %v3050 = vsel %vm3041, %v3033, %v2354
        %v3051 = vsel %vm3041, %v3034, %v2356
        %v3052 = vsel %vm3041, %v3035, %v2358
        %v3053 = vsel %vm3041, %v3036, %v2360
        %v3054 = vsel %vm3041, %v3037, %v2362
        %v3055 = vsel %vm3041, %v3038, %v2364
        %v3056 = vsel %vm3041, %v3039, %v2366
        %v3057 = vsel %vm3041, %v3040, %v2368
        %vm3058 = vcmask 1042432
        %v3059 = vsel %vm3058, %v3042, %v2386
        %v3060 = vsel %vm3058, %v3043, %v2388
        %v3061 = vsel %vm3058, %v3044, %v2390
        %v3062 = vsel %vm3058, %v3045, %v2392
        %v3063 = vsel %vm3058, %v3046, %v2394
        %v3064 = vsel %vm3058, %v3047, %v2396
        %v3065 = vsel %vm3058, %v3048, %v2398
        %v3066 = vsel %vm3058, %v3049, %v2400
        %v3067 = vsel %vm3058, %v3050, %v2402
        %v3068 = vsel %vm3058, %v3051, %v2404
        %v3069 = vsel %vm3058, %v3052, %v2406
        %v3070 = vsel %vm3058, %v3053, %v2408
        %v3071 = vsel %vm3058, %v3054, %v2410
        %v3072 = vsel %vm3058, %v3055, %v2412
        %v3073 = vsel %vm3058, %v3056, %v2414
        %v3074 = vsel %vm3058, %v3057, %v2416
        %v3075 = vsel %vm1905, %v3059, %v2434
        %v3076 = vsel %vm1905, %v3060, %v2436
        %v3077 = vsel %vm1905, %v3061, %v2438
        %v3078 = vsel %vm1905, %v3062, %v2440
        %v3079 = vsel %vm1905, %v3063, %v2442
        %v3080 = vsel %vm1905, %v3064, %v2444
        %v3081 = vsel %vm1905, %v3065, %v2446
        %v3082 = vsel %vm1905, %v3066, %v2448
        %v3083 = vsel %vm1905, %v3067, %v2450
        %v3084 = vsel %vm1905, %v3068, %v2452
        %v3085 = vsel %vm1905, %v3069, %v2454
        %v3086 = vsel %vm1905, %v3070, %v2456
        %v3087 = vsel %vm1905, %v3071, %v2458
        %v3088 = vsel %vm1905, %v3072, %v2460
        %v3089 = vsel %vm1905, %v3073, %v2462
        %v3090 = vsel %vm1905, %v3074, %v2464
        %vm3091 = vcmask 1044480
        %v3092 = vsel %vm3091, %v3075, %v2482
        %v3093 = vsel %vm3091, %v3076, %v2484
        %v3094 = vsel %vm3091, %v3077, %v2486
        %v3095 = vsel %vm3091, %v3078, %v2488
        %v3096 = vsel %vm3091, %v3079, %v2490
        %v3097 = vsel %vm3091, %v3080, %v2492
        %v3098 = vsel %vm3091, %v3081, %v2494
        %v3099 = vsel %vm3091, %v3082, %v2496
        %v3100 = vsel %vm3091, %v3083, %v2498
        %v3101 = vsel %vm3091, %v3084, %v2500
        %v3102 = vsel %vm3091, %v3085, %v2502
        %v3103 = vsel %vm3091, %v3086, %v2504
        %v3104 = vsel %vm3091, %v3087, %v2506
        %v3105 = vsel %vm3091, %v3088, %v2508
        %v3106 = vsel %vm3091, %v3089, %v2510
        %v3107 = vsel %vm3091, %v3090, %v2512
        %v3108 = vsel %vm543, %v3092, %v2530
        %v3109 = vsel %vm543, %v3093, %v2532
        %v3110 = vsel %vm543, %v3094, %v2534
        %v3111 = vsel %vm543, %v3095, %v2536
        %v3112 = vsel %vm543, %v3096, %v2538
        %v3113 = vsel %vm543, %v3097, %v2540
        %v3114 = vsel %vm543, %v3098, %v2542
        %v3115 = vsel %vm543, %v3099, %v2544
        %v3116 = vsel %vm543, %v3100, %v2546
        %v3117 = vsel %vm543, %v3101, %v2548
        %v3118 = vsel %vm543, %v3102, %v2550
        %v3119 = vsel %vm543, %v3103, %v2552
        %v3120 = vsel %vm543, %v3104, %v2554
        %v3121 = vsel %vm543, %v3105, %v2556
        %v3122 = vsel %vm543, %v3106, %v2558
        %v3123 = vsel %vm543, %v3107, %v2560
        %v3124 = vsel %vm490, %v3108, %v2578
        %v3125 = vsel %vm490, %v3109, %v2580
        %v3126 = vsel %vm490, %v3110, %v2582
        %v3127 = vsel %vm490, %v3111, %v2584
        %v3128 = vsel %vm490, %v3112, %v2586
        %v3129 = vsel %vm490, %v3113, %v2588
        %v3130 = vsel %vm490, %v3114, %v2590
        %v3131 = vsel %vm490, %v3115, %v2592
        %v3132 = vsel %vm490, %v3116, %v2594
        %v3133 = vsel %vm490, %v3117, %v2596
        %v3134 = vsel %vm490, %v3118, %v2598
        %v3135 = vsel %vm490, %v3119, %v2600
        %v3136 = vsel %vm490, %v3120, %v2602
        %v3137 = vsel %vm490, %v3121, %v2604
        %v3138 = vsel %vm490, %v3122, %v2606
        %v3139 = vsel %vm490, %v3123, %v2608
        %v3140 = vsel %vm267, %v2134, %v2690
        %v3141 = vsel %vm267, %v2148, %v2692
        %v3142 = vsel %vm267, %v2156, %v2694
        %v3143 = vsel %vm267, %v2158, %v2696
        %v3144 = vsel %vm267, %v2141, %v2698
        %v3145 = vsel %vm267, %v2155, %v2700
        %v3146 = vsel %vm267, %v2157, %v2702
        %v3147 = vsel %vm267, %v2159, %v2704
        %v3148 = vsel %vm267, %v2183, %v2706
        %v3149 = vsel %vm267, %v2197, %v2708
        %v3150 = vsel %vm267, %v2205, %v2710
        %v3151 = vsel %vm267, %v2207, %v2712
        %v3152 = vsel %vm267, %v2190, %v2714
        %v3153 = vsel %vm267, %v2204, %v2716
        %v3154 = vsel %vm267, %v2206, %v2718
        %v3155 = vsel %vm267, %v2208, %v2720
        %v3156 = vsel %vm3041, %v3140, %v2738
        %v3157 = vsel %vm3041, %v3141, %v2740
        %v3158 = vsel %vm3041, %v3142, %v2742
        %v3159 = vsel %vm3041, %v3143, %v2744
        %v3160 = vsel %vm3041, %v3144, %v2746
        %v3161 = vsel %vm3041, %v3145, %v2748
        %v3162 = vsel %vm3041, %v3146, %v2750
        %v3163 = vsel %vm3041, %v3147, %v2752
        %v3164 = vsel %vm3041, %v3148, %v2754
        %v3165 = vsel %vm3041, %v3149, %v2756
        %v3166 = vsel %vm3041, %v3150, %v2758
        %v3167 = vsel %vm3041, %v3151, %v2760
        %v3168 = vsel %vm3041, %v3152, %v2762
        %v3169 = vsel %vm3041, %v3153, %v2764
        %v3170 = vsel %vm3041, %v3154, %v2766
        %v3171 = vsel %vm3041, %v3155, %v2768
        %v3172 = vsel %vm3058, %v3156, %v2786
        %v3173 = vsel %vm3058, %v3157, %v2788
        %v3174 = vsel %vm3058, %v3158, %v2790
        %v3175 = vsel %vm3058, %v3159, %v2792
        %v3176 = vsel %vm3058, %v3160, %v2794
        %v3177 = vsel %vm3058, %v3161, %v2796
        %v3178 = vsel %vm3058, %v3162, %v2798
        %v3179 = vsel %vm3058, %v3163, %v2800
        %v3180 = vsel %vm3058, %v3164, %v2802
        %v3181 = vsel %vm3058, %v3165, %v2804
        %v3182 = vsel %vm3058, %v3166, %v2806
        %v3183 = vsel %vm3058, %v3167, %v2808
        %v3184 = vsel %vm3058, %v3168, %v2810
        %v3185 = vsel %vm3058, %v3169, %v2812
        %v3186 = vsel %vm3058, %v3170, %v2814
        %v3187 = vsel %vm3058, %v3171, %v2816
        %v3188 = vsel %vm1905, %v3172, %v2834
        %v3189 = vsel %vm1905, %v3173, %v2836
        %v3190 = vsel %vm1905, %v3174, %v2838
        %v3191 = vsel %vm1905, %v3175, %v2840
        %v3192 = vsel %vm1905, %v3176, %v2842
        %v3193 = vsel %vm1905, %v3177, %v2844
        %v3194 = vsel %vm1905, %v3178, %v2846
        %v3195 = vsel %vm1905, %v3179, %v2848
        %v3196 = vsel %vm1905, %v3180, %v2850
        %v3197 = vsel %vm1905, %v3181, %v2852
        %v3198 = vsel %vm1905, %v3182, %v2854
        %v3199 = vsel %vm1905, %v3183, %v2856
        %v3200 = vsel %vm1905, %v3184, %v2858
        %v3201 = vsel %vm1905, %v3185, %v2860
        %v3202 = vsel %vm1905, %v3186, %v2862
        %v3203 = vsel %vm1905, %v3187, %v2864
        %v3204 = vsel %vm3091, %v3188, %v2882
        %v3205 = vsel %vm3091, %v3189, %v2884
        %v3206 = vsel %vm3091, %v3190, %v2886
        %v3207 = vsel %vm3091, %v3191, %v2888
        %v3208 = vsel %vm3091, %v3192, %v2890
        %v3209 = vsel %vm3091, %v3193, %v2892
        %v3210 = vsel %vm3091, %v3194, %v2894
        %v3211 = vsel %vm3091, %v3195, %v2896
        %v3212 = vsel %vm3091, %v3196, %v2898
        %v3213 = vsel %vm3091, %v3197, %v2900
        %v3214 = vsel %vm3091, %v3198, %v2902
        %v3215 = vsel %vm3091, %v3199, %v2904
        %v3216 = vsel %vm3091, %v3200, %v2906
        %v3217 = vsel %vm3091, %v3201, %v2908
        %v3218 = vsel %vm3091, %v3202, %v2910
        %v3219 = vsel %vm3091, %v3203, %v2912
        %v3220 = vsel %vm543, %v3204, %v2930
        %v3221 = vsel %vm543, %v3205, %v2932
        %v3222 = vsel %vm543, %v3206, %v2934
        %v3223 = vsel %vm543, %v3207, %v2936
        %v3224 = vsel %vm543, %v3208, %v2938
        %v3225 = vsel %vm543, %v3209, %v2940
        %v3226 = vsel %vm543, %v3210, %v2942
        %v3227 = vsel %vm543, %v3211, %v2944
        %v3228 = vsel %vm543, %v3212, %v2946
        %v3229 = vsel %vm543, %v3213, %v2948
        %v3230 = vsel %vm543, %v3214, %v2950
        %v3231 = vsel %vm543, %v3215, %v2952
        %v3232 = vsel %vm543, %v3216, %v2954
        %v3233 = vsel %vm543, %v3217, %v2956
        %v3234 = vsel %vm543, %v3218, %v2958
        %v3235 = vsel %vm543, %v3219, %v2960
        %v3236 = vsel %vm490, %v3220, %v2978
        %v3237 = vsel %vm490, %v3221, %v2980
        %v3238 = vsel %vm490, %v3222, %v2982
        %v3239 = vsel %vm490, %v3223, %v2984
        %v3240 = vsel %vm490, %v3224, %v2986
        %v3241 = vsel %vm490, %v3225, %v2988
        %v3242 = vsel %vm490, %v3226, %v2990
        %v3243 = vsel %vm490, %v3227, %v2992
        %v3244 = vsel %vm490, %v3228, %v2994
        %v3245 = vsel %vm490, %v3229, %v2996
        %v3246 = vsel %vm490, %v3230, %v2998
        %v3247 = vsel %vm490, %v3231, %v3000
        %v3248 = vsel %vm490, %v3232, %v3002
        %v3249 = vsel %vm490, %v3233, %v3004
        %v3250 = vsel %vm490, %v3234, %v3006
        %v3251 = vsel %vm490, %v3235, %v3008
        %v3268 = vrot.slane %v3124, 1
        %v3269 = vrot.slane %v3125, 1
        %v3270 = vrot.slane %v3126, 1
        %v3271 = vrot.slane %v3127, 1
        %v3272 = vrot.slane %v3128, 1
        %v3273 = vrot.slane %v3129, 1
        %v3274 = vrot.slane %v3130, 1
        %v3275 = vrot.slane %v3131, 1
        %v3276 = vrot.slane %v3132, 1
        %v3277 = vrot.slane %v3133, 1
        %v3278 = vrot.slane %v3134, 1
        %v3279 = vrot.slane %v3135, 1
        %v3280 = vrot.slane %v3136, 1
        %v3281 = vrot.slane %v3137, 1
        %v3282 = vrot.slane %v3138, 1
        %v3283 = vrot.slane %v3139, 1
        %v3316 = vrot.slane %v3124, 7
        %v3317 = vrot.slane %v3236, 7
        %v3318 = vsel %vm267, %v3316, %v3317
        %v3319 = vrot.slane %v3125, 7
        %v3320 = vrot.slane %v3237, 7
        %v3321 = vsel %vm267, %v3319, %v3320
        %v3322 = vrot.slane %v3126, 7
        %v3323 = vrot.slane %v3238, 7
        %v3324 = vsel %vm267, %v3322, %v3323
        %v3325 = vrot.slane %v3127, 7
        %v3326 = vrot.slane %v3239, 7
        %v3327 = vsel %vm267, %v3325, %v3326
        %v3328 = vrot.slane %v3128, 7
        %v3329 = vrot.slane %v3240, 7
        %v3330 = vsel %vm267, %v3328, %v3329
        %v3331 = vrot.slane %v3129, 7
        %v3332 = vrot.slane %v3241, 7
        %v3333 = vsel %vm267, %v3331, %v3332
        %v3334 = vrot.slane %v3130, 7
        %v3335 = vrot.slane %v3242, 7
        %v3336 = vsel %vm267, %v3334, %v3335
        %v3337 = vrot.slane %v3131, 7
        %v3338 = vrot.slane %v3243, 7
        %v3339 = vsel %vm267, %v3337, %v3338
        %v3340 = vrot.slane %v3132, 7
        %v3341 = vrot.slane %v3244, 7
        %v3342 = vsel %vm267, %v3340, %v3341
        %v3343 = vrot.slane %v3133, 7
        %v3344 = vrot.slane %v3245, 7
        %v3345 = vsel %vm267, %v3343, %v3344
        %v3346 = vrot.slane %v3134, 7
        %v3347 = vrot.slane %v3246, 7
        %v3348 = vsel %vm267, %v3346, %v3347
        %v3349 = vrot.slane %v3135, 7
        %v3350 = vrot.slane %v3247, 7
        %v3351 = vsel %vm267, %v3349, %v3350
        %v3352 = vrot.slane %v3136, 7
        %v3353 = vrot.slane %v3248, 7
        %v3354 = vsel %vm267, %v3352, %v3353
        %v3355 = vrot.slane %v3137, 7
        %v3356 = vrot.slane %v3249, 7
        %v3357 = vsel %vm267, %v3355, %v3356
        %v3358 = vrot.slane %v3138, 7
        %v3359 = vrot.slane %v3250, 7
        %v3360 = vsel %vm267, %v3358, %v3359
        %v3361 = vrot.slane %v3139, 7
        %v3362 = vrot.slane %v3251, 7
        %v3363 = vsel %vm267, %v3361, %v3362
        %v3396 = vrot.slane %v3236, 5
        %v3397 = vrot.slane %v3237, 5
        %v3398 = vrot.slane %v3238, 5
        %v3399 = vrot.slane %v3239, 5
        %v3400 = vrot.slane %v3240, 5
        %v3401 = vrot.slane %v3241, 5
        %v3402 = vrot.slane %v3242, 5
        %v3403 = vrot.slane %v3243, 5
        %v3404 = vrot.slane %v3244, 5
        %v3405 = vrot.slane %v3245, 5
        %v3406 = vrot.slane %v3246, 5
        %v3407 = vrot.slane %v3247, 5
        %v3408 = vrot.slane %v3248, 5
        %v3409 = vrot.slane %v3249, 5
        %v3410 = vrot.slane %v3250, 5
        %v3411 = vrot.slane %v3251, 5
        %v3428 = vsel %vm267, %v3268, %v3316
        %v3429 = vsel %vm267, %v3269, %v3319
        %v3430 = vsel %vm267, %v3270, %v3322
        %v3431 = vsel %vm267, %v3271, %v3325
        %v3432 = vsel %vm267, %v3272, %v3328
        %v3433 = vsel %vm267, %v3273, %v3331
        %v3434 = vsel %vm267, %v3274, %v3334
        %v3435 = vsel %vm267, %v3275, %v3337
        %v3436 = vsel %vm267, %v3276, %v3340
        %v3437 = vsel %vm267, %v3277, %v3343
        %v3438 = vsel %vm267, %v3278, %v3346
        %v3439 = vsel %vm267, %v3279, %v3349
        %v3440 = vsel %vm267, %v3280, %v3352
        %v3441 = vsel %vm267, %v3281, %v3355
        %v3442 = vsel %vm267, %v3282, %v3358
        %v3443 = vsel %vm267, %v3283, %v3361
        %v3444 = vsel %vm267, %v3317, %v3396
        %v3445 = vsel %vm267, %v3320, %v3397
        %v3446 = vsel %vm267, %v3323, %v3398
        %v3447 = vsel %vm267, %v3326, %v3399
        %v3448 = vsel %vm267, %v3329, %v3400
        %v3449 = vsel %vm267, %v3332, %v3401
        %v3450 = vsel %vm267, %v3335, %v3402
        %v3451 = vsel %vm267, %v3338, %v3403
        %v3452 = vsel %vm267, %v3341, %v3404
        %v3453 = vsel %vm267, %v3344, %v3405
        %v3454 = vsel %vm267, %v3347, %v3406
        %v3455 = vsel %vm267, %v3350, %v3407
        %v3456 = vsel %vm267, %v3353, %v3408
        %v3457 = vsel %vm267, %v3356, %v3409
        %v3458 = vsel %vm267, %v3359, %v3410
        %v3459 = vsel %vm267, %v3362, %v3411
        %3492 = vrot.lane.b32.xlu0 %v3428, 127
        %v3493 = vpop.permute.xlu0 %3492
        %3494 = vrot.lane.b32.xlu0 %v3318, 127
        %v3495 = vpop.permute.xlu0 %3494
        %3496 = vrot.lane.b32.xlu0 %v3444, 127
        %v3497 = vpop.permute.xlu0 %3496
        %3498 = vrot.lane.b32.xlu0 %v3429, 127
        %v3499 = vpop.permute.xlu0 %3498
        %3500 = vrot.lane.b32.xlu0 %v3321, 127
        %v3501 = vpop.permute.xlu0 %3500
        %3502 = vrot.lane.b32.xlu0 %v3445, 127
        %v3503 = vpop.permute.xlu0 %3502
        %3504 = vrot.lane.b32.xlu0 %v3430, 127
        %v3505 = vpop.permute.xlu0 %3504
        %3506 = vrot.lane.b32.xlu0 %v3324, 127
        %v3507 = vpop.permute.xlu0 %3506
        %3508 = vrot.lane.b32.xlu0 %v3446, 127
        %v3509 = vpop.permute.xlu0 %3508
        %3510 = vrot.lane.b32.xlu0 %v3431, 127
        %v3511 = vpop.permute.xlu0 %3510
        %3512 = vrot.lane.b32.xlu0 %v3327, 127
        %v3513 = vpop.permute.xlu0 %3512
        %3514 = vrot.lane.b32.xlu0 %v3447, 127
        %v3515 = vpop.permute.xlu0 %3514
        %3516 = vrot.lane.b32.xlu0 %v3432, 127
        %v3517 = vpop.permute.xlu0 %3516
        %3518 = vrot.lane.b32.xlu0 %v3330, 127
        %v3519 = vpop.permute.xlu0 %3518
        %3520 = vrot.lane.b32.xlu0 %v3448, 127
        %v3521 = vpop.permute.xlu0 %3520
        %3522 = vrot.lane.b32.xlu0 %v3433, 127
        %v3523 = vpop.permute.xlu0 %3522
        %3524 = vrot.lane.b32.xlu0 %v3333, 127
        %v3525 = vpop.permute.xlu0 %3524
        %3526 = vrot.lane.b32.xlu0 %v3449, 127
        %v3527 = vpop.permute.xlu0 %3526
        %3528 = vrot.lane.b32.xlu0 %v3434, 127
        %v3529 = vpop.permute.xlu0 %3528
        %3530 = vrot.lane.b32.xlu0 %v3336, 127
        %v3531 = vpop.permute.xlu0 %3530
        %3532 = vrot.lane.b32.xlu0 %v3450, 127
        %v3533 = vpop.permute.xlu0 %3532
        %3534 = vrot.lane.b32.xlu0 %v3435, 127
        %v3535 = vpop.permute.xlu0 %3534
        %3536 = vrot.lane.b32.xlu0 %v3339, 127
        %v3537 = vpop.permute.xlu0 %3536
        %3538 = vrot.lane.b32.xlu0 %v3451, 127
        %v3539 = vpop.permute.xlu0 %3538
        %3540 = vrot.lane.b32.xlu0 %v3436, 127
        %v3541 = vpop.permute.xlu0 %3540
        %3542 = vrot.lane.b32.xlu0 %v3342, 127
        %v3543 = vpop.permute.xlu0 %3542
        %3544 = vrot.lane.b32.xlu0 %v3452, 127
        %v3545 = vpop.permute.xlu0 %3544
        %3546 = vrot.lane.b32.xlu0 %v3437, 127
        %v3547 = vpop.permute.xlu0 %3546
        %3548 = vrot.lane.b32.xlu0 %v3345, 127
        %v3549 = vpop.permute.xlu0 %3548
        %3550 = vrot.lane.b32.xlu0 %v3453, 127
        %v3551 = vpop.permute.xlu0 %3550
        %3552 = vrot.lane.b32.xlu0 %v3438, 127
        %v3553 = vpop.permute.xlu0 %3552
        %3554 = vrot.lane.b32.xlu0 %v3348, 127
        %v3555 = vpop.permute.xlu0 %3554
        %3556 = vrot.lane.b32.xlu0 %v3454, 127
        %v3557 = vpop.permute.xlu0 %3556
        %3558 = vrot.lane.b32.xlu0 %v3439, 127
        %v3559 = vpop.permute.xlu0 %3558
        %3560 = vrot.lane.b32.xlu0 %v3351, 127
        %v3561 = vpop.permute.xlu0 %3560
        %3562 = vrot.lane.b32.xlu0 %v3455, 127
        %v3563 = vpop.permute.xlu0 %3562
        %3564 = vrot.lane.b32.xlu0 %v3440, 127
        %v3565 = vpop.permute.xlu0 %3564
        %3566 = vrot.lane.b32.xlu0 %v3354, 127
        %v3567 = vpop.permute.xlu0 %3566
        %3568 = vrot.lane.b32.xlu0 %v3456, 127
        %v3569 = vpop.permute.xlu0 %3568
        %3570 = vrot.lane.b32.xlu0 %v3441, 127
        %v3571 = vpop.permute.xlu0 %3570
        %3572 = vrot.lane.b32.xlu0 %v3357, 127
        %v3573 = vpop.permute.xlu0 %3572
        %3574 = vrot.lane.b32.xlu0 %v3457, 127
        %v3575 = vpop.permute.xlu0 %3574
        %3576 = vrot.lane.b32.xlu0 %v3442, 127
        %v3577 = vpop.permute.xlu0 %3576
        %3578 = vrot.lane.b32.xlu0 %v3360, 127
        %v3579 = vpop.permute.xlu0 %3578
        %3580 = vrot.lane.b32.xlu0 %v3458, 127
        %v3581 = vpop.permute.xlu0 %3580
        %3582 = vrot.lane.b32.xlu0 %v3443, 127
        %v3583 = vpop.permute.xlu0 %3582
        %3584 = vrot.lane.b32.xlu0 %v3363, 127
        %v3585 = vpop.permute.xlu0 %3584
        %3586 = vrot.lane.b32.xlu0 %v3459, 127
        %v3587 = vpop.permute.xlu0 %3586
        %3636 = vrot.lane.b32.xlu0 %v3428, 1
        %v3637 = vpop.permute.xlu0 %3636
        %3638 = vrot.lane.b32.xlu0 %v3318, 1
        %v3639 = vpop.permute.xlu0 %3638
        %3640 = vrot.lane.b32.xlu0 %v3444, 1
        %v3641 = vpop.permute.xlu0 %3640
        %3642 = vrot.lane.b32.xlu0 %v3429, 1
        %v3643 = vpop.permute.xlu0 %3642
        %3644 = vrot.lane.b32.xlu0 %v3321, 1
        %v3645 = vpop.permute.xlu0 %3644
        %3646 = vrot.lane.b32.xlu0 %v3445, 1
        %v3647 = vpop.permute.xlu0 %3646
        %3648 = vrot.lane.b32.xlu0 %v3430, 1
        %v3649 = vpop.permute.xlu0 %3648
        %3650 = vrot.lane.b32.xlu0 %v3324, 1
        %v3651 = vpop.permute.xlu0 %3650
        %3652 = vrot.lane.b32.xlu0 %v3446, 1
        %v3653 = vpop.permute.xlu0 %3652
        %3654 = vrot.lane.b32.xlu0 %v3431, 1
        %v3655 = vpop.permute.xlu0 %3654
        %3656 = vrot.lane.b32.xlu0 %v3327, 1
        %v3657 = vpop.permute.xlu0 %3656
        %3658 = vrot.lane.b32.xlu0 %v3447, 1
        %v3659 = vpop.permute.xlu0 %3658
        %3660 = vrot.lane.b32.xlu0 %v3432, 1
        %v3661 = vpop.permute.xlu0 %3660
        %3662 = vrot.lane.b32.xlu0 %v3330, 1
        %v3663 = vpop.permute.xlu0 %3662
        %3664 = vrot.lane.b32.xlu0 %v3448, 1
        %v3665 = vpop.permute.xlu0 %3664
        %3666 = vrot.lane.b32.xlu0 %v3433, 1
        %v3667 = vpop.permute.xlu0 %3666
        %3668 = vrot.lane.b32.xlu0 %v3333, 1
        %v3669 = vpop.permute.xlu0 %3668
        %3670 = vrot.lane.b32.xlu0 %v3449, 1
        %v3671 = vpop.permute.xlu0 %3670
        %3672 = vrot.lane.b32.xlu0 %v3434, 1
        %v3673 = vpop.permute.xlu0 %3672
        %3674 = vrot.lane.b32.xlu0 %v3336, 1
        %v3675 = vpop.permute.xlu0 %3674
        %3676 = vrot.lane.b32.xlu0 %v3450, 1
        %v3677 = vpop.permute.xlu0 %3676
        %3678 = vrot.lane.b32.xlu0 %v3435, 1
        %v3679 = vpop.permute.xlu0 %3678
        %3680 = vrot.lane.b32.xlu0 %v3339, 1
        %v3681 = vpop.permute.xlu0 %3680
        %3682 = vrot.lane.b32.xlu0 %v3451, 1
        %v3683 = vpop.permute.xlu0 %3682
        %3684 = vrot.lane.b32.xlu0 %v3436, 1
        %v3685 = vpop.permute.xlu0 %3684
        %3686 = vrot.lane.b32.xlu0 %v3342, 1
        %v3687 = vpop.permute.xlu0 %3686
        %3688 = vrot.lane.b32.xlu0 %v3452, 1
        %v3689 = vpop.permute.xlu0 %3688
        %3690 = vrot.lane.b32.xlu0 %v3437, 1
        %v3691 = vpop.permute.xlu0 %3690
        %3692 = vrot.lane.b32.xlu0 %v3345, 1
        %v3693 = vpop.permute.xlu0 %3692
        %3694 = vrot.lane.b32.xlu0 %v3453, 1
        %v3695 = vpop.permute.xlu0 %3694
        %3696 = vrot.lane.b32.xlu0 %v3438, 1
        %v3697 = vpop.permute.xlu0 %3696
        %3698 = vrot.lane.b32.xlu0 %v3348, 1
        %v3699 = vpop.permute.xlu0 %3698
        %3700 = vrot.lane.b32.xlu0 %v3454, 1
        %v3701 = vpop.permute.xlu0 %3700
        %3702 = vrot.lane.b32.xlu0 %v3439, 1
        %v3703 = vpop.permute.xlu0 %3702
        %3704 = vrot.lane.b32.xlu0 %v3351, 1
        %v3705 = vpop.permute.xlu0 %3704
        %3706 = vrot.lane.b32.xlu0 %v3455, 1
        %v3707 = vpop.permute.xlu0 %3706
        %3708 = vrot.lane.b32.xlu0 %v3440, 1
        %v3709 = vpop.permute.xlu0 %3708
        %3710 = vrot.lane.b32.xlu0 %v3354, 1
        %v3711 = vpop.permute.xlu0 %3710
        %3712 = vrot.lane.b32.xlu0 %v3456, 1
        %v3713 = vpop.permute.xlu0 %3712
        %3714 = vrot.lane.b32.xlu0 %v3441, 1
        %v3715 = vpop.permute.xlu0 %3714
        %3716 = vrot.lane.b32.xlu0 %v3357, 1
        %v3717 = vpop.permute.xlu0 %3716
        %3718 = vrot.lane.b32.xlu0 %v3457, 1
        %v3719 = vpop.permute.xlu0 %3718
        %3720 = vrot.lane.b32.xlu0 %v3442, 1
        %v3721 = vpop.permute.xlu0 %3720
        %3722 = vrot.lane.b32.xlu0 %v3360, 1
        %v3723 = vpop.permute.xlu0 %3722
        %3724 = vrot.lane.b32.xlu0 %v3458, 1
        %v3725 = vpop.permute.xlu0 %3724
        %3726 = vrot.lane.b32.xlu0 %v3443, 1
        %v3727 = vpop.permute.xlu0 %3726
        %3728 = vrot.lane.b32.xlu0 %v3363, 1
        %v3729 = vpop.permute.xlu0 %3728
        %3730 = vrot.lane.b32.xlu0 %v3459, 1
        %v3731 = vpop.permute.xlu0 %3730
        %3780 = vrot.lane.b32.xlu0 %v3428, 3
        %v3781 = vpop.permute.xlu0 %3780
        %3782 = vrot.lane.b32.xlu0 %v3318, 3
        %v3783 = vpop.permute.xlu0 %3782
        %3784 = vrot.lane.b32.xlu0 %v3444, 3
        %v3785 = vpop.permute.xlu0 %3784
        %3786 = vrot.lane.b32.xlu0 %v3429, 3
        %v3787 = vpop.permute.xlu0 %3786
        %3788 = vrot.lane.b32.xlu0 %v3321, 3
        %v3789 = vpop.permute.xlu0 %3788
        %3790 = vrot.lane.b32.xlu0 %v3445, 3
        %v3791 = vpop.permute.xlu0 %3790
        %3792 = vrot.lane.b32.xlu0 %v3430, 3
        %v3793 = vpop.permute.xlu0 %3792
        %3794 = vrot.lane.b32.xlu0 %v3324, 3
        %v3795 = vpop.permute.xlu0 %3794
        %3796 = vrot.lane.b32.xlu0 %v3446, 3
        %v3797 = vpop.permute.xlu0 %3796
        %3798 = vrot.lane.b32.xlu0 %v3431, 3
        %v3799 = vpop.permute.xlu0 %3798
        %3800 = vrot.lane.b32.xlu0 %v3327, 3
        %v3801 = vpop.permute.xlu0 %3800
        %3802 = vrot.lane.b32.xlu0 %v3447, 3
        %v3803 = vpop.permute.xlu0 %3802
        %3804 = vrot.lane.b32.xlu0 %v3432, 3
        %v3805 = vpop.permute.xlu0 %3804
        %3806 = vrot.lane.b32.xlu0 %v3330, 3
        %v3807 = vpop.permute.xlu0 %3806
        %3808 = vrot.lane.b32.xlu0 %v3448, 3
        %v3809 = vpop.permute.xlu0 %3808
        %3810 = vrot.lane.b32.xlu0 %v3433, 3
        %v3811 = vpop.permute.xlu0 %3810
        %3812 = vrot.lane.b32.xlu0 %v3333, 3
        %v3813 = vpop.permute.xlu0 %3812
        %3814 = vrot.lane.b32.xlu0 %v3449, 3
        %v3815 = vpop.permute.xlu0 %3814
        %3816 = vrot.lane.b32.xlu0 %v3434, 3
        %v3817 = vpop.permute.xlu0 %3816
        %3818 = vrot.lane.b32.xlu0 %v3336, 3
        %v3819 = vpop.permute.xlu0 %3818
        %3820 = vrot.lane.b32.xlu0 %v3450, 3
        %v3821 = vpop.permute.xlu0 %3820
        %3822 = vrot.lane.b32.xlu0 %v3435, 3
        %v3823 = vpop.permute.xlu0 %3822
        %3824 = vrot.lane.b32.xlu0 %v3339, 3
        %v3825 = vpop.permute.xlu0 %3824
        %3826 = vrot.lane.b32.xlu0 %v3451, 3
        %v3827 = vpop.permute.xlu0 %3826
        %3828 = vrot.lane.b32.xlu0 %v3436, 3
        %v3829 = vpop.permute.xlu0 %3828
        %3830 = vrot.lane.b32.xlu0 %v3342, 3
        %v3831 = vpop.permute.xlu0 %3830
        %3832 = vrot.lane.b32.xlu0 %v3452, 3
        %v3833 = vpop.permute.xlu0 %3832
        %3834 = vrot.lane.b32.xlu0 %v3437, 3
        %v3835 = vpop.permute.xlu0 %3834
        %3836 = vrot.lane.b32.xlu0 %v3345, 3
        %v3837 = vpop.permute.xlu0 %3836
        %3838 = vrot.lane.b32.xlu0 %v3453, 3
        %v3839 = vpop.permute.xlu0 %3838
        %3840 = vrot.lane.b32.xlu0 %v3438, 3
        %v3841 = vpop.permute.xlu0 %3840
        %3842 = vrot.lane.b32.xlu0 %v3348, 3
        %v3843 = vpop.permute.xlu0 %3842
        %3844 = vrot.lane.b32.xlu0 %v3454, 3
        %v3845 = vpop.permute.xlu0 %3844
        %3846 = vrot.lane.b32.xlu0 %v3439, 3
        %v3847 = vpop.permute.xlu0 %3846
        %3848 = vrot.lane.b32.xlu0 %v3351, 3
        %v3849 = vpop.permute.xlu0 %3848
        %3850 = vrot.lane.b32.xlu0 %v3455, 3
        %v3851 = vpop.permute.xlu0 %3850
        %3852 = vrot.lane.b32.xlu0 %v3440, 3
        %v3853 = vpop.permute.xlu0 %3852
        %3854 = vrot.lane.b32.xlu0 %v3354, 3
        %v3855 = vpop.permute.xlu0 %3854
        %3856 = vrot.lane.b32.xlu0 %v3456, 3
        %v3857 = vpop.permute.xlu0 %3856
        %3858 = vrot.lane.b32.xlu0 %v3441, 3
        %v3859 = vpop.permute.xlu0 %3858
        %3860 = vrot.lane.b32.xlu0 %v3357, 3
        %v3861 = vpop.permute.xlu0 %3860
        %3862 = vrot.lane.b32.xlu0 %v3457, 3
        %v3863 = vpop.permute.xlu0 %3862
        %3864 = vrot.lane.b32.xlu0 %v3442, 3
        %v3865 = vpop.permute.xlu0 %3864
        %3866 = vrot.lane.b32.xlu0 %v3360, 3
        %v3867 = vpop.permute.xlu0 %3866
        %3868 = vrot.lane.b32.xlu0 %v3458, 3
        %v3869 = vpop.permute.xlu0 %3868
        %3870 = vrot.lane.b32.xlu0 %v3443, 3
        %v3871 = vpop.permute.xlu0 %3870
        %3872 = vrot.lane.b32.xlu0 %v3363, 3
        %v3873 = vpop.permute.xlu0 %3872
        %3874 = vrot.lane.b32.xlu0 %v3459, 3
        %v3875 = vpop.permute.xlu0 %3874
        %v3924 = vsel %vm420, %v3493, %v3637
        %v3925 = vsel %vm420, %v3495, %v3639
        %v3926 = vsel %vm420, %v3497, %v3641
        %v3927 = vsel %vm420, %v3499, %v3643
        %v3928 = vsel %vm420, %v3501, %v3645
        %v3929 = vsel %vm420, %v3503, %v3647
        %v3930 = vsel %vm420, %v3505, %v3649
        %v3931 = vsel %vm420, %v3507, %v3651
        %v3932 = vsel %vm420, %v3509, %v3653
        %v3933 = vsel %vm420, %v3511, %v3655
        %v3934 = vsel %vm420, %v3513, %v3657
        %v3935 = vsel %vm420, %v3515, %v3659
        %v3936 = vsel %vm420, %v3517, %v3661
        %v3937 = vsel %vm420, %v3519, %v3663
        %v3938 = vsel %vm420, %v3521, %v3665
        %v3939 = vsel %vm420, %v3523, %v3667
        %v3940 = vsel %vm420, %v3525, %v3669
        %v3941 = vsel %vm420, %v3527, %v3671
        %v3942 = vsel %vm420, %v3529, %v3673
        %v3943 = vsel %vm420, %v3531, %v3675
        %v3944 = vsel %vm420, %v3533, %v3677
        %v3945 = vsel %vm420, %v3535, %v3679
        %v3946 = vsel %vm420, %v3537, %v3681
        %v3947 = vsel %vm420, %v3539, %v3683
        %v3948 = vsel %vm420, %v3541, %v3685
        %v3949 = vsel %vm420, %v3543, %v3687
        %v3950 = vsel %vm420, %v3545, %v3689
        %v3951 = vsel %vm420, %v3547, %v3691
        %v3952 = vsel %vm420, %v3549, %v3693
        %v3953 = vsel %vm420, %v3551, %v3695
        %v3954 = vsel %vm420, %v3553, %v3697
        %v3955 = vsel %vm420, %v3555, %v3699
        %v3956 = vsel %vm420, %v3557, %v3701
        %v3957 = vsel %vm420, %v3559, %v3703
        %v3958 = vsel %vm420, %v3561, %v3705
        %v3959 = vsel %vm420, %v3563, %v3707
        %v3960 = vsel %vm420, %v3565, %v3709
        %v3961 = vsel %vm420, %v3567, %v3711
        %v3962 = vsel %vm420, %v3569, %v3713
        %v3963 = vsel %vm420, %v3571, %v3715
        %v3964 = vsel %vm420, %v3573, %v3717
        %v3965 = vsel %vm420, %v3575, %v3719
        %v3966 = vsel %vm420, %v3577, %v3721
        %v3967 = vsel %vm420, %v3579, %v3723
        %v3968 = vsel %vm420, %v3581, %v3725
        %v3969 = vsel %vm420, %v3583, %v3727
        %v3970 = vsel %vm420, %v3585, %v3729
        %v3971 = vsel %vm420, %v3587, %v3731
        %v3972 = vsel %vm433, %v3924, %v3781
        %v3973 = vsel %vm433, %v3925, %v3783
        %v3974 = vsel %vm433, %v3926, %v3785
        %v3975 = vsel %vm433, %v3927, %v3787
        %v3976 = vsel %vm433, %v3928, %v3789
        %v3977 = vsel %vm433, %v3929, %v3791
        %v3978 = vsel %vm433, %v3930, %v3793
        %v3979 = vsel %vm433, %v3931, %v3795
        %v3980 = vsel %vm433, %v3932, %v3797
        %v3981 = vsel %vm433, %v3933, %v3799
        %v3982 = vsel %vm433, %v3934, %v3801
        %v3983 = vsel %vm433, %v3935, %v3803
        %v3984 = vsel %vm433, %v3936, %v3805
        %v3985 = vsel %vm433, %v3937, %v3807
        %v3986 = vsel %vm433, %v3938, %v3809
        %v3987 = vsel %vm433, %v3939, %v3811
        %v3988 = vsel %vm433, %v3940, %v3813
        %v3989 = vsel %vm433, %v3941, %v3815
        %v3990 = vsel %vm433, %v3942, %v3817
        %v3991 = vsel %vm433, %v3943, %v3819
        %v3992 = vsel %vm433, %v3944, %v3821
        %v3993 = vsel %vm433, %v3945, %v3823
        %v3994 = vsel %vm433, %v3946, %v3825
        %v3995 = vsel %vm433, %v3947, %v3827
        %v3996 = vsel %vm433, %v3948, %v3829
        %v3997 = vsel %vm433, %v3949, %v3831
        %v3998 = vsel %vm433, %v3950, %v3833
        %v3999 = vsel %vm433, %v3951, %v3835
        %v4000 = vsel %vm433, %v3952, %v3837
        %v4001 = vsel %vm433, %v3953, %v3839
        %v4002 = vsel %vm433, %v3954, %v3841
        %v4003 = vsel %vm433, %v3955, %v3843
        %v4004 = vsel %vm433, %v3956, %v3845
        %v4005 = vsel %vm433, %v3957, %v3847
        %v4006 = vsel %vm433, %v3958, %v3849
        %v4007 = vsel %vm433, %v3959, %v3851
        %v4008 = vsel %vm433, %v3960, %v3853
        %v4009 = vsel %vm433, %v3961, %v3855
        %v4010 = vsel %vm433, %v3962, %v3857
        %v4011 = vsel %vm433, %v3963, %v3859
        %v4012 = vsel %vm433, %v3964, %v3861
        %v4013 = vsel %vm433, %v3965, %v3863
        %v4014 = vsel %vm433, %v3966, %v3865
        %v4015 = vsel %vm433, %v3967, %v3867
        %v4016 = vsel %vm433, %v3968, %v3869
        %v4017 = vsel %vm433, %v3969, %v3871
        %v4018 = vsel %vm433, %v3970, %v3873
        %v4019 = vsel %vm433, %v3971, %v3875
        %4052 = vrot.lane.b32.xlu0 %v3972, 127
        %v4053 = vpop.permute.xlu0 %4052
        %4054 = vrot.lane.b32.xlu0 %v3973, 127
        %v4055 = vpop.permute.xlu0 %4054
        %4056 = vrot.lane.b32.xlu0 %v3975, 127
        %v4057 = vpop.permute.xlu0 %4056
        %4058 = vrot.lane.b32.xlu0 %v3976, 127
        %v4059 = vpop.permute.xlu0 %4058
        %4060 = vrot.lane.b32.xlu0 %v3978, 127
        %v4061 = vpop.permute.xlu0 %4060
        %4062 = vrot.lane.b32.xlu0 %v3979, 127
        %v4063 = vpop.permute.xlu0 %4062
        %4064 = vrot.lane.b32.xlu0 %v3981, 127
        %v4065 = vpop.permute.xlu0 %4064
        %4066 = vrot.lane.b32.xlu0 %v3982, 127
        %v4067 = vpop.permute.xlu0 %4066
        %4068 = vrot.lane.b32.xlu0 %v3984, 127
        %v4069 = vpop.permute.xlu0 %4068
        %4070 = vrot.lane.b32.xlu0 %v3985, 127
        %v4071 = vpop.permute.xlu0 %4070
        %4072 = vrot.lane.b32.xlu0 %v3987, 127
        %v4073 = vpop.permute.xlu0 %4072
        %4074 = vrot.lane.b32.xlu0 %v3988, 127
        %v4075 = vpop.permute.xlu0 %4074
        %4076 = vrot.lane.b32.xlu0 %v3990, 127
        %v4077 = vpop.permute.xlu0 %4076
        %4078 = vrot.lane.b32.xlu0 %v3991, 127
        %v4079 = vpop.permute.xlu0 %4078
        %4080 = vrot.lane.b32.xlu0 %v3993, 127
        %v4081 = vpop.permute.xlu0 %4080
        %4082 = vrot.lane.b32.xlu0 %v3994, 127
        %v4083 = vpop.permute.xlu0 %4082
        %4084 = vrot.lane.b32.xlu0 %v3996, 127
        %v4085 = vpop.permute.xlu0 %4084
        %4086 = vrot.lane.b32.xlu0 %v3997, 127
        %v4087 = vpop.permute.xlu0 %4086
        %4088 = vrot.lane.b32.xlu0 %v3999, 127
        %v4089 = vpop.permute.xlu0 %4088
        %4090 = vrot.lane.b32.xlu0 %v4000, 127
        %v4091 = vpop.permute.xlu0 %4090
        %4092 = vrot.lane.b32.xlu0 %v4002, 127
        %v4093 = vpop.permute.xlu0 %4092
        %4094 = vrot.lane.b32.xlu0 %v4003, 127
        %v4095 = vpop.permute.xlu0 %4094
        %4096 = vrot.lane.b32.xlu0 %v4005, 127
        %v4097 = vpop.permute.xlu0 %4096
        %4098 = vrot.lane.b32.xlu0 %v4006, 127
        %v4099 = vpop.permute.xlu0 %4098
        %4100 = vrot.lane.b32.xlu0 %v4008, 127
        %v4101 = vpop.permute.xlu0 %4100
        %4102 = vrot.lane.b32.xlu0 %v4009, 127
        %v4103 = vpop.permute.xlu0 %4102
        %4104 = vrot.lane.b32.xlu0 %v4011, 127
        %v4105 = vpop.permute.xlu0 %4104
        %4106 = vrot.lane.b32.xlu0 %v4012, 127
        %v4107 = vpop.permute.xlu0 %4106
        %4108 = vrot.lane.b32.xlu0 %v4014, 127
        %v4109 = vpop.permute.xlu0 %4108
        %4110 = vrot.lane.b32.xlu0 %v4015, 127
        %v4111 = vpop.permute.xlu0 %4110
        %4112 = vrot.lane.b32.xlu0 %v4017, 127
        %v4113 = vpop.permute.xlu0 %4112
        %4114 = vrot.lane.b32.xlu0 %v4018, 127
        %v4115 = vpop.permute.xlu0 %4114
        %4116 = vrot.lane.b32.xlu0 %v3972, 126
        %v4117 = vpop.permute.xlu0 %4116
        %4118 = vrot.lane.b32.xlu0 %v3973, 126
        %v4119 = vpop.permute.xlu0 %4118
        %4120 = vrot.lane.b32.xlu0 %v3975, 126
        %v4121 = vpop.permute.xlu0 %4120
        %4122 = vrot.lane.b32.xlu0 %v3976, 126
        %v4123 = vpop.permute.xlu0 %4122
        %4124 = vrot.lane.b32.xlu0 %v3978, 126
        %v4125 = vpop.permute.xlu0 %4124
        %4126 = vrot.lane.b32.xlu0 %v3979, 126
        %v4127 = vpop.permute.xlu0 %4126
        %4128 = vrot.lane.b32.xlu0 %v3981, 126
        %v4129 = vpop.permute.xlu0 %4128
        %4130 = vrot.lane.b32.xlu0 %v3982, 126
        %v4131 = vpop.permute.xlu0 %4130
        %4132 = vrot.lane.b32.xlu0 %v3984, 126
        %v4133 = vpop.permute.xlu0 %4132
        %4134 = vrot.lane.b32.xlu0 %v3985, 126
        %v4135 = vpop.permute.xlu0 %4134
        %4136 = vrot.lane.b32.xlu0 %v3987, 126
        %v4137 = vpop.permute.xlu0 %4136
        %4138 = vrot.lane.b32.xlu0 %v3988, 126
        %v4139 = vpop.permute.xlu0 %4138
        %4140 = vrot.lane.b32.xlu0 %v3990, 126
        %v4141 = vpop.permute.xlu0 %4140
        %4142 = vrot.lane.b32.xlu0 %v3991, 126
        %v4143 = vpop.permute.xlu0 %4142
        %4144 = vrot.lane.b32.xlu0 %v3993, 126
        %v4145 = vpop.permute.xlu0 %4144
        %4146 = vrot.lane.b32.xlu0 %v3994, 126
        %v4147 = vpop.permute.xlu0 %4146
        %4148 = vrot.lane.b32.xlu0 %v3996, 126
        %v4149 = vpop.permute.xlu0 %4148
        %4150 = vrot.lane.b32.xlu0 %v3997, 126
        %v4151 = vpop.permute.xlu0 %4150
        %4152 = vrot.lane.b32.xlu0 %v3999, 126
        %v4153 = vpop.permute.xlu0 %4152
        %4154 = vrot.lane.b32.xlu0 %v4000, 126
        %v4155 = vpop.permute.xlu0 %4154
        %4156 = vrot.lane.b32.xlu0 %v4002, 126
        %v4157 = vpop.permute.xlu0 %4156
        %4158 = vrot.lane.b32.xlu0 %v4003, 126
        %v4159 = vpop.permute.xlu0 %4158
        %4160 = vrot.lane.b32.xlu0 %v4005, 126
        %v4161 = vpop.permute.xlu0 %4160
        %4162 = vrot.lane.b32.xlu0 %v4006, 126
        %v4163 = vpop.permute.xlu0 %4162
        %4164 = vrot.lane.b32.xlu0 %v4008, 126
        %v4165 = vpop.permute.xlu0 %4164
        %4166 = vrot.lane.b32.xlu0 %v4009, 126
        %v4167 = vpop.permute.xlu0 %4166
        %4168 = vrot.lane.b32.xlu0 %v4011, 126
        %v4169 = vpop.permute.xlu0 %4168
        %4170 = vrot.lane.b32.xlu0 %v4012, 126
        %v4171 = vpop.permute.xlu0 %4170
        %4172 = vrot.lane.b32.xlu0 %v4014, 126
        %v4173 = vpop.permute.xlu0 %4172
        %4174 = vrot.lane.b32.xlu0 %v4015, 126
        %v4175 = vpop.permute.xlu0 %4174
        %4176 = vrot.lane.b32.xlu0 %v4017, 126
        %v4177 = vpop.permute.xlu0 %4176
        %4178 = vrot.lane.b32.xlu0 %v4018, 126
        %v4179 = vpop.permute.xlu0 %4178
        %v4196 = vrot.slane %v3972, 1
        %v4197 = vrot.slane %v3973, 1
        %v4198 = vsel %vm490, %v4196, %v4197
        %v4199 = vrot.slane %v3974, 1
        %v4200 = vsel %vm490, %v4197, %v4199
        %v4201 = vrot.slane %v3975, 1
        %v4202 = vrot.slane %v3976, 1
        %v4203 = vsel %vm490, %v4201, %v4202
        %v4204 = vrot.slane %v3977, 1
        %v4205 = vsel %vm490, %v4202, %v4204
        %v4206 = vrot.slane %v3978, 1
        %v4207 = vrot.slane %v3979, 1
        %v4208 = vsel %vm490, %v4206, %v4207
        %v4209 = vrot.slane %v3980, 1
        %v4210 = vsel %vm490, %v4207, %v4209
        %v4211 = vrot.slane %v3981, 1
        %v4212 = vrot.slane %v3982, 1
        %v4213 = vsel %vm490, %v4211, %v4212
        %v4214 = vrot.slane %v3983, 1
        %v4215 = vsel %vm490, %v4212, %v4214
        %v4216 = vrot.slane %v3984, 1
        %v4217 = vrot.slane %v3985, 1
        %v4218 = vsel %vm490, %v4216, %v4217
        %v4219 = vrot.slane %v3986, 1
        %v4220 = vsel %vm490, %v4217, %v4219
        %v4221 = vrot.slane %v3987, 1
        %v4222 = vrot.slane %v3988, 1
        %v4223 = vsel %vm490, %v4221, %v4222
        %v4224 = vrot.slane %v3989, 1
        %v4225 = vsel %vm490, %v4222, %v4224
        %v4226 = vrot.slane %v3990, 1
        %v4227 = vrot.slane %v3991, 1
        %v4228 = vsel %vm490, %v4226, %v4227
        %v4229 = vrot.slane %v3992, 1
        %v4230 = vsel %vm490, %v4227, %v4229
        %v4231 = vrot.slane %v3993, 1
        %v4232 = vrot.slane %v3994, 1
        %v4233 = vsel %vm490, %v4231, %v4232
        %v4234 = vrot.slane %v3995, 1
        %v4235 = vsel %vm490, %v4232, %v4234
        %v4236 = vrot.slane %v3996, 1
        %v4237 = vrot.slane %v3997, 1
        %v4238 = vsel %vm490, %v4236, %v4237
        %v4239 = vrot.slane %v3998, 1
        %v4240 = vsel %vm490, %v4237, %v4239
        %v4241 = vrot.slane %v3999, 1
        %v4242 = vrot.slane %v4000, 1
        %v4243 = vsel %vm490, %v4241, %v4242
        %v4244 = vrot.slane %v4001, 1
        %v4245 = vsel %vm490, %v4242, %v4244
        %v4246 = vrot.slane %v4002, 1
        %v4247 = vrot.slane %v4003, 1
        %v4248 = vsel %vm490, %v4246, %v4247
        %v4249 = vrot.slane %v4004, 1
        %v4250 = vsel %vm490, %v4247, %v4249
        %v4251 = vrot.slane %v4005, 1
        %v4252 = vrot.slane %v4006, 1
        %v4253 = vsel %vm490, %v4251, %v4252
        %v4254 = vrot.slane %v4007, 1
        %v4255 = vsel %vm490, %v4252, %v4254
        %v4256 = vrot.slane %v4008, 1
        %v4257 = vrot.slane %v4009, 1
        %v4258 = vsel %vm490, %v4256, %v4257
        %v4259 = vrot.slane %v4010, 1
        %v4260 = vsel %vm490, %v4257, %v4259
        %v4261 = vrot.slane %v4011, 1
        %v4262 = vrot.slane %v4012, 1
        %v4263 = vsel %vm490, %v4261, %v4262
        %v4264 = vrot.slane %v4013, 1
        %v4265 = vsel %vm490, %v4262, %v4264
        %v4266 = vrot.slane %v4014, 1
        %v4267 = vrot.slane %v4015, 1
        %v4268 = vsel %vm490, %v4266, %v4267
        %v4269 = vrot.slane %v4016, 1
        %v4270 = vsel %vm490, %v4267, %v4269
        %v4271 = vrot.slane %v4017, 1
        %v4272 = vrot.slane %v4018, 1
        %v4273 = vsel %vm490, %v4271, %v4272
        %v4274 = vrot.slane %v4019, 1
        %v4275 = vsel %vm490, %v4272, %v4274
        %4276 = vrot.lane.b32.xlu0 %v4198, 127
        %v4277 = vpop.permute.xlu0 %4276
        %4278 = vrot.lane.b32.xlu0 %v4200, 127
        %v4279 = vpop.permute.xlu0 %4278
        %4280 = vrot.lane.b32.xlu0 %v4203, 127
        %v4281 = vpop.permute.xlu0 %4280
        %4282 = vrot.lane.b32.xlu0 %v4205, 127
        %v4283 = vpop.permute.xlu0 %4282
        %4284 = vrot.lane.b32.xlu0 %v4208, 127
        %v4285 = vpop.permute.xlu0 %4284
        %4286 = vrot.lane.b32.xlu0 %v4210, 127
        %v4287 = vpop.permute.xlu0 %4286
        %4288 = vrot.lane.b32.xlu0 %v4213, 127
        %v4289 = vpop.permute.xlu0 %4288
        %4290 = vrot.lane.b32.xlu0 %v4215, 127
        %v4291 = vpop.permute.xlu0 %4290
        %4292 = vrot.lane.b32.xlu0 %v4218, 127
        %v4293 = vpop.permute.xlu0 %4292
        %4294 = vrot.lane.b32.xlu0 %v4220, 127
        %v4295 = vpop.permute.xlu0 %4294
        %4296 = vrot.lane.b32.xlu0 %v4223, 127
        %v4297 = vpop.permute.xlu0 %4296
        %4298 = vrot.lane.b32.xlu0 %v4225, 127
        %v4299 = vpop.permute.xlu0 %4298
        %4300 = vrot.lane.b32.xlu0 %v4228, 127
        %v4301 = vpop.permute.xlu0 %4300
        %4302 = vrot.lane.b32.xlu0 %v4230, 127
        %v4303 = vpop.permute.xlu0 %4302
        %4304 = vrot.lane.b32.xlu0 %v4233, 127
        %v4305 = vpop.permute.xlu0 %4304
        %4306 = vrot.lane.b32.xlu0 %v4235, 127
        %v4307 = vpop.permute.xlu0 %4306
        %4308 = vrot.lane.b32.xlu0 %v4238, 127
        %v4309 = vpop.permute.xlu0 %4308
        %4310 = vrot.lane.b32.xlu0 %v4240, 127
        %v4311 = vpop.permute.xlu0 %4310
        %4312 = vrot.lane.b32.xlu0 %v4243, 127
        %v4313 = vpop.permute.xlu0 %4312
        %4314 = vrot.lane.b32.xlu0 %v4245, 127
        %v4315 = vpop.permute.xlu0 %4314
        %4316 = vrot.lane.b32.xlu0 %v4248, 127
        %v4317 = vpop.permute.xlu0 %4316
        %4318 = vrot.lane.b32.xlu0 %v4250, 127
        %v4319 = vpop.permute.xlu0 %4318
        %4320 = vrot.lane.b32.xlu0 %v4253, 127
        %v4321 = vpop.permute.xlu0 %4320
        %4322 = vrot.lane.b32.xlu0 %v4255, 127
        %v4323 = vpop.permute.xlu0 %4322
        %4324 = vrot.lane.b32.xlu0 %v4258, 127
        %v4325 = vpop.permute.xlu0 %4324
        %4326 = vrot.lane.b32.xlu0 %v4260, 127
        %v4327 = vpop.permute.xlu0 %4326
        %4328 = vrot.lane.b32.xlu0 %v4263, 127
        %v4329 = vpop.permute.xlu0 %4328
        %4330 = vrot.lane.b32.xlu0 %v4265, 127
        %v4331 = vpop.permute.xlu0 %4330
        %4332 = vrot.lane.b32.xlu0 %v4268, 127
        %v4333 = vpop.permute.xlu0 %4332
        %4334 = vrot.lane.b32.xlu0 %v4270, 127
        %v4335 = vpop.permute.xlu0 %4334
        %4336 = vrot.lane.b32.xlu0 %v4273, 127
        %v4337 = vpop.permute.xlu0 %4336
        %4338 = vrot.lane.b32.xlu0 %v4275, 127
        %v4339 = vpop.permute.xlu0 %4338
        %4340 = vrot.lane.b32.xlu0 %v4198, 126
        %v4341 = vpop.permute.xlu0 %4340
        %4342 = vrot.lane.b32.xlu0 %v4200, 126
        %v4343 = vpop.permute.xlu0 %4342
        %4344 = vrot.lane.b32.xlu0 %v4203, 126
        %v4345 = vpop.permute.xlu0 %4344
        %4346 = vrot.lane.b32.xlu0 %v4205, 126
        %v4347 = vpop.permute.xlu0 %4346
        %4348 = vrot.lane.b32.xlu0 %v4208, 126
        %v4349 = vpop.permute.xlu0 %4348
        %4350 = vrot.lane.b32.xlu0 %v4210, 126
        %v4351 = vpop.permute.xlu0 %4350
        %4352 = vrot.lane.b32.xlu0 %v4213, 126
        %v4353 = vpop.permute.xlu0 %4352
        %4354 = vrot.lane.b32.xlu0 %v4215, 126
        %v4355 = vpop.permute.xlu0 %4354
        %4356 = vrot.lane.b32.xlu0 %v4218, 126
        %v4357 = vpop.permute.xlu0 %4356
        %4358 = vrot.lane.b32.xlu0 %v4220, 126
        %v4359 = vpop.permute.xlu0 %4358
        %4360 = vrot.lane.b32.xlu0 %v4223, 126
        %v4361 = vpop.permute.xlu0 %4360
        %4362 = vrot.lane.b32.xlu0 %v4225, 126
        %v4363 = vpop.permute.xlu0 %4362
        %4364 = vrot.lane.b32.xlu0 %v4228, 126
        %v4365 = vpop.permute.xlu0 %4364
        %4366 = vrot.lane.b32.xlu0 %v4230, 126
        %v4367 = vpop.permute.xlu0 %4366
        %4368 = vrot.lane.b32.xlu0 %v4233, 126
        %v4369 = vpop.permute.xlu0 %4368
        %4370 = vrot.lane.b32.xlu0 %v4235, 126
        %v4371 = vpop.permute.xlu0 %4370
        %4372 = vrot.lane.b32.xlu0 %v4238, 126
        %v4373 = vpop.permute.xlu0 %4372
        %4374 = vrot.lane.b32.xlu0 %v4240, 126
        %v4375 = vpop.permute.xlu0 %4374
        %4376 = vrot.lane.b32.xlu0 %v4243, 126
        %v4377 = vpop.permute.xlu0 %4376
        %4378 = vrot.lane.b32.xlu0 %v4245, 126
        %v4379 = vpop.permute.xlu0 %4378
        %4380 = vrot.lane.b32.xlu0 %v4248, 126
        %v4381 = vpop.permute.xlu0 %4380
        %4382 = vrot.lane.b32.xlu0 %v4250, 126
        %v4383 = vpop.permute.xlu0 %4382
        %4384 = vrot.lane.b32.xlu0 %v4253, 126
        %v4385 = vpop.permute.xlu0 %4384
        %4386 = vrot.lane.b32.xlu0 %v4255, 126
        %v4387 = vpop.permute.xlu0 %4386
        %4388 = vrot.lane.b32.xlu0 %v4258, 126
        %v4389 = vpop.permute.xlu0 %4388
        %4390 = vrot.lane.b32.xlu0 %v4260, 126
        %v4391 = vpop.permute.xlu0 %4390
        %4392 = vrot.lane.b32.xlu0 %v4263, 126
        %v4393 = vpop.permute.xlu0 %4392
        %4394 = vrot.lane.b32.xlu0 %v4265, 126
        %v4395 = vpop.permute.xlu0 %4394
        %4396 = vrot.lane.b32.xlu0 %v4268, 126
        %v4397 = vpop.permute.xlu0 %4396
        %4398 = vrot.lane.b32.xlu0 %v4270, 126
        %v4399 = vpop.permute.xlu0 %4398
        %4400 = vrot.lane.b32.xlu0 %v4273, 126
        %v4401 = vpop.permute.xlu0 %4400
        %4402 = vrot.lane.b32.xlu0 %v4275, 126
        %v4403 = vpop.permute.xlu0 %4402
        %v4404 = vrot.slane %v3972, 2
        %v4405 = vrot.slane %v3973, 2
        %v4406 = vsel %vm543, %v4404, %v4405
        %v4407 = vrot.slane %v3974, 2
        %v4408 = vsel %vm543, %v4405, %v4407
        %v4409 = vrot.slane %v3975, 2
        %v4410 = vrot.slane %v3976, 2
        %v4411 = vsel %vm543, %v4409, %v4410
        %v4412 = vrot.slane %v3977, 2
        %v4413 = vsel %vm543, %v4410, %v4412
        %v4414 = vrot.slane %v3978, 2
        %v4415 = vrot.slane %v3979, 2
        %v4416 = vsel %vm543, %v4414, %v4415
        %v4417 = vrot.slane %v3980, 2
        %v4418 = vsel %vm543, %v4415, %v4417
        %v4419 = vrot.slane %v3981, 2
        %v4420 = vrot.slane %v3982, 2
        %v4421 = vsel %vm543, %v4419, %v4420
        %v4422 = vrot.slane %v3983, 2
        %v4423 = vsel %vm543, %v4420, %v4422
        %v4424 = vrot.slane %v3984, 2
        %v4425 = vrot.slane %v3985, 2
        %v4426 = vsel %vm543, %v4424, %v4425
        %v4427 = vrot.slane %v3986, 2
        %v4428 = vsel %vm543, %v4425, %v4427
        %v4429 = vrot.slane %v3987, 2
        %v4430 = vrot.slane %v3988, 2
        %v4431 = vsel %vm543, %v4429, %v4430
        %v4432 = vrot.slane %v3989, 2
        %v4433 = vsel %vm543, %v4430, %v4432
        %v4434 = vrot.slane %v3990, 2
        %v4435 = vrot.slane %v3991, 2
        %v4436 = vsel %vm543, %v4434, %v4435
        %v4437 = vrot.slane %v3992, 2
        %v4438 = vsel %vm543, %v4435, %v4437
        %v4439 = vrot.slane %v3993, 2
        %v4440 = vrot.slane %v3994, 2
        %v4441 = vsel %vm543, %v4439, %v4440
        %v4442 = vrot.slane %v3995, 2
        %v4443 = vsel %vm543, %v4440, %v4442
        %v4444 = vrot.slane %v3996, 2
        %v4445 = vrot.slane %v3997, 2
        %v4446 = vsel %vm543, %v4444, %v4445
        %v4447 = vrot.slane %v3998, 2
        %v4448 = vsel %vm543, %v4445, %v4447
        %v4449 = vrot.slane %v3999, 2
        %v4450 = vrot.slane %v4000, 2
        %v4451 = vsel %vm543, %v4449, %v4450
        %v4452 = vrot.slane %v4001, 2
        %v4453 = vsel %vm543, %v4450, %v4452
        %v4454 = vrot.slane %v4002, 2
        %v4455 = vrot.slane %v4003, 2
        %v4456 = vsel %vm543, %v4454, %v4455
        %v4457 = vrot.slane %v4004, 2
        %v4458 = vsel %vm543, %v4455, %v4457
        %v4459 = vrot.slane %v4005, 2
        %v4460 = vrot.slane %v4006, 2
        %v4461 = vsel %vm543, %v4459, %v4460
        %v4462 = vrot.slane %v4007, 2
        %v4463 = vsel %vm543, %v4460, %v4462
        %v4464 = vrot.slane %v4008, 2
        %v4465 = vrot.slane %v4009, 2
        %v4466 = vsel %vm543, %v4464, %v4465
        %v4467 = vrot.slane %v4010, 2
        %v4468 = vsel %vm543, %v4465, %v4467
        %v4469 = vrot.slane %v4011, 2
        %v4470 = vrot.slane %v4012, 2
        %v4471 = vsel %vm543, %v4469, %v4470
        %v4472 = vrot.slane %v4013, 2
        %v4473 = vsel %vm543, %v4470, %v4472
        %v4474 = vrot.slane %v4014, 2
        %v4475 = vrot.slane %v4015, 2
        %v4476 = vsel %vm543, %v4474, %v4475
        %v4477 = vrot.slane %v4016, 2
        %v4478 = vsel %vm543, %v4475, %v4477
        %v4479 = vrot.slane %v4017, 2
        %v4480 = vrot.slane %v4018, 2
        %v4481 = vsel %vm543, %v4479, %v4480
        %v4482 = vrot.slane %v4019, 2
        %v4483 = vsel %vm543, %v4480, %v4482
        %4484 = vrot.lane.b32.xlu0 %v4406, 127
        %v4485 = vpop.permute.xlu0 %4484
        %4486 = vrot.lane.b32.xlu0 %v4408, 127
        %v4487 = vpop.permute.xlu0 %4486
        %4488 = vrot.lane.b32.xlu0 %v4411, 127
        %v4489 = vpop.permute.xlu0 %4488
        %4490 = vrot.lane.b32.xlu0 %v4413, 127
        %v4491 = vpop.permute.xlu0 %4490
        %4492 = vrot.lane.b32.xlu0 %v4416, 127
        %v4493 = vpop.permute.xlu0 %4492
        %4494 = vrot.lane.b32.xlu0 %v4418, 127
        %v4495 = vpop.permute.xlu0 %4494
        %4496 = vrot.lane.b32.xlu0 %v4421, 127
        %v4497 = vpop.permute.xlu0 %4496
        %4498 = vrot.lane.b32.xlu0 %v4423, 127
        %v4499 = vpop.permute.xlu0 %4498
        %4500 = vrot.lane.b32.xlu0 %v4426, 127
        %v4501 = vpop.permute.xlu0 %4500
        %4502 = vrot.lane.b32.xlu0 %v4428, 127
        %v4503 = vpop.permute.xlu0 %4502
        %4504 = vrot.lane.b32.xlu0 %v4431, 127
        %v4505 = vpop.permute.xlu0 %4504
        %4506 = vrot.lane.b32.xlu0 %v4433, 127
        %v4507 = vpop.permute.xlu0 %4506
        %4508 = vrot.lane.b32.xlu0 %v4436, 127
        %v4509 = vpop.permute.xlu0 %4508
        %4510 = vrot.lane.b32.xlu0 %v4438, 127
        %v4511 = vpop.permute.xlu0 %4510
        %4512 = vrot.lane.b32.xlu0 %v4441, 127
        %v4513 = vpop.permute.xlu0 %4512
        %4514 = vrot.lane.b32.xlu0 %v4443, 127
        %v4515 = vpop.permute.xlu0 %4514
        %4516 = vrot.lane.b32.xlu0 %v4446, 127
        %v4517 = vpop.permute.xlu0 %4516
        %4518 = vrot.lane.b32.xlu0 %v4448, 127
        %v4519 = vpop.permute.xlu0 %4518
        %4520 = vrot.lane.b32.xlu0 %v4451, 127
        %v4521 = vpop.permute.xlu0 %4520
        %4522 = vrot.lane.b32.xlu0 %v4453, 127
        %v4523 = vpop.permute.xlu0 %4522
        %4524 = vrot.lane.b32.xlu0 %v4456, 127
        %v4525 = vpop.permute.xlu0 %4524
        %4526 = vrot.lane.b32.xlu0 %v4458, 127
        %v4527 = vpop.permute.xlu0 %4526
        %4528 = vrot.lane.b32.xlu0 %v4461, 127
        %v4529 = vpop.permute.xlu0 %4528
        %4530 = vrot.lane.b32.xlu0 %v4463, 127
        %v4531 = vpop.permute.xlu0 %4530
        %4532 = vrot.lane.b32.xlu0 %v4466, 127
        %v4533 = vpop.permute.xlu0 %4532
        %4534 = vrot.lane.b32.xlu0 %v4468, 127
        %v4535 = vpop.permute.xlu0 %4534
        %4536 = vrot.lane.b32.xlu0 %v4471, 127
        %v4537 = vpop.permute.xlu0 %4536
        %4538 = vrot.lane.b32.xlu0 %v4473, 127
        %v4539 = vpop.permute.xlu0 %4538
        %4540 = vrot.lane.b32.xlu0 %v4476, 127
        %v4541 = vpop.permute.xlu0 %4540
        %4542 = vrot.lane.b32.xlu0 %v4478, 127
        %v4543 = vpop.permute.xlu0 %4542
        %4544 = vrot.lane.b32.xlu0 %v4481, 127
        %v4545 = vpop.permute.xlu0 %4544
        %4546 = vrot.lane.b32.xlu0 %v4483, 127
        %v4547 = vpop.permute.xlu0 %4546
        %4548 = vrot.lane.b32.xlu0 %v4406, 126
        %v4549 = vpop.permute.xlu0 %4548
        %4550 = vrot.lane.b32.xlu0 %v4408, 126
        %v4551 = vpop.permute.xlu0 %4550
        %4552 = vrot.lane.b32.xlu0 %v4411, 126
        %v4553 = vpop.permute.xlu0 %4552
        %4554 = vrot.lane.b32.xlu0 %v4413, 126
        %v4555 = vpop.permute.xlu0 %4554
        %4556 = vrot.lane.b32.xlu0 %v4416, 126
        %v4557 = vpop.permute.xlu0 %4556
        %4558 = vrot.lane.b32.xlu0 %v4418, 126
        %v4559 = vpop.permute.xlu0 %4558
        %4560 = vrot.lane.b32.xlu0 %v4421, 126
        %v4561 = vpop.permute.xlu0 %4560
        %4562 = vrot.lane.b32.xlu0 %v4423, 126
        %v4563 = vpop.permute.xlu0 %4562
        %4564 = vrot.lane.b32.xlu0 %v4426, 126
        %v4565 = vpop.permute.xlu0 %4564
        %4566 = vrot.lane.b32.xlu0 %v4428, 126
        %v4567 = vpop.permute.xlu0 %4566
        %4568 = vrot.lane.b32.xlu0 %v4431, 126
        %v4569 = vpop.permute.xlu0 %4568
        %4570 = vrot.lane.b32.xlu0 %v4433, 126
        %v4571 = vpop.permute.xlu0 %4570
        %4572 = vrot.lane.b32.xlu0 %v4436, 126
        %v4573 = vpop.permute.xlu0 %4572
        %4574 = vrot.lane.b32.xlu0 %v4438, 126
        %v4575 = vpop.permute.xlu0 %4574
        %4576 = vrot.lane.b32.xlu0 %v4441, 126
        %v4577 = vpop.permute.xlu0 %4576
        %4578 = vrot.lane.b32.xlu0 %v4443, 126
        %v4579 = vpop.permute.xlu0 %4578
        %4580 = vrot.lane.b32.xlu0 %v4446, 126
        %v4581 = vpop.permute.xlu0 %4580
        %4582 = vrot.lane.b32.xlu0 %v4448, 126
        %v4583 = vpop.permute.xlu0 %4582
        %4584 = vrot.lane.b32.xlu0 %v4451, 126
        %v4585 = vpop.permute.xlu0 %4584
        %4586 = vrot.lane.b32.xlu0 %v4453, 126
        %v4587 = vpop.permute.xlu0 %4586
        %4588 = vrot.lane.b32.xlu0 %v4456, 126
        %v4589 = vpop.permute.xlu0 %4588
        %4590 = vrot.lane.b32.xlu0 %v4458, 126
        %v4591 = vpop.permute.xlu0 %4590
        %4592 = vrot.lane.b32.xlu0 %v4461, 126
        %v4593 = vpop.permute.xlu0 %4592
        %4594 = vrot.lane.b32.xlu0 %v4463, 126
        %v4595 = vpop.permute.xlu0 %4594
        %4596 = vrot.lane.b32.xlu0 %v4466, 126
        %v4597 = vpop.permute.xlu0 %4596
        %4598 = vrot.lane.b32.xlu0 %v4468, 126
        %v4599 = vpop.permute.xlu0 %4598
        %4600 = vrot.lane.b32.xlu0 %v4471, 126
        %v4601 = vpop.permute.xlu0 %4600
        %4602 = vrot.lane.b32.xlu0 %v4473, 126
        %v4603 = vpop.permute.xlu0 %4602
        %4604 = vrot.lane.b32.xlu0 %v4476, 126
        %v4605 = vpop.permute.xlu0 %4604
        %4606 = vrot.lane.b32.xlu0 %v4478, 126
        %v4607 = vpop.permute.xlu0 %4606
        %4608 = vrot.lane.b32.xlu0 %v4481, 126
        %v4609 = vpop.permute.xlu0 %4608
        %4610 = vrot.lane.b32.xlu0 %v4483, 126
        %v4611 = vpop.permute.xlu0 %4610
        %v4612 = vrot.slane %v3975, 7
        %v4613 = vsel %vm597, %v4612, %v3972
        %v4614 = vrot.slane %v3978, 6
        %v4615 = vsel %vm600, %v4614, %v4613
        %v4616 = vrot.slane %v3981, 5
        %v4617 = vsel %vm603, %v4616, %v4615
        %v4618 = vrot.slane %v3984, 4
        %v4619 = vsel %vm606, %v4618, %v4617
        %v4620 = vrot.slane %v3987, 3
        %v4621 = vsel %vm609, %v4620, %v4619
        %v4622 = vsel %vm612, %v4434, %v4621
        %v4623 = vsel %vm615, %v4231, %v4622
        %v4624 = vrot.slane %v3999, 7
        %v4625 = vsel %vm597, %v4624, %v3996
        %v4626 = vrot.slane %v4002, 6
        %v4627 = vsel %vm600, %v4626, %v4625
        %v4628 = vrot.slane %v4005, 5
        %v4629 = vsel %vm603, %v4628, %v4627
        %v4630 = vrot.slane %v4008, 4
        %v4631 = vsel %vm606, %v4630, %v4629
        %v4632 = vrot.slane %v4011, 3
        %v4633 = vsel %vm609, %v4632, %v4631
        %v4634 = vsel %vm612, %v4474, %v4633
        %v4635 = vsel %vm615, %v4271, %v4634
        %v4636 = vrot.slane %v4057, 7
        %v4637 = vsel %vm597, %v4636, %v4053
        %v4638 = vrot.slane %v4061, 6
        %v4639 = vsel %vm600, %v4638, %v4637
        %v4640 = vrot.slane %v4065, 5
        %v4641 = vsel %vm603, %v4640, %v4639
        %v4642 = vrot.slane %v4069, 4
        %v4643 = vsel %vm606, %v4642, %v4641
        %v4644 = vrot.slane %v4073, 3
        %v4645 = vsel %vm609, %v4644, %v4643
        %v4646 = vrot.slane %v4077, 2
        %v4647 = vsel %vm612, %v4646, %v4645
        %v4648 = vrot.slane %v4081, 1
        %v4649 = vsel %vm615, %v4648, %v4647
        %v4650 = vrot.slane %v4089, 7
        %v4651 = vsel %vm597, %v4650, %v4085
        %v4652 = vrot.slane %v4093, 6
        %v4653 = vsel %vm600, %v4652, %v4651
        %v4654 = vrot.slane %v4097, 5
        %v4655 = vsel %vm603, %v4654, %v4653
        %v4656 = vrot.slane %v4101, 4
        %v4657 = vsel %vm606, %v4656, %v4655
        %v4658 = vrot.slane %v4105, 3
        %v4659 = vsel %vm609, %v4658, %v4657
        %v4660 = vrot.slane %v4109, 2
        %v4661 = vsel %vm612, %v4660, %v4659
        %v4662 = vrot.slane %v4113, 1
        %v4663 = vsel %vm615, %v4662, %v4661
        %v4664 = vrot.slane %v4121, 7
        %v4665 = vsel %vm597, %v4664, %v4117
        %v4666 = vrot.slane %v4125, 6
        %v4667 = vsel %vm600, %v4666, %v4665
        %v4668 = vrot.slane %v4129, 5
        %v4669 = vsel %vm603, %v4668, %v4667
        %v4670 = vrot.slane %v4133, 4
        %v4671 = vsel %vm606, %v4670, %v4669
        %v4672 = vrot.slane %v4137, 3
        %v4673 = vsel %vm609, %v4672, %v4671
        %v4674 = vrot.slane %v4141, 2
        %v4675 = vsel %vm612, %v4674, %v4673
        %v4676 = vrot.slane %v4145, 1
        %v4677 = vsel %vm615, %v4676, %v4675
        %v4678 = vrot.slane %v4153, 7
        %v4679 = vsel %vm597, %v4678, %v4149
        %v4680 = vrot.slane %v4157, 6
        %v4681 = vsel %vm600, %v4680, %v4679
        %v4682 = vrot.slane %v4161, 5
        %v4683 = vsel %vm603, %v4682, %v4681
        %v4684 = vrot.slane %v4165, 4
        %v4685 = vsel %vm606, %v4684, %v4683
        %v4686 = vrot.slane %v4169, 3
        %v4687 = vsel %vm609, %v4686, %v4685
        %v4688 = vrot.slane %v4173, 2
        %v4689 = vsel %vm612, %v4688, %v4687
        %v4690 = vrot.slane %v4177, 1
        %v4691 = vsel %vm615, %v4690, %v4689
        %v4692 = vrot.slane %v4203, 7
        %v4693 = vsel %vm597, %v4692, %v4198
        %v4694 = vrot.slane %v4208, 6
        %v4695 = vsel %vm600, %v4694, %v4693
        %v4696 = vrot.slane %v4213, 5
        %v4697 = vsel %vm603, %v4696, %v4695
        %v4698 = vrot.slane %v4218, 4
        %v4699 = vsel %vm606, %v4698, %v4697
        %v4700 = vrot.slane %v4223, 3
        %v4701 = vsel %vm609, %v4700, %v4699
        %v4702 = vrot.slane %v4228, 2
        %v4703 = vsel %vm612, %v4702, %v4701
        %v4704 = vrot.slane %v4233, 1
        %v4705 = vsel %vm615, %v4704, %v4703
        %v4706 = vrot.slane %v4243, 7
        %v4707 = vsel %vm597, %v4706, %v4238
        %v4708 = vrot.slane %v4248, 6
        %v4709 = vsel %vm600, %v4708, %v4707
        %v4710 = vrot.slane %v4253, 5
        %v4711 = vsel %vm603, %v4710, %v4709
        %v4712 = vrot.slane %v4258, 4
        %v4713 = vsel %vm606, %v4712, %v4711
        %v4714 = vrot.slane %v4263, 3
        %v4715 = vsel %vm609, %v4714, %v4713
        %v4716 = vrot.slane %v4268, 2
        %v4717 = vsel %vm612, %v4716, %v4715
        %v4718 = vrot.slane %v4273, 1
        %v4719 = vsel %vm615, %v4718, %v4717
        %v4720 = vrot.slane %v4281, 7
        %v4721 = vsel %vm597, %v4720, %v4277
        %v4722 = vrot.slane %v4285, 6
        %v4723 = vsel %vm600, %v4722, %v4721
        %v4724 = vrot.slane %v4289, 5
        %v4725 = vsel %vm603, %v4724, %v4723
        %v4726 = vrot.slane %v4293, 4
        %v4727 = vsel %vm606, %v4726, %v4725
        %v4728 = vrot.slane %v4297, 3
        %v4729 = vsel %vm609, %v4728, %v4727
        %v4730 = vrot.slane %v4301, 2
        %v4731 = vsel %vm612, %v4730, %v4729
        %v4732 = vrot.slane %v4305, 1
        %v4733 = vsel %vm615, %v4732, %v4731
        %v4734 = vrot.slane %v4313, 7
        %v4735 = vsel %vm597, %v4734, %v4309
        %v4736 = vrot.slane %v4317, 6
        %v4737 = vsel %vm600, %v4736, %v4735
        %v4738 = vrot.slane %v4321, 5
        %v4739 = vsel %vm603, %v4738, %v4737
        %v4740 = vrot.slane %v4325, 4
        %v4741 = vsel %vm606, %v4740, %v4739
        %v4742 = vrot.slane %v4329, 3
        %v4743 = vsel %vm609, %v4742, %v4741
        %v4744 = vrot.slane %v4333, 2
        %v4745 = vsel %vm612, %v4744, %v4743
        %v4746 = vrot.slane %v4337, 1
        %v4747 = vsel %vm615, %v4746, %v4745
        %v4748 = vrot.slane %v4345, 7
        %v4749 = vsel %vm597, %v4748, %v4341
        %v4750 = vrot.slane %v4349, 6
        %v4751 = vsel %vm600, %v4750, %v4749
        %v4752 = vrot.slane %v4353, 5
        %v4753 = vsel %vm603, %v4752, %v4751
        %v4754 = vrot.slane %v4357, 4
        %v4755 = vsel %vm606, %v4754, %v4753
        %v4756 = vrot.slane %v4361, 3
        %v4757 = vsel %vm609, %v4756, %v4755
        %v4758 = vrot.slane %v4365, 2
        %v4759 = vsel %vm612, %v4758, %v4757
        %v4760 = vrot.slane %v4369, 1
        %v4761 = vsel %vm615, %v4760, %v4759
        %v4762 = vrot.slane %v4377, 7
        %v4763 = vsel %vm597, %v4762, %v4373
        %v4764 = vrot.slane %v4381, 6
        %v4765 = vsel %vm600, %v4764, %v4763
        %v4766 = vrot.slane %v4385, 5
        %v4767 = vsel %vm603, %v4766, %v4765
        %v4768 = vrot.slane %v4389, 4
        %v4769 = vsel %vm606, %v4768, %v4767
        %v4770 = vrot.slane %v4393, 3
        %v4771 = vsel %vm609, %v4770, %v4769
        %v4772 = vrot.slane %v4397, 2
        %v4773 = vsel %vm612, %v4772, %v4771
        %v4774 = vrot.slane %v4401, 1
        %v4775 = vsel %vm615, %v4774, %v4773
        %v4776 = vrot.slane %v4411, 7
        %v4777 = vsel %vm597, %v4776, %v4406
        %v4778 = vrot.slane %v4416, 6
        %v4779 = vsel %vm600, %v4778, %v4777
        %v4780 = vrot.slane %v4421, 5
        %v4781 = vsel %vm603, %v4780, %v4779
        %v4782 = vrot.slane %v4426, 4
        %v4783 = vsel %vm606, %v4782, %v4781
        %v4784 = vrot.slane %v4431, 3
        %v4785 = vsel %vm609, %v4784, %v4783
        %v4786 = vrot.slane %v4436, 2
        %v4787 = vsel %vm612, %v4786, %v4785
        %v4788 = vrot.slane %v4441, 1
        %v4789 = vsel %vm615, %v4788, %v4787
        %v4790 = vrot.slane %v4451, 7
        %v4791 = vsel %vm597, %v4790, %v4446
        %v4792 = vrot.slane %v4456, 6
        %v4793 = vsel %vm600, %v4792, %v4791
        %v4794 = vrot.slane %v4461, 5
        %v4795 = vsel %vm603, %v4794, %v4793
        %v4796 = vrot.slane %v4466, 4
        %v4797 = vsel %vm606, %v4796, %v4795
        %v4798 = vrot.slane %v4471, 3
        %v4799 = vsel %vm609, %v4798, %v4797
        %v4800 = vrot.slane %v4476, 2
        %v4801 = vsel %vm612, %v4800, %v4799
        %v4802 = vrot.slane %v4481, 1
        %v4803 = vsel %vm615, %v4802, %v4801
        %v4804 = vrot.slane %v4489, 7
        %v4805 = vsel %vm597, %v4804, %v4485
        %v4806 = vrot.slane %v4493, 6
        %v4807 = vsel %vm600, %v4806, %v4805
        %v4808 = vrot.slane %v4497, 5
        %v4809 = vsel %vm603, %v4808, %v4807
        %v4810 = vrot.slane %v4501, 4
        %v4811 = vsel %vm606, %v4810, %v4809
        %v4812 = vrot.slane %v4505, 3
        %v4813 = vsel %vm609, %v4812, %v4811
        %v4814 = vrot.slane %v4509, 2
        %v4815 = vsel %vm612, %v4814, %v4813
        %v4816 = vrot.slane %v4513, 1
        %v4817 = vsel %vm615, %v4816, %v4815
        %v4818 = vrot.slane %v4521, 7
        %v4819 = vsel %vm597, %v4818, %v4517
        %v4820 = vrot.slane %v4525, 6
        %v4821 = vsel %vm600, %v4820, %v4819
        %v4822 = vrot.slane %v4529, 5
        %v4823 = vsel %vm603, %v4822, %v4821
        %v4824 = vrot.slane %v4533, 4
        %v4825 = vsel %vm606, %v4824, %v4823
        %v4826 = vrot.slane %v4537, 3
        %v4827 = vsel %vm609, %v4826, %v4825
        %v4828 = vrot.slane %v4541, 2
        %v4829 = vsel %vm612, %v4828, %v4827
        %v4830 = vrot.slane %v4545, 1
        %v4831 = vsel %vm615, %v4830, %v4829
        %v4832 = vrot.slane %v4553, 7
        %v4833 = vsel %vm597, %v4832, %v4549
        %v4834 = vrot.slane %v4557, 6
        %v4835 = vsel %vm600, %v4834, %v4833
        %v4836 = vrot.slane %v4561, 5
        %v4837 = vsel %vm603, %v4836, %v4835
        %v4838 = vrot.slane %v4565, 4
        %v4839 = vsel %vm606, %v4838, %v4837
        %v4840 = vrot.slane %v4569, 3
        %v4841 = vsel %vm609, %v4840, %v4839
        %v4842 = vrot.slane %v4573, 2
        %v4843 = vsel %vm612, %v4842, %v4841
        %v4844 = vrot.slane %v4577, 1
        %v4845 = vsel %vm615, %v4844, %v4843
        %v4846 = vrot.slane %v4585, 7
        %v4847 = vsel %vm597, %v4846, %v4581
        %v4848 = vrot.slane %v4589, 6
        %v4849 = vsel %vm600, %v4848, %v4847
        %v4850 = vrot.slane %v4593, 5
        %v4851 = vsel %vm603, %v4850, %v4849
        %v4852 = vrot.slane %v4597, 4
        %v4853 = vsel %vm606, %v4852, %v4851
        %v4854 = vrot.slane %v4601, 3
        %v4855 = vsel %vm609, %v4854, %v4853
        %v4856 = vrot.slane %v4605, 2
        %v4857 = vsel %vm612, %v4856, %v4855
        %v4858 = vrot.slane %v4609, 1
        %v4859 = vsel %vm615, %v4858, %v4857
        %v4878 = vsel %vm597, %v3975, %v4196
        %v4879 = vrot.slane %v3978, 7
        %v4880 = vsel %vm600, %v4879, %v4878
        %v4881 = vrot.slane %v3981, 6
        %v4882 = vsel %vm603, %v4881, %v4880
        %v4883 = vrot.slane %v3984, 5
        %v4884 = vsel %vm606, %v4883, %v4882
        %v4885 = vrot.slane %v3987, 4
        %v4886 = vsel %vm609, %v4885, %v4884
        %v4887 = vrot.slane %v3990, 3
        %v4888 = vsel %vm612, %v4887, %v4886
        %v4889 = vsel %vm615, %v4439, %v4888
        %v4890 = vsel %vm597, %v3999, %v4236
        %v4891 = vrot.slane %v4002, 7
        %v4892 = vsel %vm600, %v4891, %v4890
        %v4893 = vrot.slane %v4005, 6
        %v4894 = vsel %vm603, %v4893, %v4892
        %v4895 = vrot.slane %v4008, 5
        %v4896 = vsel %vm606, %v4895, %v4894
        %v4897 = vrot.slane %v4011, 4
        %v4898 = vsel %vm609, %v4897, %v4896
        %v4899 = vrot.slane %v4014, 3
        %v4900 = vsel %vm612, %v4899, %v4898
        %v4901 = vsel %vm615, %v4479, %v4900
        %v4902 = vrot.slane %v4053, 1
        %v4903 = vsel %vm597, %v4057, %v4902
        %v4904 = vrot.slane %v4061, 7
        %v4905 = vsel %vm600, %v4904, %v4903
        %v4906 = vrot.slane %v4065, 6
        %v4907 = vsel %vm603, %v4906, %v4905
        %v4908 = vrot.slane %v4069, 5
        %v4909 = vsel %vm606, %v4908, %v4907
        %v4910 = vrot.slane %v4073, 4
        %v4911 = vsel %vm609, %v4910, %v4909
        %v4912 = vrot.slane %v4077, 3
        %v4913 = vsel %vm612, %v4912, %v4911
        %v4914 = vrot.slane %v4081, 2
        %v4915 = vsel %vm615, %v4914, %v4913
        %v4916 = vrot.slane %v4085, 1
        %v4917 = vsel %vm597, %v4089, %v4916
        %v4918 = vrot.slane %v4093, 7
        %v4919 = vsel %vm600, %v4918, %v4917
        %v4920 = vrot.slane %v4097, 6
        %v4921 = vsel %vm603, %v4920, %v4919
        %v4922 = vrot.slane %v4101, 5
        %v4923 = vsel %vm606, %v4922, %v4921
        %v4924 = vrot.slane %v4105, 4
        %v4925 = vsel %vm609, %v4924, %v4923
        %v4926 = vrot.slane %v4109, 3
        %v4927 = vsel %vm612, %v4926, %v4925
        %v4928 = vrot.slane %v4113, 2
        %v4929 = vsel %vm615, %v4928, %v4927
        %v4930 = vrot.slane %v4117, 1
        %v4931 = vsel %vm597, %v4121, %v4930
        %v4932 = vrot.slane %v4125, 7
        %v4933 = vsel %vm600, %v4932, %v4931
        %v4934 = vrot.slane %v4129, 6
        %v4935 = vsel %vm603, %v4934, %v4933
        %v4936 = vrot.slane %v4133, 5
        %v4937 = vsel %vm606, %v4936, %v4935
        %v4938 = vrot.slane %v4137, 4
        %v4939 = vsel %vm609, %v4938, %v4937
        %v4940 = vrot.slane %v4141, 3
        %v4941 = vsel %vm612, %v4940, %v4939
        %v4942 = vrot.slane %v4145, 2
        %v4943 = vsel %vm615, %v4942, %v4941
        %v4944 = vrot.slane %v4149, 1
        %v4945 = vsel %vm597, %v4153, %v4944
        %v4946 = vrot.slane %v4157, 7
        %v4947 = vsel %vm600, %v4946, %v4945
        %v4948 = vrot.slane %v4161, 6
        %v4949 = vsel %vm603, %v4948, %v4947
        %v4950 = vrot.slane %v4165, 5
        %v4951 = vsel %vm606, %v4950, %v4949
        %v4952 = vrot.slane %v4169, 4
        %v4953 = vsel %vm609, %v4952, %v4951
        %v4954 = vrot.slane %v4173, 3
        %v4955 = vsel %vm612, %v4954, %v4953
        %v4956 = vrot.slane %v4177, 2
        %v4957 = vsel %vm615, %v4956, %v4955
        %v4958 = vrot.slane %v4198, 1
        %v4959 = vsel %vm597, %v4203, %v4958
        %v4960 = vrot.slane %v4208, 7
        %v4961 = vsel %vm600, %v4960, %v4959
        %v4962 = vrot.slane %v4213, 6
        %v4963 = vsel %vm603, %v4962, %v4961
        %v4964 = vrot.slane %v4218, 5
        %v4965 = vsel %vm606, %v4964, %v4963
        %v4966 = vrot.slane %v4223, 4
        %v4967 = vsel %vm609, %v4966, %v4965
        %v4968 = vrot.slane %v4228, 3
        %v4969 = vsel %vm612, %v4968, %v4967
        %v4970 = vrot.slane %v4233, 2
        %v4971 = vsel %vm615, %v4970, %v4969
        %v4972 = vrot.slane %v4238, 1
        %v4973 = vsel %vm597, %v4243, %v4972
        %v4974 = vrot.slane %v4248, 7
        %v4975 = vsel %vm600, %v4974, %v4973
        %v4976 = vrot.slane %v4253, 6
        %v4977 = vsel %vm603, %v4976, %v4975
        %v4978 = vrot.slane %v4258, 5
        %v4979 = vsel %vm606, %v4978, %v4977
        %v4980 = vrot.slane %v4263, 4
        %v4981 = vsel %vm609, %v4980, %v4979
        %v4982 = vrot.slane %v4268, 3
        %v4983 = vsel %vm612, %v4982, %v4981
        %v4984 = vrot.slane %v4273, 2
        %v4985 = vsel %vm615, %v4984, %v4983
        %v4986 = vrot.slane %v4277, 1
        %v4987 = vsel %vm597, %v4281, %v4986
        %v4988 = vrot.slane %v4285, 7
        %v4989 = vsel %vm600, %v4988, %v4987
        %v4990 = vrot.slane %v4289, 6
        %v4991 = vsel %vm603, %v4990, %v4989
        %v4992 = vrot.slane %v4293, 5
        %v4993 = vsel %vm606, %v4992, %v4991
        %v4994 = vrot.slane %v4297, 4
        %v4995 = vsel %vm609, %v4994, %v4993
        %v4996 = vrot.slane %v4301, 3
        %v4997 = vsel %vm612, %v4996, %v4995
        %v4998 = vrot.slane %v4305, 2
        %v4999 = vsel %vm615, %v4998, %v4997
        %v5000 = vrot.slane %v4309, 1
        %v5001 = vsel %vm597, %v4313, %v5000
        %v5002 = vrot.slane %v4317, 7
        %v5003 = vsel %vm600, %v5002, %v5001
        %v5004 = vrot.slane %v4321, 6
        %v5005 = vsel %vm603, %v5004, %v5003
        %v5006 = vrot.slane %v4325, 5
        %v5007 = vsel %vm606, %v5006, %v5005
        %v5008 = vrot.slane %v4329, 4
        %v5009 = vsel %vm609, %v5008, %v5007
        %v5010 = vrot.slane %v4333, 3
        %v5011 = vsel %vm612, %v5010, %v5009
        %v5012 = vrot.slane %v4337, 2
        %v5013 = vsel %vm615, %v5012, %v5011
        %v5014 = vrot.slane %v4341, 1
        %v5015 = vsel %vm597, %v4345, %v5014
        %v5016 = vrot.slane %v4349, 7
        %v5017 = vsel %vm600, %v5016, %v5015
        %v5018 = vrot.slane %v4353, 6
        %v5019 = vsel %vm603, %v5018, %v5017
        %v5020 = vrot.slane %v4357, 5
        %v5021 = vsel %vm606, %v5020, %v5019
        %v5022 = vrot.slane %v4361, 4
        %v5023 = vsel %vm609, %v5022, %v5021
        %v5024 = vrot.slane %v4365, 3
        %v5025 = vsel %vm612, %v5024, %v5023
        %v5026 = vrot.slane %v4369, 2
        %v5027 = vsel %vm615, %v5026, %v5025
        %v5028 = vrot.slane %v4373, 1
        %v5029 = vsel %vm597, %v4377, %v5028
        %v5030 = vrot.slane %v4381, 7
        %v5031 = vsel %vm600, %v5030, %v5029
        %v5032 = vrot.slane %v4385, 6
        %v5033 = vsel %vm603, %v5032, %v5031
        %v5034 = vrot.slane %v4389, 5
        %v5035 = vsel %vm606, %v5034, %v5033
        %v5036 = vrot.slane %v4393, 4
        %v5037 = vsel %vm609, %v5036, %v5035
        %v5038 = vrot.slane %v4397, 3
        %v5039 = vsel %vm612, %v5038, %v5037
        %v5040 = vrot.slane %v4401, 2
        %v5041 = vsel %vm615, %v5040, %v5039
        %v5042 = vrot.slane %v4406, 1
        %v5043 = vsel %vm597, %v4411, %v5042
        %v5044 = vrot.slane %v4416, 7
        %v5045 = vsel %vm600, %v5044, %v5043
        %v5046 = vrot.slane %v4421, 6
        %v5047 = vsel %vm603, %v5046, %v5045
        %v5048 = vrot.slane %v4426, 5
        %v5049 = vsel %vm606, %v5048, %v5047
        %v5050 = vrot.slane %v4431, 4
        %v5051 = vsel %vm609, %v5050, %v5049
        %v5052 = vrot.slane %v4436, 3
        %v5053 = vsel %vm612, %v5052, %v5051
        %v5054 = vrot.slane %v4441, 2
        %v5055 = vsel %vm615, %v5054, %v5053
        %v5056 = vrot.slane %v4446, 1
        %v5057 = vsel %vm597, %v4451, %v5056
        %v5058 = vrot.slane %v4456, 7
        %v5059 = vsel %vm600, %v5058, %v5057
        %v5060 = vrot.slane %v4461, 6
        %v5061 = vsel %vm603, %v5060, %v5059
        %v5062 = vrot.slane %v4466, 5
        %v5063 = vsel %vm606, %v5062, %v5061
        %v5064 = vrot.slane %v4471, 4
        %v5065 = vsel %vm609, %v5064, %v5063
        %v5066 = vrot.slane %v4476, 3
        %v5067 = vsel %vm612, %v5066, %v5065
        %v5068 = vrot.slane %v4481, 2
        %v5069 = vsel %vm615, %v5068, %v5067
        %v5070 = vrot.slane %v4485, 1
        %v5071 = vsel %vm597, %v4489, %v5070
        %v5072 = vrot.slane %v4493, 7
        %v5073 = vsel %vm600, %v5072, %v5071
        %v5074 = vrot.slane %v4497, 6
        %v5075 = vsel %vm603, %v5074, %v5073
        %v5076 = vrot.slane %v4501, 5
        %v5077 = vsel %vm606, %v5076, %v5075
        %v5078 = vrot.slane %v4505, 4
        %v5079 = vsel %vm609, %v5078, %v5077
        %v5080 = vrot.slane %v4509, 3
        %v5081 = vsel %vm612, %v5080, %v5079
        %v5082 = vrot.slane %v4513, 2
        %v5083 = vsel %vm615, %v5082, %v5081
        %v5084 = vrot.slane %v4517, 1
        %v5085 = vsel %vm597, %v4521, %v5084
        %v5086 = vrot.slane %v4525, 7
        %v5087 = vsel %vm600, %v5086, %v5085
        %v5088 = vrot.slane %v4529, 6
        %v5089 = vsel %vm603, %v5088, %v5087
        %v5090 = vrot.slane %v4533, 5
        %v5091 = vsel %vm606, %v5090, %v5089
        %v5092 = vrot.slane %v4537, 4
        %v5093 = vsel %vm609, %v5092, %v5091
        %v5094 = vrot.slane %v4541, 3
        %v5095 = vsel %vm612, %v5094, %v5093
        %v5096 = vrot.slane %v4545, 2
        %v5097 = vsel %vm615, %v5096, %v5095
        %v5098 = vrot.slane %v4549, 1
        %v5099 = vsel %vm597, %v4553, %v5098
        %v5100 = vrot.slane %v4557, 7
        %v5101 = vsel %vm600, %v5100, %v5099
        %v5102 = vrot.slane %v4561, 6
        %v5103 = vsel %vm603, %v5102, %v5101
        %v5104 = vrot.slane %v4565, 5
        %v5105 = vsel %vm606, %v5104, %v5103
        %v5106 = vrot.slane %v4569, 4
        %v5107 = vsel %vm609, %v5106, %v5105
        %v5108 = vrot.slane %v4573, 3
        %v5109 = vsel %vm612, %v5108, %v5107
        %v5110 = vrot.slane %v4577, 2
        %v5111 = vsel %vm615, %v5110, %v5109
        %v5112 = vrot.slane %v4581, 1
        %v5113 = vsel %vm597, %v4585, %v5112
        %v5114 = vrot.slane %v4589, 7
        %v5115 = vsel %vm600, %v5114, %v5113
        %v5116 = vrot.slane %v4593, 6
        %v5117 = vsel %vm603, %v5116, %v5115
        %v5118 = vrot.slane %v4597, 5
        %v5119 = vsel %vm606, %v5118, %v5117
        %v5120 = vrot.slane %v4601, 4
        %v5121 = vsel %vm609, %v5120, %v5119
        %v5122 = vrot.slane %v4605, 3
        %v5123 = vsel %vm612, %v5122, %v5121
        %v5124 = vrot.slane %v4609, 2
        %v5125 = vsel %vm615, %v5124, %v5123
        %5126 = vrot.lane.b32.xlu0 %v4889, 16
        %v5127 = vpop.permute.xlu0 %5126
        %5128 = vrot.lane.b32.xlu0 %v4901, 16
        %v5129 = vpop.permute.xlu0 %5128
        %5130 = vrot.lane.b32.xlu0 %v4915, 16
        %v5131 = vpop.permute.xlu0 %5130
        %5132 = vrot.lane.b32.xlu0 %v4929, 16
        %v5133 = vpop.permute.xlu0 %5132
        %5134 = vrot.lane.b32.xlu0 %v4943, 16
        %v5135 = vpop.permute.xlu0 %5134
        %5136 = vrot.lane.b32.xlu0 %v4957, 16
        %v5137 = vpop.permute.xlu0 %5136
        %5138 = vrot.lane.b32.xlu0 %v4971, 16
        %v5139 = vpop.permute.xlu0 %5138
        %5140 = vrot.lane.b32.xlu0 %v4985, 16
        %v5141 = vpop.permute.xlu0 %5140
        %5142 = vrot.lane.b32.xlu0 %v4999, 16
        %v5143 = vpop.permute.xlu0 %5142
        %5144 = vrot.lane.b32.xlu0 %v5013, 16
        %v5145 = vpop.permute.xlu0 %5144
        %5146 = vrot.lane.b32.xlu0 %v5027, 16
        %v5147 = vpop.permute.xlu0 %5146
        %5148 = vrot.lane.b32.xlu0 %v5041, 16
        %v5149 = vpop.permute.xlu0 %5148
        %5150 = vrot.lane.b32.xlu0 %v5055, 16
        %v5151 = vpop.permute.xlu0 %5150
        %5152 = vrot.lane.b32.xlu0 %v5069, 16
        %v5153 = vpop.permute.xlu0 %5152
        %5154 = vrot.lane.b32.xlu0 %v5083, 16
        %v5155 = vpop.permute.xlu0 %5154
        %5156 = vrot.lane.b32.xlu0 %v5097, 16
        %v5157 = vpop.permute.xlu0 %5156
        %5158 = vrot.lane.b32.xlu0 %v5111, 16
        %v5159 = vpop.permute.xlu0 %5158
        %5160 = vrot.lane.b32.xlu0 %v5125, 16
        %v5161 = vpop.permute.xlu0 %5160
        %v5180 = vsel %vm597, %v4201, %v4404
        %v5181 = vsel %vm600, %v3978, %v5180
        %v5182 = vrot.slane %v3981, 7
        %v5183 = vsel %vm603, %v5182, %v5181
        %v5184 = vrot.slane %v3984, 6
        %v5185 = vsel %vm606, %v5184, %v5183
        %v5186 = vrot.slane %v3987, 5
        %v5187 = vsel %vm609, %v5186, %v5185
        %v5188 = vrot.slane %v3990, 4
        %v5189 = vsel %vm612, %v5188, %v5187
        %v5190 = vrot.slane %v3993, 3
        %v5191 = vsel %vm615, %v5190, %v5189
        %v5192 = vsel %vm597, %v4241, %v4444
        %v5193 = vsel %vm600, %v4002, %v5192
        %v5194 = vrot.slane %v4005, 7
        %v5195 = vsel %vm603, %v5194, %v5193
        %v5196 = vrot.slane %v4008, 6
        %v5197 = vsel %vm606, %v5196, %v5195
        %v5198 = vrot.slane %v4011, 5
        %v5199 = vsel %vm609, %v5198, %v5197
        %v5200 = vrot.slane %v4014, 4
        %v5201 = vsel %vm612, %v5200, %v5199
        %v5202 = vrot.slane %v4017, 3
        %v5203 = vsel %vm615, %v5202, %v5201
        %v5204 = vrot.slane %v4053, 2
        %v5205 = vrot.slane %v4057, 1
        %v5206 = vsel %vm597, %v5205, %v5204
        %v5207 = vsel %vm600, %v4061, %v5206
        %v5208 = vrot.slane %v4065, 7
        %v5209 = vsel %vm603, %v5208, %v5207
        %v5210 = vrot.slane %v4069, 6
        %v5211 = vsel %vm606, %v5210, %v5209
        %v5212 = vrot.slane %v4073, 5
        %v5213 = vsel %vm609, %v5212, %v5211
        %v5214 = vrot.slane %v4077, 4
        %v5215 = vsel %vm612, %v5214, %v5213
        %v5216 = vrot.slane %v4081, 3
        %v5217 = vsel %vm615, %v5216, %v5215
        %v5218 = vrot.slane %v4085, 2
        %v5219 = vrot.slane %v4089, 1
        %v5220 = vsel %vm597, %v5219, %v5218
        %v5221 = vsel %vm600, %v4093, %v5220
        %v5222 = vrot.slane %v4097, 7
        %v5223 = vsel %vm603, %v5222, %v5221
        %v5224 = vrot.slane %v4101, 6
        %v5225 = vsel %vm606, %v5224, %v5223
        %v5226 = vrot.slane %v4105, 5
        %v5227 = vsel %vm609, %v5226, %v5225
        %v5228 = vrot.slane %v4109, 4
        %v5229 = vsel %vm612, %v5228, %v5227
        %v5230 = vrot.slane %v4113, 3
        %v5231 = vsel %vm615, %v5230, %v5229
        %v5232 = vrot.slane %v4117, 2
        %v5233 = vrot.slane %v4121, 1
        %v5234 = vsel %vm597, %v5233, %v5232
        %v5235 = vsel %vm600, %v4125, %v5234
        %v5236 = vrot.slane %v4129, 7
        %v5237 = vsel %vm603, %v5236, %v5235
        %v5238 = vrot.slane %v4133, 6
        %v5239 = vsel %vm606, %v5238, %v5237
        %v5240 = vrot.slane %v4137, 5
        %v5241 = vsel %vm609, %v5240, %v5239
        %v5242 = vrot.slane %v4141, 4
        %v5243 = vsel %vm612, %v5242, %v5241
        %v5244 = vrot.slane %v4145, 3
        %v5245 = vsel %vm615, %v5244, %v5243
        %v5246 = vrot.slane %v4149, 2
        %v5247 = vrot.slane %v4153, 1
        %v5248 = vsel %vm597, %v5247, %v5246
        %v5249 = vsel %vm600, %v4157, %v5248
        %v5250 = vrot.slane %v4161, 7
        %v5251 = vsel %vm603, %v5250, %v5249
        %v5252 = vrot.slane %v4165, 6
        %v5253 = vsel %vm606, %v5252, %v5251
        %v5254 = vrot.slane %v4169, 5
        %v5255 = vsel %vm609, %v5254, %v5253
        %v5256 = vrot.slane %v4173, 4
        %v5257 = vsel %vm612, %v5256, %v5255
        %v5258 = vrot.slane %v4177, 3
        %v5259 = vsel %vm615, %v5258, %v5257
        %v5260 = vrot.slane %v4198, 2
        %v5261 = vrot.slane %v4203, 1
        %v5262 = vsel %vm597, %v5261, %v5260
        %v5263 = vsel %vm600, %v4208, %v5262
        %v5264 = vrot.slane %v4213, 7
        %v5265 = vsel %vm603, %v5264, %v5263
        %v5266 = vrot.slane %v4218, 6
        %v5267 = vsel %vm606, %v5266, %v5265
        %v5268 = vrot.slane %v4223, 5
        %v5269 = vsel %vm609, %v5268, %v5267
        %v5270 = vrot.slane %v4228, 4
        %v5271 = vsel %vm612, %v5270, %v5269
        %v5272 = vrot.slane %v4233, 3
        %v5273 = vsel %vm615, %v5272, %v5271
        %v5274 = vrot.slane %v4238, 2
        %v5275 = vrot.slane %v4243, 1
        %v5276 = vsel %vm597, %v5275, %v5274
        %v5277 = vsel %vm600, %v4248, %v5276
        %v5278 = vrot.slane %v4253, 7
        %v5279 = vsel %vm603, %v5278, %v5277
        %v5280 = vrot.slane %v4258, 6
        %v5281 = vsel %vm606, %v5280, %v5279
        %v5282 = vrot.slane %v4263, 5
        %v5283 = vsel %vm609, %v5282, %v5281
        %v5284 = vrot.slane %v4268, 4
        %v5285 = vsel %vm612, %v5284, %v5283
        %v5286 = vrot.slane %v4273, 3
        %v5287 = vsel %vm615, %v5286, %v5285
        %v5288 = vrot.slane %v4277, 2
        %v5289 = vrot.slane %v4281, 1
        %v5290 = vsel %vm597, %v5289, %v5288
        %v5291 = vsel %vm600, %v4285, %v5290
        %v5292 = vrot.slane %v4289, 7
        %v5293 = vsel %vm603, %v5292, %v5291
        %v5294 = vrot.slane %v4293, 6
        %v5295 = vsel %vm606, %v5294, %v5293
        %v5296 = vrot.slane %v4297, 5
        %v5297 = vsel %vm609, %v5296, %v5295
        %v5298 = vrot.slane %v4301, 4
        %v5299 = vsel %vm612, %v5298, %v5297
        %v5300 = vrot.slane %v4305, 3
        %v5301 = vsel %vm615, %v5300, %v5299
        %v5302 = vrot.slane %v4309, 2
        %v5303 = vrot.slane %v4313, 1
        %v5304 = vsel %vm597, %v5303, %v5302
        %v5305 = vsel %vm600, %v4317, %v5304
        %v5306 = vrot.slane %v4321, 7
        %v5307 = vsel %vm603, %v5306, %v5305
        %v5308 = vrot.slane %v4325, 6
        %v5309 = vsel %vm606, %v5308, %v5307
        %v5310 = vrot.slane %v4329, 5
        %v5311 = vsel %vm609, %v5310, %v5309
        %v5312 = vrot.slane %v4333, 4
        %v5313 = vsel %vm612, %v5312, %v5311
        %v5314 = vrot.slane %v4337, 3
        %v5315 = vsel %vm615, %v5314, %v5313
        %v5316 = vrot.slane %v4341, 2
        %v5317 = vrot.slane %v4345, 1
        %v5318 = vsel %vm597, %v5317, %v5316
        %v5319 = vsel %vm600, %v4349, %v5318
        %v5320 = vrot.slane %v4353, 7
        %v5321 = vsel %vm603, %v5320, %v5319
        %v5322 = vrot.slane %v4357, 6
        %v5323 = vsel %vm606, %v5322, %v5321
        %v5324 = vrot.slane %v4361, 5
        %v5325 = vsel %vm609, %v5324, %v5323
        %v5326 = vrot.slane %v4365, 4
        %v5327 = vsel %vm612, %v5326, %v5325
        %v5328 = vrot.slane %v4369, 3
        %v5329 = vsel %vm615, %v5328, %v5327
        %v5330 = vrot.slane %v4373, 2
        %v5331 = vrot.slane %v4377, 1
        %v5332 = vsel %vm597, %v5331, %v5330
        %v5333 = vsel %vm600, %v4381, %v5332
        %v5334 = vrot.slane %v4385, 7
        %v5335 = vsel %vm603, %v5334, %v5333
        %v5336 = vrot.slane %v4389, 6
        %v5337 = vsel %vm606, %v5336, %v5335
        %v5338 = vrot.slane %v4393, 5
        %v5339 = vsel %vm609, %v5338, %v5337
        %v5340 = vrot.slane %v4397, 4
        %v5341 = vsel %vm612, %v5340, %v5339
        %v5342 = vrot.slane %v4401, 3
        %v5343 = vsel %vm615, %v5342, %v5341
        %v5344 = vrot.slane %v4406, 2
        %v5345 = vrot.slane %v4411, 1
        %v5346 = vsel %vm597, %v5345, %v5344
        %v5347 = vsel %vm600, %v4416, %v5346
        %v5348 = vrot.slane %v4421, 7
        %v5349 = vsel %vm603, %v5348, %v5347
        %v5350 = vrot.slane %v4426, 6
        %v5351 = vsel %vm606, %v5350, %v5349
        %v5352 = vrot.slane %v4431, 5
        %v5353 = vsel %vm609, %v5352, %v5351
        %v5354 = vrot.slane %v4436, 4
        %v5355 = vsel %vm612, %v5354, %v5353
        %v5356 = vrot.slane %v4441, 3
        %v5357 = vsel %vm615, %v5356, %v5355
        %v5358 = vrot.slane %v4446, 2
        %v5359 = vrot.slane %v4451, 1
        %v5360 = vsel %vm597, %v5359, %v5358
        %v5361 = vsel %vm600, %v4456, %v5360
        %v5362 = vrot.slane %v4461, 7
        %v5363 = vsel %vm603, %v5362, %v5361
        %v5364 = vrot.slane %v4466, 6
        %v5365 = vsel %vm606, %v5364, %v5363
        %v5366 = vrot.slane %v4471, 5
        %v5367 = vsel %vm609, %v5366, %v5365
        %v5368 = vrot.slane %v4476, 4
        %v5369 = vsel %vm612, %v5368, %v5367
        %v5370 = vrot.slane %v4481, 3
        %v5371 = vsel %vm615, %v5370, %v5369
        %v5372 = vrot.slane %v4485, 2
        %v5373 = vrot.slane %v4489, 1
        %v5374 = vsel %vm597, %v5373, %v5372
        %v5375 = vsel %vm600, %v4493, %v5374
        %v5376 = vrot.slane %v4497, 7
        %v5377 = vsel %vm603, %v5376, %v5375
        %v5378 = vrot.slane %v4501, 6
        %v5379 = vsel %vm606, %v5378, %v5377
        %v5380 = vrot.slane %v4505, 5
        %v5381 = vsel %vm609, %v5380, %v5379
        %v5382 = vrot.slane %v4509, 4
        %v5383 = vsel %vm612, %v5382, %v5381
        %v5384 = vrot.slane %v4513, 3
        %v5385 = vsel %vm615, %v5384, %v5383
        %v5386 = vrot.slane %v4517, 2
        %v5387 = vrot.slane %v4521, 1
        %v5388 = vsel %vm597, %v5387, %v5386
        %v5389 = vsel %vm600, %v4525, %v5388
        %v5390 = vrot.slane %v4529, 7
        %v5391 = vsel %vm603, %v5390, %v5389
        %v5392 = vrot.slane %v4533, 6
        %v5393 = vsel %vm606, %v5392, %v5391
        %v5394 = vrot.slane %v4537, 5
        %v5395 = vsel %vm609, %v5394, %v5393
        %v5396 = vrot.slane %v4541, 4
        %v5397 = vsel %vm612, %v5396, %v5395
        %v5398 = vrot.slane %v4545, 3
        %v5399 = vsel %vm615, %v5398, %v5397
        %v5400 = vrot.slane %v4549, 2
        %v5401 = vrot.slane %v4553, 1
        %v5402 = vsel %vm597, %v5401, %v5400
        %v5403 = vsel %vm600, %v4557, %v5402
        %v5404 = vrot.slane %v4561, 7
        %v5405 = vsel %vm603, %v5404, %v5403
        %v5406 = vrot.slane %v4565, 6
        %v5407 = vsel %vm606, %v5406, %v5405
        %v5408 = vrot.slane %v4569, 5
        %v5409 = vsel %vm609, %v5408, %v5407
        %v5410 = vrot.slane %v4573, 4
        %v5411 = vsel %vm612, %v5410, %v5409
        %v5412 = vrot.slane %v4577, 3
        %v5413 = vsel %vm615, %v5412, %v5411
        %v5414 = vrot.slane %v4581, 2
        %v5415 = vrot.slane %v4585, 1
        %v5416 = vsel %vm597, %v5415, %v5414
        %v5417 = vsel %vm600, %v4589, %v5416
        %v5418 = vrot.slane %v4593, 7
        %v5419 = vsel %vm603, %v5418, %v5417
        %v5420 = vrot.slane %v4597, 6
        %v5421 = vsel %vm606, %v5420, %v5419
        %v5422 = vrot.slane %v4601, 5
        %v5423 = vsel %vm609, %v5422, %v5421
        %v5424 = vrot.slane %v4605, 4
        %v5425 = vsel %vm612, %v5424, %v5423
        %v5426 = vrot.slane %v4609, 3
        %v5427 = vsel %vm615, %v5426, %v5425
        %5428 = vrot.lane.b32.xlu0 %v5191, 32
        %v5429 = vpop.permute.xlu0 %5428
        %5430 = vrot.lane.b32.xlu0 %v5203, 32
        %v5431 = vpop.permute.xlu0 %5430
        %5432 = vrot.lane.b32.xlu0 %v5217, 32
        %v5433 = vpop.permute.xlu0 %5432
        %5434 = vrot.lane.b32.xlu0 %v5231, 32
        %v5435 = vpop.permute.xlu0 %5434
        %5436 = vrot.lane.b32.xlu0 %v5245, 32
        %v5437 = vpop.permute.xlu0 %5436
        %5438 = vrot.lane.b32.xlu0 %v5259, 32
        %v5439 = vpop.permute.xlu0 %5438
        %5440 = vrot.lane.b32.xlu0 %v5273, 32
        %v5441 = vpop.permute.xlu0 %5440
        %5442 = vrot.lane.b32.xlu0 %v5287, 32
        %v5443 = vpop.permute.xlu0 %5442
        %5444 = vrot.lane.b32.xlu0 %v5301, 32
        %v5445 = vpop.permute.xlu0 %5444
        %5446 = vrot.lane.b32.xlu0 %v5315, 32
        %v5447 = vpop.permute.xlu0 %5446
        %5448 = vrot.lane.b32.xlu0 %v5329, 32
        %v5449 = vpop.permute.xlu0 %5448
        %5450 = vrot.lane.b32.xlu0 %v5343, 32
        %v5451 = vpop.permute.xlu0 %5450
        %5452 = vrot.lane.b32.xlu0 %v5357, 32
        %v5453 = vpop.permute.xlu0 %5452
        %5454 = vrot.lane.b32.xlu0 %v5371, 32
        %v5455 = vpop.permute.xlu0 %5454
        %5456 = vrot.lane.b32.xlu0 %v5385, 32
        %v5457 = vpop.permute.xlu0 %5456
        %5458 = vrot.lane.b32.xlu0 %v5399, 32
        %v5459 = vpop.permute.xlu0 %5458
        %5460 = vrot.lane.b32.xlu0 %v5413, 32
        %v5461 = vpop.permute.xlu0 %5460
        %5462 = vrot.lane.b32.xlu0 %v5427, 32
        %v5463 = vpop.permute.xlu0 %5462
        %v5482 = vrot.slane %v3972, 3
        %v5483 = vsel %vm597, %v4409, %v5482
        %v5484 = vsel %vm600, %v4206, %v5483
        %v5485 = vsel %vm603, %v3981, %v5484
        %v5486 = vrot.slane %v3984, 7
        %v5487 = vsel %vm606, %v5486, %v5485
        %v5488 = vrot.slane %v3987, 6
        %v5489 = vsel %vm609, %v5488, %v5487
        %v5490 = vrot.slane %v3990, 5
        %v5491 = vsel %vm612, %v5490, %v5489
        %v5492 = vrot.slane %v3993, 4
        %v5493 = vsel %vm615, %v5492, %v5491
        %v5494 = vrot.slane %v3996, 3
        %v5495 = vsel %vm597, %v4449, %v5494
        %v5496 = vsel %vm600, %v4246, %v5495
        %v5497 = vsel %vm603, %v4005, %v5496
        %v5498 = vrot.slane %v4008, 7
        %v5499 = vsel %vm606, %v5498, %v5497
        %v5500 = vrot.slane %v4011, 6
        %v5501 = vsel %vm609, %v5500, %v5499
        %v5502 = vrot.slane %v4014, 5
        %v5503 = vsel %vm612, %v5502, %v5501
        %v5504 = vrot.slane %v4017, 4
        %v5505 = vsel %vm615, %v5504, %v5503
        %v5506 = vrot.slane %v4053, 3
        %v5507 = vrot.slane %v4057, 2
        %v5508 = vsel %vm597, %v5507, %v5506
        %v5509 = vrot.slane %v4061, 1
        %v5510 = vsel %vm600, %v5509, %v5508
        %v5511 = vsel %vm603, %v4065, %v5510
        %v5512 = vrot.slane %v4069, 7
        %v5513 = vsel %vm606, %v5512, %v5511
        %v5514 = vrot.slane %v4073, 6
        %v5515 = vsel %vm609, %v5514, %v5513
        %v5516 = vrot.slane %v4077, 5
        %v5517 = vsel %vm612, %v5516, %v5515
        %v5518 = vrot.slane %v4081, 4
        %v5519 = vsel %vm615, %v5518, %v5517
        %v5520 = vrot.slane %v4085, 3
        %v5521 = vrot.slane %v4089, 2
        %v5522 = vsel %vm597, %v5521, %v5520
        %v5523 = vrot.slane %v4093, 1
        %v5524 = vsel %vm600, %v5523, %v5522
        %v5525 = vsel %vm603, %v4097, %v5524
        %v5526 = vrot.slane %v4101, 7
        %v5527 = vsel %vm606, %v5526, %v5525
        %v5528 = vrot.slane %v4105, 6
        %v5529 = vsel %vm609, %v5528, %v5527
        %v5530 = vrot.slane %v4109, 5
        %v5531 = vsel %vm612, %v5530, %v5529
        %v5532 = vrot.slane %v4113, 4
        %v5533 = vsel %vm615, %v5532, %v5531
        %v5534 = vrot.slane %v4117, 3
        %v5535 = vrot.slane %v4121, 2
        %v5536 = vsel %vm597, %v5535, %v5534
        %v5537 = vrot.slane %v4125, 1
        %v5538 = vsel %vm600, %v5537, %v5536
        %v5539 = vsel %vm603, %v4129, %v5538
        %v5540 = vrot.slane %v4133, 7
        %v5541 = vsel %vm606, %v5540, %v5539
        %v5542 = vrot.slane %v4137, 6
        %v5543 = vsel %vm609, %v5542, %v5541
        %v5544 = vrot.slane %v4141, 5
        %v5545 = vsel %vm612, %v5544, %v5543
        %v5546 = vrot.slane %v4145, 4
        %v5547 = vsel %vm615, %v5546, %v5545
        %v5548 = vrot.slane %v4149, 3
        %v5549 = vrot.slane %v4153, 2
        %v5550 = vsel %vm597, %v5549, %v5548
        %v5551 = vrot.slane %v4157, 1
        %v5552 = vsel %vm600, %v5551, %v5550
        %v5553 = vsel %vm603, %v4161, %v5552
        %v5554 = vrot.slane %v4165, 7
        %v5555 = vsel %vm606, %v5554, %v5553
        %v5556 = vrot.slane %v4169, 6
        %v5557 = vsel %vm609, %v5556, %v5555
        %v5558 = vrot.slane %v4173, 5
        %v5559 = vsel %vm612, %v5558, %v5557
        %v5560 = vrot.slane %v4177, 4
        %v5561 = vsel %vm615, %v5560, %v5559
        %v5562 = vrot.slane %v4198, 3
        %v5563 = vrot.slane %v4203, 2
        %v5564 = vsel %vm597, %v5563, %v5562
        %v5565 = vrot.slane %v4208, 1
        %v5566 = vsel %vm600, %v5565, %v5564
        %v5567 = vsel %vm603, %v4213, %v5566
        %v5568 = vrot.slane %v4218, 7
        %v5569 = vsel %vm606, %v5568, %v5567
        %v5570 = vrot.slane %v4223, 6
        %v5571 = vsel %vm609, %v5570, %v5569
        %v5572 = vrot.slane %v4228, 5
        %v5573 = vsel %vm612, %v5572, %v5571
        %v5574 = vrot.slane %v4233, 4
        %v5575 = vsel %vm615, %v5574, %v5573
        %v5576 = vrot.slane %v4238, 3
        %v5577 = vrot.slane %v4243, 2
        %v5578 = vsel %vm597, %v5577, %v5576
        %v5579 = vrot.slane %v4248, 1
        %v5580 = vsel %vm600, %v5579, %v5578
        %v5581 = vsel %vm603, %v4253, %v5580
        %v5582 = vrot.slane %v4258, 7
        %v5583 = vsel %vm606, %v5582, %v5581
        %v5584 = vrot.slane %v4263, 6
        %v5585 = vsel %vm609, %v5584, %v5583
        %v5586 = vrot.slane %v4268, 5
        %v5587 = vsel %vm612, %v5586, %v5585
        %v5588 = vrot.slane %v4273, 4
        %v5589 = vsel %vm615, %v5588, %v5587
        %v5590 = vrot.slane %v4277, 3
        %v5591 = vrot.slane %v4281, 2
        %v5592 = vsel %vm597, %v5591, %v5590
        %v5593 = vrot.slane %v4285, 1
        %v5594 = vsel %vm600, %v5593, %v5592
        %v5595 = vsel %vm603, %v4289, %v5594
        %v5596 = vrot.slane %v4293, 7
        %v5597 = vsel %vm606, %v5596, %v5595
        %v5598 = vrot.slane %v4297, 6
        %v5599 = vsel %vm609, %v5598, %v5597
        %v5600 = vrot.slane %v4301, 5
        %v5601 = vsel %vm612, %v5600, %v5599
        %v5602 = vrot.slane %v4305, 4
        %v5603 = vsel %vm615, %v5602, %v5601
        %v5604 = vrot.slane %v4309, 3
        %v5605 = vrot.slane %v4313, 2
        %v5606 = vsel %vm597, %v5605, %v5604
        %v5607 = vrot.slane %v4317, 1
        %v5608 = vsel %vm600, %v5607, %v5606
        %v5609 = vsel %vm603, %v4321, %v5608
        %v5610 = vrot.slane %v4325, 7
        %v5611 = vsel %vm606, %v5610, %v5609
        %v5612 = vrot.slane %v4329, 6
        %v5613 = vsel %vm609, %v5612, %v5611
        %v5614 = vrot.slane %v4333, 5
        %v5615 = vsel %vm612, %v5614, %v5613
        %v5616 = vrot.slane %v4337, 4
        %v5617 = vsel %vm615, %v5616, %v5615
        %v5618 = vrot.slane %v4341, 3
        %v5619 = vrot.slane %v4345, 2
        %v5620 = vsel %vm597, %v5619, %v5618
        %v5621 = vrot.slane %v4349, 1
        %v5622 = vsel %vm600, %v5621, %v5620
        %v5623 = vsel %vm603, %v4353, %v5622
        %v5624 = vrot.slane %v4357, 7
        %v5625 = vsel %vm606, %v5624, %v5623
        %v5626 = vrot.slane %v4361, 6
        %v5627 = vsel %vm609, %v5626, %v5625
        %v5628 = vrot.slane %v4365, 5
        %v5629 = vsel %vm612, %v5628, %v5627
        %v5630 = vrot.slane %v4369, 4
        %v5631 = vsel %vm615, %v5630, %v5629
        %v5632 = vrot.slane %v4373, 3
        %v5633 = vrot.slane %v4377, 2
        %v5634 = vsel %vm597, %v5633, %v5632
        %v5635 = vrot.slane %v4381, 1
        %v5636 = vsel %vm600, %v5635, %v5634
        %v5637 = vsel %vm603, %v4385, %v5636
        %v5638 = vrot.slane %v4389, 7
        %v5639 = vsel %vm606, %v5638, %v5637
        %v5640 = vrot.slane %v4393, 6
        %v5641 = vsel %vm609, %v5640, %v5639
        %v5642 = vrot.slane %v4397, 5
        %v5643 = vsel %vm612, %v5642, %v5641
        %v5644 = vrot.slane %v4401, 4
        %v5645 = vsel %vm615, %v5644, %v5643
        %v5646 = vrot.slane %v4406, 3
        %v5647 = vrot.slane %v4411, 2
        %v5648 = vsel %vm597, %v5647, %v5646
        %v5649 = vrot.slane %v4416, 1
        %v5650 = vsel %vm600, %v5649, %v5648
        %v5651 = vsel %vm603, %v4421, %v5650
        %v5652 = vrot.slane %v4426, 7
        %v5653 = vsel %vm606, %v5652, %v5651
        %v5654 = vrot.slane %v4431, 6
        %v5655 = vsel %vm609, %v5654, %v5653
        %v5656 = vrot.slane %v4436, 5
        %v5657 = vsel %vm612, %v5656, %v5655
        %v5658 = vrot.slane %v4441, 4
        %v5659 = vsel %vm615, %v5658, %v5657
        %v5660 = vrot.slane %v4446, 3
        %v5661 = vrot.slane %v4451, 2
        %v5662 = vsel %vm597, %v5661, %v5660
        %v5663 = vrot.slane %v4456, 1
        %v5664 = vsel %vm600, %v5663, %v5662
        %v5665 = vsel %vm603, %v4461, %v5664
        %v5666 = vrot.slane %v4466, 7
        %v5667 = vsel %vm606, %v5666, %v5665
        %v5668 = vrot.slane %v4471, 6
        %v5669 = vsel %vm609, %v5668, %v5667
        %v5670 = vrot.slane %v4476, 5
        %v5671 = vsel %vm612, %v5670, %v5669
        %v5672 = vrot.slane %v4481, 4
        %v5673 = vsel %vm615, %v5672, %v5671
        %v5674 = vrot.slane %v4485, 3
        %v5675 = vrot.slane %v4489, 2
        %v5676 = vsel %vm597, %v5675, %v5674
        %v5677 = vrot.slane %v4493, 1
        %v5678 = vsel %vm600, %v5677, %v5676
        %v5679 = vsel %vm603, %v4497, %v5678
        %v5680 = vrot.slane %v4501, 7
        %v5681 = vsel %vm606, %v5680, %v5679
        %v5682 = vrot.slane %v4505, 6
        %v5683 = vsel %vm609, %v5682, %v5681
        %v5684 = vrot.slane %v4509, 5
        %v5685 = vsel %vm612, %v5684, %v5683
        %v5686 = vrot.slane %v4513, 4
        %v5687 = vsel %vm615, %v5686, %v5685
        %v5688 = vrot.slane %v4517, 3
        %v5689 = vrot.slane %v4521, 2
        %v5690 = vsel %vm597, %v5689, %v5688
        %v5691 = vrot.slane %v4525, 1
        %v5692 = vsel %vm600, %v5691, %v5690
        %v5693 = vsel %vm603, %v4529, %v5692
        %v5694 = vrot.slane %v4533, 7
        %v5695 = vsel %vm606, %v5694, %v5693
        %v5696 = vrot.slane %v4537, 6
        %v5697 = vsel %vm609, %v5696, %v5695
        %v5698 = vrot.slane %v4541, 5
        %v5699 = vsel %vm612, %v5698, %v5697
        %v5700 = vrot.slane %v4545, 4
        %v5701 = vsel %vm615, %v5700, %v5699
        %v5702 = vrot.slane %v4549, 3
        %v5703 = vrot.slane %v4553, 2
        %v5704 = vsel %vm597, %v5703, %v5702
        %v5705 = vrot.slane %v4557, 1
        %v5706 = vsel %vm600, %v5705, %v5704
        %v5707 = vsel %vm603, %v4561, %v5706
        %v5708 = vrot.slane %v4565, 7
        %v5709 = vsel %vm606, %v5708, %v5707
        %v5710 = vrot.slane %v4569, 6
        %v5711 = vsel %vm609, %v5710, %v5709
        %v5712 = vrot.slane %v4573, 5
        %v5713 = vsel %vm612, %v5712, %v5711
        %v5714 = vrot.slane %v4577, 4
        %v5715 = vsel %vm615, %v5714, %v5713
        %v5716 = vrot.slane %v4581, 3
        %v5717 = vrot.slane %v4585, 2
        %v5718 = vsel %vm597, %v5717, %v5716
        %v5719 = vrot.slane %v4589, 1
        %v5720 = vsel %vm600, %v5719, %v5718
        %v5721 = vsel %vm603, %v4593, %v5720
        %v5722 = vrot.slane %v4597, 7
        %v5723 = vsel %vm606, %v5722, %v5721
        %v5724 = vrot.slane %v4601, 6
        %v5725 = vsel %vm609, %v5724, %v5723
        %v5726 = vrot.slane %v4605, 5
        %v5727 = vsel %vm612, %v5726, %v5725
        %v5728 = vrot.slane %v4609, 4
        %v5729 = vsel %vm615, %v5728, %v5727
        %5730 = vrot.lane.b32.xlu0 %v5493, 48
        %v5731 = vpop.permute.xlu0 %5730
        %5732 = vrot.lane.b32.xlu0 %v5505, 48
        %v5733 = vpop.permute.xlu0 %5732
        %5734 = vrot.lane.b32.xlu0 %v5519, 48
        %v5735 = vpop.permute.xlu0 %5734
        %5736 = vrot.lane.b32.xlu0 %v5533, 48
        %v5737 = vpop.permute.xlu0 %5736
        %5738 = vrot.lane.b32.xlu0 %v5547, 48
        %v5739 = vpop.permute.xlu0 %5738
        %5740 = vrot.lane.b32.xlu0 %v5561, 48
        %v5741 = vpop.permute.xlu0 %5740
        %5742 = vrot.lane.b32.xlu0 %v5575, 48
        %v5743 = vpop.permute.xlu0 %5742
        %5744 = vrot.lane.b32.xlu0 %v5589, 48
        %v5745 = vpop.permute.xlu0 %5744
        %5746 = vrot.lane.b32.xlu0 %v5603, 48
        %v5747 = vpop.permute.xlu0 %5746
        %5748 = vrot.lane.b32.xlu0 %v5617, 48
        %v5749 = vpop.permute.xlu0 %5748
        %5750 = vrot.lane.b32.xlu0 %v5631, 48
        %v5751 = vpop.permute.xlu0 %5750
        %5752 = vrot.lane.b32.xlu0 %v5645, 48
        %v5753 = vpop.permute.xlu0 %5752
        %5754 = vrot.lane.b32.xlu0 %v5659, 48
        %v5755 = vpop.permute.xlu0 %5754
        %5756 = vrot.lane.b32.xlu0 %v5673, 48
        %v5757 = vpop.permute.xlu0 %5756
        %5758 = vrot.lane.b32.xlu0 %v5687, 48
        %v5759 = vpop.permute.xlu0 %5758
        %5760 = vrot.lane.b32.xlu0 %v5701, 48
        %v5761 = vpop.permute.xlu0 %5760
        %5762 = vrot.lane.b32.xlu0 %v5715, 48
        %v5763 = vpop.permute.xlu0 %5762
        %5764 = vrot.lane.b32.xlu0 %v5729, 48
        %v5765 = vpop.permute.xlu0 %5764
        %v5784 = vrot.slane %v3972, 4
        %v5785 = vrot.slane %v3975, 3
        %v5786 = vsel %vm597, %v5785, %v5784
        %v5787 = vsel %vm600, %v4414, %v5786
        %v5788 = vsel %vm603, %v4211, %v5787
        %v5789 = vsel %vm606, %v3984, %v5788
        %v5790 = vrot.slane %v3987, 7
        %v5791 = vsel %vm609, %v5790, %v5789
        %v5792 = vrot.slane %v3990, 6
        %v5793 = vsel %vm612, %v5792, %v5791
        %v5794 = vrot.slane %v3993, 5
        %v5795 = vsel %vm615, %v5794, %v5793
        %v5796 = vrot.slane %v3996, 4
        %v5797 = vrot.slane %v3999, 3
        %v5798 = vsel %vm597, %v5797, %v5796
        %v5799 = vsel %vm600, %v4454, %v5798
        %v5800 = vsel %vm603, %v4251, %v5799
        %v5801 = vsel %vm606, %v4008, %v5800
        %v5802 = vrot.slane %v4011, 7
        %v5803 = vsel %vm609, %v5802, %v5801
        %v5804 = vrot.slane %v4014, 6
        %v5805 = vsel %vm612, %v5804, %v5803
        %v5806 = vrot.slane %v4017, 5
        %v5807 = vsel %vm615, %v5806, %v5805
        %v5808 = vrot.slane %v4053, 4
        %v5809 = vrot.slane %v4057, 3
        %v5810 = vsel %vm597, %v5809, %v5808
        %v5811 = vrot.slane %v4061, 2
        %v5812 = vsel %vm600, %v5811, %v5810
        %v5813 = vrot.slane %v4065, 1
        %v5814 = vsel %vm603, %v5813, %v5812
        %v5815 = vsel %vm606, %v4069, %v5814
        %v5816 = vrot.slane %v4073, 7
        %v5817 = vsel %vm609, %v5816, %v5815
        %v5818 = vrot.slane %v4077, 6
        %v5819 = vsel %vm612, %v5818, %v5817
        %v5820 = vrot.slane %v4081, 5
        %v5821 = vsel %vm615, %v5820, %v5819
        %v5822 = vrot.slane %v4085, 4
        %v5823 = vrot.slane %v4089, 3
        %v5824 = vsel %vm597, %v5823, %v5822
        %v5825 = vrot.slane %v4093, 2
        %v5826 = vsel %vm600, %v5825, %v5824
        %v5827 = vrot.slane %v4097, 1
        %v5828 = vsel %vm603, %v5827, %v5826
        %v5829 = vsel %vm606, %v4101, %v5828
        %v5830 = vrot.slane %v4105, 7
        %v5831 = vsel %vm609, %v5830, %v5829
        %v5832 = vrot.slane %v4109, 6
        %v5833 = vsel %vm612, %v5832, %v5831
        %v5834 = vrot.slane %v4113, 5
        %v5835 = vsel %vm615, %v5834, %v5833
        %v5836 = vrot.slane %v4117, 4
        %v5837 = vrot.slane %v4121, 3
        %v5838 = vsel %vm597, %v5837, %v5836
        %v5839 = vrot.slane %v4125, 2
        %v5840 = vsel %vm600, %v5839, %v5838
        %v5841 = vrot.slane %v4129, 1
        %v5842 = vsel %vm603, %v5841, %v5840
        %v5843 = vsel %vm606, %v4133, %v5842
        %v5844 = vrot.slane %v4137, 7
        %v5845 = vsel %vm609, %v5844, %v5843
        %v5846 = vrot.slane %v4141, 6
        %v5847 = vsel %vm612, %v5846, %v5845
        %v5848 = vrot.slane %v4145, 5
        %v5849 = vsel %vm615, %v5848, %v5847
        %v5850 = vrot.slane %v4149, 4
        %v5851 = vrot.slane %v4153, 3
        %v5852 = vsel %vm597, %v5851, %v5850
        %v5853 = vrot.slane %v4157, 2
        %v5854 = vsel %vm600, %v5853, %v5852
        %v5855 = vrot.slane %v4161, 1
        %v5856 = vsel %vm603, %v5855, %v5854
        %v5857 = vsel %vm606, %v4165, %v5856
        %v5858 = vrot.slane %v4169, 7
        %v5859 = vsel %vm609, %v5858, %v5857
        %v5860 = vrot.slane %v4173, 6
        %v5861 = vsel %vm612, %v5860, %v5859
        %v5862 = vrot.slane %v4177, 5
        %v5863 = vsel %vm615, %v5862, %v5861
        %v5864 = vrot.slane %v4198, 4
        %v5865 = vrot.slane %v4203, 3
        %v5866 = vsel %vm597, %v5865, %v5864
        %v5867 = vrot.slane %v4208, 2
        %v5868 = vsel %vm600, %v5867, %v5866
        %v5869 = vrot.slane %v4213, 1
        %v5870 = vsel %vm603, %v5869, %v5868
        %v5871 = vsel %vm606, %v4218, %v5870
        %v5872 = vrot.slane %v4223, 7
        %v5873 = vsel %vm609, %v5872, %v5871
        %v5874 = vrot.slane %v4228, 6
        %v5875 = vsel %vm612, %v5874, %v5873
        %v5876 = vrot.slane %v4233, 5
        %v5877 = vsel %vm615, %v5876, %v5875
        %v5878 = vrot.slane %v4238, 4
        %v5879 = vrot.slane %v4243, 3
        %v5880 = vsel %vm597, %v5879, %v5878
        %v5881 = vrot.slane %v4248, 2
        %v5882 = vsel %vm600, %v5881, %v5880
        %v5883 = vrot.slane %v4253, 1
        %v5884 = vsel %vm603, %v5883, %v5882
        %v5885 = vsel %vm606, %v4258, %v5884
        %v5886 = vrot.slane %v4263, 7
        %v5887 = vsel %vm609, %v5886, %v5885
        %v5888 = vrot.slane %v4268, 6
        %v5889 = vsel %vm612, %v5888, %v5887
        %v5890 = vrot.slane %v4273, 5
        %v5891 = vsel %vm615, %v5890, %v5889
        %v5892 = vrot.slane %v4277, 4
        %v5893 = vrot.slane %v4281, 3
        %v5894 = vsel %vm597, %v5893, %v5892
        %v5895 = vrot.slane %v4285, 2
        %v5896 = vsel %vm600, %v5895, %v5894
        %v5897 = vrot.slane %v4289, 1
        %v5898 = vsel %vm603, %v5897, %v5896
        %v5899 = vsel %vm606, %v4293, %v5898
        %v5900 = vrot.slane %v4297, 7
        %v5901 = vsel %vm609, %v5900, %v5899
        %v5902 = vrot.slane %v4301, 6
        %v5903 = vsel %vm612, %v5902, %v5901
        %v5904 = vrot.slane %v4305, 5
        %v5905 = vsel %vm615, %v5904, %v5903
        %v5906 = vrot.slane %v4309, 4
        %v5907 = vrot.slane %v4313, 3
        %v5908 = vsel %vm597, %v5907, %v5906
        %v5909 = vrot.slane %v4317, 2
        %v5910 = vsel %vm600, %v5909, %v5908
        %v5911 = vrot.slane %v4321, 1
        %v5912 = vsel %vm603, %v5911, %v5910
        %v5913 = vsel %vm606, %v4325, %v5912
        %v5914 = vrot.slane %v4329, 7
        %v5915 = vsel %vm609, %v5914, %v5913
        %v5916 = vrot.slane %v4333, 6
        %v5917 = vsel %vm612, %v5916, %v5915
        %v5918 = vrot.slane %v4337, 5
        %v5919 = vsel %vm615, %v5918, %v5917
        %v5920 = vrot.slane %v4341, 4
        %v5921 = vrot.slane %v4345, 3
        %v5922 = vsel %vm597, %v5921, %v5920
        %v5923 = vrot.slane %v4349, 2
        %v5924 = vsel %vm600, %v5923, %v5922
        %v5925 = vrot.slane %v4353, 1
        %v5926 = vsel %vm603, %v5925, %v5924
        %v5927 = vsel %vm606, %v4357, %v5926
        %v5928 = vrot.slane %v4361, 7
        %v5929 = vsel %vm609, %v5928, %v5927
        %v5930 = vrot.slane %v4365, 6
        %v5931 = vsel %vm612, %v5930, %v5929
        %v5932 = vrot.slane %v4369, 5
        %v5933 = vsel %vm615, %v5932, %v5931
        %v5934 = vrot.slane %v4373, 4
        %v5935 = vrot.slane %v4377, 3
        %v5936 = vsel %vm597, %v5935, %v5934
        %v5937 = vrot.slane %v4381, 2
        %v5938 = vsel %vm600, %v5937, %v5936
        %v5939 = vrot.slane %v4385, 1
        %v5940 = vsel %vm603, %v5939, %v5938
        %v5941 = vsel %vm606, %v4389, %v5940
        %v5942 = vrot.slane %v4393, 7
        %v5943 = vsel %vm609, %v5942, %v5941
        %v5944 = vrot.slane %v4397, 6
        %v5945 = vsel %vm612, %v5944, %v5943
        %v5946 = vrot.slane %v4401, 5
        %v5947 = vsel %vm615, %v5946, %v5945
        %v5948 = vrot.slane %v4406, 4
        %v5949 = vrot.slane %v4411, 3
        %v5950 = vsel %vm597, %v5949, %v5948
        %v5951 = vrot.slane %v4416, 2
        %v5952 = vsel %vm600, %v5951, %v5950
        %v5953 = vrot.slane %v4421, 1
        %v5954 = vsel %vm603, %v5953, %v5952
        %v5955 = vsel %vm606, %v4426, %v5954
        %v5956 = vrot.slane %v4431, 7
        %v5957 = vsel %vm609, %v5956, %v5955
        %v5958 = vrot.slane %v4436, 6
        %v5959 = vsel %vm612, %v5958, %v5957
        %v5960 = vrot.slane %v4441, 5
        %v5961 = vsel %vm615, %v5960, %v5959
        %v5962 = vrot.slane %v4446, 4
        %v5963 = vrot.slane %v4451, 3
        %v5964 = vsel %vm597, %v5963, %v5962
        %v5965 = vrot.slane %v4456, 2
        %v5966 = vsel %vm600, %v5965, %v5964
        %v5967 = vrot.slane %v4461, 1
        %v5968 = vsel %vm603, %v5967, %v5966
        %v5969 = vsel %vm606, %v4466, %v5968
        %v5970 = vrot.slane %v4471, 7
        %v5971 = vsel %vm609, %v5970, %v5969
        %v5972 = vrot.slane %v4476, 6
        %v5973 = vsel %vm612, %v5972, %v5971
        %v5974 = vrot.slane %v4481, 5
        %v5975 = vsel %vm615, %v5974, %v5973
        %v5976 = vrot.slane %v4485, 4
        %v5977 = vrot.slane %v4489, 3
        %v5978 = vsel %vm597, %v5977, %v5976
        %v5979 = vrot.slane %v4493, 2
        %v5980 = vsel %vm600, %v5979, %v5978
        %v5981 = vrot.slane %v4497, 1
        %v5982 = vsel %vm603, %v5981, %v5980
        %v5983 = vsel %vm606, %v4501, %v5982
        %v5984 = vrot.slane %v4505, 7
        %v5985 = vsel %vm609, %v5984, %v5983
        %v5986 = vrot.slane %v4509, 6
        %v5987 = vsel %vm612, %v5986, %v5985
        %v5988 = vrot.slane %v4513, 5
        %v5989 = vsel %vm615, %v5988, %v5987
        %v5990 = vrot.slane %v4517, 4
        %v5991 = vrot.slane %v4521, 3
        %v5992 = vsel %vm597, %v5991, %v5990
        %v5993 = vrot.slane %v4525, 2
        %v5994 = vsel %vm600, %v5993, %v5992
        %v5995 = vrot.slane %v4529, 1
        %v5996 = vsel %vm603, %v5995, %v5994
        %v5997 = vsel %vm606, %v4533, %v5996
        %v5998 = vrot.slane %v4537, 7
        %v5999 = vsel %vm609, %v5998, %v5997
        %v6000 = vrot.slane %v4541, 6
        %v6001 = vsel %vm612, %v6000, %v5999
        %v6002 = vrot.slane %v4545, 5
        %v6003 = vsel %vm615, %v6002, %v6001
        %v6004 = vrot.slane %v4549, 4
        %v6005 = vrot.slane %v4553, 3
        %v6006 = vsel %vm597, %v6005, %v6004
        %v6007 = vrot.slane %v4557, 2
        %v6008 = vsel %vm600, %v6007, %v6006
        %v6009 = vrot.slane %v4561, 1
        %v6010 = vsel %vm603, %v6009, %v6008
        %v6011 = vsel %vm606, %v4565, %v6010
        %v6012 = vrot.slane %v4569, 7
        %v6013 = vsel %vm609, %v6012, %v6011
        %v6014 = vrot.slane %v4573, 6
        %v6015 = vsel %vm612, %v6014, %v6013
        %v6016 = vrot.slane %v4577, 5
        %v6017 = vsel %vm615, %v6016, %v6015
        %v6018 = vrot.slane %v4581, 4
        %v6019 = vrot.slane %v4585, 3
        %v6020 = vsel %vm597, %v6019, %v6018
        %v6021 = vrot.slane %v4589, 2
        %v6022 = vsel %vm600, %v6021, %v6020
        %v6023 = vrot.slane %v4593, 1
        %v6024 = vsel %vm603, %v6023, %v6022
        %v6025 = vsel %vm606, %v4597, %v6024
        %v6026 = vrot.slane %v4601, 7
        %v6027 = vsel %vm609, %v6026, %v6025
        %v6028 = vrot.slane %v4605, 6
        %v6029 = vsel %vm612, %v6028, %v6027
        %v6030 = vrot.slane %v4609, 5
        %v6031 = vsel %vm615, %v6030, %v6029
        %6032 = vrot.lane.b32.xlu0 %v5795, 64
        %v6033 = vpop.permute.xlu0 %6032
        %6034 = vrot.lane.b32.xlu0 %v5807, 64
        %v6035 = vpop.permute.xlu0 %6034
        %6036 = vrot.lane.b32.xlu0 %v5821, 64
        %v6037 = vpop.permute.xlu0 %6036
        %6038 = vrot.lane.b32.xlu0 %v5835, 64
        %v6039 = vpop.permute.xlu0 %6038
        %6040 = vrot.lane.b32.xlu0 %v5849, 64
        %v6041 = vpop.permute.xlu0 %6040
        %6042 = vrot.lane.b32.xlu0 %v5863, 64
        %v6043 = vpop.permute.xlu0 %6042
        %6044 = vrot.lane.b32.xlu0 %v5877, 64
        %v6045 = vpop.permute.xlu0 %6044
        %6046 = vrot.lane.b32.xlu0 %v5891, 64
        %v6047 = vpop.permute.xlu0 %6046
        %6048 = vrot.lane.b32.xlu0 %v5905, 64
        %v6049 = vpop.permute.xlu0 %6048
        %6050 = vrot.lane.b32.xlu0 %v5919, 64
        %v6051 = vpop.permute.xlu0 %6050
        %6052 = vrot.lane.b32.xlu0 %v5933, 64
        %v6053 = vpop.permute.xlu0 %6052
        %6054 = vrot.lane.b32.xlu0 %v5947, 64
        %v6055 = vpop.permute.xlu0 %6054
        %6056 = vrot.lane.b32.xlu0 %v5961, 64
        %v6057 = vpop.permute.xlu0 %6056
        %6058 = vrot.lane.b32.xlu0 %v5975, 64
        %v6059 = vpop.permute.xlu0 %6058
        %6060 = vrot.lane.b32.xlu0 %v5989, 64
        %v6061 = vpop.permute.xlu0 %6060
        %6062 = vrot.lane.b32.xlu0 %v6003, 64
        %v6063 = vpop.permute.xlu0 %6062
        %6064 = vrot.lane.b32.xlu0 %v6017, 64
        %v6065 = vpop.permute.xlu0 %6064
        %6066 = vrot.lane.b32.xlu0 %v6031, 64
        %v6067 = vpop.permute.xlu0 %6066
        %v6086 = vrot.slane %v3972, 5
        %v6087 = vrot.slane %v3975, 4
        %v6088 = vsel %vm597, %v6087, %v6086
        %v6089 = vrot.slane %v3978, 3
        %v6090 = vsel %vm600, %v6089, %v6088
        %v6091 = vsel %vm603, %v4419, %v6090
        %v6092 = vsel %vm606, %v4216, %v6091
        %v6093 = vsel %vm609, %v3987, %v6092
        %v6094 = vrot.slane %v3990, 7
        %v6095 = vsel %vm612, %v6094, %v6093
        %v6096 = vrot.slane %v3993, 6
        %v6097 = vsel %vm615, %v6096, %v6095
        %v6098 = vrot.slane %v3996, 5
        %v6099 = vrot.slane %v3999, 4
        %v6100 = vsel %vm597, %v6099, %v6098
        %v6101 = vrot.slane %v4002, 3
        %v6102 = vsel %vm600, %v6101, %v6100
        %v6103 = vsel %vm603, %v4459, %v6102
        %v6104 = vsel %vm606, %v4256, %v6103
        %v6105 = vsel %vm609, %v4011, %v6104
        %v6106 = vrot.slane %v4014, 7
        %v6107 = vsel %vm612, %v6106, %v6105
        %v6108 = vrot.slane %v4017, 6
        %v6109 = vsel %vm615, %v6108, %v6107
        %v6110 = vrot.slane %v4053, 5
        %v6111 = vrot.slane %v4057, 4
        %v6112 = vsel %vm597, %v6111, %v6110
        %v6113 = vrot.slane %v4061, 3
        %v6114 = vsel %vm600, %v6113, %v6112
        %v6115 = vrot.slane %v4065, 2
        %v6116 = vsel %vm603, %v6115, %v6114
        %v6117 = vrot.slane %v4069, 1
        %v6118 = vsel %vm606, %v6117, %v6116
        %v6119 = vsel %vm609, %v4073, %v6118
        %v6120 = vrot.slane %v4077, 7
        %v6121 = vsel %vm612, %v6120, %v6119
        %v6122 = vrot.slane %v4081, 6
        %v6123 = vsel %vm615, %v6122, %v6121
        %v6124 = vrot.slane %v4085, 5
        %v6125 = vrot.slane %v4089, 4
        %v6126 = vsel %vm597, %v6125, %v6124
        %v6127 = vrot.slane %v4093, 3
        %v6128 = vsel %vm600, %v6127, %v6126
        %v6129 = vrot.slane %v4097, 2
        %v6130 = vsel %vm603, %v6129, %v6128
        %v6131 = vrot.slane %v4101, 1
        %v6132 = vsel %vm606, %v6131, %v6130
        %v6133 = vsel %vm609, %v4105, %v6132
        %v6134 = vrot.slane %v4109, 7
        %v6135 = vsel %vm612, %v6134, %v6133
        %v6136 = vrot.slane %v4113, 6
        %v6137 = vsel %vm615, %v6136, %v6135
        %v6138 = vrot.slane %v4117, 5
        %v6139 = vrot.slane %v4121, 4
        %v6140 = vsel %vm597, %v6139, %v6138
        %v6141 = vrot.slane %v4125, 3
        %v6142 = vsel %vm600, %v6141, %v6140
        %v6143 = vrot.slane %v4129, 2
        %v6144 = vsel %vm603, %v6143, %v6142
        %v6145 = vrot.slane %v4133, 1
        %v6146 = vsel %vm606, %v6145, %v6144
        %v6147 = vsel %vm609, %v4137, %v6146
        %v6148 = vrot.slane %v4141, 7
        %v6149 = vsel %vm612, %v6148, %v6147
        %v6150 = vrot.slane %v4145, 6
        %v6151 = vsel %vm615, %v6150, %v6149
        %v6152 = vrot.slane %v4149, 5
        %v6153 = vrot.slane %v4153, 4
        %v6154 = vsel %vm597, %v6153, %v6152
        %v6155 = vrot.slane %v4157, 3
        %v6156 = vsel %vm600, %v6155, %v6154
        %v6157 = vrot.slane %v4161, 2
        %v6158 = vsel %vm603, %v6157, %v6156
        %v6159 = vrot.slane %v4165, 1
        %v6160 = vsel %vm606, %v6159, %v6158
        %v6161 = vsel %vm609, %v4169, %v6160
        %v6162 = vrot.slane %v4173, 7
        %v6163 = vsel %vm612, %v6162, %v6161
        %v6164 = vrot.slane %v4177, 6
        %v6165 = vsel %vm615, %v6164, %v6163
        %v6166 = vrot.slane %v4198, 5
        %v6167 = vrot.slane %v4203, 4
        %v6168 = vsel %vm597, %v6167, %v6166
        %v6169 = vrot.slane %v4208, 3
        %v6170 = vsel %vm600, %v6169, %v6168
        %v6171 = vrot.slane %v4213, 2
        %v6172 = vsel %vm603, %v6171, %v6170
        %v6173 = vrot.slane %v4218, 1
        %v6174 = vsel %vm606, %v6173, %v6172
        %v6175 = vsel %vm609, %v4223, %v6174
        %v6176 = vrot.slane %v4228, 7
        %v6177 = vsel %vm612, %v6176, %v6175
        %v6178 = vrot.slane %v4233, 6
        %v6179 = vsel %vm615, %v6178, %v6177
        %v6180 = vrot.slane %v4238, 5
        %v6181 = vrot.slane %v4243, 4
        %v6182 = vsel %vm597, %v6181, %v6180
        %v6183 = vrot.slane %v4248, 3
        %v6184 = vsel %vm600, %v6183, %v6182
        %v6185 = vrot.slane %v4253, 2
        %v6186 = vsel %vm603, %v6185, %v6184
        %v6187 = vrot.slane %v4258, 1
        %v6188 = vsel %vm606, %v6187, %v6186
        %v6189 = vsel %vm609, %v4263, %v6188
        %v6190 = vrot.slane %v4268, 7
        %v6191 = vsel %vm612, %v6190, %v6189
        %v6192 = vrot.slane %v4273, 6
        %v6193 = vsel %vm615, %v6192, %v6191
        %v6194 = vrot.slane %v4277, 5
        %v6195 = vrot.slane %v4281, 4
        %v6196 = vsel %vm597, %v6195, %v6194
        %v6197 = vrot.slane %v4285, 3
        %v6198 = vsel %vm600, %v6197, %v6196
        %v6199 = vrot.slane %v4289, 2
        %v6200 = vsel %vm603, %v6199, %v6198
        %v6201 = vrot.slane %v4293, 1
        %v6202 = vsel %vm606, %v6201, %v6200
        %v6203 = vsel %vm609, %v4297, %v6202
        %v6204 = vrot.slane %v4301, 7
        %v6205 = vsel %vm612, %v6204, %v6203
        %v6206 = vrot.slane %v4305, 6
        %v6207 = vsel %vm615, %v6206, %v6205
        %v6208 = vrot.slane %v4309, 5
        %v6209 = vrot.slane %v4313, 4
        %v6210 = vsel %vm597, %v6209, %v6208
        %v6211 = vrot.slane %v4317, 3
        %v6212 = vsel %vm600, %v6211, %v6210
        %v6213 = vrot.slane %v4321, 2
        %v6214 = vsel %vm603, %v6213, %v6212
        %v6215 = vrot.slane %v4325, 1
        %v6216 = vsel %vm606, %v6215, %v6214
        %v6217 = vsel %vm609, %v4329, %v6216
        %v6218 = vrot.slane %v4333, 7
        %v6219 = vsel %vm612, %v6218, %v6217
        %v6220 = vrot.slane %v4337, 6
        %v6221 = vsel %vm615, %v6220, %v6219
        %v6222 = vrot.slane %v4341, 5
        %v6223 = vrot.slane %v4345, 4
        %v6224 = vsel %vm597, %v6223, %v6222
        %v6225 = vrot.slane %v4349, 3
        %v6226 = vsel %vm600, %v6225, %v6224
        %v6227 = vrot.slane %v4353, 2
        %v6228 = vsel %vm603, %v6227, %v6226
        %v6229 = vrot.slane %v4357, 1
        %v6230 = vsel %vm606, %v6229, %v6228
        %v6231 = vsel %vm609, %v4361, %v6230
        %v6232 = vrot.slane %v4365, 7
        %v6233 = vsel %vm612, %v6232, %v6231
        %v6234 = vrot.slane %v4369, 6
        %v6235 = vsel %vm615, %v6234, %v6233
        %v6236 = vrot.slane %v4373, 5
        %v6237 = vrot.slane %v4377, 4
        %v6238 = vsel %vm597, %v6237, %v6236
        %v6239 = vrot.slane %v4381, 3
        %v6240 = vsel %vm600, %v6239, %v6238
        %v6241 = vrot.slane %v4385, 2
        %v6242 = vsel %vm603, %v6241, %v6240
        %v6243 = vrot.slane %v4389, 1
        %v6244 = vsel %vm606, %v6243, %v6242
        %v6245 = vsel %vm609, %v4393, %v6244
        %v6246 = vrot.slane %v4397, 7
        %v6247 = vsel %vm612, %v6246, %v6245
        %v6248 = vrot.slane %v4401, 6
        %v6249 = vsel %vm615, %v6248, %v6247
        %v6250 = vrot.slane %v4406, 5
        %v6251 = vrot.slane %v4411, 4
        %v6252 = vsel %vm597, %v6251, %v6250
        %v6253 = vrot.slane %v4416, 3
        %v6254 = vsel %vm600, %v6253, %v6252
        %v6255 = vrot.slane %v4421, 2
        %v6256 = vsel %vm603, %v6255, %v6254
        %v6257 = vrot.slane %v4426, 1
        %v6258 = vsel %vm606, %v6257, %v6256
        %v6259 = vsel %vm609, %v4431, %v6258
        %v6260 = vrot.slane %v4436, 7
        %v6261 = vsel %vm612, %v6260, %v6259
        %v6262 = vrot.slane %v4441, 6
        %v6263 = vsel %vm615, %v6262, %v6261
        %v6264 = vrot.slane %v4446, 5
        %v6265 = vrot.slane %v4451, 4
        %v6266 = vsel %vm597, %v6265, %v6264
        %v6267 = vrot.slane %v4456, 3
        %v6268 = vsel %vm600, %v6267, %v6266
        %v6269 = vrot.slane %v4461, 2
        %v6270 = vsel %vm603, %v6269, %v6268
        %v6271 = vrot.slane %v4466, 1
        %v6272 = vsel %vm606, %v6271, %v6270
        %v6273 = vsel %vm609, %v4471, %v6272
        %v6274 = vrot.slane %v4476, 7
        %v6275 = vsel %vm612, %v6274, %v6273
        %v6276 = vrot.slane %v4481, 6
        %v6277 = vsel %vm615, %v6276, %v6275
        %v6278 = vrot.slane %v4485, 5
        %v6279 = vrot.slane %v4489, 4
        %v6280 = vsel %vm597, %v6279, %v6278
        %v6281 = vrot.slane %v4493, 3
        %v6282 = vsel %vm600, %v6281, %v6280
        %v6283 = vrot.slane %v4497, 2
        %v6284 = vsel %vm603, %v6283, %v6282
        %v6285 = vrot.slane %v4501, 1
        %v6286 = vsel %vm606, %v6285, %v6284
        %v6287 = vsel %vm609, %v4505, %v6286
        %v6288 = vrot.slane %v4509, 7
        %v6289 = vsel %vm612, %v6288, %v6287
        %v6290 = vrot.slane %v4513, 6
        %v6291 = vsel %vm615, %v6290, %v6289
        %v6292 = vrot.slane %v4517, 5
        %v6293 = vrot.slane %v4521, 4
        %v6294 = vsel %vm597, %v6293, %v6292
        %v6295 = vrot.slane %v4525, 3
        %v6296 = vsel %vm600, %v6295, %v6294
        %v6297 = vrot.slane %v4529, 2
        %v6298 = vsel %vm603, %v6297, %v6296
        %v6299 = vrot.slane %v4533, 1
        %v6300 = vsel %vm606, %v6299, %v6298
        %v6301 = vsel %vm609, %v4537, %v6300
        %v6302 = vrot.slane %v4541, 7
        %v6303 = vsel %vm612, %v6302, %v6301
        %v6304 = vrot.slane %v4545, 6
        %v6305 = vsel %vm615, %v6304, %v6303
        %v6306 = vrot.slane %v4549, 5
        %v6307 = vrot.slane %v4553, 4
        %v6308 = vsel %vm597, %v6307, %v6306
        %v6309 = vrot.slane %v4557, 3
        %v6310 = vsel %vm600, %v6309, %v6308
        %v6311 = vrot.slane %v4561, 2
        %v6312 = vsel %vm603, %v6311, %v6310
        %v6313 = vrot.slane %v4565, 1
        %v6314 = vsel %vm606, %v6313, %v6312
        %v6315 = vsel %vm609, %v4569, %v6314
        %v6316 = vrot.slane %v4573, 7
        %v6317 = vsel %vm612, %v6316, %v6315
        %v6318 = vrot.slane %v4577, 6
        %v6319 = vsel %vm615, %v6318, %v6317
        %v6320 = vrot.slane %v4581, 5
        %v6321 = vrot.slane %v4585, 4
        %v6322 = vsel %vm597, %v6321, %v6320
        %v6323 = vrot.slane %v4589, 3
        %v6324 = vsel %vm600, %v6323, %v6322
        %v6325 = vrot.slane %v4593, 2
        %v6326 = vsel %vm603, %v6325, %v6324
        %v6327 = vrot.slane %v4597, 1
        %v6328 = vsel %vm606, %v6327, %v6326
        %v6329 = vsel %vm609, %v4601, %v6328
        %v6330 = vrot.slane %v4605, 7
        %v6331 = vsel %vm612, %v6330, %v6329
        %v6332 = vrot.slane %v4609, 6
        %v6333 = vsel %vm615, %v6332, %v6331
        %6334 = vrot.lane.b32.xlu0 %v6097, 80
        %v6335 = vpop.permute.xlu0 %6334
        %6336 = vrot.lane.b32.xlu0 %v6109, 80
        %v6337 = vpop.permute.xlu0 %6336
        %6338 = vrot.lane.b32.xlu0 %v6123, 80
        %v6339 = vpop.permute.xlu0 %6338
        %6340 = vrot.lane.b32.xlu0 %v6137, 80
        %v6341 = vpop.permute.xlu0 %6340
        %6342 = vrot.lane.b32.xlu0 %v6151, 80
        %v6343 = vpop.permute.xlu0 %6342
        %6344 = vrot.lane.b32.xlu0 %v6165, 80
        %v6345 = vpop.permute.xlu0 %6344
        %6346 = vrot.lane.b32.xlu0 %v6179, 80
        %v6347 = vpop.permute.xlu0 %6346
        %6348 = vrot.lane.b32.xlu0 %v6193, 80
        %v6349 = vpop.permute.xlu0 %6348
        %6350 = vrot.lane.b32.xlu0 %v6207, 80
        %v6351 = vpop.permute.xlu0 %6350
        %6352 = vrot.lane.b32.xlu0 %v6221, 80
        %v6353 = vpop.permute.xlu0 %6352
        %6354 = vrot.lane.b32.xlu0 %v6235, 80
        %v6355 = vpop.permute.xlu0 %6354
        %6356 = vrot.lane.b32.xlu0 %v6249, 80
        %v6357 = vpop.permute.xlu0 %6356
        %6358 = vrot.lane.b32.xlu0 %v6263, 80
        %v6359 = vpop.permute.xlu0 %6358
        %6360 = vrot.lane.b32.xlu0 %v6277, 80
        %v6361 = vpop.permute.xlu0 %6360
        %6362 = vrot.lane.b32.xlu0 %v6291, 80
        %v6363 = vpop.permute.xlu0 %6362
        %6364 = vrot.lane.b32.xlu0 %v6305, 80
        %v6365 = vpop.permute.xlu0 %6364
        %6366 = vrot.lane.b32.xlu0 %v6319, 80
        %v6367 = vpop.permute.xlu0 %6366
        %6368 = vrot.lane.b32.xlu0 %v6333, 80
        %v6369 = vpop.permute.xlu0 %6368
        %v6388 = vrot.slane %v3972, 6
        %v6389 = vrot.slane %v3975, 5
        %v6390 = vsel %vm597, %v6389, %v6388
        %v6391 = vrot.slane %v3978, 4
        %v6392 = vsel %vm600, %v6391, %v6390
        %v6393 = vrot.slane %v3981, 3
        %v6394 = vsel %vm603, %v6393, %v6392
        %v6395 = vsel %vm606, %v4424, %v6394
        %v6396 = vsel %vm609, %v4221, %v6395
        %v6397 = vsel %vm612, %v3990, %v6396
        %v6398 = vrot.slane %v3993, 7
        %v6399 = vsel %vm615, %v6398, %v6397
        %v6400 = vrot.slane %v3996, 6
        %v6401 = vrot.slane %v3999, 5
        %v6402 = vsel %vm597, %v6401, %v6400
        %v6403 = vrot.slane %v4002, 4
        %v6404 = vsel %vm600, %v6403, %v6402
        %v6405 = vrot.slane %v4005, 3
        %v6406 = vsel %vm603, %v6405, %v6404
        %v6407 = vsel %vm606, %v4464, %v6406
        %v6408 = vsel %vm609, %v4261, %v6407
        %v6409 = vsel %vm612, %v4014, %v6408
        %v6410 = vrot.slane %v4017, 7
        %v6411 = vsel %vm615, %v6410, %v6409
        %v6412 = vrot.slane %v4053, 6
        %v6413 = vrot.slane %v4057, 5
        %v6414 = vsel %vm597, %v6413, %v6412
        %v6415 = vrot.slane %v4061, 4
        %v6416 = vsel %vm600, %v6415, %v6414
        %v6417 = vrot.slane %v4065, 3
        %v6418 = vsel %vm603, %v6417, %v6416
        %v6419 = vrot.slane %v4069, 2
        %v6420 = vsel %vm606, %v6419, %v6418
        %v6421 = vrot.slane %v4073, 1
        %v6422 = vsel %vm609, %v6421, %v6420
        %v6423 = vsel %vm612, %v4077, %v6422
        %v6424 = vrot.slane %v4081, 7
        %v6425 = vsel %vm615, %v6424, %v6423
        %v6426 = vrot.slane %v4085, 6
        %v6427 = vrot.slane %v4089, 5
        %v6428 = vsel %vm597, %v6427, %v6426
        %v6429 = vrot.slane %v4093, 4
        %v6430 = vsel %vm600, %v6429, %v6428
        %v6431 = vrot.slane %v4097, 3
        %v6432 = vsel %vm603, %v6431, %v6430
        %v6433 = vrot.slane %v4101, 2
        %v6434 = vsel %vm606, %v6433, %v6432
        %v6435 = vrot.slane %v4105, 1
        %v6436 = vsel %vm609, %v6435, %v6434
        %v6437 = vsel %vm612, %v4109, %v6436
        %v6438 = vrot.slane %v4113, 7
        %v6439 = vsel %vm615, %v6438, %v6437
        %v6440 = vrot.slane %v4117, 6
        %v6441 = vrot.slane %v4121, 5
        %v6442 = vsel %vm597, %v6441, %v6440
        %v6443 = vrot.slane %v4125, 4
        %v6444 = vsel %vm600, %v6443, %v6442
        %v6445 = vrot.slane %v4129, 3
        %v6446 = vsel %vm603, %v6445, %v6444
        %v6447 = vrot.slane %v4133, 2
        %v6448 = vsel %vm606, %v6447, %v6446
        %v6449 = vrot.slane %v4137, 1
        %v6450 = vsel %vm609, %v6449, %v6448
        %v6451 = vsel %vm612, %v4141, %v6450
        %v6452 = vrot.slane %v4145, 7
        %v6453 = vsel %vm615, %v6452, %v6451
        %v6454 = vrot.slane %v4149, 6
        %v6455 = vrot.slane %v4153, 5
        %v6456 = vsel %vm597, %v6455, %v6454
        %v6457 = vrot.slane %v4157, 4
        %v6458 = vsel %vm600, %v6457, %v6456
        %v6459 = vrot.slane %v4161, 3
        %v6460 = vsel %vm603, %v6459, %v6458
        %v6461 = vrot.slane %v4165, 2
        %v6462 = vsel %vm606, %v6461, %v6460
        %v6463 = vrot.slane %v4169, 1
        %v6464 = vsel %vm609, %v6463, %v6462
        %v6465 = vsel %vm612, %v4173, %v6464
        %v6466 = vrot.slane %v4177, 7
        %v6467 = vsel %vm615, %v6466, %v6465
        %v6468 = vrot.slane %v4198, 6
        %v6469 = vrot.slane %v4203, 5
        %v6470 = vsel %vm597, %v6469, %v6468
        %v6471 = vrot.slane %v4208, 4
        %v6472 = vsel %vm600, %v6471, %v6470
        %v6473 = vrot.slane %v4213, 3
        %v6474 = vsel %vm603, %v6473, %v6472
        %v6475 = vrot.slane %v4218, 2
        %v6476 = vsel %vm606, %v6475, %v6474
        %v6477 = vrot.slane %v4223, 1
        %v6478 = vsel %vm609, %v6477, %v6476
        %v6479 = vsel %vm612, %v4228, %v6478
        %v6480 = vrot.slane %v4233, 7
        %v6481 = vsel %vm615, %v6480, %v6479
        %v6482 = vrot.slane %v4238, 6
        %v6483 = vrot.slane %v4243, 5
        %v6484 = vsel %vm597, %v6483, %v6482
        %v6485 = vrot.slane %v4248, 4
        %v6486 = vsel %vm600, %v6485, %v6484
        %v6487 = vrot.slane %v4253, 3
        %v6488 = vsel %vm603, %v6487, %v6486
        %v6489 = vrot.slane %v4258, 2
        %v6490 = vsel %vm606, %v6489, %v6488
        %v6491 = vrot.slane %v4263, 1
        %v6492 = vsel %vm609, %v6491, %v6490
        %v6493 = vsel %vm612, %v4268, %v6492
        %v6494 = vrot.slane %v4273, 7
        %v6495 = vsel %vm615, %v6494, %v6493
        %v6496 = vrot.slane %v4277, 6
        %v6497 = vrot.slane %v4281, 5
        %v6498 = vsel %vm597, %v6497, %v6496
        %v6499 = vrot.slane %v4285, 4
        %v6500 = vsel %vm600, %v6499, %v6498
        %v6501 = vrot.slane %v4289, 3
        %v6502 = vsel %vm603, %v6501, %v6500
        %v6503 = vrot.slane %v4293, 2
        %v6504 = vsel %vm606, %v6503, %v6502
        %v6505 = vrot.slane %v4297, 1
        %v6506 = vsel %vm609, %v6505, %v6504
        %v6507 = vsel %vm612, %v4301, %v6506
        %v6508 = vrot.slane %v4305, 7
        %v6509 = vsel %vm615, %v6508, %v6507
        %v6510 = vrot.slane %v4309, 6
        %v6511 = vrot.slane %v4313, 5
        %v6512 = vsel %vm597, %v6511, %v6510
        %v6513 = vrot.slane %v4317, 4
        %v6514 = vsel %vm600, %v6513, %v6512
        %v6515 = vrot.slane %v4321, 3
        %v6516 = vsel %vm603, %v6515, %v6514
        %v6517 = vrot.slane %v4325, 2
        %v6518 = vsel %vm606, %v6517, %v6516
        %v6519 = vrot.slane %v4329, 1
        %v6520 = vsel %vm609, %v6519, %v6518
        %v6521 = vsel %vm612, %v4333, %v6520
        %v6522 = vrot.slane %v4337, 7
        %v6523 = vsel %vm615, %v6522, %v6521
        %v6524 = vrot.slane %v4341, 6
        %v6525 = vrot.slane %v4345, 5
        %v6526 = vsel %vm597, %v6525, %v6524
        %v6527 = vrot.slane %v4349, 4
        %v6528 = vsel %vm600, %v6527, %v6526
        %v6529 = vrot.slane %v4353, 3
        %v6530 = vsel %vm603, %v6529, %v6528
        %v6531 = vrot.slane %v4357, 2
        %v6532 = vsel %vm606, %v6531, %v6530
        %v6533 = vrot.slane %v4361, 1
        %v6534 = vsel %vm609, %v6533, %v6532
        %v6535 = vsel %vm612, %v4365, %v6534
        %v6536 = vrot.slane %v4369, 7
        %v6537 = vsel %vm615, %v6536, %v6535
        %v6538 = vrot.slane %v4373, 6
        %v6539 = vrot.slane %v4377, 5
        %v6540 = vsel %vm597, %v6539, %v6538
        %v6541 = vrot.slane %v4381, 4
        %v6542 = vsel %vm600, %v6541, %v6540
        %v6543 = vrot.slane %v4385, 3
        %v6544 = vsel %vm603, %v6543, %v6542
        %v6545 = vrot.slane %v4389, 2
        %v6546 = vsel %vm606, %v6545, %v6544
        %v6547 = vrot.slane %v4393, 1
        %v6548 = vsel %vm609, %v6547, %v6546
        %v6549 = vsel %vm612, %v4397, %v6548
        %v6550 = vrot.slane %v4401, 7
        %v6551 = vsel %vm615, %v6550, %v6549
        %v6552 = vrot.slane %v4406, 6
        %v6553 = vrot.slane %v4411, 5
        %v6554 = vsel %vm597, %v6553, %v6552
        %v6555 = vrot.slane %v4416, 4
        %v6556 = vsel %vm600, %v6555, %v6554
        %v6557 = vrot.slane %v4421, 3
        %v6558 = vsel %vm603, %v6557, %v6556
        %v6559 = vrot.slane %v4426, 2
        %v6560 = vsel %vm606, %v6559, %v6558
        %v6561 = vrot.slane %v4431, 1
        %v6562 = vsel %vm609, %v6561, %v6560
        %v6563 = vsel %vm612, %v4436, %v6562
        %v6564 = vrot.slane %v4441, 7
        %v6565 = vsel %vm615, %v6564, %v6563
        %v6566 = vrot.slane %v4446, 6
        %v6567 = vrot.slane %v4451, 5
        %v6568 = vsel %vm597, %v6567, %v6566
        %v6569 = vrot.slane %v4456, 4
        %v6570 = vsel %vm600, %v6569, %v6568
        %v6571 = vrot.slane %v4461, 3
        %v6572 = vsel %vm603, %v6571, %v6570
        %v6573 = vrot.slane %v4466, 2
        %v6574 = vsel %vm606, %v6573, %v6572
        %v6575 = vrot.slane %v4471, 1
        %v6576 = vsel %vm609, %v6575, %v6574
        %v6577 = vsel %vm612, %v4476, %v6576
        %v6578 = vrot.slane %v4481, 7
        %v6579 = vsel %vm615, %v6578, %v6577
        %v6580 = vrot.slane %v4485, 6
        %v6581 = vrot.slane %v4489, 5
        %v6582 = vsel %vm597, %v6581, %v6580
        %v6583 = vrot.slane %v4493, 4
        %v6584 = vsel %vm600, %v6583, %v6582
        %v6585 = vrot.slane %v4497, 3
        %v6586 = vsel %vm603, %v6585, %v6584
        %v6587 = vrot.slane %v4501, 2
        %v6588 = vsel %vm606, %v6587, %v6586
        %v6589 = vrot.slane %v4505, 1
        %v6590 = vsel %vm609, %v6589, %v6588
        %v6591 = vsel %vm612, %v4509, %v6590
        %v6592 = vrot.slane %v4513, 7
        %v6593 = vsel %vm615, %v6592, %v6591
        %v6594 = vrot.slane %v4517, 6
        %v6595 = vrot.slane %v4521, 5
        %v6596 = vsel %vm597, %v6595, %v6594
        %v6597 = vrot.slane %v4525, 4
        %v6598 = vsel %vm600, %v6597, %v6596
        %v6599 = vrot.slane %v4529, 3
        %v6600 = vsel %vm603, %v6599, %v6598
        %v6601 = vrot.slane %v4533, 2
        %v6602 = vsel %vm606, %v6601, %v6600
        %v6603 = vrot.slane %v4537, 1
        %v6604 = vsel %vm609, %v6603, %v6602
        %v6605 = vsel %vm612, %v4541, %v6604
        %v6606 = vrot.slane %v4545, 7
        %v6607 = vsel %vm615, %v6606, %v6605
        %v6608 = vrot.slane %v4549, 6
        %v6609 = vrot.slane %v4553, 5
        %v6610 = vsel %vm597, %v6609, %v6608
        %v6611 = vrot.slane %v4557, 4
        %v6612 = vsel %vm600, %v6611, %v6610
        %v6613 = vrot.slane %v4561, 3
        %v6614 = vsel %vm603, %v6613, %v6612
        %v6615 = vrot.slane %v4565, 2
        %v6616 = vsel %vm606, %v6615, %v6614
        %v6617 = vrot.slane %v4569, 1
        %v6618 = vsel %vm609, %v6617, %v6616
        %v6619 = vsel %vm612, %v4573, %v6618
        %v6620 = vrot.slane %v4577, 7
        %v6621 = vsel %vm615, %v6620, %v6619
        %v6622 = vrot.slane %v4581, 6
        %v6623 = vrot.slane %v4585, 5
        %v6624 = vsel %vm597, %v6623, %v6622
        %v6625 = vrot.slane %v4589, 4
        %v6626 = vsel %vm600, %v6625, %v6624
        %v6627 = vrot.slane %v4593, 3
        %v6628 = vsel %vm603, %v6627, %v6626
        %v6629 = vrot.slane %v4597, 2
        %v6630 = vsel %vm606, %v6629, %v6628
        %v6631 = vrot.slane %v4601, 1
        %v6632 = vsel %vm609, %v6631, %v6630
        %v6633 = vsel %vm612, %v4605, %v6632
        %v6634 = vrot.slane %v4609, 7
        %v6635 = vsel %vm615, %v6634, %v6633
        %6636 = vrot.lane.b32.xlu0 %v6399, 96
        %v6637 = vpop.permute.xlu0 %6636
        %6638 = vrot.lane.b32.xlu0 %v6411, 96
        %v6639 = vpop.permute.xlu0 %6638
        %6640 = vrot.lane.b32.xlu0 %v6425, 96
        %v6641 = vpop.permute.xlu0 %6640
        %6642 = vrot.lane.b32.xlu0 %v6439, 96
        %v6643 = vpop.permute.xlu0 %6642
        %6644 = vrot.lane.b32.xlu0 %v6453, 96
        %v6645 = vpop.permute.xlu0 %6644
        %6646 = vrot.lane.b32.xlu0 %v6467, 96
        %v6647 = vpop.permute.xlu0 %6646
        %6648 = vrot.lane.b32.xlu0 %v6481, 96
        %v6649 = vpop.permute.xlu0 %6648
        %6650 = vrot.lane.b32.xlu0 %v6495, 96
        %v6651 = vpop.permute.xlu0 %6650
        %6652 = vrot.lane.b32.xlu0 %v6509, 96
        %v6653 = vpop.permute.xlu0 %6652
        %6654 = vrot.lane.b32.xlu0 %v6523, 96
        %v6655 = vpop.permute.xlu0 %6654
        %6656 = vrot.lane.b32.xlu0 %v6537, 96
        %v6657 = vpop.permute.xlu0 %6656
        %6658 = vrot.lane.b32.xlu0 %v6551, 96
        %v6659 = vpop.permute.xlu0 %6658
        %6660 = vrot.lane.b32.xlu0 %v6565, 96
        %v6661 = vpop.permute.xlu0 %6660
        %6662 = vrot.lane.b32.xlu0 %v6579, 96
        %v6663 = vpop.permute.xlu0 %6662
        %6664 = vrot.lane.b32.xlu0 %v6593, 96
        %v6665 = vpop.permute.xlu0 %6664
        %6666 = vrot.lane.b32.xlu0 %v6607, 96
        %v6667 = vpop.permute.xlu0 %6666
        %6668 = vrot.lane.b32.xlu0 %v6621, 96
        %v6669 = vpop.permute.xlu0 %6668
        %6670 = vrot.lane.b32.xlu0 %v6635, 96
        %v6671 = vpop.permute.xlu0 %6670
        %v6690 = vrot.slane %v3972, 7
        %v6691 = vrot.slane %v3975, 6
        %v6692 = vsel %vm597, %v6691, %v6690
        %v6693 = vrot.slane %v3978, 5
        %v6694 = vsel %vm600, %v6693, %v6692
        %v6695 = vrot.slane %v3981, 4
        %v6696 = vsel %vm603, %v6695, %v6694
        %v6697 = vrot.slane %v3984, 3
        %v6698 = vsel %vm606, %v6697, %v6696
        %v6699 = vsel %vm609, %v4429, %v6698
        %v6700 = vsel %vm612, %v4226, %v6699
        %v6701 = vsel %vm615, %v3993, %v6700
        %v6702 = vrot.slane %v3996, 7
        %v6703 = vrot.slane %v3999, 6
        %v6704 = vsel %vm597, %v6703, %v6702
        %v6705 = vrot.slane %v4002, 5
        %v6706 = vsel %vm600, %v6705, %v6704
        %v6707 = vrot.slane %v4005, 4
        %v6708 = vsel %vm603, %v6707, %v6706
        %v6709 = vrot.slane %v4008, 3
        %v6710 = vsel %vm606, %v6709, %v6708
        %v6711 = vsel %vm609, %v4469, %v6710
        %v6712 = vsel %vm612, %v4266, %v6711
        %v6713 = vsel %vm615, %v4017, %v6712
        %v6714 = vrot.slane %v4053, 7
        %v6715 = vrot.slane %v4057, 6
        %v6716 = vsel %vm597, %v6715, %v6714
        %v6717 = vrot.slane %v4061, 5
        %v6718 = vsel %vm600, %v6717, %v6716
        %v6719 = vrot.slane %v4065, 4
        %v6720 = vsel %vm603, %v6719, %v6718
        %v6721 = vrot.slane %v4069, 3
        %v6722 = vsel %vm606, %v6721, %v6720
        %v6723 = vrot.slane %v4073, 2
        %v6724 = vsel %vm609, %v6723, %v6722
        %v6725 = vrot.slane %v4077, 1
        %v6726 = vsel %vm612, %v6725, %v6724
        %v6727 = vsel %vm615, %v4081, %v6726
        %v6728 = vrot.slane %v4085, 7
        %v6729 = vrot.slane %v4089, 6
        %v6730 = vsel %vm597, %v6729, %v6728
        %v6731 = vrot.slane %v4093, 5
        %v6732 = vsel %vm600, %v6731, %v6730
        %v6733 = vrot.slane %v4097, 4
        %v6734 = vsel %vm603, %v6733, %v6732
        %v6735 = vrot.slane %v4101, 3
        %v6736 = vsel %vm606, %v6735, %v6734
        %v6737 = vrot.slane %v4105, 2
        %v6738 = vsel %vm609, %v6737, %v6736
        %v6739 = vrot.slane %v4109, 1
        %v6740 = vsel %vm612, %v6739, %v6738
        %v6741 = vsel %vm615, %v4113, %v6740
        %v6742 = vrot.slane %v4117, 7
        %v6743 = vrot.slane %v4121, 6
        %v6744 = vsel %vm597, %v6743, %v6742
        %v6745 = vrot.slane %v4125, 5
        %v6746 = vsel %vm600, %v6745, %v6744
        %v6747 = vrot.slane %v4129, 4
        %v6748 = vsel %vm603, %v6747, %v6746
        %v6749 = vrot.slane %v4133, 3
        %v6750 = vsel %vm606, %v6749, %v6748
        %v6751 = vrot.slane %v4137, 2
        %v6752 = vsel %vm609, %v6751, %v6750
        %v6753 = vrot.slane %v4141, 1
        %v6754 = vsel %vm612, %v6753, %v6752
        %v6755 = vsel %vm615, %v4145, %v6754
        %v6756 = vrot.slane %v4149, 7
        %v6757 = vrot.slane %v4153, 6
        %v6758 = vsel %vm597, %v6757, %v6756
        %v6759 = vrot.slane %v4157, 5
        %v6760 = vsel %vm600, %v6759, %v6758
        %v6761 = vrot.slane %v4161, 4
        %v6762 = vsel %vm603, %v6761, %v6760
        %v6763 = vrot.slane %v4165, 3
        %v6764 = vsel %vm606, %v6763, %v6762
        %v6765 = vrot.slane %v4169, 2
        %v6766 = vsel %vm609, %v6765, %v6764
        %v6767 = vrot.slane %v4173, 1
        %v6768 = vsel %vm612, %v6767, %v6766
        %v6769 = vsel %vm615, %v4177, %v6768
        %v6770 = vrot.slane %v4198, 7
        %v6771 = vrot.slane %v4203, 6
        %v6772 = vsel %vm597, %v6771, %v6770
        %v6773 = vrot.slane %v4208, 5
        %v6774 = vsel %vm600, %v6773, %v6772
        %v6775 = vrot.slane %v4213, 4
        %v6776 = vsel %vm603, %v6775, %v6774
        %v6777 = vrot.slane %v4218, 3
        %v6778 = vsel %vm606, %v6777, %v6776
        %v6779 = vrot.slane %v4223, 2
        %v6780 = vsel %vm609, %v6779, %v6778
        %v6781 = vrot.slane %v4228, 1
        %v6782 = vsel %vm612, %v6781, %v6780
        %v6783 = vsel %vm615, %v4233, %v6782
        %v6784 = vrot.slane %v4238, 7
        %v6785 = vrot.slane %v4243, 6
        %v6786 = vsel %vm597, %v6785, %v6784
        %v6787 = vrot.slane %v4248, 5
        %v6788 = vsel %vm600, %v6787, %v6786
        %v6789 = vrot.slane %v4253, 4
        %v6790 = vsel %vm603, %v6789, %v6788
        %v6791 = vrot.slane %v4258, 3
        %v6792 = vsel %vm606, %v6791, %v6790
        %v6793 = vrot.slane %v4263, 2
        %v6794 = vsel %vm609, %v6793, %v6792
        %v6795 = vrot.slane %v4268, 1
        %v6796 = vsel %vm612, %v6795, %v6794
        %v6797 = vsel %vm615, %v4273, %v6796
        %v6798 = vrot.slane %v4277, 7
        %v6799 = vrot.slane %v4281, 6
        %v6800 = vsel %vm597, %v6799, %v6798
        %v6801 = vrot.slane %v4285, 5
        %v6802 = vsel %vm600, %v6801, %v6800
        %v6803 = vrot.slane %v4289, 4
        %v6804 = vsel %vm603, %v6803, %v6802
        %v6805 = vrot.slane %v4293, 3
        %v6806 = vsel %vm606, %v6805, %v6804
        %v6807 = vrot.slane %v4297, 2
        %v6808 = vsel %vm609, %v6807, %v6806
        %v6809 = vrot.slane %v4301, 1
        %v6810 = vsel %vm612, %v6809, %v6808
        %v6811 = vsel %vm615, %v4305, %v6810
        %v6812 = vrot.slane %v4309, 7
        %v6813 = vrot.slane %v4313, 6
        %v6814 = vsel %vm597, %v6813, %v6812
        %v6815 = vrot.slane %v4317, 5
        %v6816 = vsel %vm600, %v6815, %v6814
        %v6817 = vrot.slane %v4321, 4
        %v6818 = vsel %vm603, %v6817, %v6816
        %v6819 = vrot.slane %v4325, 3
        %v6820 = vsel %vm606, %v6819, %v6818
        %v6821 = vrot.slane %v4329, 2
        %v6822 = vsel %vm609, %v6821, %v6820
        %v6823 = vrot.slane %v4333, 1
        %v6824 = vsel %vm612, %v6823, %v6822
        %v6825 = vsel %vm615, %v4337, %v6824
        %v6826 = vrot.slane %v4341, 7
        %v6827 = vrot.slane %v4345, 6
        %v6828 = vsel %vm597, %v6827, %v6826
        %v6829 = vrot.slane %v4349, 5
        %v6830 = vsel %vm600, %v6829, %v6828
        %v6831 = vrot.slane %v4353, 4
        %v6832 = vsel %vm603, %v6831, %v6830
        %v6833 = vrot.slane %v4357, 3
        %v6834 = vsel %vm606, %v6833, %v6832
        %v6835 = vrot.slane %v4361, 2
        %v6836 = vsel %vm609, %v6835, %v6834
        %v6837 = vrot.slane %v4365, 1
        %v6838 = vsel %vm612, %v6837, %v6836
        %v6839 = vsel %vm615, %v4369, %v6838
        %v6840 = vrot.slane %v4373, 7
        %v6841 = vrot.slane %v4377, 6
        %v6842 = vsel %vm597, %v6841, %v6840
        %v6843 = vrot.slane %v4381, 5
        %v6844 = vsel %vm600, %v6843, %v6842
        %v6845 = vrot.slane %v4385, 4
        %v6846 = vsel %vm603, %v6845, %v6844
        %v6847 = vrot.slane %v4389, 3
        %v6848 = vsel %vm606, %v6847, %v6846
        %v6849 = vrot.slane %v4393, 2
        %v6850 = vsel %vm609, %v6849, %v6848
        %v6851 = vrot.slane %v4397, 1
        %v6852 = vsel %vm612, %v6851, %v6850
        %v6853 = vsel %vm615, %v4401, %v6852
        %v6854 = vrot.slane %v4406, 7
        %v6855 = vrot.slane %v4411, 6
        %v6856 = vsel %vm597, %v6855, %v6854
        %v6857 = vrot.slane %v4416, 5
        %v6858 = vsel %vm600, %v6857, %v6856
        %v6859 = vrot.slane %v4421, 4
        %v6860 = vsel %vm603, %v6859, %v6858
        %v6861 = vrot.slane %v4426, 3
        %v6862 = vsel %vm606, %v6861, %v6860
        %v6863 = vrot.slane %v4431, 2
        %v6864 = vsel %vm609, %v6863, %v6862
        %v6865 = vrot.slane %v4436, 1
        %v6866 = vsel %vm612, %v6865, %v6864
        %v6867 = vsel %vm615, %v4441, %v6866
        %v6868 = vrot.slane %v4446, 7
        %v6869 = vrot.slane %v4451, 6
        %v6870 = vsel %vm597, %v6869, %v6868
        %v6871 = vrot.slane %v4456, 5
        %v6872 = vsel %vm600, %v6871, %v6870
        %v6873 = vrot.slane %v4461, 4
        %v6874 = vsel %vm603, %v6873, %v6872
        %v6875 = vrot.slane %v4466, 3
        %v6876 = vsel %vm606, %v6875, %v6874
        %v6877 = vrot.slane %v4471, 2
        %v6878 = vsel %vm609, %v6877, %v6876
        %v6879 = vrot.slane %v4476, 1
        %v6880 = vsel %vm612, %v6879, %v6878
        %v6881 = vsel %vm615, %v4481, %v6880
        %v6882 = vrot.slane %v4485, 7
        %v6883 = vrot.slane %v4489, 6
        %v6884 = vsel %vm597, %v6883, %v6882
        %v6885 = vrot.slane %v4493, 5
        %v6886 = vsel %vm600, %v6885, %v6884
        %v6887 = vrot.slane %v4497, 4
        %v6888 = vsel %vm603, %v6887, %v6886
        %v6889 = vrot.slane %v4501, 3
        %v6890 = vsel %vm606, %v6889, %v6888
        %v6891 = vrot.slane %v4505, 2
        %v6892 = vsel %vm609, %v6891, %v6890
        %v6893 = vrot.slane %v4509, 1
        %v6894 = vsel %vm612, %v6893, %v6892
        %v6895 = vsel %vm615, %v4513, %v6894
        %v6896 = vrot.slane %v4517, 7
        %v6897 = vrot.slane %v4521, 6
        %v6898 = vsel %vm597, %v6897, %v6896
        %v6899 = vrot.slane %v4525, 5
        %v6900 = vsel %vm600, %v6899, %v6898
        %v6901 = vrot.slane %v4529, 4
        %v6902 = vsel %vm603, %v6901, %v6900
        %v6903 = vrot.slane %v4533, 3
        %v6904 = vsel %vm606, %v6903, %v6902
        %v6905 = vrot.slane %v4537, 2
        %v6906 = vsel %vm609, %v6905, %v6904
        %v6907 = vrot.slane %v4541, 1
        %v6908 = vsel %vm612, %v6907, %v6906
        %v6909 = vsel %vm615, %v4545, %v6908
        %v6910 = vrot.slane %v4549, 7
        %v6911 = vrot.slane %v4553, 6
        %v6912 = vsel %vm597, %v6911, %v6910
        %v6913 = vrot.slane %v4557, 5
        %v6914 = vsel %vm600, %v6913, %v6912
        %v6915 = vrot.slane %v4561, 4
        %v6916 = vsel %vm603, %v6915, %v6914
        %v6917 = vrot.slane %v4565, 3
        %v6918 = vsel %vm606, %v6917, %v6916
        %v6919 = vrot.slane %v4569, 2
        %v6920 = vsel %vm609, %v6919, %v6918
        %v6921 = vrot.slane %v4573, 1
        %v6922 = vsel %vm612, %v6921, %v6920
        %v6923 = vsel %vm615, %v4577, %v6922
        %v6924 = vrot.slane %v4581, 7
        %v6925 = vrot.slane %v4585, 6
        %v6926 = vsel %vm597, %v6925, %v6924
        %v6927 = vrot.slane %v4589, 5
        %v6928 = vsel %vm600, %v6927, %v6926
        %v6929 = vrot.slane %v4593, 4
        %v6930 = vsel %vm603, %v6929, %v6928
        %v6931 = vrot.slane %v4597, 3
        %v6932 = vsel %vm606, %v6931, %v6930
        %v6933 = vrot.slane %v4601, 2
        %v6934 = vsel %vm609, %v6933, %v6932
        %v6935 = vrot.slane %v4605, 1
        %v6936 = vsel %vm612, %v6935, %v6934
        %v6937 = vsel %vm615, %v4609, %v6936
        %6938 = vrot.lane.b32.xlu0 %v6701, 112
        %v6939 = vpop.permute.xlu0 %6938
        %6940 = vrot.lane.b32.xlu0 %v6713, 112
        %v6941 = vpop.permute.xlu0 %6940
        %6942 = vrot.lane.b32.xlu0 %v6727, 112
        %v6943 = vpop.permute.xlu0 %6942
        %6944 = vrot.lane.b32.xlu0 %v6741, 112
        %v6945 = vpop.permute.xlu0 %6944
        %6946 = vrot.lane.b32.xlu0 %v6755, 112
        %v6947 = vpop.permute.xlu0 %6946
        %6948 = vrot.lane.b32.xlu0 %v6769, 112
        %v6949 = vpop.permute.xlu0 %6948
        %6950 = vrot.lane.b32.xlu0 %v6783, 112
        %v6951 = vpop.permute.xlu0 %6950
        %6952 = vrot.lane.b32.xlu0 %v6797, 112
        %v6953 = vpop.permute.xlu0 %6952
        %6954 = vrot.lane.b32.xlu0 %v6811, 112
        %v6955 = vpop.permute.xlu0 %6954
        %6956 = vrot.lane.b32.xlu0 %v6825, 112
        %v6957 = vpop.permute.xlu0 %6956
        %6958 = vrot.lane.b32.xlu0 %v6839, 112
        %v6959 = vpop.permute.xlu0 %6958
        %6960 = vrot.lane.b32.xlu0 %v6853, 112
        %v6961 = vpop.permute.xlu0 %6960
        %6962 = vrot.lane.b32.xlu0 %v6867, 112
        %v6963 = vpop.permute.xlu0 %6962
        %6964 = vrot.lane.b32.xlu0 %v6881, 112
        %v6965 = vpop.permute.xlu0 %6964
        %6966 = vrot.lane.b32.xlu0 %v6895, 112
        %v6967 = vpop.permute.xlu0 %6966
        %6968 = vrot.lane.b32.xlu0 %v6909, 112
        %v6969 = vpop.permute.xlu0 %6968
        %6970 = vrot.lane.b32.xlu0 %v6923, 112
        %v6971 = vpop.permute.xlu0 %6970
        %6972 = vrot.lane.b32.xlu0 %v6937, 112
        %v6973 = vpop.permute.xlu0 %6972
        %v6992 = vrot.slane %v3976, 7
        %v6993 = vsel %vm597, %v6992, %v3973
        %v6994 = vrot.slane %v3979, 6
        %v6995 = vsel %vm600, %v6994, %v6993
        %v6996 = vrot.slane %v3982, 5
        %v6997 = vsel %vm603, %v6996, %v6995
        %v6998 = vrot.slane %v3985, 4
        %v6999 = vsel %vm606, %v6998, %v6997
        %v7000 = vrot.slane %v3988, 3
        %v7001 = vsel %vm609, %v7000, %v6999
        %v7002 = vsel %vm612, %v4435, %v7001
        %v7003 = vsel %vm615, %v4232, %v7002
        %v7004 = vrot.slane %v4000, 7
        %v7005 = vsel %vm597, %v7004, %v3997
        %v7006 = vrot.slane %v4003, 6
        %v7007 = vsel %vm600, %v7006, %v7005
        %v7008 = vrot.slane %v4006, 5
        %v7009 = vsel %vm603, %v7008, %v7007
        %v7010 = vrot.slane %v4009, 4
        %v7011 = vsel %vm606, %v7010, %v7009
        %v7012 = vrot.slane %v4012, 3
        %v7013 = vsel %vm609, %v7012, %v7011
        %v7014 = vsel %vm612, %v4475, %v7013
        %v7015 = vsel %vm615, %v4272, %v7014
        %v7016 = vrot.slane %v4059, 7
        %v7017 = vsel %vm597, %v7016, %v4055
        %v7018 = vrot.slane %v4063, 6
        %v7019 = vsel %vm600, %v7018, %v7017
        %v7020 = vrot.slane %v4067, 5
        %v7021 = vsel %vm603, %v7020, %v7019
        %v7022 = vrot.slane %v4071, 4
        %v7023 = vsel %vm606, %v7022, %v7021
        %v7024 = vrot.slane %v4075, 3
        %v7025 = vsel %vm609, %v7024, %v7023
        %v7026 = vrot.slane %v4079, 2
        %v7027 = vsel %vm612, %v7026, %v7025
        %v7028 = vrot.slane %v4083, 1
        %v7029 = vsel %vm615, %v7028, %v7027
        %v7030 = vrot.slane %v4091, 7
        %v7031 = vsel %vm597, %v7030, %v4087
        %v7032 = vrot.slane %v4095, 6
        %v7033 = vsel %vm600, %v7032, %v7031
        %v7034 = vrot.slane %v4099, 5
        %v7035 = vsel %vm603, %v7034, %v7033
        %v7036 = vrot.slane %v4103, 4
        %v7037 = vsel %vm606, %v7036, %v7035
        %v7038 = vrot.slane %v4107, 3
        %v7039 = vsel %vm609, %v7038, %v7037
        %v7040 = vrot.slane %v4111, 2
        %v7041 = vsel %vm612, %v7040, %v7039
        %v7042 = vrot.slane %v4115, 1
        %v7043 = vsel %vm615, %v7042, %v7041
        %v7044 = vrot.slane %v4123, 7
        %v7045 = vsel %vm597, %v7044, %v4119
        %v7046 = vrot.slane %v4127, 6
        %v7047 = vsel %vm600, %v7046, %v7045
        %v7048 = vrot.slane %v4131, 5
        %v7049 = vsel %vm603, %v7048, %v7047
        %v7050 = vrot.slane %v4135, 4
        %v7051 = vsel %vm606, %v7050, %v7049
        %v7052 = vrot.slane %v4139, 3
        %v7053 = vsel %vm609, %v7052, %v7051
        %v7054 = vrot.slane %v4143, 2
        %v7055 = vsel %vm612, %v7054, %v7053
        %v7056 = vrot.slane %v4147, 1
        %v7057 = vsel %vm615, %v7056, %v7055
        %v7058 = vrot.slane %v4155, 7
        %v7059 = vsel %vm597, %v7058, %v4151
        %v7060 = vrot.slane %v4159, 6
        %v7061 = vsel %vm600, %v7060, %v7059
        %v7062 = vrot.slane %v4163, 5
        %v7063 = vsel %vm603, %v7062, %v7061
        %v7064 = vrot.slane %v4167, 4
        %v7065 = vsel %vm606, %v7064, %v7063
        %v7066 = vrot.slane %v4171, 3
        %v7067 = vsel %vm609, %v7066, %v7065
        %v7068 = vrot.slane %v4175, 2
        %v7069 = vsel %vm612, %v7068, %v7067
        %v7070 = vrot.slane %v4179, 1
        %v7071 = vsel %vm615, %v7070, %v7069
        %v7072 = vrot.slane %v4205, 7
        %v7073 = vsel %vm597, %v7072, %v4200
        %v7074 = vrot.slane %v4210, 6
        %v7075 = vsel %vm600, %v7074, %v7073
        %v7076 = vrot.slane %v4215, 5
        %v7077 = vsel %vm603, %v7076, %v7075
        %v7078 = vrot.slane %v4220, 4
        %v7079 = vsel %vm606, %v7078, %v7077
        %v7080 = vrot.slane %v4225, 3
        %v7081 = vsel %vm609, %v7080, %v7079
        %v7082 = vrot.slane %v4230, 2
        %v7083 = vsel %vm612, %v7082, %v7081
        %v7084 = vrot.slane %v4235, 1
        %v7085 = vsel %vm615, %v7084, %v7083
        %v7086 = vrot.slane %v4245, 7
        %v7087 = vsel %vm597, %v7086, %v4240
        %v7088 = vrot.slane %v4250, 6
        %v7089 = vsel %vm600, %v7088, %v7087
        %v7090 = vrot.slane %v4255, 5
        %v7091 = vsel %vm603, %v7090, %v7089
        %v7092 = vrot.slane %v4260, 4
        %v7093 = vsel %vm606, %v7092, %v7091
        %v7094 = vrot.slane %v4265, 3
        %v7095 = vsel %vm609, %v7094, %v7093
        %v7096 = vrot.slane %v4270, 2
        %v7097 = vsel %vm612, %v7096, %v7095
        %v7098 = vrot.slane %v4275, 1
        %v7099 = vsel %vm615, %v7098, %v7097
        %v7100 = vrot.slane %v4283, 7
        %v7101 = vsel %vm597, %v7100, %v4279
        %v7102 = vrot.slane %v4287, 6
        %v7103 = vsel %vm600, %v7102, %v7101
        %v7104 = vrot.slane %v4291, 5
        %v7105 = vsel %vm603, %v7104, %v7103
        %v7106 = vrot.slane %v4295, 4
        %v7107 = vsel %vm606, %v7106, %v7105
        %v7108 = vrot.slane %v4299, 3
        %v7109 = vsel %vm609, %v7108, %v7107
        %v7110 = vrot.slane %v4303, 2
        %v7111 = vsel %vm612, %v7110, %v7109
        %v7112 = vrot.slane %v4307, 1
        %v7113 = vsel %vm615, %v7112, %v7111
        %v7114 = vrot.slane %v4315, 7
        %v7115 = vsel %vm597, %v7114, %v4311
        %v7116 = vrot.slane %v4319, 6
        %v7117 = vsel %vm600, %v7116, %v7115
        %v7118 = vrot.slane %v4323, 5
        %v7119 = vsel %vm603, %v7118, %v7117
        %v7120 = vrot.slane %v4327, 4
        %v7121 = vsel %vm606, %v7120, %v7119
        %v7122 = vrot.slane %v4331, 3
        %v7123 = vsel %vm609, %v7122, %v7121
        %v7124 = vrot.slane %v4335, 2
        %v7125 = vsel %vm612, %v7124, %v7123
        %v7126 = vrot.slane %v4339, 1
        %v7127 = vsel %vm615, %v7126, %v7125
        %v7128 = vrot.slane %v4347, 7
        %v7129 = vsel %vm597, %v7128, %v4343
        %v7130 = vrot.slane %v4351, 6
        %v7131 = vsel %vm600, %v7130, %v7129
        %v7132 = vrot.slane %v4355, 5
        %v7133 = vsel %vm603, %v7132, %v7131
        %v7134 = vrot.slane %v4359, 4
        %v7135 = vsel %vm606, %v7134, %v7133
        %v7136 = vrot.slane %v4363, 3
        %v7137 = vsel %vm609, %v7136, %v7135
        %v7138 = vrot.slane %v4367, 2
        %v7139 = vsel %vm612, %v7138, %v7137
        %v7140 = vrot.slane %v4371, 1
        %v7141 = vsel %vm615, %v7140, %v7139
        %v7142 = vrot.slane %v4379, 7
        %v7143 = vsel %vm597, %v7142, %v4375
        %v7144 = vrot.slane %v4383, 6
        %v7145 = vsel %vm600, %v7144, %v7143
        %v7146 = vrot.slane %v4387, 5
        %v7147 = vsel %vm603, %v7146, %v7145
        %v7148 = vrot.slane %v4391, 4
        %v7149 = vsel %vm606, %v7148, %v7147
        %v7150 = vrot.slane %v4395, 3
        %v7151 = vsel %vm609, %v7150, %v7149
        %v7152 = vrot.slane %v4399, 2
        %v7153 = vsel %vm612, %v7152, %v7151
        %v7154 = vrot.slane %v4403, 1
        %v7155 = vsel %vm615, %v7154, %v7153
        %v7156 = vrot.slane %v4413, 7
        %v7157 = vsel %vm597, %v7156, %v4408
        %v7158 = vrot.slane %v4418, 6
        %v7159 = vsel %vm600, %v7158, %v7157
        %v7160 = vrot.slane %v4423, 5
        %v7161 = vsel %vm603, %v7160, %v7159
        %v7162 = vrot.slane %v4428, 4
        %v7163 = vsel %vm606, %v7162, %v7161
        %v7164 = vrot.slane %v4433, 3
        %v7165 = vsel %vm609, %v7164, %v7163
        %v7166 = vrot.slane %v4438, 2
        %v7167 = vsel %vm612, %v7166, %v7165
        %v7168 = vrot.slane %v4443, 1
        %v7169 = vsel %vm615, %v7168, %v7167
        %v7170 = vrot.slane %v4453, 7
        %v7171 = vsel %vm597, %v7170, %v4448
        %v7172 = vrot.slane %v4458, 6
        %v7173 = vsel %vm600, %v7172, %v7171
        %v7174 = vrot.slane %v4463, 5
        %v7175 = vsel %vm603, %v7174, %v7173
        %v7176 = vrot.slane %v4468, 4
        %v7177 = vsel %vm606, %v7176, %v7175
        %v7178 = vrot.slane %v4473, 3
        %v7179 = vsel %vm609, %v7178, %v7177
        %v7180 = vrot.slane %v4478, 2
        %v7181 = vsel %vm612, %v7180, %v7179
        %v7182 = vrot.slane %v4483, 1
        %v7183 = vsel %vm615, %v7182, %v7181
        %v7184 = vrot.slane %v4491, 7
        %v7185 = vsel %vm597, %v7184, %v4487
        %v7186 = vrot.slane %v4495, 6
        %v7187 = vsel %vm600, %v7186, %v7185
        %v7188 = vrot.slane %v4499, 5
        %v7189 = vsel %vm603, %v7188, %v7187
        %v7190 = vrot.slane %v4503, 4
        %v7191 = vsel %vm606, %v7190, %v7189
        %v7192 = vrot.slane %v4507, 3
        %v7193 = vsel %vm609, %v7192, %v7191
        %v7194 = vrot.slane %v4511, 2
        %v7195 = vsel %vm612, %v7194, %v7193
        %v7196 = vrot.slane %v4515, 1
        %v7197 = vsel %vm615, %v7196, %v7195
        %v7198 = vrot.slane %v4523, 7
        %v7199 = vsel %vm597, %v7198, %v4519
        %v7200 = vrot.slane %v4527, 6
        %v7201 = vsel %vm600, %v7200, %v7199
        %v7202 = vrot.slane %v4531, 5
        %v7203 = vsel %vm603, %v7202, %v7201
        %v7204 = vrot.slane %v4535, 4
        %v7205 = vsel %vm606, %v7204, %v7203
        %v7206 = vrot.slane %v4539, 3
        %v7207 = vsel %vm609, %v7206, %v7205
        %v7208 = vrot.slane %v4543, 2
        %v7209 = vsel %vm612, %v7208, %v7207
        %v7210 = vrot.slane %v4547, 1
        %v7211 = vsel %vm615, %v7210, %v7209
        %v7212 = vrot.slane %v4555, 7
        %v7213 = vsel %vm597, %v7212, %v4551
        %v7214 = vrot.slane %v4559, 6
        %v7215 = vsel %vm600, %v7214, %v7213
        %v7216 = vrot.slane %v4563, 5
        %v7217 = vsel %vm603, %v7216, %v7215
        %v7218 = vrot.slane %v4567, 4
        %v7219 = vsel %vm606, %v7218, %v7217
        %v7220 = vrot.slane %v4571, 3
        %v7221 = vsel %vm609, %v7220, %v7219
        %v7222 = vrot.slane %v4575, 2
        %v7223 = vsel %vm612, %v7222, %v7221
        %v7224 = vrot.slane %v4579, 1
        %v7225 = vsel %vm615, %v7224, %v7223
        %v7226 = vrot.slane %v4587, 7
        %v7227 = vsel %vm597, %v7226, %v4583
        %v7228 = vrot.slane %v4591, 6
        %v7229 = vsel %vm600, %v7228, %v7227
        %v7230 = vrot.slane %v4595, 5
        %v7231 = vsel %vm603, %v7230, %v7229
        %v7232 = vrot.slane %v4599, 4
        %v7233 = vsel %vm606, %v7232, %v7231
        %v7234 = vrot.slane %v4603, 3
        %v7235 = vsel %vm609, %v7234, %v7233
        %v7236 = vrot.slane %v4607, 2
        %v7237 = vsel %vm612, %v7236, %v7235
        %v7238 = vrot.slane %v4611, 1
        %v7239 = vsel %vm615, %v7238, %v7237
        %v7258 = vsel %vm597, %v3976, %v4197
        %v7259 = vrot.slane %v3979, 7
        %v7260 = vsel %vm600, %v7259, %v7258
        %v7261 = vrot.slane %v3982, 6
        %v7262 = vsel %vm603, %v7261, %v7260
        %v7263 = vrot.slane %v3985, 5
        %v7264 = vsel %vm606, %v7263, %v7262
        %v7265 = vrot.slane %v3988, 4
        %v7266 = vsel %vm609, %v7265, %v7264
        %v7267 = vrot.slane %v3991, 3
        %v7268 = vsel %vm612, %v7267, %v7266
        %v7269 = vsel %vm615, %v4440, %v7268
        %v7270 = vsel %vm597, %v4000, %v4237
        %v7271 = vrot.slane %v4003, 7
        %v7272 = vsel %vm600, %v7271, %v7270
        %v7273 = vrot.slane %v4006, 6
        %v7274 = vsel %vm603, %v7273, %v7272
        %v7275 = vrot.slane %v4009, 5
        %v7276 = vsel %vm606, %v7275, %v7274
        %v7277 = vrot.slane %v4012, 4
        %v7278 = vsel %vm609, %v7277, %v7276
        %v7279 = vrot.slane %v4015, 3
        %v7280 = vsel %vm612, %v7279, %v7278
        %v7281 = vsel %vm615, %v4480, %v7280
        %v7282 = vrot.slane %v4055, 1
        %v7283 = vsel %vm597, %v4059, %v7282
        %v7284 = vrot.slane %v4063, 7
        %v7285 = vsel %vm600, %v7284, %v7283
        %v7286 = vrot.slane %v4067, 6
        %v7287 = vsel %vm603, %v7286, %v7285
        %v7288 = vrot.slane %v4071, 5
        %v7289 = vsel %vm606, %v7288, %v7287
        %v7290 = vrot.slane %v4075, 4
        %v7291 = vsel %vm609, %v7290, %v7289
        %v7292 = vrot.slane %v4079, 3
        %v7293 = vsel %vm612, %v7292, %v7291
        %v7294 = vrot.slane %v4083, 2
        %v7295 = vsel %vm615, %v7294, %v7293
        %v7296 = vrot.slane %v4087, 1
        %v7297 = vsel %vm597, %v4091, %v7296
        %v7298 = vrot.slane %v4095, 7
        %v7299 = vsel %vm600, %v7298, %v7297
        %v7300 = vrot.slane %v4099, 6
        %v7301 = vsel %vm603, %v7300, %v7299
        %v7302 = vrot.slane %v4103, 5
        %v7303 = vsel %vm606, %v7302, %v7301
        %v7304 = vrot.slane %v4107, 4
        %v7305 = vsel %vm609, %v7304, %v7303
        %v7306 = vrot.slane %v4111, 3
        %v7307 = vsel %vm612, %v7306, %v7305
        %v7308 = vrot.slane %v4115, 2
        %v7309 = vsel %vm615, %v7308, %v7307
        %v7310 = vrot.slane %v4119, 1
        %v7311 = vsel %vm597, %v4123, %v7310
        %v7312 = vrot.slane %v4127, 7
        %v7313 = vsel %vm600, %v7312, %v7311
        %v7314 = vrot.slane %v4131, 6
        %v7315 = vsel %vm603, %v7314, %v7313
        %v7316 = vrot.slane %v4135, 5
        %v7317 = vsel %vm606, %v7316, %v7315
        %v7318 = vrot.slane %v4139, 4
        %v7319 = vsel %vm609, %v7318, %v7317
        %v7320 = vrot.slane %v4143, 3
        %v7321 = vsel %vm612, %v7320, %v7319
        %v7322 = vrot.slane %v4147, 2
        %v7323 = vsel %vm615, %v7322, %v7321
        %v7324 = vrot.slane %v4151, 1
        %v7325 = vsel %vm597, %v4155, %v7324
        %v7326 = vrot.slane %v4159, 7
        %v7327 = vsel %vm600, %v7326, %v7325
        %v7328 = vrot.slane %v4163, 6
        %v7329 = vsel %vm603, %v7328, %v7327
        %v7330 = vrot.slane %v4167, 5
        %v7331 = vsel %vm606, %v7330, %v7329
        %v7332 = vrot.slane %v4171, 4
        %v7333 = vsel %vm609, %v7332, %v7331
        %v7334 = vrot.slane %v4175, 3
        %v7335 = vsel %vm612, %v7334, %v7333
        %v7336 = vrot.slane %v4179, 2
        %v7337 = vsel %vm615, %v7336, %v7335
        %v7338 = vrot.slane %v4200, 1
        %v7339 = vsel %vm597, %v4205, %v7338
        %v7340 = vrot.slane %v4210, 7
        %v7341 = vsel %vm600, %v7340, %v7339
        %v7342 = vrot.slane %v4215, 6
        %v7343 = vsel %vm603, %v7342, %v7341
        %v7344 = vrot.slane %v4220, 5
        %v7345 = vsel %vm606, %v7344, %v7343
        %v7346 = vrot.slane %v4225, 4
        %v7347 = vsel %vm609, %v7346, %v7345
        %v7348 = vrot.slane %v4230, 3
        %v7349 = vsel %vm612, %v7348, %v7347
        %v7350 = vrot.slane %v4235, 2
        %v7351 = vsel %vm615, %v7350, %v7349
        %v7352 = vrot.slane %v4240, 1
        %v7353 = vsel %vm597, %v4245, %v7352
        %v7354 = vrot.slane %v4250, 7
        %v7355 = vsel %vm600, %v7354, %v7353
        %v7356 = vrot.slane %v4255, 6
        %v7357 = vsel %vm603, %v7356, %v7355
        %v7358 = vrot.slane %v4260, 5
        %v7359 = vsel %vm606, %v7358, %v7357
        %v7360 = vrot.slane %v4265, 4
        %v7361 = vsel %vm609, %v7360, %v7359
        %v7362 = vrot.slane %v4270, 3
        %v7363 = vsel %vm612, %v7362, %v7361
        %v7364 = vrot.slane %v4275, 2
        %v7365 = vsel %vm615, %v7364, %v7363
        %v7366 = vrot.slane %v4279, 1
        %v7367 = vsel %vm597, %v4283, %v7366
        %v7368 = vrot.slane %v4287, 7
        %v7369 = vsel %vm600, %v7368, %v7367
        %v7370 = vrot.slane %v4291, 6
        %v7371 = vsel %vm603, %v7370, %v7369
        %v7372 = vrot.slane %v4295, 5
        %v7373 = vsel %vm606, %v7372, %v7371
        %v7374 = vrot.slane %v4299, 4
        %v7375 = vsel %vm609, %v7374, %v7373
        %v7376 = vrot.slane %v4303, 3
        %v7377 = vsel %vm612, %v7376, %v7375
        %v7378 = vrot.slane %v4307, 2
        %v7379 = vsel %vm615, %v7378, %v7377
        %v7380 = vrot.slane %v4311, 1
        %v7381 = vsel %vm597, %v4315, %v7380
        %v7382 = vrot.slane %v4319, 7
        %v7383 = vsel %vm600, %v7382, %v7381
        %v7384 = vrot.slane %v4323, 6
        %v7385 = vsel %vm603, %v7384, %v7383
        %v7386 = vrot.slane %v4327, 5
        %v7387 = vsel %vm606, %v7386, %v7385
        %v7388 = vrot.slane %v4331, 4
        %v7389 = vsel %vm609, %v7388, %v7387
        %v7390 = vrot.slane %v4335, 3
        %v7391 = vsel %vm612, %v7390, %v7389
        %v7392 = vrot.slane %v4339, 2
        %v7393 = vsel %vm615, %v7392, %v7391
        %v7394 = vrot.slane %v4343, 1
        %v7395 = vsel %vm597, %v4347, %v7394
        %v7396 = vrot.slane %v4351, 7
        %v7397 = vsel %vm600, %v7396, %v7395
        %v7398 = vrot.slane %v4355, 6
        %v7399 = vsel %vm603, %v7398, %v7397
        %v7400 = vrot.slane %v4359, 5
        %v7401 = vsel %vm606, %v7400, %v7399
        %v7402 = vrot.slane %v4363, 4
        %v7403 = vsel %vm609, %v7402, %v7401
        %v7404 = vrot.slane %v4367, 3
        %v7405 = vsel %vm612, %v7404, %v7403
        %v7406 = vrot.slane %v4371, 2
        %v7407 = vsel %vm615, %v7406, %v7405
        %v7408 = vrot.slane %v4375, 1
        %v7409 = vsel %vm597, %v4379, %v7408
        %v7410 = vrot.slane %v4383, 7
        %v7411 = vsel %vm600, %v7410, %v7409
        %v7412 = vrot.slane %v4387, 6
        %v7413 = vsel %vm603, %v7412, %v7411
        %v7414 = vrot.slane %v4391, 5
        %v7415 = vsel %vm606, %v7414, %v7413
        %v7416 = vrot.slane %v4395, 4
        %v7417 = vsel %vm609, %v7416, %v7415
        %v7418 = vrot.slane %v4399, 3
        %v7419 = vsel %vm612, %v7418, %v7417
        %v7420 = vrot.slane %v4403, 2
        %v7421 = vsel %vm615, %v7420, %v7419
        %v7422 = vrot.slane %v4408, 1
        %v7423 = vsel %vm597, %v4413, %v7422
        %v7424 = vrot.slane %v4418, 7
        %v7425 = vsel %vm600, %v7424, %v7423
        %v7426 = vrot.slane %v4423, 6
        %v7427 = vsel %vm603, %v7426, %v7425
        %v7428 = vrot.slane %v4428, 5
        %v7429 = vsel %vm606, %v7428, %v7427
        %v7430 = vrot.slane %v4433, 4
        %v7431 = vsel %vm609, %v7430, %v7429
        %v7432 = vrot.slane %v4438, 3
        %v7433 = vsel %vm612, %v7432, %v7431
        %v7434 = vrot.slane %v4443, 2
        %v7435 = vsel %vm615, %v7434, %v7433
        %v7436 = vrot.slane %v4448, 1
        %v7437 = vsel %vm597, %v4453, %v7436
        %v7438 = vrot.slane %v4458, 7
        %v7439 = vsel %vm600, %v7438, %v7437
        %v7440 = vrot.slane %v4463, 6
        %v7441 = vsel %vm603, %v7440, %v7439
        %v7442 = vrot.slane %v4468, 5
        %v7443 = vsel %vm606, %v7442, %v7441
        %v7444 = vrot.slane %v4473, 4
        %v7445 = vsel %vm609, %v7444, %v7443
        %v7446 = vrot.slane %v4478, 3
        %v7447 = vsel %vm612, %v7446, %v7445
        %v7448 = vrot.slane %v4483, 2
        %v7449 = vsel %vm615, %v7448, %v7447
        %v7450 = vrot.slane %v4487, 1
        %v7451 = vsel %vm597, %v4491, %v7450
        %v7452 = vrot.slane %v4495, 7
        %v7453 = vsel %vm600, %v7452, %v7451
        %v7454 = vrot.slane %v4499, 6
        %v7455 = vsel %vm603, %v7454, %v7453
        %v7456 = vrot.slane %v4503, 5
        %v7457 = vsel %vm606, %v7456, %v7455
        %v7458 = vrot.slane %v4507, 4
        %v7459 = vsel %vm609, %v7458, %v7457
        %v7460 = vrot.slane %v4511, 3
        %v7461 = vsel %vm612, %v7460, %v7459
        %v7462 = vrot.slane %v4515, 2
        %v7463 = vsel %vm615, %v7462, %v7461
        %v7464 = vrot.slane %v4519, 1
        %v7465 = vsel %vm597, %v4523, %v7464
        %v7466 = vrot.slane %v4527, 7
        %v7467 = vsel %vm600, %v7466, %v7465
        %v7468 = vrot.slane %v4531, 6
        %v7469 = vsel %vm603, %v7468, %v7467
        %v7470 = vrot.slane %v4535, 5
        %v7471 = vsel %vm606, %v7470, %v7469
        %v7472 = vrot.slane %v4539, 4
        %v7473 = vsel %vm609, %v7472, %v7471
        %v7474 = vrot.slane %v4543, 3
        %v7475 = vsel %vm612, %v7474, %v7473
        %v7476 = vrot.slane %v4547, 2
        %v7477 = vsel %vm615, %v7476, %v7475
        %v7478 = vrot.slane %v4551, 1
        %v7479 = vsel %vm597, %v4555, %v7478
        %v7480 = vrot.slane %v4559, 7
        %v7481 = vsel %vm600, %v7480, %v7479
        %v7482 = vrot.slane %v4563, 6
        %v7483 = vsel %vm603, %v7482, %v7481
        %v7484 = vrot.slane %v4567, 5
        %v7485 = vsel %vm606, %v7484, %v7483
        %v7486 = vrot.slane %v4571, 4
        %v7487 = vsel %vm609, %v7486, %v7485
        %v7488 = vrot.slane %v4575, 3
        %v7489 = vsel %vm612, %v7488, %v7487
        %v7490 = vrot.slane %v4579, 2
        %v7491 = vsel %vm615, %v7490, %v7489
        %v7492 = vrot.slane %v4583, 1
        %v7493 = vsel %vm597, %v4587, %v7492
        %v7494 = vrot.slane %v4591, 7
        %v7495 = vsel %vm600, %v7494, %v7493
        %v7496 = vrot.slane %v4595, 6
        %v7497 = vsel %vm603, %v7496, %v7495
        %v7498 = vrot.slane %v4599, 5
        %v7499 = vsel %vm606, %v7498, %v7497
        %v7500 = vrot.slane %v4603, 4
        %v7501 = vsel %vm609, %v7500, %v7499
        %v7502 = vrot.slane %v4607, 3
        %v7503 = vsel %vm612, %v7502, %v7501
        %v7504 = vrot.slane %v4611, 2
        %v7505 = vsel %vm615, %v7504, %v7503
        %7506 = vrot.lane.b32.xlu0 %v7269, 16
        %v7507 = vpop.permute.xlu0 %7506
        %7508 = vrot.lane.b32.xlu0 %v7281, 16
        %v7509 = vpop.permute.xlu0 %7508
        %7510 = vrot.lane.b32.xlu0 %v7295, 16
        %v7511 = vpop.permute.xlu0 %7510
        %7512 = vrot.lane.b32.xlu0 %v7309, 16
        %v7513 = vpop.permute.xlu0 %7512
        %7514 = vrot.lane.b32.xlu0 %v7323, 16
        %v7515 = vpop.permute.xlu0 %7514
        %7516 = vrot.lane.b32.xlu0 %v7337, 16
        %v7517 = vpop.permute.xlu0 %7516
        %7518 = vrot.lane.b32.xlu0 %v7351, 16
        %v7519 = vpop.permute.xlu0 %7518
        %7520 = vrot.lane.b32.xlu0 %v7365, 16
        %v7521 = vpop.permute.xlu0 %7520
        %7522 = vrot.lane.b32.xlu0 %v7379, 16
        %v7523 = vpop.permute.xlu0 %7522
        %7524 = vrot.lane.b32.xlu0 %v7393, 16
        %v7525 = vpop.permute.xlu0 %7524
        %7526 = vrot.lane.b32.xlu0 %v7407, 16
        %v7527 = vpop.permute.xlu0 %7526
        %7528 = vrot.lane.b32.xlu0 %v7421, 16
        %v7529 = vpop.permute.xlu0 %7528
        %7530 = vrot.lane.b32.xlu0 %v7435, 16
        %v7531 = vpop.permute.xlu0 %7530
        %7532 = vrot.lane.b32.xlu0 %v7449, 16
        %v7533 = vpop.permute.xlu0 %7532
        %7534 = vrot.lane.b32.xlu0 %v7463, 16
        %v7535 = vpop.permute.xlu0 %7534
        %7536 = vrot.lane.b32.xlu0 %v7477, 16
        %v7537 = vpop.permute.xlu0 %7536
        %7538 = vrot.lane.b32.xlu0 %v7491, 16
        %v7539 = vpop.permute.xlu0 %7538
        %7540 = vrot.lane.b32.xlu0 %v7505, 16
        %v7541 = vpop.permute.xlu0 %7540
        %v7560 = vsel %vm597, %v4202, %v4405
        %v7561 = vsel %vm600, %v3979, %v7560
        %v7562 = vrot.slane %v3982, 7
        %v7563 = vsel %vm603, %v7562, %v7561
        %v7564 = vrot.slane %v3985, 6
        %v7565 = vsel %vm606, %v7564, %v7563
        %v7566 = vrot.slane %v3988, 5
        %v7567 = vsel %vm609, %v7566, %v7565
        %v7568 = vrot.slane %v3991, 4
        %v7569 = vsel %vm612, %v7568, %v7567
        %v7570 = vrot.slane %v3994, 3
        %v7571 = vsel %vm615, %v7570, %v7569
        %v7572 = vsel %vm597, %v4242, %v4445
        %v7573 = vsel %vm600, %v4003, %v7572
        %v7574 = vrot.slane %v4006, 7
        %v7575 = vsel %vm603, %v7574, %v7573
        %v7576 = vrot.slane %v4009, 6
        %v7577 = vsel %vm606, %v7576, %v7575
        %v7578 = vrot.slane %v4012, 5
        %v7579 = vsel %vm609, %v7578, %v7577
        %v7580 = vrot.slane %v4015, 4
        %v7581 = vsel %vm612, %v7580, %v7579
        %v7582 = vrot.slane %v4018, 3
        %v7583 = vsel %vm615, %v7582, %v7581
        %v7584 = vrot.slane %v4055, 2
        %v7585 = vrot.slane %v4059, 1
        %v7586 = vsel %vm597, %v7585, %v7584
        %v7587 = vsel %vm600, %v4063, %v7586
        %v7588 = vrot.slane %v4067, 7
        %v7589 = vsel %vm603, %v7588, %v7587
        %v7590 = vrot.slane %v4071, 6
        %v7591 = vsel %vm606, %v7590, %v7589
        %v7592 = vrot.slane %v4075, 5
        %v7593 = vsel %vm609, %v7592, %v7591
        %v7594 = vrot.slane %v4079, 4
        %v7595 = vsel %vm612, %v7594, %v7593
        %v7596 = vrot.slane %v4083, 3
        %v7597 = vsel %vm615, %v7596, %v7595
        %v7598 = vrot.slane %v4087, 2
        %v7599 = vrot.slane %v4091, 1
        %v7600 = vsel %vm597, %v7599, %v7598
        %v7601 = vsel %vm600, %v4095, %v7600
        %v7602 = vrot.slane %v4099, 7
        %v7603 = vsel %vm603, %v7602, %v7601
        %v7604 = vrot.slane %v4103, 6
        %v7605 = vsel %vm606, %v7604, %v7603
        %v7606 = vrot.slane %v4107, 5
        %v7607 = vsel %vm609, %v7606, %v7605
        %v7608 = vrot.slane %v4111, 4
        %v7609 = vsel %vm612, %v7608, %v7607
        %v7610 = vrot.slane %v4115, 3
        %v7611 = vsel %vm615, %v7610, %v7609
        %v7612 = vrot.slane %v4119, 2
        %v7613 = vrot.slane %v4123, 1
        %v7614 = vsel %vm597, %v7613, %v7612
        %v7615 = vsel %vm600, %v4127, %v7614
        %v7616 = vrot.slane %v4131, 7
        %v7617 = vsel %vm603, %v7616, %v7615
        %v7618 = vrot.slane %v4135, 6
        %v7619 = vsel %vm606, %v7618, %v7617
        %v7620 = vrot.slane %v4139, 5
        %v7621 = vsel %vm609, %v7620, %v7619
        %v7622 = vrot.slane %v4143, 4
        %v7623 = vsel %vm612, %v7622, %v7621
        %v7624 = vrot.slane %v4147, 3
        %v7625 = vsel %vm615, %v7624, %v7623
        %v7626 = vrot.slane %v4151, 2
        %v7627 = vrot.slane %v4155, 1
        %v7628 = vsel %vm597, %v7627, %v7626
        %v7629 = vsel %vm600, %v4159, %v7628
        %v7630 = vrot.slane %v4163, 7
        %v7631 = vsel %vm603, %v7630, %v7629
        %v7632 = vrot.slane %v4167, 6
        %v7633 = vsel %vm606, %v7632, %v7631
        %v7634 = vrot.slane %v4171, 5
        %v7635 = vsel %vm609, %v7634, %v7633
        %v7636 = vrot.slane %v4175, 4
        %v7637 = vsel %vm612, %v7636, %v7635
        %v7638 = vrot.slane %v4179, 3
        %v7639 = vsel %vm615, %v7638, %v7637
        %v7640 = vrot.slane %v4200, 2
        %v7641 = vrot.slane %v4205, 1
        %v7642 = vsel %vm597, %v7641, %v7640
        %v7643 = vsel %vm600, %v4210, %v7642
        %v7644 = vrot.slane %v4215, 7
        %v7645 = vsel %vm603, %v7644, %v7643
        %v7646 = vrot.slane %v4220, 6
        %v7647 = vsel %vm606, %v7646, %v7645
        %v7648 = vrot.slane %v4225, 5
        %v7649 = vsel %vm609, %v7648, %v7647
        %v7650 = vrot.slane %v4230, 4
        %v7651 = vsel %vm612, %v7650, %v7649
        %v7652 = vrot.slane %v4235, 3
        %v7653 = vsel %vm615, %v7652, %v7651
        %v7654 = vrot.slane %v4240, 2
        %v7655 = vrot.slane %v4245, 1
        %v7656 = vsel %vm597, %v7655, %v7654
        %v7657 = vsel %vm600, %v4250, %v7656
        %v7658 = vrot.slane %v4255, 7
        %v7659 = vsel %vm603, %v7658, %v7657
        %v7660 = vrot.slane %v4260, 6
        %v7661 = vsel %vm606, %v7660, %v7659
        %v7662 = vrot.slane %v4265, 5
        %v7663 = vsel %vm609, %v7662, %v7661
        %v7664 = vrot.slane %v4270, 4
        %v7665 = vsel %vm612, %v7664, %v7663
        %v7666 = vrot.slane %v4275, 3
        %v7667 = vsel %vm615, %v7666, %v7665
        %v7668 = vrot.slane %v4279, 2
        %v7669 = vrot.slane %v4283, 1
        %v7670 = vsel %vm597, %v7669, %v7668
        %v7671 = vsel %vm600, %v4287, %v7670
        %v7672 = vrot.slane %v4291, 7
        %v7673 = vsel %vm603, %v7672, %v7671
        %v7674 = vrot.slane %v4295, 6
        %v7675 = vsel %vm606, %v7674, %v7673
        %v7676 = vrot.slane %v4299, 5
        %v7677 = vsel %vm609, %v7676, %v7675
        %v7678 = vrot.slane %v4303, 4
        %v7679 = vsel %vm612, %v7678, %v7677
        %v7680 = vrot.slane %v4307, 3
        %v7681 = vsel %vm615, %v7680, %v7679
        %v7682 = vrot.slane %v4311, 2
        %v7683 = vrot.slane %v4315, 1
        %v7684 = vsel %vm597, %v7683, %v7682
        %v7685 = vsel %vm600, %v4319, %v7684
        %v7686 = vrot.slane %v4323, 7
        %v7687 = vsel %vm603, %v7686, %v7685
        %v7688 = vrot.slane %v4327, 6
        %v7689 = vsel %vm606, %v7688, %v7687
        %v7690 = vrot.slane %v4331, 5
        %v7691 = vsel %vm609, %v7690, %v7689
        %v7692 = vrot.slane %v4335, 4
        %v7693 = vsel %vm612, %v7692, %v7691
        %v7694 = vrot.slane %v4339, 3
        %v7695 = vsel %vm615, %v7694, %v7693
        %v7696 = vrot.slane %v4343, 2
        %v7697 = vrot.slane %v4347, 1
        %v7698 = vsel %vm597, %v7697, %v7696
        %v7699 = vsel %vm600, %v4351, %v7698
        %v7700 = vrot.slane %v4355, 7
        %v7701 = vsel %vm603, %v7700, %v7699
        %v7702 = vrot.slane %v4359, 6
        %v7703 = vsel %vm606, %v7702, %v7701
        %v7704 = vrot.slane %v4363, 5
        %v7705 = vsel %vm609, %v7704, %v7703
        %v7706 = vrot.slane %v4367, 4
        %v7707 = vsel %vm612, %v7706, %v7705
        %v7708 = vrot.slane %v4371, 3
        %v7709 = vsel %vm615, %v7708, %v7707
        %v7710 = vrot.slane %v4375, 2
        %v7711 = vrot.slane %v4379, 1
        %v7712 = vsel %vm597, %v7711, %v7710
        %v7713 = vsel %vm600, %v4383, %v7712
        %v7714 = vrot.slane %v4387, 7
        %v7715 = vsel %vm603, %v7714, %v7713
        %v7716 = vrot.slane %v4391, 6
        %v7717 = vsel %vm606, %v7716, %v7715
        %v7718 = vrot.slane %v4395, 5
        %v7719 = vsel %vm609, %v7718, %v7717
        %v7720 = vrot.slane %v4399, 4
        %v7721 = vsel %vm612, %v7720, %v7719
        %v7722 = vrot.slane %v4403, 3
        %v7723 = vsel %vm615, %v7722, %v7721
        %v7724 = vrot.slane %v4408, 2
        %v7725 = vrot.slane %v4413, 1
        %v7726 = vsel %vm597, %v7725, %v7724
        %v7727 = vsel %vm600, %v4418, %v7726
        %v7728 = vrot.slane %v4423, 7
        %v7729 = vsel %vm603, %v7728, %v7727
        %v7730 = vrot.slane %v4428, 6
        %v7731 = vsel %vm606, %v7730, %v7729
        %v7732 = vrot.slane %v4433, 5
        %v7733 = vsel %vm609, %v7732, %v7731
        %v7734 = vrot.slane %v4438, 4
        %v7735 = vsel %vm612, %v7734, %v7733
        %v7736 = vrot.slane %v4443, 3
        %v7737 = vsel %vm615, %v7736, %v7735
        %v7738 = vrot.slane %v4448, 2
        %v7739 = vrot.slane %v4453, 1
        %v7740 = vsel %vm597, %v7739, %v7738
        %v7741 = vsel %vm600, %v4458, %v7740
        %v7742 = vrot.slane %v4463, 7
        %v7743 = vsel %vm603, %v7742, %v7741
        %v7744 = vrot.slane %v4468, 6
        %v7745 = vsel %vm606, %v7744, %v7743
        %v7746 = vrot.slane %v4473, 5
        %v7747 = vsel %vm609, %v7746, %v7745
        %v7748 = vrot.slane %v4478, 4
        %v7749 = vsel %vm612, %v7748, %v7747
        %v7750 = vrot.slane %v4483, 3
        %v7751 = vsel %vm615, %v7750, %v7749
        %v7752 = vrot.slane %v4487, 2
        %v7753 = vrot.slane %v4491, 1
        %v7754 = vsel %vm597, %v7753, %v7752
        %v7755 = vsel %vm600, %v4495, %v7754
        %v7756 = vrot.slane %v4499, 7
        %v7757 = vsel %vm603, %v7756, %v7755
        %v7758 = vrot.slane %v4503, 6
        %v7759 = vsel %vm606, %v7758, %v7757
        %v7760 = vrot.slane %v4507, 5
        %v7761 = vsel %vm609, %v7760, %v7759
        %v7762 = vrot.slane %v4511, 4
        %v7763 = vsel %vm612, %v7762, %v7761
        %v7764 = vrot.slane %v4515, 3
        %v7765 = vsel %vm615, %v7764, %v7763
        %v7766 = vrot.slane %v4519, 2
        %v7767 = vrot.slane %v4523, 1
        %v7768 = vsel %vm597, %v7767, %v7766
        %v7769 = vsel %vm600, %v4527, %v7768
        %v7770 = vrot.slane %v4531, 7
        %v7771 = vsel %vm603, %v7770, %v7769
        %v7772 = vrot.slane %v4535, 6
        %v7773 = vsel %vm606, %v7772, %v7771
        %v7774 = vrot.slane %v4539, 5
        %v7775 = vsel %vm609, %v7774, %v7773
        %v7776 = vrot.slane %v4543, 4
        %v7777 = vsel %vm612, %v7776, %v7775
        %v7778 = vrot.slane %v4547, 3
        %v7779 = vsel %vm615, %v7778, %v7777
        %v7780 = vrot.slane %v4551, 2
        %v7781 = vrot.slane %v4555, 1
        %v7782 = vsel %vm597, %v7781, %v7780
        %v7783 = vsel %vm600, %v4559, %v7782
        %v7784 = vrot.slane %v4563, 7
        %v7785 = vsel %vm603, %v7784, %v7783
        %v7786 = vrot.slane %v4567, 6
        %v7787 = vsel %vm606, %v7786, %v7785
        %v7788 = vrot.slane %v4571, 5
        %v7789 = vsel %vm609, %v7788, %v7787
        %v7790 = vrot.slane %v4575, 4
        %v7791 = vsel %vm612, %v7790, %v7789
        %v7792 = vrot.slane %v4579, 3
        %v7793 = vsel %vm615, %v7792, %v7791
        %v7794 = vrot.slane %v4583, 2
        %v7795 = vrot.slane %v4587, 1
        %v7796 = vsel %vm597, %v7795, %v7794
        %v7797 = vsel %vm600, %v4591, %v7796
        %v7798 = vrot.slane %v4595, 7
        %v7799 = vsel %vm603, %v7798, %v7797
        %v7800 = vrot.slane %v4599, 6
        %v7801 = vsel %vm606, %v7800, %v7799
        %v7802 = vrot.slane %v4603, 5
        %v7803 = vsel %vm609, %v7802, %v7801
        %v7804 = vrot.slane %v4607, 4
        %v7805 = vsel %vm612, %v7804, %v7803
        %v7806 = vrot.slane %v4611, 3
        %v7807 = vsel %vm615, %v7806, %v7805
        %7808 = vrot.lane.b32.xlu0 %v7571, 32
        %v7809 = vpop.permute.xlu0 %7808
        %7810 = vrot.lane.b32.xlu0 %v7583, 32
        %v7811 = vpop.permute.xlu0 %7810
        %7812 = vrot.lane.b32.xlu0 %v7597, 32
        %v7813 = vpop.permute.xlu0 %7812
        %7814 = vrot.lane.b32.xlu0 %v7611, 32
        %v7815 = vpop.permute.xlu0 %7814
        %7816 = vrot.lane.b32.xlu0 %v7625, 32
        %v7817 = vpop.permute.xlu0 %7816
        %7818 = vrot.lane.b32.xlu0 %v7639, 32
        %v7819 = vpop.permute.xlu0 %7818
        %7820 = vrot.lane.b32.xlu0 %v7653, 32
        %v7821 = vpop.permute.xlu0 %7820
        %7822 = vrot.lane.b32.xlu0 %v7667, 32
        %v7823 = vpop.permute.xlu0 %7822
        %7824 = vrot.lane.b32.xlu0 %v7681, 32
        %v7825 = vpop.permute.xlu0 %7824
        %7826 = vrot.lane.b32.xlu0 %v7695, 32
        %v7827 = vpop.permute.xlu0 %7826
        %7828 = vrot.lane.b32.xlu0 %v7709, 32
        %v7829 = vpop.permute.xlu0 %7828
        %7830 = vrot.lane.b32.xlu0 %v7723, 32
        %v7831 = vpop.permute.xlu0 %7830
        %7832 = vrot.lane.b32.xlu0 %v7737, 32
        %v7833 = vpop.permute.xlu0 %7832
        %7834 = vrot.lane.b32.xlu0 %v7751, 32
        %v7835 = vpop.permute.xlu0 %7834
        %7836 = vrot.lane.b32.xlu0 %v7765, 32
        %v7837 = vpop.permute.xlu0 %7836
        %7838 = vrot.lane.b32.xlu0 %v7779, 32
        %v7839 = vpop.permute.xlu0 %7838
        %7840 = vrot.lane.b32.xlu0 %v7793, 32
        %v7841 = vpop.permute.xlu0 %7840
        %7842 = vrot.lane.b32.xlu0 %v7807, 32
        %v7843 = vpop.permute.xlu0 %7842
        %v7862 = vrot.slane %v3973, 3
        %v7863 = vsel %vm597, %v4410, %v7862
        %v7864 = vsel %vm600, %v4207, %v7863
        %v7865 = vsel %vm603, %v3982, %v7864
        %v7866 = vrot.slane %v3985, 7
        %v7867 = vsel %vm606, %v7866, %v7865
        %v7868 = vrot.slane %v3988, 6
        %v7869 = vsel %vm609, %v7868, %v7867
        %v7870 = vrot.slane %v3991, 5
        %v7871 = vsel %vm612, %v7870, %v7869
        %v7872 = vrot.slane %v3994, 4
        %v7873 = vsel %vm615, %v7872, %v7871
        %v7874 = vrot.slane %v3997, 3
        %v7875 = vsel %vm597, %v4450, %v7874
        %v7876 = vsel %vm600, %v4247, %v7875
        %v7877 = vsel %vm603, %v4006, %v7876
        %v7878 = vrot.slane %v4009, 7
        %v7879 = vsel %vm606, %v7878, %v7877
        %v7880 = vrot.slane %v4012, 6
        %v7881 = vsel %vm609, %v7880, %v7879
        %v7882 = vrot.slane %v4015, 5
        %v7883 = vsel %vm612, %v7882, %v7881
        %v7884 = vrot.slane %v4018, 4
        %v7885 = vsel %vm615, %v7884, %v7883
        %v7886 = vrot.slane %v4055, 3
        %v7887 = vrot.slane %v4059, 2
        %v7888 = vsel %vm597, %v7887, %v7886
        %v7889 = vrot.slane %v4063, 1
        %v7890 = vsel %vm600, %v7889, %v7888
        %v7891 = vsel %vm603, %v4067, %v7890
        %v7892 = vrot.slane %v4071, 7
        %v7893 = vsel %vm606, %v7892, %v7891
        %v7894 = vrot.slane %v4075, 6
        %v7895 = vsel %vm609, %v7894, %v7893
        %v7896 = vrot.slane %v4079, 5
        %v7897 = vsel %vm612, %v7896, %v7895
        %v7898 = vrot.slane %v4083, 4
        %v7899 = vsel %vm615, %v7898, %v7897
        %v7900 = vrot.slane %v4087, 3
        %v7901 = vrot.slane %v4091, 2
        %v7902 = vsel %vm597, %v7901, %v7900
        %v7903 = vrot.slane %v4095, 1
        %v7904 = vsel %vm600, %v7903, %v7902
        %v7905 = vsel %vm603, %v4099, %v7904
        %v7906 = vrot.slane %v4103, 7
        %v7907 = vsel %vm606, %v7906, %v7905
        %v7908 = vrot.slane %v4107, 6
        %v7909 = vsel %vm609, %v7908, %v7907
        %v7910 = vrot.slane %v4111, 5
        %v7911 = vsel %vm612, %v7910, %v7909
        %v7912 = vrot.slane %v4115, 4
        %v7913 = vsel %vm615, %v7912, %v7911
        %v7914 = vrot.slane %v4119, 3
        %v7915 = vrot.slane %v4123, 2
        %v7916 = vsel %vm597, %v7915, %v7914
        %v7917 = vrot.slane %v4127, 1
        %v7918 = vsel %vm600, %v7917, %v7916
        %v7919 = vsel %vm603, %v4131, %v7918
        %v7920 = vrot.slane %v4135, 7
        %v7921 = vsel %vm606, %v7920, %v7919
        %v7922 = vrot.slane %v4139, 6
        %v7923 = vsel %vm609, %v7922, %v7921
        %v7924 = vrot.slane %v4143, 5
        %v7925 = vsel %vm612, %v7924, %v7923
        %v7926 = vrot.slane %v4147, 4
        %v7927 = vsel %vm615, %v7926, %v7925
        %v7928 = vrot.slane %v4151, 3
        %v7929 = vrot.slane %v4155, 2
        %v7930 = vsel %vm597, %v7929, %v7928
        %v7931 = vrot.slane %v4159, 1
        %v7932 = vsel %vm600, %v7931, %v7930
        %v7933 = vsel %vm603, %v4163, %v7932
        %v7934 = vrot.slane %v4167, 7
        %v7935 = vsel %vm606, %v7934, %v7933
        %v7936 = vrot.slane %v4171, 6
        %v7937 = vsel %vm609, %v7936, %v7935
        %v7938 = vrot.slane %v4175, 5
        %v7939 = vsel %vm612, %v7938, %v7937
        %v7940 = vrot.slane %v4179, 4
        %v7941 = vsel %vm615, %v7940, %v7939
        %v7942 = vrot.slane %v4200, 3
        %v7943 = vrot.slane %v4205, 2
        %v7944 = vsel %vm597, %v7943, %v7942
        %v7945 = vrot.slane %v4210, 1
        %v7946 = vsel %vm600, %v7945, %v7944
        %v7947 = vsel %vm603, %v4215, %v7946
        %v7948 = vrot.slane %v4220, 7
        %v7949 = vsel %vm606, %v7948, %v7947
        %v7950 = vrot.slane %v4225, 6
        %v7951 = vsel %vm609, %v7950, %v7949
        %v7952 = vrot.slane %v4230, 5
        %v7953 = vsel %vm612, %v7952, %v7951
        %v7954 = vrot.slane %v4235, 4
        %v7955 = vsel %vm615, %v7954, %v7953
        %v7956 = vrot.slane %v4240, 3
        %v7957 = vrot.slane %v4245, 2
        %v7958 = vsel %vm597, %v7957, %v7956
        %v7959 = vrot.slane %v4250, 1
        %v7960 = vsel %vm600, %v7959, %v7958
        %v7961 = vsel %vm603, %v4255, %v7960
        %v7962 = vrot.slane %v4260, 7
        %v7963 = vsel %vm606, %v7962, %v7961
        %v7964 = vrot.slane %v4265, 6
        %v7965 = vsel %vm609, %v7964, %v7963
        %v7966 = vrot.slane %v4270, 5
        %v7967 = vsel %vm612, %v7966, %v7965
        %v7968 = vrot.slane %v4275, 4
        %v7969 = vsel %vm615, %v7968, %v7967
        %v7970 = vrot.slane %v4279, 3
        %v7971 = vrot.slane %v4283, 2
        %v7972 = vsel %vm597, %v7971, %v7970
        %v7973 = vrot.slane %v4287, 1
        %v7974 = vsel %vm600, %v7973, %v7972
        %v7975 = vsel %vm603, %v4291, %v7974
        %v7976 = vrot.slane %v4295, 7
        %v7977 = vsel %vm606, %v7976, %v7975
        %v7978 = vrot.slane %v4299, 6
        %v7979 = vsel %vm609, %v7978, %v7977
        %v7980 = vrot.slane %v4303, 5
        %v7981 = vsel %vm612, %v7980, %v7979
        %v7982 = vrot.slane %v4307, 4
        %v7983 = vsel %vm615, %v7982, %v7981
        %v7984 = vrot.slane %v4311, 3
        %v7985 = vrot.slane %v4315, 2
        %v7986 = vsel %vm597, %v7985, %v7984
        %v7987 = vrot.slane %v4319, 1
        %v7988 = vsel %vm600, %v7987, %v7986
        %v7989 = vsel %vm603, %v4323, %v7988
        %v7990 = vrot.slane %v4327, 7
        %v7991 = vsel %vm606, %v7990, %v7989
        %v7992 = vrot.slane %v4331, 6
        %v7993 = vsel %vm609, %v7992, %v7991
        %v7994 = vrot.slane %v4335, 5
        %v7995 = vsel %vm612, %v7994, %v7993
        %v7996 = vrot.slane %v4339, 4
        %v7997 = vsel %vm615, %v7996, %v7995
        %v7998 = vrot.slane %v4343, 3
        %v7999 = vrot.slane %v4347, 2
        %v8000 = vsel %vm597, %v7999, %v7998
        %v8001 = vrot.slane %v4351, 1
        %v8002 = vsel %vm600, %v8001, %v8000
        %v8003 = vsel %vm603, %v4355, %v8002
        %v8004 = vrot.slane %v4359, 7
        %v8005 = vsel %vm606, %v8004, %v8003
        %v8006 = vrot.slane %v4363, 6
        %v8007 = vsel %vm609, %v8006, %v8005
        %v8008 = vrot.slane %v4367, 5
        %v8009 = vsel %vm612, %v8008, %v8007
        %v8010 = vrot.slane %v4371, 4
        %v8011 = vsel %vm615, %v8010, %v8009
        %v8012 = vrot.slane %v4375, 3
        %v8013 = vrot.slane %v4379, 2
        %v8014 = vsel %vm597, %v8013, %v8012
        %v8015 = vrot.slane %v4383, 1
        %v8016 = vsel %vm600, %v8015, %v8014
        %v8017 = vsel %vm603, %v4387, %v8016
        %v8018 = vrot.slane %v4391, 7
        %v8019 = vsel %vm606, %v8018, %v8017
        %v8020 = vrot.slane %v4395, 6
        %v8021 = vsel %vm609, %v8020, %v8019
        %v8022 = vrot.slane %v4399, 5
        %v8023 = vsel %vm612, %v8022, %v8021
        %v8024 = vrot.slane %v4403, 4
        %v8025 = vsel %vm615, %v8024, %v8023
        %v8026 = vrot.slane %v4408, 3
        %v8027 = vrot.slane %v4413, 2
        %v8028 = vsel %vm597, %v8027, %v8026
        %v8029 = vrot.slane %v4418, 1
        %v8030 = vsel %vm600, %v8029, %v8028
        %v8031 = vsel %vm603, %v4423, %v8030
        %v8032 = vrot.slane %v4428, 7
        %v8033 = vsel %vm606, %v8032, %v8031
        %v8034 = vrot.slane %v4433, 6
        %v8035 = vsel %vm609, %v8034, %v8033
        %v8036 = vrot.slane %v4438, 5
        %v8037 = vsel %vm612, %v8036, %v8035
        %v8038 = vrot.slane %v4443, 4
        %v8039 = vsel %vm615, %v8038, %v8037
        %v8040 = vrot.slane %v4448, 3
        %v8041 = vrot.slane %v4453, 2
        %v8042 = vsel %vm597, %v8041, %v8040
        %v8043 = vrot.slane %v4458, 1
        %v8044 = vsel %vm600, %v8043, %v8042
        %v8045 = vsel %vm603, %v4463, %v8044
        %v8046 = vrot.slane %v4468, 7
        %v8047 = vsel %vm606, %v8046, %v8045
        %v8048 = vrot.slane %v4473, 6
        %v8049 = vsel %vm609, %v8048, %v8047
        %v8050 = vrot.slane %v4478, 5
        %v8051 = vsel %vm612, %v8050, %v8049
        %v8052 = vrot.slane %v4483, 4
        %v8053 = vsel %vm615, %v8052, %v8051
        %v8054 = vrot.slane %v4487, 3
        %v8055 = vrot.slane %v4491, 2
        %v8056 = vsel %vm597, %v8055, %v8054
        %v8057 = vrot.slane %v4495, 1
        %v8058 = vsel %vm600, %v8057, %v8056
        %v8059 = vsel %vm603, %v4499, %v8058
        %v8060 = vrot.slane %v4503, 7
        %v8061 = vsel %vm606, %v8060, %v8059
        %v8062 = vrot.slane %v4507, 6
        %v8063 = vsel %vm609, %v8062, %v8061
        %v8064 = vrot.slane %v4511, 5
        %v8065 = vsel %vm612, %v8064, %v8063
        %v8066 = vrot.slane %v4515, 4
        %v8067 = vsel %vm615, %v8066, %v8065
        %v8068 = vrot.slane %v4519, 3
        %v8069 = vrot.slane %v4523, 2
        %v8070 = vsel %vm597, %v8069, %v8068
        %v8071 = vrot.slane %v4527, 1
        %v8072 = vsel %vm600, %v8071, %v8070
        %v8073 = vsel %vm603, %v4531, %v8072
        %v8074 = vrot.slane %v4535, 7
        %v8075 = vsel %vm606, %v8074, %v8073
        %v8076 = vrot.slane %v4539, 6
        %v8077 = vsel %vm609, %v8076, %v8075
        %v8078 = vrot.slane %v4543, 5
        %v8079 = vsel %vm612, %v8078, %v8077
        %v8080 = vrot.slane %v4547, 4
        %v8081 = vsel %vm615, %v8080, %v8079
        %v8082 = vrot.slane %v4551, 3
        %v8083 = vrot.slane %v4555, 2
        %v8084 = vsel %vm597, %v8083, %v8082
        %v8085 = vrot.slane %v4559, 1
        %v8086 = vsel %vm600, %v8085, %v8084
        %v8087 = vsel %vm603, %v4563, %v8086
        %v8088 = vrot.slane %v4567, 7
        %v8089 = vsel %vm606, %v8088, %v8087
        %v8090 = vrot.slane %v4571, 6
        %v8091 = vsel %vm609, %v8090, %v8089
        %v8092 = vrot.slane %v4575, 5
        %v8093 = vsel %vm612, %v8092, %v8091
        %v8094 = vrot.slane %v4579, 4
        %v8095 = vsel %vm615, %v8094, %v8093
        %v8096 = vrot.slane %v4583, 3
        %v8097 = vrot.slane %v4587, 2
        %v8098 = vsel %vm597, %v8097, %v8096
        %v8099 = vrot.slane %v4591, 1
        %v8100 = vsel %vm600, %v8099, %v8098
        %v8101 = vsel %vm603, %v4595, %v8100
        %v8102 = vrot.slane %v4599, 7
        %v8103 = vsel %vm606, %v8102, %v8101
        %v8104 = vrot.slane %v4603, 6
        %v8105 = vsel %vm609, %v8104, %v8103
        %v8106 = vrot.slane %v4607, 5
        %v8107 = vsel %vm612, %v8106, %v8105
        %v8108 = vrot.slane %v4611, 4
        %v8109 = vsel %vm615, %v8108, %v8107
        %8110 = vrot.lane.b32.xlu0 %v7873, 48
        %v8111 = vpop.permute.xlu0 %8110
        %8112 = vrot.lane.b32.xlu0 %v7885, 48
        %v8113 = vpop.permute.xlu0 %8112
        %8114 = vrot.lane.b32.xlu0 %v7899, 48
        %v8115 = vpop.permute.xlu0 %8114
        %8116 = vrot.lane.b32.xlu0 %v7913, 48
        %v8117 = vpop.permute.xlu0 %8116
        %8118 = vrot.lane.b32.xlu0 %v7927, 48
        %v8119 = vpop.permute.xlu0 %8118
        %8120 = vrot.lane.b32.xlu0 %v7941, 48
        %v8121 = vpop.permute.xlu0 %8120
        %8122 = vrot.lane.b32.xlu0 %v7955, 48
        %v8123 = vpop.permute.xlu0 %8122
        %8124 = vrot.lane.b32.xlu0 %v7969, 48
        %v8125 = vpop.permute.xlu0 %8124
        %8126 = vrot.lane.b32.xlu0 %v7983, 48
        %v8127 = vpop.permute.xlu0 %8126
        %8128 = vrot.lane.b32.xlu0 %v7997, 48
        %v8129 = vpop.permute.xlu0 %8128
        %8130 = vrot.lane.b32.xlu0 %v8011, 48
        %v8131 = vpop.permute.xlu0 %8130
        %8132 = vrot.lane.b32.xlu0 %v8025, 48
        %v8133 = vpop.permute.xlu0 %8132
        %8134 = vrot.lane.b32.xlu0 %v8039, 48
        %v8135 = vpop.permute.xlu0 %8134
        %8136 = vrot.lane.b32.xlu0 %v8053, 48
        %v8137 = vpop.permute.xlu0 %8136
        %8138 = vrot.lane.b32.xlu0 %v8067, 48
        %v8139 = vpop.permute.xlu0 %8138
        %8140 = vrot.lane.b32.xlu0 %v8081, 48
        %v8141 = vpop.permute.xlu0 %8140
        %8142 = vrot.lane.b32.xlu0 %v8095, 48
        %v8143 = vpop.permute.xlu0 %8142
        %8144 = vrot.lane.b32.xlu0 %v8109, 48
        %v8145 = vpop.permute.xlu0 %8144
        %v8164 = vrot.slane %v3973, 4
        %v8165 = vrot.slane %v3976, 3
        %v8166 = vsel %vm597, %v8165, %v8164
        %v8167 = vsel %vm600, %v4415, %v8166
        %v8168 = vsel %vm603, %v4212, %v8167
        %v8169 = vsel %vm606, %v3985, %v8168
        %v8170 = vrot.slane %v3988, 7
        %v8171 = vsel %vm609, %v8170, %v8169
        %v8172 = vrot.slane %v3991, 6
        %v8173 = vsel %vm612, %v8172, %v8171
        %v8174 = vrot.slane %v3994, 5
        %v8175 = vsel %vm615, %v8174, %v8173
        %v8176 = vrot.slane %v3997, 4
        %v8177 = vrot.slane %v4000, 3
        %v8178 = vsel %vm597, %v8177, %v8176
        %v8179 = vsel %vm600, %v4455, %v8178
        %v8180 = vsel %vm603, %v4252, %v8179
        %v8181 = vsel %vm606, %v4009, %v8180
        %v8182 = vrot.slane %v4012, 7
        %v8183 = vsel %vm609, %v8182, %v8181
        %v8184 = vrot.slane %v4015, 6
        %v8185 = vsel %vm612, %v8184, %v8183
        %v8186 = vrot.slane %v4018, 5
        %v8187 = vsel %vm615, %v8186, %v8185
        %v8188 = vrot.slane %v4055, 4
        %v8189 = vrot.slane %v4059, 3
        %v8190 = vsel %vm597, %v8189, %v8188
        %v8191 = vrot.slane %v4063, 2
        %v8192 = vsel %vm600, %v8191, %v8190
        %v8193 = vrot.slane %v4067, 1
        %v8194 = vsel %vm603, %v8193, %v8192
        %v8195 = vsel %vm606, %v4071, %v8194
        %v8196 = vrot.slane %v4075, 7
        %v8197 = vsel %vm609, %v8196, %v8195
        %v8198 = vrot.slane %v4079, 6
        %v8199 = vsel %vm612, %v8198, %v8197
        %v8200 = vrot.slane %v4083, 5
        %v8201 = vsel %vm615, %v8200, %v8199
        %v8202 = vrot.slane %v4087, 4
        %v8203 = vrot.slane %v4091, 3
        %v8204 = vsel %vm597, %v8203, %v8202
        %v8205 = vrot.slane %v4095, 2
        %v8206 = vsel %vm600, %v8205, %v8204
        %v8207 = vrot.slane %v4099, 1
        %v8208 = vsel %vm603, %v8207, %v8206
        %v8209 = vsel %vm606, %v4103, %v8208
        %v8210 = vrot.slane %v4107, 7
        %v8211 = vsel %vm609, %v8210, %v8209
        %v8212 = vrot.slane %v4111, 6
        %v8213 = vsel %vm612, %v8212, %v8211
        %v8214 = vrot.slane %v4115, 5
        %v8215 = vsel %vm615, %v8214, %v8213
        %v8216 = vrot.slane %v4119, 4
        %v8217 = vrot.slane %v4123, 3
        %v8218 = vsel %vm597, %v8217, %v8216
        %v8219 = vrot.slane %v4127, 2
        %v8220 = vsel %vm600, %v8219, %v8218
        %v8221 = vrot.slane %v4131, 1
        %v8222 = vsel %vm603, %v8221, %v8220
        %v8223 = vsel %vm606, %v4135, %v8222
        %v8224 = vrot.slane %v4139, 7
        %v8225 = vsel %vm609, %v8224, %v8223
        %v8226 = vrot.slane %v4143, 6
        %v8227 = vsel %vm612, %v8226, %v8225
        %v8228 = vrot.slane %v4147, 5
        %v8229 = vsel %vm615, %v8228, %v8227
        %v8230 = vrot.slane %v4151, 4
        %v8231 = vrot.slane %v4155, 3
        %v8232 = vsel %vm597, %v8231, %v8230
        %v8233 = vrot.slane %v4159, 2
        %v8234 = vsel %vm600, %v8233, %v8232
        %v8235 = vrot.slane %v4163, 1
        %v8236 = vsel %vm603, %v8235, %v8234
        %v8237 = vsel %vm606, %v4167, %v8236
        %v8238 = vrot.slane %v4171, 7
        %v8239 = vsel %vm609, %v8238, %v8237
        %v8240 = vrot.slane %v4175, 6
        %v8241 = vsel %vm612, %v8240, %v8239
        %v8242 = vrot.slane %v4179, 5
        %v8243 = vsel %vm615, %v8242, %v8241
        %v8244 = vrot.slane %v4200, 4
        %v8245 = vrot.slane %v4205, 3
        %v8246 = vsel %vm597, %v8245, %v8244
        %v8247 = vrot.slane %v4210, 2
        %v8248 = vsel %vm600, %v8247, %v8246
        %v8249 = vrot.slane %v4215, 1
        %v8250 = vsel %vm603, %v8249, %v8248
        %v8251 = vsel %vm606, %v4220, %v8250
        %v8252 = vrot.slane %v4225, 7
        %v8253 = vsel %vm609, %v8252, %v8251
        %v8254 = vrot.slane %v4230, 6
        %v8255 = vsel %vm612, %v8254, %v8253
        %v8256 = vrot.slane %v4235, 5
        %v8257 = vsel %vm615, %v8256, %v8255
        %v8258 = vrot.slane %v4240, 4
        %v8259 = vrot.slane %v4245, 3
        %v8260 = vsel %vm597, %v8259, %v8258
        %v8261 = vrot.slane %v4250, 2
        %v8262 = vsel %vm600, %v8261, %v8260
        %v8263 = vrot.slane %v4255, 1
        %v8264 = vsel %vm603, %v8263, %v8262
        %v8265 = vsel %vm606, %v4260, %v8264
        %v8266 = vrot.slane %v4265, 7
        %v8267 = vsel %vm609, %v8266, %v8265
        %v8268 = vrot.slane %v4270, 6
        %v8269 = vsel %vm612, %v8268, %v8267
        %v8270 = vrot.slane %v4275, 5
        %v8271 = vsel %vm615, %v8270, %v8269
        %v8272 = vrot.slane %v4279, 4
        %v8273 = vrot.slane %v4283, 3
        %v8274 = vsel %vm597, %v8273, %v8272
        %v8275 = vrot.slane %v4287, 2
        %v8276 = vsel %vm600, %v8275, %v8274
        %v8277 = vrot.slane %v4291, 1
        %v8278 = vsel %vm603, %v8277, %v8276
        %v8279 = vsel %vm606, %v4295, %v8278
        %v8280 = vrot.slane %v4299, 7
        %v8281 = vsel %vm609, %v8280, %v8279
        %v8282 = vrot.slane %v4303, 6
        %v8283 = vsel %vm612, %v8282, %v8281
        %v8284 = vrot.slane %v4307, 5
        %v8285 = vsel %vm615, %v8284, %v8283
        %v8286 = vrot.slane %v4311, 4
        %v8287 = vrot.slane %v4315, 3
        %v8288 = vsel %vm597, %v8287, %v8286
        %v8289 = vrot.slane %v4319, 2
        %v8290 = vsel %vm600, %v8289, %v8288
        %v8291 = vrot.slane %v4323, 1
        %v8292 = vsel %vm603, %v8291, %v8290
        %v8293 = vsel %vm606, %v4327, %v8292
        %v8294 = vrot.slane %v4331, 7
        %v8295 = vsel %vm609, %v8294, %v8293
        %v8296 = vrot.slane %v4335, 6
        %v8297 = vsel %vm612, %v8296, %v8295
        %v8298 = vrot.slane %v4339, 5
        %v8299 = vsel %vm615, %v8298, %v8297
        %v8300 = vrot.slane %v4343, 4
        %v8301 = vrot.slane %v4347, 3
        %v8302 = vsel %vm597, %v8301, %v8300
        %v8303 = vrot.slane %v4351, 2
        %v8304 = vsel %vm600, %v8303, %v8302
        %v8305 = vrot.slane %v4355, 1
        %v8306 = vsel %vm603, %v8305, %v8304
        %v8307 = vsel %vm606, %v4359, %v8306
        %v8308 = vrot.slane %v4363, 7
        %v8309 = vsel %vm609, %v8308, %v8307
        %v8310 = vrot.slane %v4367, 6
        %v8311 = vsel %vm612, %v8310, %v8309
        %v8312 = vrot.slane %v4371, 5
        %v8313 = vsel %vm615, %v8312, %v8311
        %v8314 = vrot.slane %v4375, 4
        %v8315 = vrot.slane %v4379, 3
        %v8316 = vsel %vm597, %v8315, %v8314
        %v8317 = vrot.slane %v4383, 2
        %v8318 = vsel %vm600, %v8317, %v8316
        %v8319 = vrot.slane %v4387, 1
        %v8320 = vsel %vm603, %v8319, %v8318
        %v8321 = vsel %vm606, %v4391, %v8320
        %v8322 = vrot.slane %v4395, 7
        %v8323 = vsel %vm609, %v8322, %v8321
        %v8324 = vrot.slane %v4399, 6
        %v8325 = vsel %vm612, %v8324, %v8323
        %v8326 = vrot.slane %v4403, 5
        %v8327 = vsel %vm615, %v8326, %v8325
        %v8328 = vrot.slane %v4408, 4
        %v8329 = vrot.slane %v4413, 3
        %v8330 = vsel %vm597, %v8329, %v8328
        %v8331 = vrot.slane %v4418, 2
        %v8332 = vsel %vm600, %v8331, %v8330
        %v8333 = vrot.slane %v4423, 1
        %v8334 = vsel %vm603, %v8333, %v8332
        %v8335 = vsel %vm606, %v4428, %v8334
        %v8336 = vrot.slane %v4433, 7
        %v8337 = vsel %vm609, %v8336, %v8335
        %v8338 = vrot.slane %v4438, 6
        %v8339 = vsel %vm612, %v8338, %v8337
        %v8340 = vrot.slane %v4443, 5
        %v8341 = vsel %vm615, %v8340, %v8339
        %v8342 = vrot.slane %v4448, 4
        %v8343 = vrot.slane %v4453, 3
        %v8344 = vsel %vm597, %v8343, %v8342
        %v8345 = vrot.slane %v4458, 2
        %v8346 = vsel %vm600, %v8345, %v8344
        %v8347 = vrot.slane %v4463, 1
        %v8348 = vsel %vm603, %v8347, %v8346
        %v8349 = vsel %vm606, %v4468, %v8348
        %v8350 = vrot.slane %v4473, 7
        %v8351 = vsel %vm609, %v8350, %v8349
        %v8352 = vrot.slane %v4478, 6
        %v8353 = vsel %vm612, %v8352, %v8351
        %v8354 = vrot.slane %v4483, 5
        %v8355 = vsel %vm615, %v8354, %v8353
        %v8356 = vrot.slane %v4487, 4
        %v8357 = vrot.slane %v4491, 3
        %v8358 = vsel %vm597, %v8357, %v8356
        %v8359 = vrot.slane %v4495, 2
        %v8360 = vsel %vm600, %v8359, %v8358
        %v8361 = vrot.slane %v4499, 1
        %v8362 = vsel %vm603, %v8361, %v8360
        %v8363 = vsel %vm606, %v4503, %v8362
        %v8364 = vrot.slane %v4507, 7
        %v8365 = vsel %vm609, %v8364, %v8363
        %v8366 = vrot.slane %v4511, 6
        %v8367 = vsel %vm612, %v8366, %v8365
        %v8368 = vrot.slane %v4515, 5
        %v8369 = vsel %vm615, %v8368, %v8367
        %v8370 = vrot.slane %v4519, 4
        %v8371 = vrot.slane %v4523, 3
        %v8372 = vsel %vm597, %v8371, %v8370
        %v8373 = vrot.slane %v4527, 2
        %v8374 = vsel %vm600, %v8373, %v8372
        %v8375 = vrot.slane %v4531, 1
        %v8376 = vsel %vm603, %v8375, %v8374
        %v8377 = vsel %vm606, %v4535, %v8376
        %v8378 = vrot.slane %v4539, 7
        %v8379 = vsel %vm609, %v8378, %v8377
        %v8380 = vrot.slane %v4543, 6
        %v8381 = vsel %vm612, %v8380, %v8379
        %v8382 = vrot.slane %v4547, 5
        %v8383 = vsel %vm615, %v8382, %v8381
        %v8384 = vrot.slane %v4551, 4
        %v8385 = vrot.slane %v4555, 3
        %v8386 = vsel %vm597, %v8385, %v8384
        %v8387 = vrot.slane %v4559, 2
        %v8388 = vsel %vm600, %v8387, %v8386
        %v8389 = vrot.slane %v4563, 1
        %v8390 = vsel %vm603, %v8389, %v8388
        %v8391 = vsel %vm606, %v4567, %v8390
        %v8392 = vrot.slane %v4571, 7
        %v8393 = vsel %vm609, %v8392, %v8391
        %v8394 = vrot.slane %v4575, 6
        %v8395 = vsel %vm612, %v8394, %v8393
        %v8396 = vrot.slane %v4579, 5
        %v8397 = vsel %vm615, %v8396, %v8395
        %v8398 = vrot.slane %v4583, 4
        %v8399 = vrot.slane %v4587, 3
        %v8400 = vsel %vm597, %v8399, %v8398
        %v8401 = vrot.slane %v4591, 2
        %v8402 = vsel %vm600, %v8401, %v8400
        %v8403 = vrot.slane %v4595, 1
        %v8404 = vsel %vm603, %v8403, %v8402
        %v8405 = vsel %vm606, %v4599, %v8404
        %v8406 = vrot.slane %v4603, 7
        %v8407 = vsel %vm609, %v8406, %v8405
        %v8408 = vrot.slane %v4607, 6
        %v8409 = vsel %vm612, %v8408, %v8407
        %v8410 = vrot.slane %v4611, 5
        %v8411 = vsel %vm615, %v8410, %v8409
        %8412 = vrot.lane.b32.xlu0 %v8175, 64
        %v8413 = vpop.permute.xlu0 %8412
        %8414 = vrot.lane.b32.xlu0 %v8187, 64
        %v8415 = vpop.permute.xlu0 %8414
        %8416 = vrot.lane.b32.xlu0 %v8201, 64
        %v8417 = vpop.permute.xlu0 %8416
        %8418 = vrot.lane.b32.xlu0 %v8215, 64
        %v8419 = vpop.permute.xlu0 %8418
        %8420 = vrot.lane.b32.xlu0 %v8229, 64
        %v8421 = vpop.permute.xlu0 %8420
        %8422 = vrot.lane.b32.xlu0 %v8243, 64
        %v8423 = vpop.permute.xlu0 %8422
        %8424 = vrot.lane.b32.xlu0 %v8257, 64
        %v8425 = vpop.permute.xlu0 %8424
        %8426 = vrot.lane.b32.xlu0 %v8271, 64
        %v8427 = vpop.permute.xlu0 %8426
        %8428 = vrot.lane.b32.xlu0 %v8285, 64
        %v8429 = vpop.permute.xlu0 %8428
        %8430 = vrot.lane.b32.xlu0 %v8299, 64
        %v8431 = vpop.permute.xlu0 %8430
        %8432 = vrot.lane.b32.xlu0 %v8313, 64
        %v8433 = vpop.permute.xlu0 %8432
        %8434 = vrot.lane.b32.xlu0 %v8327, 64
        %v8435 = vpop.permute.xlu0 %8434
        %8436 = vrot.lane.b32.xlu0 %v8341, 64
        %v8437 = vpop.permute.xlu0 %8436
        %8438 = vrot.lane.b32.xlu0 %v8355, 64
        %v8439 = vpop.permute.xlu0 %8438
        %8440 = vrot.lane.b32.xlu0 %v8369, 64
        %v8441 = vpop.permute.xlu0 %8440
        %8442 = vrot.lane.b32.xlu0 %v8383, 64
        %v8443 = vpop.permute.xlu0 %8442
        %8444 = vrot.lane.b32.xlu0 %v8397, 64
        %v8445 = vpop.permute.xlu0 %8444
        %8446 = vrot.lane.b32.xlu0 %v8411, 64
        %v8447 = vpop.permute.xlu0 %8446
        %v8466 = vrot.slane %v3973, 5
        %v8467 = vrot.slane %v3976, 4
        %v8468 = vsel %vm597, %v8467, %v8466
        %v8469 = vrot.slane %v3979, 3
        %v8470 = vsel %vm600, %v8469, %v8468
        %v8471 = vsel %vm603, %v4420, %v8470
        %v8472 = vsel %vm606, %v4217, %v8471
        %v8473 = vsel %vm609, %v3988, %v8472
        %v8474 = vrot.slane %v3991, 7
        %v8475 = vsel %vm612, %v8474, %v8473
        %v8476 = vrot.slane %v3994, 6
        %v8477 = vsel %vm615, %v8476, %v8475
        %v8478 = vrot.slane %v3997, 5
        %v8479 = vrot.slane %v4000, 4
        %v8480 = vsel %vm597, %v8479, %v8478
        %v8481 = vrot.slane %v4003, 3
        %v8482 = vsel %vm600, %v8481, %v8480
        %v8483 = vsel %vm603, %v4460, %v8482
        %v8484 = vsel %vm606, %v4257, %v8483
        %v8485 = vsel %vm609, %v4012, %v8484
        %v8486 = vrot.slane %v4015, 7
        %v8487 = vsel %vm612, %v8486, %v8485
        %v8488 = vrot.slane %v4018, 6
        %v8489 = vsel %vm615, %v8488, %v8487
        %v8490 = vrot.slane %v4055, 5
        %v8491 = vrot.slane %v4059, 4
        %v8492 = vsel %vm597, %v8491, %v8490
        %v8493 = vrot.slane %v4063, 3
        %v8494 = vsel %vm600, %v8493, %v8492
        %v8495 = vrot.slane %v4067, 2
        %v8496 = vsel %vm603, %v8495, %v8494
        %v8497 = vrot.slane %v4071, 1
        %v8498 = vsel %vm606, %v8497, %v8496
        %v8499 = vsel %vm609, %v4075, %v8498
        %v8500 = vrot.slane %v4079, 7
        %v8501 = vsel %vm612, %v8500, %v8499
        %v8502 = vrot.slane %v4083, 6
        %v8503 = vsel %vm615, %v8502, %v8501
        %v8504 = vrot.slane %v4087, 5
        %v8505 = vrot.slane %v4091, 4
        %v8506 = vsel %vm597, %v8505, %v8504
        %v8507 = vrot.slane %v4095, 3
        %v8508 = vsel %vm600, %v8507, %v8506
        %v8509 = vrot.slane %v4099, 2
        %v8510 = vsel %vm603, %v8509, %v8508
        %v8511 = vrot.slane %v4103, 1
        %v8512 = vsel %vm606, %v8511, %v8510
        %v8513 = vsel %vm609, %v4107, %v8512
        %v8514 = vrot.slane %v4111, 7
        %v8515 = vsel %vm612, %v8514, %v8513
        %v8516 = vrot.slane %v4115, 6
        %v8517 = vsel %vm615, %v8516, %v8515
        %v8518 = vrot.slane %v4119, 5
        %v8519 = vrot.slane %v4123, 4
        %v8520 = vsel %vm597, %v8519, %v8518
        %v8521 = vrot.slane %v4127, 3
        %v8522 = vsel %vm600, %v8521, %v8520
        %v8523 = vrot.slane %v4131, 2
        %v8524 = vsel %vm603, %v8523, %v8522
        %v8525 = vrot.slane %v4135, 1
        %v8526 = vsel %vm606, %v8525, %v8524
        %v8527 = vsel %vm609, %v4139, %v8526
        %v8528 = vrot.slane %v4143, 7
        %v8529 = vsel %vm612, %v8528, %v8527
        %v8530 = vrot.slane %v4147, 6
        %v8531 = vsel %vm615, %v8530, %v8529
        %v8532 = vrot.slane %v4151, 5
        %v8533 = vrot.slane %v4155, 4
        %v8534 = vsel %vm597, %v8533, %v8532
        %v8535 = vrot.slane %v4159, 3
        %v8536 = vsel %vm600, %v8535, %v8534
        %v8537 = vrot.slane %v4163, 2
        %v8538 = vsel %vm603, %v8537, %v8536
        %v8539 = vrot.slane %v4167, 1
        %v8540 = vsel %vm606, %v8539, %v8538
        %v8541 = vsel %vm609, %v4171, %v8540
        %v8542 = vrot.slane %v4175, 7
        %v8543 = vsel %vm612, %v8542, %v8541
        %v8544 = vrot.slane %v4179, 6
        %v8545 = vsel %vm615, %v8544, %v8543
        %v8546 = vrot.slane %v4200, 5
        %v8547 = vrot.slane %v4205, 4
        %v8548 = vsel %vm597, %v8547, %v8546
        %v8549 = vrot.slane %v4210, 3
        %v8550 = vsel %vm600, %v8549, %v8548
        %v8551 = vrot.slane %v4215, 2
        %v8552 = vsel %vm603, %v8551, %v8550
        %v8553 = vrot.slane %v4220, 1
        %v8554 = vsel %vm606, %v8553, %v8552
        %v8555 = vsel %vm609, %v4225, %v8554
        %v8556 = vrot.slane %v4230, 7
        %v8557 = vsel %vm612, %v8556, %v8555
        %v8558 = vrot.slane %v4235, 6
        %v8559 = vsel %vm615, %v8558, %v8557
        %v8560 = vrot.slane %v4240, 5
        %v8561 = vrot.slane %v4245, 4
        %v8562 = vsel %vm597, %v8561, %v8560
        %v8563 = vrot.slane %v4250, 3
        %v8564 = vsel %vm600, %v8563, %v8562
        %v8565 = vrot.slane %v4255, 2
        %v8566 = vsel %vm603, %v8565, %v8564
        %v8567 = vrot.slane %v4260, 1
        %v8568 = vsel %vm606, %v8567, %v8566
        %v8569 = vsel %vm609, %v4265, %v8568
        %v8570 = vrot.slane %v4270, 7
        %v8571 = vsel %vm612, %v8570, %v8569
        %v8572 = vrot.slane %v4275, 6
        %v8573 = vsel %vm615, %v8572, %v8571
        %v8574 = vrot.slane %v4279, 5
        %v8575 = vrot.slane %v4283, 4
        %v8576 = vsel %vm597, %v8575, %v8574
        %v8577 = vrot.slane %v4287, 3
        %v8578 = vsel %vm600, %v8577, %v8576
        %v8579 = vrot.slane %v4291, 2
        %v8580 = vsel %vm603, %v8579, %v8578
        %v8581 = vrot.slane %v4295, 1
        %v8582 = vsel %vm606, %v8581, %v8580
        %v8583 = vsel %vm609, %v4299, %v8582
        %v8584 = vrot.slane %v4303, 7
        %v8585 = vsel %vm612, %v8584, %v8583
        %v8586 = vrot.slane %v4307, 6
        %v8587 = vsel %vm615, %v8586, %v8585
        %v8588 = vrot.slane %v4311, 5
        %v8589 = vrot.slane %v4315, 4
        %v8590 = vsel %vm597, %v8589, %v8588
        %v8591 = vrot.slane %v4319, 3
        %v8592 = vsel %vm600, %v8591, %v8590
        %v8593 = vrot.slane %v4323, 2
        %v8594 = vsel %vm603, %v8593, %v8592
        %v8595 = vrot.slane %v4327, 1
        %v8596 = vsel %vm606, %v8595, %v8594
        %v8597 = vsel %vm609, %v4331, %v8596
        %v8598 = vrot.slane %v4335, 7
        %v8599 = vsel %vm612, %v8598, %v8597
        %v8600 = vrot.slane %v4339, 6
        %v8601 = vsel %vm615, %v8600, %v8599
        %v8602 = vrot.slane %v4343, 5
        %v8603 = vrot.slane %v4347, 4
        %v8604 = vsel %vm597, %v8603, %v8602
        %v8605 = vrot.slane %v4351, 3
        %v8606 = vsel %vm600, %v8605, %v8604
        %v8607 = vrot.slane %v4355, 2
        %v8608 = vsel %vm603, %v8607, %v8606
        %v8609 = vrot.slane %v4359, 1
        %v8610 = vsel %vm606, %v8609, %v8608
        %v8611 = vsel %vm609, %v4363, %v8610
        %v8612 = vrot.slane %v4367, 7
        %v8613 = vsel %vm612, %v8612, %v8611
        %v8614 = vrot.slane %v4371, 6
        %v8615 = vsel %vm615, %v8614, %v8613
        %v8616 = vrot.slane %v4375, 5
        %v8617 = vrot.slane %v4379, 4
        %v8618 = vsel %vm597, %v8617, %v8616
        %v8619 = vrot.slane %v4383, 3
        %v8620 = vsel %vm600, %v8619, %v8618
        %v8621 = vrot.slane %v4387, 2
        %v8622 = vsel %vm603, %v8621, %v8620
        %v8623 = vrot.slane %v4391, 1
        %v8624 = vsel %vm606, %v8623, %v8622
        %v8625 = vsel %vm609, %v4395, %v8624
        %v8626 = vrot.slane %v4399, 7
        %v8627 = vsel %vm612, %v8626, %v8625
        %v8628 = vrot.slane %v4403, 6
        %v8629 = vsel %vm615, %v8628, %v8627
        %v8630 = vrot.slane %v4408, 5
        %v8631 = vrot.slane %v4413, 4
        %v8632 = vsel %vm597, %v8631, %v8630
        %v8633 = vrot.slane %v4418, 3
        %v8634 = vsel %vm600, %v8633, %v8632
        %v8635 = vrot.slane %v4423, 2
        %v8636 = vsel %vm603, %v8635, %v8634
        %v8637 = vrot.slane %v4428, 1
        %v8638 = vsel %vm606, %v8637, %v8636
        %v8639 = vsel %vm609, %v4433, %v8638
        %v8640 = vrot.slane %v4438, 7
        %v8641 = vsel %vm612, %v8640, %v8639
        %v8642 = vrot.slane %v4443, 6
        %v8643 = vsel %vm615, %v8642, %v8641
        %v8644 = vrot.slane %v4448, 5
        %v8645 = vrot.slane %v4453, 4
        %v8646 = vsel %vm597, %v8645, %v8644
        %v8647 = vrot.slane %v4458, 3
        %v8648 = vsel %vm600, %v8647, %v8646
        %v8649 = vrot.slane %v4463, 2
        %v8650 = vsel %vm603, %v8649, %v8648
        %v8651 = vrot.slane %v4468, 1
        %v8652 = vsel %vm606, %v8651, %v8650
        %v8653 = vsel %vm609, %v4473, %v8652
        %v8654 = vrot.slane %v4478, 7
        %v8655 = vsel %vm612, %v8654, %v8653
        %v8656 = vrot.slane %v4483, 6
        %v8657 = vsel %vm615, %v8656, %v8655
        %v8658 = vrot.slane %v4487, 5
        %v8659 = vrot.slane %v4491, 4
        %v8660 = vsel %vm597, %v8659, %v8658
        %v8661 = vrot.slane %v4495, 3
        %v8662 = vsel %vm600, %v8661, %v8660
        %v8663 = vrot.slane %v4499, 2
        %v8664 = vsel %vm603, %v8663, %v8662
        %v8665 = vrot.slane %v4503, 1
        %v8666 = vsel %vm606, %v8665, %v8664
        %v8667 = vsel %vm609, %v4507, %v8666
        %v8668 = vrot.slane %v4511, 7
        %v8669 = vsel %vm612, %v8668, %v8667
        %v8670 = vrot.slane %v4515, 6
        %v8671 = vsel %vm615, %v8670, %v8669
        %v8672 = vrot.slane %v4519, 5
        %v8673 = vrot.slane %v4523, 4
        %v8674 = vsel %vm597, %v8673, %v8672
        %v8675 = vrot.slane %v4527, 3
        %v8676 = vsel %vm600, %v8675, %v8674
        %v8677 = vrot.slane %v4531, 2
        %v8678 = vsel %vm603, %v8677, %v8676
        %v8679 = vrot.slane %v4535, 1
        %v8680 = vsel %vm606, %v8679, %v8678
        %v8681 = vsel %vm609, %v4539, %v8680
        %v8682 = vrot.slane %v4543, 7
        %v8683 = vsel %vm612, %v8682, %v8681
        %v8684 = vrot.slane %v4547, 6
        %v8685 = vsel %vm615, %v8684, %v8683
        %v8686 = vrot.slane %v4551, 5
        %v8687 = vrot.slane %v4555, 4
        %v8688 = vsel %vm597, %v8687, %v8686
        %v8689 = vrot.slane %v4559, 3
        %v8690 = vsel %vm600, %v8689, %v8688
        %v8691 = vrot.slane %v4563, 2
        %v8692 = vsel %vm603, %v8691, %v8690
        %v8693 = vrot.slane %v4567, 1
        %v8694 = vsel %vm606, %v8693, %v8692
        %v8695 = vsel %vm609, %v4571, %v8694
        %v8696 = vrot.slane %v4575, 7
        %v8697 = vsel %vm612, %v8696, %v8695
        %v8698 = vrot.slane %v4579, 6
        %v8699 = vsel %vm615, %v8698, %v8697
        %v8700 = vrot.slane %v4583, 5
        %v8701 = vrot.slane %v4587, 4
        %v8702 = vsel %vm597, %v8701, %v8700
        %v8703 = vrot.slane %v4591, 3
        %v8704 = vsel %vm600, %v8703, %v8702
        %v8705 = vrot.slane %v4595, 2
        %v8706 = vsel %vm603, %v8705, %v8704
        %v8707 = vrot.slane %v4599, 1
        %v8708 = vsel %vm606, %v8707, %v8706
        %v8709 = vsel %vm609, %v4603, %v8708
        %v8710 = vrot.slane %v4607, 7
        %v8711 = vsel %vm612, %v8710, %v8709
        %v8712 = vrot.slane %v4611, 6
        %v8713 = vsel %vm615, %v8712, %v8711
        %8714 = vrot.lane.b32.xlu0 %v8477, 80
        %v8715 = vpop.permute.xlu0 %8714
        %8716 = vrot.lane.b32.xlu0 %v8489, 80
        %v8717 = vpop.permute.xlu0 %8716
        %8718 = vrot.lane.b32.xlu0 %v8503, 80
        %v8719 = vpop.permute.xlu0 %8718
        %8720 = vrot.lane.b32.xlu0 %v8517, 80
        %v8721 = vpop.permute.xlu0 %8720
        %8722 = vrot.lane.b32.xlu0 %v8531, 80
        %v8723 = vpop.permute.xlu0 %8722
        %8724 = vrot.lane.b32.xlu0 %v8545, 80
        %v8725 = vpop.permute.xlu0 %8724
        %8726 = vrot.lane.b32.xlu0 %v8559, 80
        %v8727 = vpop.permute.xlu0 %8726
        %8728 = vrot.lane.b32.xlu0 %v8573, 80
        %v8729 = vpop.permute.xlu0 %8728
        %8730 = vrot.lane.b32.xlu0 %v8587, 80
        %v8731 = vpop.permute.xlu0 %8730
        %8732 = vrot.lane.b32.xlu0 %v8601, 80
        %v8733 = vpop.permute.xlu0 %8732
        %8734 = vrot.lane.b32.xlu0 %v8615, 80
        %v8735 = vpop.permute.xlu0 %8734
        %8736 = vrot.lane.b32.xlu0 %v8629, 80
        %v8737 = vpop.permute.xlu0 %8736
        %8738 = vrot.lane.b32.xlu0 %v8643, 80
        %v8739 = vpop.permute.xlu0 %8738
        %8740 = vrot.lane.b32.xlu0 %v8657, 80
        %v8741 = vpop.permute.xlu0 %8740
        %8742 = vrot.lane.b32.xlu0 %v8671, 80
        %v8743 = vpop.permute.xlu0 %8742
        %8744 = vrot.lane.b32.xlu0 %v8685, 80
        %v8745 = vpop.permute.xlu0 %8744
        %8746 = vrot.lane.b32.xlu0 %v8699, 80
        %v8747 = vpop.permute.xlu0 %8746
        %8748 = vrot.lane.b32.xlu0 %v8713, 80
        %v8749 = vpop.permute.xlu0 %8748
        %v8768 = vrot.slane %v3973, 6
        %v8769 = vrot.slane %v3976, 5
        %v8770 = vsel %vm597, %v8769, %v8768
        %v8771 = vrot.slane %v3979, 4
        %v8772 = vsel %vm600, %v8771, %v8770
        %v8773 = vrot.slane %v3982, 3
        %v8774 = vsel %vm603, %v8773, %v8772
        %v8775 = vsel %vm606, %v4425, %v8774
        %v8776 = vsel %vm609, %v4222, %v8775
        %v8777 = vsel %vm612, %v3991, %v8776
        %v8778 = vrot.slane %v3994, 7
        %v8779 = vsel %vm615, %v8778, %v8777
        %v8780 = vrot.slane %v3997, 6
        %v8781 = vrot.slane %v4000, 5
        %v8782 = vsel %vm597, %v8781, %v8780
        %v8783 = vrot.slane %v4003, 4
        %v8784 = vsel %vm600, %v8783, %v8782
        %v8785 = vrot.slane %v4006, 3
        %v8786 = vsel %vm603, %v8785, %v8784
        %v8787 = vsel %vm606, %v4465, %v8786
        %v8788 = vsel %vm609, %v4262, %v8787
        %v8789 = vsel %vm612, %v4015, %v8788
        %v8790 = vrot.slane %v4018, 7
        %v8791 = vsel %vm615, %v8790, %v8789
        %v8792 = vrot.slane %v4055, 6
        %v8793 = vrot.slane %v4059, 5
        %v8794 = vsel %vm597, %v8793, %v8792
        %v8795 = vrot.slane %v4063, 4
        %v8796 = vsel %vm600, %v8795, %v8794
        %v8797 = vrot.slane %v4067, 3
        %v8798 = vsel %vm603, %v8797, %v8796
        %v8799 = vrot.slane %v4071, 2
        %v8800 = vsel %vm606, %v8799, %v8798
        %v8801 = vrot.slane %v4075, 1
        %v8802 = vsel %vm609, %v8801, %v8800
        %v8803 = vsel %vm612, %v4079, %v8802
        %v8804 = vrot.slane %v4083, 7
        %v8805 = vsel %vm615, %v8804, %v8803
        %v8806 = vrot.slane %v4087, 6
        %v8807 = vrot.slane %v4091, 5
        %v8808 = vsel %vm597, %v8807, %v8806
        %v8809 = vrot.slane %v4095, 4
        %v8810 = vsel %vm600, %v8809, %v8808
        %v8811 = vrot.slane %v4099, 3
        %v8812 = vsel %vm603, %v8811, %v8810
        %v8813 = vrot.slane %v4103, 2
        %v8814 = vsel %vm606, %v8813, %v8812
        %v8815 = vrot.slane %v4107, 1
        %v8816 = vsel %vm609, %v8815, %v8814
        %v8817 = vsel %vm612, %v4111, %v8816
        %v8818 = vrot.slane %v4115, 7
        %v8819 = vsel %vm615, %v8818, %v8817
        %v8820 = vrot.slane %v4119, 6
        %v8821 = vrot.slane %v4123, 5
        %v8822 = vsel %vm597, %v8821, %v8820
        %v8823 = vrot.slane %v4127, 4
        %v8824 = vsel %vm600, %v8823, %v8822
        %v8825 = vrot.slane %v4131, 3
        %v8826 = vsel %vm603, %v8825, %v8824
        %v8827 = vrot.slane %v4135, 2
        %v8828 = vsel %vm606, %v8827, %v8826
        %v8829 = vrot.slane %v4139, 1
        %v8830 = vsel %vm609, %v8829, %v8828
        %v8831 = vsel %vm612, %v4143, %v8830
        %v8832 = vrot.slane %v4147, 7
        %v8833 = vsel %vm615, %v8832, %v8831
        %v8834 = vrot.slane %v4151, 6
        %v8835 = vrot.slane %v4155, 5
        %v8836 = vsel %vm597, %v8835, %v8834
        %v8837 = vrot.slane %v4159, 4
        %v8838 = vsel %vm600, %v8837, %v8836
        %v8839 = vrot.slane %v4163, 3
        %v8840 = vsel %vm603, %v8839, %v8838
        %v8841 = vrot.slane %v4167, 2
        %v8842 = vsel %vm606, %v8841, %v8840
        %v8843 = vrot.slane %v4171, 1
        %v8844 = vsel %vm609, %v8843, %v8842
        %v8845 = vsel %vm612, %v4175, %v8844
        %v8846 = vrot.slane %v4179, 7
        %v8847 = vsel %vm615, %v8846, %v8845
        %v8848 = vrot.slane %v4200, 6
        %v8849 = vrot.slane %v4205, 5
        %v8850 = vsel %vm597, %v8849, %v8848
        %v8851 = vrot.slane %v4210, 4
        %v8852 = vsel %vm600, %v8851, %v8850
        %v8853 = vrot.slane %v4215, 3
        %v8854 = vsel %vm603, %v8853, %v8852
        %v8855 = vrot.slane %v4220, 2
        %v8856 = vsel %vm606, %v8855, %v8854
        %v8857 = vrot.slane %v4225, 1
        %v8858 = vsel %vm609, %v8857, %v8856
        %v8859 = vsel %vm612, %v4230, %v8858
        %v8860 = vrot.slane %v4235, 7
        %v8861 = vsel %vm615, %v8860, %v8859
        %v8862 = vrot.slane %v4240, 6
        %v8863 = vrot.slane %v4245, 5
        %v8864 = vsel %vm597, %v8863, %v8862
        %v8865 = vrot.slane %v4250, 4
        %v8866 = vsel %vm600, %v8865, %v8864
        %v8867 = vrot.slane %v4255, 3
        %v8868 = vsel %vm603, %v8867, %v8866
        %v8869 = vrot.slane %v4260, 2
        %v8870 = vsel %vm606, %v8869, %v8868
        %v8871 = vrot.slane %v4265, 1
        %v8872 = vsel %vm609, %v8871, %v8870
        %v8873 = vsel %vm612, %v4270, %v8872
        %v8874 = vrot.slane %v4275, 7
        %v8875 = vsel %vm615, %v8874, %v8873
        %v8876 = vrot.slane %v4279, 6
        %v8877 = vrot.slane %v4283, 5
        %v8878 = vsel %vm597, %v8877, %v8876
        %v8879 = vrot.slane %v4287, 4
        %v8880 = vsel %vm600, %v8879, %v8878
        %v8881 = vrot.slane %v4291, 3
        %v8882 = vsel %vm603, %v8881, %v8880
        %v8883 = vrot.slane %v4295, 2
        %v8884 = vsel %vm606, %v8883, %v8882
        %v8885 = vrot.slane %v4299, 1
        %v8886 = vsel %vm609, %v8885, %v8884
        %v8887 = vsel %vm612, %v4303, %v8886
        %v8888 = vrot.slane %v4307, 7
        %v8889 = vsel %vm615, %v8888, %v8887
        %v8890 = vrot.slane %v4311, 6
        %v8891 = vrot.slane %v4315, 5
        %v8892 = vsel %vm597, %v8891, %v8890
        %v8893 = vrot.slane %v4319, 4
        %v8894 = vsel %vm600, %v8893, %v8892
        %v8895 = vrot.slane %v4323, 3
        %v8896 = vsel %vm603, %v8895, %v8894
        %v8897 = vrot.slane %v4327, 2
        %v8898 = vsel %vm606, %v8897, %v8896
        %v8899 = vrot.slane %v4331, 1
        %v8900 = vsel %vm609, %v8899, %v8898
        %v8901 = vsel %vm612, %v4335, %v8900
        %v8902 = vrot.slane %v4339, 7
        %v8903 = vsel %vm615, %v8902, %v8901
        %v8904 = vrot.slane %v4343, 6
        %v8905 = vrot.slane %v4347, 5
        %v8906 = vsel %vm597, %v8905, %v8904
        %v8907 = vrot.slane %v4351, 4
        %v8908 = vsel %vm600, %v8907, %v8906
        %v8909 = vrot.slane %v4355, 3
        %v8910 = vsel %vm603, %v8909, %v8908
        %v8911 = vrot.slane %v4359, 2
        %v8912 = vsel %vm606, %v8911, %v8910
        %v8913 = vrot.slane %v4363, 1
        %v8914 = vsel %vm609, %v8913, %v8912
        %v8915 = vsel %vm612, %v4367, %v8914
        %v8916 = vrot.slane %v4371, 7
        %v8917 = vsel %vm615, %v8916, %v8915
        %v8918 = vrot.slane %v4375, 6
        %v8919 = vrot.slane %v4379, 5
        %v8920 = vsel %vm597, %v8919, %v8918
        %v8921 = vrot.slane %v4383, 4
        %v8922 = vsel %vm600, %v8921, %v8920
        %v8923 = vrot.slane %v4387, 3
        %v8924 = vsel %vm603, %v8923, %v8922
        %v8925 = vrot.slane %v4391, 2
        %v8926 = vsel %vm606, %v8925, %v8924
        %v8927 = vrot.slane %v4395, 1
        %v8928 = vsel %vm609, %v8927, %v8926
        %v8929 = vsel %vm612, %v4399, %v8928
        %v8930 = vrot.slane %v4403, 7
        %v8931 = vsel %vm615, %v8930, %v8929
        %v8932 = vrot.slane %v4408, 6
        %v8933 = vrot.slane %v4413, 5
        %v8934 = vsel %vm597, %v8933, %v8932
        %v8935 = vrot.slane %v4418, 4
        %v8936 = vsel %vm600, %v8935, %v8934
        %v8937 = vrot.slane %v4423, 3
        %v8938 = vsel %vm603, %v8937, %v8936
        %v8939 = vrot.slane %v4428, 2
        %v8940 = vsel %vm606, %v8939, %v8938
        %v8941 = vrot.slane %v4433, 1
        %v8942 = vsel %vm609, %v8941, %v8940
        %v8943 = vsel %vm612, %v4438, %v8942
        %v8944 = vrot.slane %v4443, 7
        %v8945 = vsel %vm615, %v8944, %v8943
        %v8946 = vrot.slane %v4448, 6
        %v8947 = vrot.slane %v4453, 5
        %v8948 = vsel %vm597, %v8947, %v8946
        %v8949 = vrot.slane %v4458, 4
        %v8950 = vsel %vm600, %v8949, %v8948
        %v8951 = vrot.slane %v4463, 3
        %v8952 = vsel %vm603, %v8951, %v8950
        %v8953 = vrot.slane %v4468, 2
        %v8954 = vsel %vm606, %v8953, %v8952
        %v8955 = vrot.slane %v4473, 1
        %v8956 = vsel %vm609, %v8955, %v8954
        %v8957 = vsel %vm612, %v4478, %v8956
        %v8958 = vrot.slane %v4483, 7
        %v8959 = vsel %vm615, %v8958, %v8957
        %v8960 = vrot.slane %v4487, 6
        %v8961 = vrot.slane %v4491, 5
        %v8962 = vsel %vm597, %v8961, %v8960
        %v8963 = vrot.slane %v4495, 4
        %v8964 = vsel %vm600, %v8963, %v8962
        %v8965 = vrot.slane %v4499, 3
        %v8966 = vsel %vm603, %v8965, %v8964
        %v8967 = vrot.slane %v4503, 2
        %v8968 = vsel %vm606, %v8967, %v8966
        %v8969 = vrot.slane %v4507, 1
        %v8970 = vsel %vm609, %v8969, %v8968
        %v8971 = vsel %vm612, %v4511, %v8970
        %v8972 = vrot.slane %v4515, 7
        %v8973 = vsel %vm615, %v8972, %v8971
        %v8974 = vrot.slane %v4519, 6
        %v8975 = vrot.slane %v4523, 5
        %v8976 = vsel %vm597, %v8975, %v8974
        %v8977 = vrot.slane %v4527, 4
        %v8978 = vsel %vm600, %v8977, %v8976
        %v8979 = vrot.slane %v4531, 3
        %v8980 = vsel %vm603, %v8979, %v8978
        %v8981 = vrot.slane %v4535, 2
        %v8982 = vsel %vm606, %v8981, %v8980
        %v8983 = vrot.slane %v4539, 1
        %v8984 = vsel %vm609, %v8983, %v8982
        %v8985 = vsel %vm612, %v4543, %v8984
        %v8986 = vrot.slane %v4547, 7
        %v8987 = vsel %vm615, %v8986, %v8985
        %v8988 = vrot.slane %v4551, 6
        %v8989 = vrot.slane %v4555, 5
        %v8990 = vsel %vm597, %v8989, %v8988
        %v8991 = vrot.slane %v4559, 4
        %v8992 = vsel %vm600, %v8991, %v8990
        %v8993 = vrot.slane %v4563, 3
        %v8994 = vsel %vm603, %v8993, %v8992
        %v8995 = vrot.slane %v4567, 2
        %v8996 = vsel %vm606, %v8995, %v8994
        %v8997 = vrot.slane %v4571, 1
        %v8998 = vsel %vm609, %v8997, %v8996
        %v8999 = vsel %vm612, %v4575, %v8998
        %v9000 = vrot.slane %v4579, 7
        %v9001 = vsel %vm615, %v9000, %v8999
        %v9002 = vrot.slane %v4583, 6
        %v9003 = vrot.slane %v4587, 5
        %v9004 = vsel %vm597, %v9003, %v9002
        %v9005 = vrot.slane %v4591, 4
        %v9006 = vsel %vm600, %v9005, %v9004
        %v9007 = vrot.slane %v4595, 3
        %v9008 = vsel %vm603, %v9007, %v9006
        %v9009 = vrot.slane %v4599, 2
        %v9010 = vsel %vm606, %v9009, %v9008
        %v9011 = vrot.slane %v4603, 1
        %v9012 = vsel %vm609, %v9011, %v9010
        %v9013 = vsel %vm612, %v4607, %v9012
        %v9014 = vrot.slane %v4611, 7
        %v9015 = vsel %vm615, %v9014, %v9013
        %9016 = vrot.lane.b32.xlu0 %v8779, 96
        %v9017 = vpop.permute.xlu0 %9016
        %9018 = vrot.lane.b32.xlu0 %v8791, 96
        %v9019 = vpop.permute.xlu0 %9018
        %9020 = vrot.lane.b32.xlu0 %v8805, 96
        %v9021 = vpop.permute.xlu0 %9020
        %9022 = vrot.lane.b32.xlu0 %v8819, 96
        %v9023 = vpop.permute.xlu0 %9022
        %9024 = vrot.lane.b32.xlu0 %v8833, 96
        %v9025 = vpop.permute.xlu0 %9024
        %9026 = vrot.lane.b32.xlu0 %v8847, 96
        %v9027 = vpop.permute.xlu0 %9026
        %9028 = vrot.lane.b32.xlu0 %v8861, 96
        %v9029 = vpop.permute.xlu0 %9028
        %9030 = vrot.lane.b32.xlu0 %v8875, 96
        %v9031 = vpop.permute.xlu0 %9030
        %9032 = vrot.lane.b32.xlu0 %v8889, 96
        %v9033 = vpop.permute.xlu0 %9032
        %9034 = vrot.lane.b32.xlu0 %v8903, 96
        %v9035 = vpop.permute.xlu0 %9034
        %9036 = vrot.lane.b32.xlu0 %v8917, 96
        %v9037 = vpop.permute.xlu0 %9036
        %9038 = vrot.lane.b32.xlu0 %v8931, 96
        %v9039 = vpop.permute.xlu0 %9038
        %9040 = vrot.lane.b32.xlu0 %v8945, 96
        %v9041 = vpop.permute.xlu0 %9040
        %9042 = vrot.lane.b32.xlu0 %v8959, 96
        %v9043 = vpop.permute.xlu0 %9042
        %9044 = vrot.lane.b32.xlu0 %v8973, 96
        %v9045 = vpop.permute.xlu0 %9044
        %9046 = vrot.lane.b32.xlu0 %v8987, 96
        %v9047 = vpop.permute.xlu0 %9046
        %9048 = vrot.lane.b32.xlu0 %v9001, 96
        %v9049 = vpop.permute.xlu0 %9048
        %9050 = vrot.lane.b32.xlu0 %v9015, 96
        %v9051 = vpop.permute.xlu0 %9050
        %v9070 = vrot.slane %v3973, 7
        %v9071 = vrot.slane %v3976, 6
        %v9072 = vsel %vm597, %v9071, %v9070
        %v9073 = vrot.slane %v3979, 5
        %v9074 = vsel %vm600, %v9073, %v9072
        %v9075 = vrot.slane %v3982, 4
        %v9076 = vsel %vm603, %v9075, %v9074
        %v9077 = vrot.slane %v3985, 3
        %v9078 = vsel %vm606, %v9077, %v9076
        %v9079 = vsel %vm609, %v4430, %v9078
        %v9080 = vsel %vm612, %v4227, %v9079
        %v9081 = vsel %vm615, %v3994, %v9080
        %v9082 = vrot.slane %v3997, 7
        %v9083 = vrot.slane %v4000, 6
        %v9084 = vsel %vm597, %v9083, %v9082
        %v9085 = vrot.slane %v4003, 5
        %v9086 = vsel %vm600, %v9085, %v9084
        %v9087 = vrot.slane %v4006, 4
        %v9088 = vsel %vm603, %v9087, %v9086
        %v9089 = vrot.slane %v4009, 3
        %v9090 = vsel %vm606, %v9089, %v9088
        %v9091 = vsel %vm609, %v4470, %v9090
        %v9092 = vsel %vm612, %v4267, %v9091
        %v9093 = vsel %vm615, %v4018, %v9092
        %v9094 = vrot.slane %v4055, 7
        %v9095 = vrot.slane %v4059, 6
        %v9096 = vsel %vm597, %v9095, %v9094
        %v9097 = vrot.slane %v4063, 5
        %v9098 = vsel %vm600, %v9097, %v9096
        %v9099 = vrot.slane %v4067, 4
        %v9100 = vsel %vm603, %v9099, %v9098
        %v9101 = vrot.slane %v4071, 3
        %v9102 = vsel %vm606, %v9101, %v9100
        %v9103 = vrot.slane %v4075, 2
        %v9104 = vsel %vm609, %v9103, %v9102
        %v9105 = vrot.slane %v4079, 1
        %v9106 = vsel %vm612, %v9105, %v9104
        %v9107 = vsel %vm615, %v4083, %v9106
        %v9108 = vrot.slane %v4087, 7
        %v9109 = vrot.slane %v4091, 6
        %v9110 = vsel %vm597, %v9109, %v9108
        %v9111 = vrot.slane %v4095, 5
        %v9112 = vsel %vm600, %v9111, %v9110
        %v9113 = vrot.slane %v4099, 4
        %v9114 = vsel %vm603, %v9113, %v9112
        %v9115 = vrot.slane %v4103, 3
        %v9116 = vsel %vm606, %v9115, %v9114
        %v9117 = vrot.slane %v4107, 2
        %v9118 = vsel %vm609, %v9117, %v9116
        %v9119 = vrot.slane %v4111, 1
        %v9120 = vsel %vm612, %v9119, %v9118
        %v9121 = vsel %vm615, %v4115, %v9120
        %v9122 = vrot.slane %v4119, 7
        %v9123 = vrot.slane %v4123, 6
        %v9124 = vsel %vm597, %v9123, %v9122
        %v9125 = vrot.slane %v4127, 5
        %v9126 = vsel %vm600, %v9125, %v9124
        %v9127 = vrot.slane %v4131, 4
        %v9128 = vsel %vm603, %v9127, %v9126
        %v9129 = vrot.slane %v4135, 3
        %v9130 = vsel %vm606, %v9129, %v9128
        %v9131 = vrot.slane %v4139, 2
        %v9132 = vsel %vm609, %v9131, %v9130
        %v9133 = vrot.slane %v4143, 1
        %v9134 = vsel %vm612, %v9133, %v9132
        %v9135 = vsel %vm615, %v4147, %v9134
        %v9136 = vrot.slane %v4151, 7
        %v9137 = vrot.slane %v4155, 6
        %v9138 = vsel %vm597, %v9137, %v9136
        %v9139 = vrot.slane %v4159, 5
        %v9140 = vsel %vm600, %v9139, %v9138
        %v9141 = vrot.slane %v4163, 4
        %v9142 = vsel %vm603, %v9141, %v9140
        %v9143 = vrot.slane %v4167, 3
        %v9144 = vsel %vm606, %v9143, %v9142
        %v9145 = vrot.slane %v4171, 2
        %v9146 = vsel %vm609, %v9145, %v9144
        %v9147 = vrot.slane %v4175, 1
        %v9148 = vsel %vm612, %v9147, %v9146
        %v9149 = vsel %vm615, %v4179, %v9148
        %v9150 = vrot.slane %v4200, 7
        %v9151 = vrot.slane %v4205, 6
        %v9152 = vsel %vm597, %v9151, %v9150
        %v9153 = vrot.slane %v4210, 5
        %v9154 = vsel %vm600, %v9153, %v9152
        %v9155 = vrot.slane %v4215, 4
        %v9156 = vsel %vm603, %v9155, %v9154
        %v9157 = vrot.slane %v4220, 3
        %v9158 = vsel %vm606, %v9157, %v9156
        %v9159 = vrot.slane %v4225, 2
        %v9160 = vsel %vm609, %v9159, %v9158
        %v9161 = vrot.slane %v4230, 1
        %v9162 = vsel %vm612, %v9161, %v9160
        %v9163 = vsel %vm615, %v4235, %v9162
        %v9164 = vrot.slane %v4240, 7
        %v9165 = vrot.slane %v4245, 6
        %v9166 = vsel %vm597, %v9165, %v9164
        %v9167 = vrot.slane %v4250, 5
        %v9168 = vsel %vm600, %v9167, %v9166
        %v9169 = vrot.slane %v4255, 4
        %v9170 = vsel %vm603, %v9169, %v9168
        %v9171 = vrot.slane %v4260, 3
        %v9172 = vsel %vm606, %v9171, %v9170
        %v9173 = vrot.slane %v4265, 2
        %v9174 = vsel %vm609, %v9173, %v9172
        %v9175 = vrot.slane %v4270, 1
        %v9176 = vsel %vm612, %v9175, %v9174
        %v9177 = vsel %vm615, %v4275, %v9176
        %v9178 = vrot.slane %v4279, 7
        %v9179 = vrot.slane %v4283, 6
        %v9180 = vsel %vm597, %v9179, %v9178
        %v9181 = vrot.slane %v4287, 5
        %v9182 = vsel %vm600, %v9181, %v9180
        %v9183 = vrot.slane %v4291, 4
        %v9184 = vsel %vm603, %v9183, %v9182
        %v9185 = vrot.slane %v4295, 3
        %v9186 = vsel %vm606, %v9185, %v9184
        %v9187 = vrot.slane %v4299, 2
        %v9188 = vsel %vm609, %v9187, %v9186
        %v9189 = vrot.slane %v4303, 1
        %v9190 = vsel %vm612, %v9189, %v9188
        %v9191 = vsel %vm615, %v4307, %v9190
        %v9192 = vrot.slane %v4311, 7
        %v9193 = vrot.slane %v4315, 6
        %v9194 = vsel %vm597, %v9193, %v9192
        %v9195 = vrot.slane %v4319, 5
        %v9196 = vsel %vm600, %v9195, %v9194
        %v9197 = vrot.slane %v4323, 4
        %v9198 = vsel %vm603, %v9197, %v9196
        %v9199 = vrot.slane %v4327, 3
        %v9200 = vsel %vm606, %v9199, %v9198
        %v9201 = vrot.slane %v4331, 2
        %v9202 = vsel %vm609, %v9201, %v9200
        %v9203 = vrot.slane %v4335, 1
        %v9204 = vsel %vm612, %v9203, %v9202
        %v9205 = vsel %vm615, %v4339, %v9204
        %v9206 = vrot.slane %v4343, 7
        %v9207 = vrot.slane %v4347, 6
        %v9208 = vsel %vm597, %v9207, %v9206
        %v9209 = vrot.slane %v4351, 5
        %v9210 = vsel %vm600, %v9209, %v9208
        %v9211 = vrot.slane %v4355, 4
        %v9212 = vsel %vm603, %v9211, %v9210
        %v9213 = vrot.slane %v4359, 3
        %v9214 = vsel %vm606, %v9213, %v9212
        %v9215 = vrot.slane %v4363, 2
        %v9216 = vsel %vm609, %v9215, %v9214
        %v9217 = vrot.slane %v4367, 1
        %v9218 = vsel %vm612, %v9217, %v9216
        %v9219 = vsel %vm615, %v4371, %v9218
        %v9220 = vrot.slane %v4375, 7
        %v9221 = vrot.slane %v4379, 6
        %v9222 = vsel %vm597, %v9221, %v9220
        %v9223 = vrot.slane %v4383, 5
        %v9224 = vsel %vm600, %v9223, %v9222
        %v9225 = vrot.slane %v4387, 4
        %v9226 = vsel %vm603, %v9225, %v9224
        %v9227 = vrot.slane %v4391, 3
        %v9228 = vsel %vm606, %v9227, %v9226
        %v9229 = vrot.slane %v4395, 2
        %v9230 = vsel %vm609, %v9229, %v9228
        %v9231 = vrot.slane %v4399, 1
        %v9232 = vsel %vm612, %v9231, %v9230
        %v9233 = vsel %vm615, %v4403, %v9232
        %v9234 = vrot.slane %v4408, 7
        %v9235 = vrot.slane %v4413, 6
        %v9236 = vsel %vm597, %v9235, %v9234
        %v9237 = vrot.slane %v4418, 5
        %v9238 = vsel %vm600, %v9237, %v9236
        %v9239 = vrot.slane %v4423, 4
        %v9240 = vsel %vm603, %v9239, %v9238
        %v9241 = vrot.slane %v4428, 3
        %v9242 = vsel %vm606, %v9241, %v9240
        %v9243 = vrot.slane %v4433, 2
        %v9244 = vsel %vm609, %v9243, %v9242
        %v9245 = vrot.slane %v4438, 1
        %v9246 = vsel %vm612, %v9245, %v9244
        %v9247 = vsel %vm615, %v4443, %v9246
        %v9248 = vrot.slane %v4448, 7
        %v9249 = vrot.slane %v4453, 6
        %v9250 = vsel %vm597, %v9249, %v9248
        %v9251 = vrot.slane %v4458, 5
        %v9252 = vsel %vm600, %v9251, %v9250
        %v9253 = vrot.slane %v4463, 4
        %v9254 = vsel %vm603, %v9253, %v9252
        %v9255 = vrot.slane %v4468, 3
        %v9256 = vsel %vm606, %v9255, %v9254
        %v9257 = vrot.slane %v4473, 2
        %v9258 = vsel %vm609, %v9257, %v9256
        %v9259 = vrot.slane %v4478, 1
        %v9260 = vsel %vm612, %v9259, %v9258
        %v9261 = vsel %vm615, %v4483, %v9260
        %v9262 = vrot.slane %v4487, 7
        %v9263 = vrot.slane %v4491, 6
        %v9264 = vsel %vm597, %v9263, %v9262
        %v9265 = vrot.slane %v4495, 5
        %v9266 = vsel %vm600, %v9265, %v9264
        %v9267 = vrot.slane %v4499, 4
        %v9268 = vsel %vm603, %v9267, %v9266
        %v9269 = vrot.slane %v4503, 3
        %v9270 = vsel %vm606, %v9269, %v9268
        %v9271 = vrot.slane %v4507, 2
        %v9272 = vsel %vm609, %v9271, %v9270
        %v9273 = vrot.slane %v4511, 1
        %v9274 = vsel %vm612, %v9273, %v9272
        %v9275 = vsel %vm615, %v4515, %v9274
        %v9276 = vrot.slane %v4519, 7
        %v9277 = vrot.slane %v4523, 6
        %v9278 = vsel %vm597, %v9277, %v9276
        %v9279 = vrot.slane %v4527, 5
        %v9280 = vsel %vm600, %v9279, %v9278
        %v9281 = vrot.slane %v4531, 4
        %v9282 = vsel %vm603, %v9281, %v9280
        %v9283 = vrot.slane %v4535, 3
        %v9284 = vsel %vm606, %v9283, %v9282
        %v9285 = vrot.slane %v4539, 2
        %v9286 = vsel %vm609, %v9285, %v9284
        %v9287 = vrot.slane %v4543, 1
        %v9288 = vsel %vm612, %v9287, %v9286
        %v9289 = vsel %vm615, %v4547, %v9288
        %v9290 = vrot.slane %v4551, 7
        %v9291 = vrot.slane %v4555, 6
        %v9292 = vsel %vm597, %v9291, %v9290
        %v9293 = vrot.slane %v4559, 5
        %v9294 = vsel %vm600, %v9293, %v9292
        %v9295 = vrot.slane %v4563, 4
        %v9296 = vsel %vm603, %v9295, %v9294
        %v9297 = vrot.slane %v4567, 3
        %v9298 = vsel %vm606, %v9297, %v9296
        %v9299 = vrot.slane %v4571, 2
        %v9300 = vsel %vm609, %v9299, %v9298
        %v9301 = vrot.slane %v4575, 1
        %v9302 = vsel %vm612, %v9301, %v9300
        %v9303 = vsel %vm615, %v4579, %v9302
        %v9304 = vrot.slane %v4583, 7
        %v9305 = vrot.slane %v4587, 6
        %v9306 = vsel %vm597, %v9305, %v9304
        %v9307 = vrot.slane %v4591, 5
        %v9308 = vsel %vm600, %v9307, %v9306
        %v9309 = vrot.slane %v4595, 4
        %v9310 = vsel %vm603, %v9309, %v9308
        %v9311 = vrot.slane %v4599, 3
        %v9312 = vsel %vm606, %v9311, %v9310
        %v9313 = vrot.slane %v4603, 2
        %v9314 = vsel %vm609, %v9313, %v9312
        %v9315 = vrot.slane %v4607, 1
        %v9316 = vsel %vm612, %v9315, %v9314
        %v9317 = vsel %vm615, %v4611, %v9316
        %9318 = vrot.lane.b32.xlu0 %v9081, 112
        %v9319 = vpop.permute.xlu0 %9318
        %9320 = vrot.lane.b32.xlu0 %v9093, 112
        %v9321 = vpop.permute.xlu0 %9320
        %9322 = vrot.lane.b32.xlu0 %v9107, 112
        %v9323 = vpop.permute.xlu0 %9322
        %9324 = vrot.lane.b32.xlu0 %v9121, 112
        %v9325 = vpop.permute.xlu0 %9324
        %9326 = vrot.lane.b32.xlu0 %v9135, 112
        %v9327 = vpop.permute.xlu0 %9326
        %9328 = vrot.lane.b32.xlu0 %v9149, 112
        %v9329 = vpop.permute.xlu0 %9328
        %9330 = vrot.lane.b32.xlu0 %v9163, 112
        %v9331 = vpop.permute.xlu0 %9330
        %9332 = vrot.lane.b32.xlu0 %v9177, 112
        %v9333 = vpop.permute.xlu0 %9332
        %9334 = vrot.lane.b32.xlu0 %v9191, 112
        %v9335 = vpop.permute.xlu0 %9334
        %9336 = vrot.lane.b32.xlu0 %v9205, 112
        %v9337 = vpop.permute.xlu0 %9336
        %9338 = vrot.lane.b32.xlu0 %v9219, 112
        %v9339 = vpop.permute.xlu0 %9338
        %9340 = vrot.lane.b32.xlu0 %v9233, 112
        %v9341 = vpop.permute.xlu0 %9340
        %9342 = vrot.lane.b32.xlu0 %v9247, 112
        %v9343 = vpop.permute.xlu0 %9342
        %9344 = vrot.lane.b32.xlu0 %v9261, 112
        %v9345 = vpop.permute.xlu0 %9344
        %9346 = vrot.lane.b32.xlu0 %v9275, 112
        %v9347 = vpop.permute.xlu0 %9346
        %9348 = vrot.lane.b32.xlu0 %v9289, 112
        %v9349 = vpop.permute.xlu0 %9348
        %9350 = vrot.lane.b32.xlu0 %v9303, 112
        %v9351 = vpop.permute.xlu0 %9350
        %9352 = vrot.lane.b32.xlu0 %v9317, 112
        %v9353 = vpop.permute.xlu0 %9352
        %v9372 = vsel %vm1807, %v4623, %v5127
        %v9373 = vsel %vm1807, %v4635, %v5129
        %v9374 = vsel %vm1807, %v4649, %v5131
        %v9375 = vsel %vm1807, %v4663, %v5133
        %v9376 = vsel %vm1807, %v4677, %v5135
        %v9377 = vsel %vm1807, %v4691, %v5137
        %v9378 = vsel %vm1807, %v4705, %v5139
        %v9379 = vsel %vm1807, %v4719, %v5141
        %v9380 = vsel %vm1807, %v4733, %v5143
        %v9381 = vsel %vm1807, %v4747, %v5145
        %v9382 = vsel %vm1807, %v4761, %v5147
        %v9383 = vsel %vm1807, %v4775, %v5149
        %v9384 = vsel %vm1807, %v4789, %v5151
        %v9385 = vsel %vm1807, %v4803, %v5153
        %v9386 = vsel %vm1807, %v4817, %v5155
        %v9387 = vsel %vm1807, %v4831, %v5157
        %v9388 = vsel %vm1807, %v4845, %v5159
        %v9389 = vsel %vm1807, %v4859, %v5161
        %v9390 = vsel %vm1813, %v9372, %v5429
        %v9391 = vsel %vm1813, %v9373, %v5431
        %v9392 = vsel %vm1813, %v9374, %v5433
        %v9393 = vsel %vm1813, %v9375, %v5435
        %v9394 = vsel %vm1813, %v9376, %v5437
        %v9395 = vsel %vm1813, %v9377, %v5439
        %v9396 = vsel %vm1813, %v9378, %v5441
        %v9397 = vsel %vm1813, %v9379, %v5443
        %v9398 = vsel %vm1813, %v9380, %v5445
        %v9399 = vsel %vm1813, %v9381, %v5447
        %v9400 = vsel %vm1813, %v9382, %v5449
        %v9401 = vsel %vm1813, %v9383, %v5451
        %v9402 = vsel %vm1813, %v9384, %v5453
        %v9403 = vsel %vm1813, %v9385, %v5455
        %v9404 = vsel %vm1813, %v9386, %v5457
        %v9405 = vsel %vm1813, %v9387, %v5459
        %v9406 = vsel %vm1813, %v9388, %v5461
        %v9407 = vsel %vm1813, %v9389, %v5463
        %v9408 = vsel %vm1819, %v9390, %v5731
        %v9409 = vsel %vm1819, %v9391, %v5733
        %v9410 = vsel %vm1819, %v9392, %v5735
        %v9411 = vsel %vm1819, %v9393, %v5737
        %v9412 = vsel %vm1819, %v9394, %v5739
        %v9413 = vsel %vm1819, %v9395, %v5741
        %v9414 = vsel %vm1819, %v9396, %v5743
        %v9415 = vsel %vm1819, %v9397, %v5745
        %v9416 = vsel %vm1819, %v9398, %v5747
        %v9417 = vsel %vm1819, %v9399, %v5749
        %v9418 = vsel %vm1819, %v9400, %v5751
        %v9419 = vsel %vm1819, %v9401, %v5753
        %v9420 = vsel %vm1819, %v9402, %v5755
        %v9421 = vsel %vm1819, %v9403, %v5757
        %v9422 = vsel %vm1819, %v9404, %v5759
        %v9423 = vsel %vm1819, %v9405, %v5761
        %v9424 = vsel %vm1819, %v9406, %v5763
        %v9425 = vsel %vm1819, %v9407, %v5765
        %v9426 = vsel %vm1825, %v9408, %v6033
        %v9427 = vsel %vm1825, %v9409, %v6035
        %v9428 = vsel %vm1825, %v9410, %v6037
        %v9429 = vsel %vm1825, %v9411, %v6039
        %v9430 = vsel %vm1825, %v9412, %v6041
        %v9431 = vsel %vm1825, %v9413, %v6043
        %v9432 = vsel %vm1825, %v9414, %v6045
        %v9433 = vsel %vm1825, %v9415, %v6047
        %v9434 = vsel %vm1825, %v9416, %v6049
        %v9435 = vsel %vm1825, %v9417, %v6051
        %v9436 = vsel %vm1825, %v9418, %v6053
        %v9437 = vsel %vm1825, %v9419, %v6055
        %v9438 = vsel %vm1825, %v9420, %v6057
        %v9439 = vsel %vm1825, %v9421, %v6059
        %v9440 = vsel %vm1825, %v9422, %v6061
        %v9441 = vsel %vm1825, %v9423, %v6063
        %v9442 = vsel %vm1825, %v9424, %v6065
        %v9443 = vsel %vm1825, %v9425, %v6067
        %v9444 = vsel %vm1831, %v9426, %v6335
        %v9445 = vsel %vm1831, %v9427, %v6337
        %v9446 = vsel %vm1831, %v9428, %v6339
        %v9447 = vsel %vm1831, %v9429, %v6341
        %v9448 = vsel %vm1831, %v9430, %v6343
        %v9449 = vsel %vm1831, %v9431, %v6345
        %v9450 = vsel %vm1831, %v9432, %v6347
        %v9451 = vsel %vm1831, %v9433, %v6349
        %v9452 = vsel %vm1831, %v9434, %v6351
        %v9453 = vsel %vm1831, %v9435, %v6353
        %v9454 = vsel %vm1831, %v9436, %v6355
        %v9455 = vsel %vm1831, %v9437, %v6357
        %v9456 = vsel %vm1831, %v9438, %v6359
        %v9457 = vsel %vm1831, %v9439, %v6361
        %v9458 = vsel %vm1831, %v9440, %v6363
        %v9459 = vsel %vm1831, %v9441, %v6365
        %v9460 = vsel %vm1831, %v9442, %v6367
        %v9461 = vsel %vm1831, %v9443, %v6369
        %v9462 = vsel %vm1837, %v9444, %v6637
        %v9463 = vsel %vm1837, %v9445, %v6639
        %v9464 = vsel %vm1837, %v9446, %v6641
        %v9465 = vsel %vm1837, %v9447, %v6643
        %v9466 = vsel %vm1837, %v9448, %v6645
        %v9467 = vsel %vm1837, %v9449, %v6647
        %v9468 = vsel %vm1837, %v9450, %v6649
        %v9469 = vsel %vm1837, %v9451, %v6651
        %v9470 = vsel %vm1837, %v9452, %v6653
        %v9471 = vsel %vm1837, %v9453, %v6655
        %v9472 = vsel %vm1837, %v9454, %v6657
        %v9473 = vsel %vm1837, %v9455, %v6659
        %v9474 = vsel %vm1837, %v9456, %v6661
        %v9475 = vsel %vm1837, %v9457, %v6663
        %v9476 = vsel %vm1837, %v9458, %v6665
        %v9477 = vsel %vm1837, %v9459, %v6667
        %v9478 = vsel %vm1837, %v9460, %v6669
        %v9479 = vsel %vm1837, %v9461, %v6671
        %v9480 = vsel %vm1843, %v9462, %v6939
        %v9481 = vsel %vm1843, %v9463, %v6941
        %v9482 = vsel %vm1843, %v9464, %v6943
        %v9483 = vsel %vm1843, %v9465, %v6945
        %v9484 = vsel %vm1843, %v9466, %v6947
        %v9485 = vsel %vm1843, %v9467, %v6949
        %v9486 = vsel %vm1843, %v9468, %v6951
        %v9487 = vsel %vm1843, %v9469, %v6953
        %v9488 = vsel %vm1843, %v9470, %v6955
        %v9489 = vsel %vm1843, %v9471, %v6957
        %v9490 = vsel %vm1843, %v9472, %v6959
        %v9491 = vsel %vm1843, %v9473, %v6961
        %v9492 = vsel %vm1843, %v9474, %v6963
        %v9493 = vsel %vm1843, %v9475, %v6965
        %v9494 = vsel %vm1843, %v9476, %v6967
        %v9495 = vsel %vm1843, %v9477, %v6969
        %v9496 = vsel %vm1843, %v9478, %v6971
        %v9497 = vsel %vm1843, %v9479, %v6973
        %v9498 = vsel %vm1807, %v7003, %v7507
        %v9499 = vsel %vm1807, %v7015, %v7509
        %v9500 = vsel %vm1807, %v7029, %v7511
        %v9501 = vsel %vm1807, %v7043, %v7513
        %v9502 = vsel %vm1807, %v7057, %v7515
        %v9503 = vsel %vm1807, %v7071, %v7517
        %v9504 = vsel %vm1807, %v7085, %v7519
        %v9505 = vsel %vm1807, %v7099, %v7521
        %v9506 = vsel %vm1807, %v7113, %v7523
        %v9507 = vsel %vm1807, %v7127, %v7525
        %v9508 = vsel %vm1807, %v7141, %v7527
        %v9509 = vsel %vm1807, %v7155, %v7529
        %v9510 = vsel %vm1807, %v7169, %v7531
        %v9511 = vsel %vm1807, %v7183, %v7533
        %v9512 = vsel %vm1807, %v7197, %v7535
        %v9513 = vsel %vm1807, %v7211, %v7537
        %v9514 = vsel %vm1807, %v7225, %v7539
        %v9515 = vsel %vm1807, %v7239, %v7541
        %v9516 = vsel %vm1813, %v9498, %v7809
        %v9517 = vsel %vm1813, %v9499, %v7811
        %v9518 = vsel %vm1813, %v9500, %v7813
        %v9519 = vsel %vm1813, %v9501, %v7815
        %v9520 = vsel %vm1813, %v9502, %v7817
        %v9521 = vsel %vm1813, %v9503, %v7819
        %v9522 = vsel %vm1813, %v9504, %v7821
        %v9523 = vsel %vm1813, %v9505, %v7823
        %v9524 = vsel %vm1813, %v9506, %v7825
        %v9525 = vsel %vm1813, %v9507, %v7827
        %v9526 = vsel %vm1813, %v9508, %v7829
        %v9527 = vsel %vm1813, %v9509, %v7831
        %v9528 = vsel %vm1813, %v9510, %v7833
        %v9529 = vsel %vm1813, %v9511, %v7835
        %v9530 = vsel %vm1813, %v9512, %v7837
        %v9531 = vsel %vm1813, %v9513, %v7839
        %v9532 = vsel %vm1813, %v9514, %v7841
        %v9533 = vsel %vm1813, %v9515, %v7843
        %v9534 = vsel %vm1819, %v9516, %v8111
        %v9535 = vsel %vm1819, %v9517, %v8113
        %v9536 = vsel %vm1819, %v9518, %v8115
        %v9537 = vsel %vm1819, %v9519, %v8117
        %v9538 = vsel %vm1819, %v9520, %v8119
        %v9539 = vsel %vm1819, %v9521, %v8121
        %v9540 = vsel %vm1819, %v9522, %v8123
        %v9541 = vsel %vm1819, %v9523, %v8125
        %v9542 = vsel %vm1819, %v9524, %v8127
        %v9543 = vsel %vm1819, %v9525, %v8129
        %v9544 = vsel %vm1819, %v9526, %v8131
        %v9545 = vsel %vm1819, %v9527, %v8133
        %v9546 = vsel %vm1819, %v9528, %v8135
        %v9547 = vsel %vm1819, %v9529, %v8137
        %v9548 = vsel %vm1819, %v9530, %v8139
        %v9549 = vsel %vm1819, %v9531, %v8141
        %v9550 = vsel %vm1819, %v9532, %v8143
        %v9551 = vsel %vm1819, %v9533, %v8145
        %v9552 = vsel %vm1825, %v9534, %v8413
        %v9553 = vsel %vm1825, %v9535, %v8415
        %v9554 = vsel %vm1825, %v9536, %v8417
        %v9555 = vsel %vm1825, %v9537, %v8419
        %v9556 = vsel %vm1825, %v9538, %v8421
        %v9557 = vsel %vm1825, %v9539, %v8423
        %v9558 = vsel %vm1825, %v9540, %v8425
        %v9559 = vsel %vm1825, %v9541, %v8427
        %v9560 = vsel %vm1825, %v9542, %v8429
        %v9561 = vsel %vm1825, %v9543, %v8431
        %v9562 = vsel %vm1825, %v9544, %v8433
        %v9563 = vsel %vm1825, %v9545, %v8435
        %v9564 = vsel %vm1825, %v9546, %v8437
        %v9565 = vsel %vm1825, %v9547, %v8439
        %v9566 = vsel %vm1825, %v9548, %v8441
        %v9567 = vsel %vm1825, %v9549, %v8443
        %v9568 = vsel %vm1825, %v9550, %v8445
        %v9569 = vsel %vm1825, %v9551, %v8447
        %v9570 = vsel %vm1831, %v9552, %v8715
        %v9571 = vsel %vm1831, %v9553, %v8717
        %v9572 = vsel %vm1831, %v9554, %v8719
        %v9573 = vsel %vm1831, %v9555, %v8721
        %v9574 = vsel %vm1831, %v9556, %v8723
        %v9575 = vsel %vm1831, %v9557, %v8725
        %v9576 = vsel %vm1831, %v9558, %v8727
        %v9577 = vsel %vm1831, %v9559, %v8729
        %v9578 = vsel %vm1831, %v9560, %v8731
        %v9579 = vsel %vm1831, %v9561, %v8733
        %v9580 = vsel %vm1831, %v9562, %v8735
        %v9581 = vsel %vm1831, %v9563, %v8737
        %v9582 = vsel %vm1831, %v9564, %v8739
        %v9583 = vsel %vm1831, %v9565, %v8741
        %v9584 = vsel %vm1831, %v9566, %v8743
        %v9585 = vsel %vm1831, %v9567, %v8745
        %v9586 = vsel %vm1831, %v9568, %v8747
        %v9587 = vsel %vm1831, %v9569, %v8749
        %v9588 = vsel %vm1837, %v9570, %v9017
        %v9589 = vsel %vm1837, %v9571, %v9019
        %v9590 = vsel %vm1837, %v9572, %v9021
        %v9591 = vsel %vm1837, %v9573, %v9023
        %v9592 = vsel %vm1837, %v9574, %v9025
        %v9593 = vsel %vm1837, %v9575, %v9027
        %v9594 = vsel %vm1837, %v9576, %v9029
        %v9595 = vsel %vm1837, %v9577, %v9031
        %v9596 = vsel %vm1837, %v9578, %v9033
        %v9597 = vsel %vm1837, %v9579, %v9035
        %v9598 = vsel %vm1837, %v9580, %v9037
        %v9599 = vsel %vm1837, %v9581, %v9039
        %v9600 = vsel %vm1837, %v9582, %v9041
        %v9601 = vsel %vm1837, %v9583, %v9043
        %v9602 = vsel %vm1837, %v9584, %v9045
        %v9603 = vsel %vm1837, %v9585, %v9047
        %v9604 = vsel %vm1837, %v9586, %v9049
        %v9605 = vsel %vm1837, %v9587, %v9051
        %v9606 = vsel %vm1843, %v9588, %v9319
        %v9607 = vsel %vm1843, %v9589, %v9321
        %v9608 = vsel %vm1843, %v9590, %v9323
        %v9609 = vsel %vm1843, %v9591, %v9325
        %v9610 = vsel %vm1843, %v9592, %v9327
        %v9611 = vsel %vm1843, %v9593, %v9329
        %v9612 = vsel %vm1843, %v9594, %v9331
        %v9613 = vsel %vm1843, %v9595, %v9333
        %v9614 = vsel %vm1843, %v9596, %v9335
        %v9615 = vsel %vm1843, %v9597, %v9337
        %v9616 = vsel %vm1843, %v9598, %v9339
        %v9617 = vsel %vm1843, %v9599, %v9341
        %v9618 = vsel %vm1843, %v9600, %v9343
        %v9619 = vsel %vm1843, %v9601, %v9345
        %v9620 = vsel %vm1843, %v9602, %v9347
        %v9621 = vsel %vm1843, %v9603, %v9349
        %v9622 = vsel %vm1843, %v9604, %v9351
        %v9623 = vsel %vm1843, %v9605, %v9353
        %v9624 = vld [vmem:[%s3] sm:$0xff]
        %v9625 = vld [vmem:[%s3 + $0x8] sm:$0xff]
        %v9626 = vld [vmem:[%s4] sm:$0xff]
        %9628 = vset.pattern.permute.xlu0 0
        %9629 = vperm.xlu0 %9628, %v9626
        %v9630 = vpop.permute.xlu0 %9629
        %v9633 = vsel %vm1807, %v9625, 0
        %9635 = vmatprep.subr.mxu0 %v9606
        %9636 = vmatpush1.msra.mxu0 %v9480
        %9637 = vmatprep.subr.mxu0 %v9607
        %9638 = vmatpush1.msra.mxu0 %v9481
        %9639 = vmatprep.subr.mxu0 %v9608
        %9640 = vmatpush1.msra.mxu0 %v9482
        %9641 = vmatprep.subr.mxu0 %v9609
        %9642 = vmatpush1.msra.mxu0 %v9483
        %9643 = vmatprep.subr.mxu0 %v9610
        %9644 = vmatpush1.msra.mxu0 %v9484
        %9645 = vmatprep.subr.mxu0 %v9611
        %9646 = vmatpush1.msra.mxu0 %v9485
        %9647 = vmatprep.subr.mxu0 %v9612
        %9648 = vmatpush1.msra.mxu0 %v9486
        %9649 = vmatprep.subr.mxu0 %v9613
        %9650 = vmatpush1.msra.mxu0 %v9487
        %9651 = vmatprep.subr.mxu0 %v9614
        %9652 = vmatpush1.msra.mxu0 %v9488
        %9653 = vmatprep.subr.mxu0 %v9615
        %9654 = vmatpush1.msra.mxu0 %v9489
        %9655 = vmatprep.subr.mxu0 %v9616
        %9656 = vmatpush1.msra.mxu0 %v9490
        %9657 = vmatprep.subr.mxu0 %v9617
        %9658 = vmatpush1.msra.mxu0 %v9491
        %9659 = vmatprep.subr.mxu0 %v9618
        %9660 = vmatpush1.msra.mxu0 %v9492
        %9661 = vmatprep.subr.mxu0 %v9619
        %9662 = vmatpush1.msra.mxu0 %v9493
        %9663 = vmatprep.subr.mxu0 %v9620
        %9664 = vmatpush1.msra.mxu0 %v9494
        %9665 = vmatprep.subr.mxu0 %v9621
        %9666 = vmatpush1.msra.mxu0 %v9495
        %9667 = vmatprep.subr.mxu0 %v9622
        %9668 = vmatpush1.msra.mxu0 %v9496
        %9669 = vmatprep.subr.mxu0 %v9623
        %9670 = vmatpush1.msra.mxu0 %v9497
        %9671 = vmatprep.subr.mxu0 0.0
        %9672 = vmatpush1.msra.mxu0 0.0
        %9673 = vmatprep.subr.mxu0 0.0
        %9674 = vmatpush1.msra.mxu0 0.0
        %9675 = vmatprep.subr.mxu0 0.0
        %9676 = vmatpush1.msra.mxu0 0.0
        %9677 = vmatprep.subr.mxu0 0.0
        %9678 = vmatpush1.msra.mxu0 0.0
        %9679 = vmatprep.subr.mxu0 0.0
        %9680 = vmatpush1.msra.mxu0 0.0
        %9681 = vmatprep.subr.mxu0 0.0
        %9682 = vmatpush1.msra.mxu0 0.0
        %9683 = vmatprep.subr.mxu0 0.0
        %9684 = vmatpush1.msra.mxu0 0.0
        %9685 = vmatprep.subr.mxu0 0.0
        %9686 = vmatpush1.msra.mxu0 0.0
        %9687 = vmatprep.subr.mxu0 0.0
        %9688 = vmatpush1.msra.mxu0 0.0
        %9689 = vmatprep.subr.mxu0 0.0
        %9690 = vmatpush1.msra.mxu0 0.0
        %9691 = vmatprep.subr.mxu0 0.0
        %9692 = vmatpush1.msra.mxu0 0.0
        %9693 = vmatprep.subr.mxu0 0.0
        %9694 = vmatpush1.msra.mxu0 0.0
        %9695 = vmatprep.subr.mxu0 0.0
        %9696 = vmatpush1.msra.mxu0 0.0
        %9697 = vmatprep.subr.mxu0 0.0
        %9698 = vmatpush1.msra.mxu0 0.0
        %9699 = vmatprep.mubr.f32.mxu0 %v9633
        %9700 = vmatmul.mubr.f32.gmra.mrb[0].mxu0 %v9624
        %v9701 = vpop.f32.mrb[0].mxu0
        %v9702 = vadd.f32 %v9630, %v9701
        %v9703 = vpop.f32.mrb[0].mxu0
        %v9704 = vadd.f32 %v9630, %v9703
        %9705 = vdwg.mxu0
        %v9706 = vmax.f32 %v9702, 0.0
        %v9707 = vmax.f32 %v9704, 0.0
        %9708 = vst [vmem:[%s242] sm:$0xff] %v9706
        %9709 = vst [vmem:[%s242 + $0x8] sm:$0xff] %v9707
        %s9710 = sand.u32 %s140, 1
        %s9711 = scalar_lea.sflag [#allocation4], %s9710
        %s9712 = sand.u32 %s140, 1
        %s9713 = smul.addr %s9712, 16
        %s9714 = scalar_lea.vmem [#allocation5], %s9713
        // Predicated region
        $region45: #{tpu_custom_call.1} parent=39 // pred_check
          %p9715 = pneg %p150
        $region46: #{tpu_custom_call.1} parent=39 // pred_check_branch
          %9717 = sbr.rel (%p9715) target = $region48
        $region47: #{tpu_custom_call.1} parent=39 // pred_region
          %s9719 = ssub.s32 256, 256
          %9720 = vsyncadd %s9711, %s9719
          %s9721 = smul.addr %s22, 2
          %s9722 = smul.addr %s9721, 128
          %s9723 = scalar_lea.hbm %s5, %s9722
          %s9725 = sshll.u32 %s9714, 4
          %s9726 = int_to_ptr.vmem [resolvable:$true] %s9725
          %9728 = dma.vmem_to_hbm [thread:$0]  %s9726, 256, %s9723, %s9711
        $region48: #{tpu_custom_call.1} parent=39 // pred_fallthru
          _
      $region40: #{tpu_custom_call.1} parent=5 // pred_fallthru
        _
      %p9729 = scmp.le.s32.totalorder 2, %s17
      // Predicated region
      $region49: #{tpu_custom_call.1} parent=5 // pred_check
        %p9730 = pneg %p9729
      $region50: #{tpu_custom_call.1} parent=5 // pred_check_branch
        %9732 = sbr.rel (%p9730) target = $region52
      $region51: #{tpu_custom_call.1} parent=5 // pred_region
        %s9733 = ssub.s32 %s17, 2
        // Predicated region
        $region53: #{tpu_custom_call.1} parent=51 // pred_check
          %p9734 = pneg %p156
        $region54: #{tpu_custom_call.1} parent=51 // pred_check_branch
          %9736 = sbr.rel (%p9734) target = $region56
        $region55: #{tpu_custom_call.1} parent=51 // pred_region
          %s9737 = sand.u32 %s141, 1
          %s9738 = scalar_lea.sflag [#allocation4], %s9737
          %s9739 = sand.u32 %s141, 1
          %s9740 = smul.addr %s9739, 16
          %s9741 = scalar_lea.vmem [#allocation5], %s9740
          %9742 = dma.done %s9738, 256
        $region56: #{tpu_custom_call.1} parent=51 // pred_fallthru
          _
      $region52: #{tpu_custom_call.1} parent=5 // pred_fallthru
        _
    $region6: #{tpu_custom_call.1} parent=1 // loop_footer
      %s21 = sadd.s32 1, %s17
    $region7: #{tpu_custom_call.1} parent=1 // loop_footer_branch
      %16 = sbr.rel target = $region3
    $region8: #{tpu_custom_call.1} parent=1 // loop_exit
      _
    %9743 = vsyncpa [#allocation3], 1
    %s9744 = scalar_lea.sflag [#allocation3], 1
    %9745 = vsyncpa %s9744, 1
    %9746 = vsyncpa [#allocation4], 1
    %s9747 = scalar_lea.sflag [#allocation4], 1
    %9748 = vsyncpa %s9747, 1

</llo_original>
